<compile_context>
chip_gen: v7x
topology: tpu7x:2x2x1
jax: 0.10.0
libtpu: 0.0.40
codegen_flags: <defaults>
</compile_context>

<pallas_src>
import functools
import math

import jax
import jax.numpy as jnp
from jax.experimental import pallas as pl
from jax.experimental.pallas import tpu as pltpu


# -----------------------------------------------------------------------------
# Pallas kernel: adaptive-avg-pool(1,1) + flatten + linear + relu
#   (applied to n_imgs feature tensors sharing one weight load)
# -----------------------------------------------------------------------------
def _pool_proj_kernel(*refs, n_imgs, inv_hw, hw, t_hw, need_mask):
    # refs layout:
    #   x_refs[i] : [B, C, t_hw]   spatial tile of image i's features
    #   w_ref     : [C, OUT]       full weight (bf16), constant across grid
    #   b_ref     : [1, OUT]       bias (f32), constant across grid
    #   o_refs[i] : [B, OUT]       output for image i (resident across grid)
    #   acc_refs[i]: [B, C] f32    pooled-sum accumulator (VMEM scratch)
    x_refs = refs[:n_imgs]
    w_ref = refs[n_imgs]
    b_ref = refs[n_imgs + 1]
    o_refs = refs[n_imgs + 2: 2 * n_imgs + 2]
    acc_refs = refs[2 * n_imgs + 2:]

    k = pl.program_id(0)

    @pl.when(k == 0)
    def _():
        for acc in acc_refs:
            acc[...] = jnp.zeros_like(acc)

    # Partial spatial sum: reduce over the last (lane) axis; C stays dense on
    # lanes of the pooled [B, C] result, ready for the MXU contraction.
    for x_ref, acc in zip(x_refs, acc_refs):
        x = x_ref[...].astype(jnp.float32)                    # [B, C, t_hw]
        if need_mask:
            col = jax.lax.broadcasted_iota(jnp.int32, x.shape, x.ndim - 1)
            x = jnp.where(col + k * t_hw < hw, x, 0.0)        # mask ragged tail
        acc[...] += jnp.sum(x, axis=-1)                       # [B, C]

    @pl.when(k == pl.num_programs(0) - 1)
    def _():
        w = w_ref[...]                                        # bf16 [C, OUT]
        bias = b_ref[...].astype(jnp.float32)                 # [1, OUT]
        for acc, o_ref in zip(acc_refs, o_refs):
            pooled = (acc[...] * inv_hw).astype(w.dtype)      # bf16 [B, C]
            y = jnp.dot(pooled, w, preferred_element_type=jnp.float32)
            y = y + bias
            o_ref[...] = jnp.maximum(y, 0.0).astype(o_ref.dtype)


@functools.partial(jax.jit, static_argnames=("t_hw_target", "max_single_tile"))
def pooled_projection_pallas(w, b, *feats, t_hw_target=512, max_single_tile=2048):
    """Projection head for one or more feature tensors.

    feats[i]: [B, C, H, W] (or [B, C, HW]); w: [C, OUT] (bf16); b: [OUT] (f32).
    Returns one [B, OUT] array per feature tensor (tuple if more than one).
    """
    n = len(feats)
    B, C = feats[0].shape[:2]
    HW = math.prod(feats[0].shape[2:])
    OUT = w.shape[1]
    # Flattening contiguous (H, W) of NCHW is free (no transpose, no copy).
    feats = tuple(f.reshape(B, C, HW) for f in feats)
    b2 = b.reshape(1, OUT)

    # Spatial tiling: single block for modest HW, else a fixed lane-aligned
    # tile with a masked ragged remainder.  t_hw_target must be a multiple of
    # 128 (lane width).  Sizes chosen to fit v5e's 16 MiB scoped-VMEM default.
    if HW <= max_single_tile:
        t_hw = HW
    else:
        t_hw = t_hw_target
    n_steps = -(-HW // t_hw)
    need_mask = (HW % t_hw) != 0

    kernel = functools.partial(
        _pool_proj_kernel, n_imgs=n, inv_hw=1.0 / HW,
        hw=HW, t_hw=t_hw, need_mask=need_mask)

    feat_spec = pl.BlockSpec((B, C, t_hw), lambda k: (0, 0, k))
    in_specs = [feat_spec] * n + [
        pl.BlockSpec((C, OUT), lambda k: (0, 0)),             # weight (bf16)
        pl.BlockSpec((1, OUT), lambda k: (0, 0)),             # bias
    ]
    # NOTE: output dtype follows the feature dtype (f32 features -> f32 head
    # output, matching the PyTorch module).
    out_shape = tuple(jax.ShapeDtypeStruct((B, OUT), feats[0].dtype)
                      for _ in range(n))
    out_specs = tuple(pl.BlockSpec((B, OUT), lambda k: (0, 0)) for _ in range(n))
    scratch = [pltpu.VMEM((B, C), jnp.float32) for _ in range(n)]

    feat_isize = feats[0].dtype.itemsize
    cost = pl.CostEstimate(
        flops=n * (B * C * HW + 2 * B * C * OUT),
        transcendentals=0,
        bytes_accessed=(n * B * C * HW * feat_isize
                        + C * OUT * w.dtype.itemsize
                        + OUT * b.dtype.itemsize
                        + n * B * OUT * feat_isize))

    outs = pl.pallas_call(
        kernel,
        out_shape=out_shape,
        grid_spec=pltpu.PrefetchScalarGridSpec(
            num_scalar_prefetch=0,
            grid=(n_steps,),                      # spatial reduction axis
            in_specs=in_specs,
            out_specs=out_specs,
            scratch_shapes=scratch,
        ),
        compiler_params=pltpu.CompilerParams(
            dimension_semantics=("arbitrary",),
        ),
        cost_estimate=cost,
    )(*feats, w, b2)
    return outs if n > 1 else outs[0]


# -----------------------------------------------------------------------------
# TimmModel ('segformer' branch) in JAX
# -----------------------------------------------------------------------------
def init_params(key, hidden_channels, out_dim=1024):
    kw, kb = jax.random.split(key)
    # nn.Linear(hidden_channels, out_dim): weight stored transposed [C, OUT],
    # kept in bf16 (MXU-native) per the perf review.
    w = jax.random.normal(kw, (hidden_channels, out_dim), jnp.float32) * 0.02
    b = jax.random.normal(kb, (out_dim,), jnp.float32) * 0.01
    logit_scale = jnp.array(jnp.log(1.0 / 0.07), jnp.float32)  # defined, unused in fwd
    return {"proj_w": w.astype(jnp.bfloat16), "proj_b": b, "logit_scale": logit_scale}


def timm_model_forward(params, feats1, feats2=None):
    """Mirrors TimmModel.forward (segformer branch).

    feats1/feats2 stand in for `self.model(img).last_hidden_state` ([B,C,H,W]).
    """
    w, b = params["proj_w"], params["proj_b"]
    if feats2 is None:
        return pooled_projection_pallas(w, b, feats1)
    return pooled_projection_pallas(w, b, feats1, feats2)   # (feat1, feat2)


def _reference(params, feats):
    pooled = feats.mean(axis=(2, 3))                          # AvgPool + Flatten
    w = params["proj_w"].astype(jnp.float32)
    y = pooled @ w + params["proj_b"]                         # Linear
    return jnp.maximum(y, 0.0)                                # ReLU


if __name__ == "__main__":
    key = jax.random.PRNGKey(0)
    k1, k2, k3, kp = jax.random.split(key, 4)

    # Small shapes: batch=2, backbone hidden channels=256, spatial 8x8.
    B, C, H, W = 2, 256, 8, 8
    feats1 = jax.random.normal(k1, (B, C, H, W), jnp.float32)
    feats2 = jax.random.normal(k2, (B, C, H, W), jnp.float32)
    params = init_params(kp, hidden_channels=C, out_dim=1024)

    # Two-image path (single fused pallas_call, no concat / no transpose).
    out1, out2 = timm_model_forward(params, feats1, feats2)
    out1 = jax.block_until_ready(out1)
    out2 = jax.block_until_ready(out2)

    # Single-image path.
    out_single = jax.block_until_ready(timm_model_forward(params, feats1))

    ref1 = _reference(params, feats1)
    ref2 = _reference(params, feats2)
    assert out1.shape == (B, 1024) and out2.shape == (B, 1024)
    assert jnp.allclose(out1, ref1, atol=1e-2, rtol=1e-2)
    assert jnp.allclose(out2, ref2, atol=1e-2, rtol=1e-2)
    assert jnp.allclose(out_single, ref1, atol=1e-2, rtol=1e-2)

    # Ragged spatial size exercising the masked-remainder tiling path
    # (HW = 400 with t_hw = 128 -> grid of 4, last tile has 16 valid columns).
    H2 = W2 = 20
    feats3 = jax.random.normal(k3, (B, C, H2, W2), jnp.float32)
    out3 = jax.block_until_ready(
        pooled_projection_pallas(params["proj_w"], params["proj_b"], feats3,
                                 t_hw_target=128, max_single_tile=128))
    ref3 = _reference(params, feats3)
    assert out3.shape == (B, 1024)
    assert jnp.allclose(out3, ref3, atol=1e-2, rtol=1e-2)

    print("KERNEL_OK")
</pallas_src>

<mosaic_0001>
module attributes {stable_mosaic.version = 11 : i64} {
  func.func @_pool_proj_kernel(%arg0: i32, %arg1: memref<2x256x64xf32, #tpu.memory_space<vmem>>, %arg2: memref<2x256x64xf32, #tpu.memory_space<vmem>>, %arg3: memref<256x1024xbf16, #tpu.memory_space<vmem>>, %arg4: memref<1x1024xf32, #tpu.memory_space<vmem>>, %arg5: memref<2x1024xf32, #tpu.memory_space<vmem>>, %arg6: memref<2x1024xf32, #tpu.memory_space<vmem>>, %arg7: memref<2x256xf32, #tpu.memory_space<vmem>>, %arg8: memref<2x256xf32, #tpu.memory_space<vmem>>) attributes {dimension_semantics = [#tpu.dimension_semantics<arbitrary>], iteration_bounds = array<i64: 1>, scalar_prefetch = 0 : i64, scratch_operands = 2 : i64, tpu.core_type = #tpu.core_type<tc>, window_params = [{transform_indices = @transform_0, window_bounds = array<i64: 2, 256, 64>}, {transform_indices = @transform_1, window_bounds = array<i64: 2, 256, 64>}, {pipeline_mode = #tpu.pipeline_mode<synchronous>, transform_indices = @transform_2, window_bounds = array<i64: 256, 1024>}, {pipeline_mode = #tpu.pipeline_mode<synchronous>, transform_indices = @transform_3, window_bounds = array<i64: 1, 1024>}, {pipeline_mode = #tpu.pipeline_mode<synchronous>, transform_indices = @transform_4, window_bounds = array<i64: 2, 1024>}, {pipeline_mode = #tpu.pipeline_mode<synchronous>, transform_indices = @transform_5, window_bounds = array<i64: 2, 1024>}]} {
    %c0_i32 = arith.constant 0 : i32
    %0 = arith.cmpi eq, %arg0, %c0_i32 : i32
    %1 = arith.extui %0 : i1 to i32
    %c0_i32_0 = arith.constant 0 : i32
    %2 = arith.cmpi ne, %1, %c0_i32_0 : i32
    scf.if %2 {
      %cst_17 = arith.constant 0.000000e+00 : f32
      %16 = vector.broadcast %cst_17 : f32 to vector<2x256xf32>
      %c0_18 = arith.constant 0 : index
      %c0_19 = arith.constant 0 : index
      %17 = vector.load %arg7[%c0_18, %c0_19] : memref<2x256xf32, #tpu.memory_space<vmem>>, vector<2x256xf32>
      tpu.vector_store %arg7[%c0_18, %c0_19], %16 {strides = array<i32>} : memref<2x256xf32, #tpu.memory_space<vmem>>, vector<2x256xf32>,
      %cst_20 = arith.constant 0.000000e+00 : f32
      %18 = vector.broadcast %cst_20 : f32 to vector<2x256xf32>
      %c0_21 = arith.constant 0 : index
      %c0_22 = arith.constant 0 : index
      %19 = vector.load %arg8[%c0_21, %c0_22] : memref<2x256xf32, #tpu.memory_space<vmem>>, vector<2x256xf32>
      tpu.vector_store %arg8[%c0_21, %c0_22], %18 {strides = array<i32>} : memref<2x256xf32, #tpu.memory_space<vmem>>, vector<2x256xf32>,
    } else {
    }
    %c0 = arith.constant 0 : index
    %c0_1 = arith.constant 0 : index
    %c0_2 = arith.constant 0 : index
    %3 = vector.load %arg1[%c0, %c0_1, %c0_2] : memref<2x256x64xf32, #tpu.memory_space<vmem>>, vector<2x256x64xf32>
    %c0_3 = arith.constant 0 : index
    %c0_4 = arith.constant 0 : index
    %4 = vector.load %arg7[%c0_3, %c0_4] : memref<2x256xf32, #tpu.memory_space<vmem>>, vector<2x256xf32>
    %cst = arith.constant dense<0.000000e+00> : vector<2x256xf32>
    %5 = vector.multi_reduction <add>, %3, %cst [2] : vector<2x256x64xf32> to vector<2x256xf32>
    %6 = arith.addf %4, %5 : vector<2x256xf32>
    %c0_5 = arith.constant 0 : index
    %c0_6 = arith.constant 0 : index
    %7 = vector.load %arg7[%c0_5, %c0_6] : memref<2x256xf32, #tpu.memory_space<vmem>>, vector<2x256xf32>
    tpu.vector_store %arg7[%c0_5, %c0_6], %6 {strides = array<i32>} : memref<2x256xf32, #tpu.memory_space<vmem>>, vector<2x256xf32>,
    %c0_7 = arith.constant 0 : index
    %c0_8 = arith.constant 0 : index
    %c0_9 = arith.constant 0 : index
    %8 = vector.load %arg2[%c0_7, %c0_8, %c0_9] : memref<2x256x64xf32, #tpu.memory_space<vmem>>, vector<2x256x64xf32>
    %c0_10 = arith.constant 0 : index
    %c0_11 = arith.constant 0 : index
    %9 = vector.load %arg8[%c0_10, %c0_11] : memref<2x256xf32, #tpu.memory_space<vmem>>, vector<2x256xf32>
    %cst_12 = arith.constant dense<0.000000e+00> : vector<2x256xf32>
    %10 = vector.multi_reduction <add>, %8, %cst_12 [2] : vector<2x256x64xf32> to vector<2x256xf32>
    %11 = arith.addf %9, %10 : vector<2x256xf32>
    %c0_13 = arith.constant 0 : index
    %c0_14 = arith.constant 0 : index
    %12 = vector.load %arg8[%c0_13, %c0_14] : memref<2x256xf32, #tpu.memory_space<vmem>>, vector<2x256xf32>
    tpu.vector_store %arg8[%c0_13, %c0_14], %11 {strides = array<i32>} : memref<2x256xf32, #tpu.memory_space<vmem>>, vector<2x256xf32>,
    %c0_i32_15 = arith.constant 0 : i32
    %13 = arith.cmpi eq, %arg0, %c0_i32_15 : i32
    %14 = arith.extui %13 : i1 to i32
    %c0_i32_16 = arith.constant 0 : i32
    %15 = arith.cmpi ne, %14, %c0_i32_16 : i32
    scf.if %15 {
      %c0_17 = arith.constant 0 : index
      %c0_18 = arith.constant 0 : index
      %16 = vector.load %arg3[%c0_17, %c0_18] : memref<256x1024xbf16, #tpu.memory_space<vmem>>, vector<256x1024xbf16>
      %c0_19 = arith.constant 0 : index
      %c0_20 = arith.constant 0 : index
      %17 = vector.load %arg4[%c0_19, %c0_20] : memref<1x1024xf32, #tpu.memory_space<vmem>>, vector<1x1024xf32>
      %c0_21 = arith.constant 0 : index
      %c0_22 = arith.constant 0 : index
      %18 = vector.load %arg7[%c0_21, %c0_22] : memref<2x256xf32, #tpu.memory_space<vmem>>, vector<2x256xf32>
      %cst_23 = arith.constant 1.562500e-02 : f32
      %19 = vector.broadcast %cst_23 : f32 to vector<2x256xf32>
      %20 = arith.mulf %18, %19 : vector<2x256xf32>
      %21 = arith.truncf %20 : vector<2x256xf32> to vector<2x256xbf16>
      %cst_24 = arith.constant dense<0.000000e+00> : vector<2x1024xf32>
      %22 = tpu.matmul %21, %16, %cst_24 {dimension_numbers = #tpu.dot_dimension_numbers<[1], [0], [0], [1], [0, 0, 1, 1], [], []>} : vector<2x256xbf16>, vector<256x1024xbf16>, vector<2x1024xf32> -> vector<2x1024xf32>
      %23 = vector.broadcast %17 : vector<1x1024xf32> to vector<2x1024xf32>
      %24 = arith.addf %22, %23 : vector<2x1024xf32>
      %cst_25 = arith.constant 0.000000e+00 : f32
      %25 = vector.broadcast %cst_25 : f32 to vector<2x1024xf32>
      %26 = arith.maximumf %24, %25 : vector<2x1024xf32>
      %c0_26 = arith.constant 0 : index
      %c0_27 = arith.constant 0 : index
      %27 = vector.load %arg5[%c0_26, %c0_27] : memref<2x1024xf32, #tpu.memory_space<vmem>>, vector<2x1024xf32>
      tpu.vector_store %arg5[%c0_26, %c0_27], %26 {strides = array<i32>} : memref<2x1024xf32, #tpu.memory_space<vmem>>, vector<2x1024xf32>,
      %c0_28 = arith.constant 0 : index
      %c0_29 = arith.constant 0 : index
      %28 = vector.load %arg8[%c0_28, %c0_29] : memref<2x256xf32, #tpu.memory_space<vmem>>, vector<2x256xf32>
      %cst_30 = arith.constant 1.562500e-02 : f32
      %29 = vector.broadcast %cst_30 : f32 to vector<2x256xf32>
      %30 = arith.mulf %28, %29 : vector<2x256xf32>
      %31 = arith.truncf %30 : vector<2x256xf32> to vector<2x256xbf16>
      %cst_31 = arith.constant dense<0.000000e+00> : vector<2x1024xf32>
      %32 = tpu.matmul %31, %16, %cst_31 {dimension_numbers = #tpu.dot_dimension_numbers<[1], [0], [0], [1], [0, 0, 1, 1], [], []>} : vector<2x256xbf16>, vector<256x1024xbf16>, vector<2x1024xf32> -> vector<2x1024xf32>
      %33 = vector.broadcast %17 : vector<1x1024xf32> to vector<2x1024xf32>
      %34 = arith.addf %32, %33 : vector<2x1024xf32>
      %cst_32 = arith.constant 0.000000e+00 : f32
      %35 = vector.broadcast %cst_32 : f32 to vector<2x1024xf32>
      %36 = arith.maximumf %34, %35 : vector<2x1024xf32>
      %c0_33 = arith.constant 0 : index
      %c0_34 = arith.constant 0 : index
      %37 = vector.load %arg6[%c0_33, %c0_34] : memref<2x1024xf32, #tpu.memory_space<vmem>>, vector<2x1024xf32>
      tpu.vector_store %arg6[%c0_33, %c0_34], %36 {strides = array<i32>} : memref<2x1024xf32, #tpu.memory_space<vmem>>, vector<2x1024xf32>,
    } else {
    }
    return
  }
  func.func @transform_0(%arg0: i32) -> (i32, i32, i32) {
    %c0_i32 = arith.constant 0 : i32
    %c0_i32_0 = arith.constant 0 : i32
    %c0_i32_1 = arith.constant 0 : i32
    return %c0_i32, %c0_i32_0, %arg0 : i32, i32, i32
  }
  func.func @transform_1(%arg0: i32) -> (i32, i32, i32) {
    %c0_i32 = arith.constant 0 : i32
    %c0_i32_0 = arith.constant 0 : i32
    %c0_i32_1 = arith.constant 0 : i32
    return %c0_i32, %c0_i32_0, %arg0 : i32, i32, i32
  }
  func.func @transform_2(%arg0: i32) -> (i32, i32) {
    %c0_i32 = arith.constant 0 : i32
    %c0_i32_0 = arith.constant 0 : i32
    %c0_i32_1 = arith.constant 0 : i32
    return %c0_i32, %c0_i32_0 : i32, i32
  }
  func.func @transform_3(%arg0: i32) -> (i32, i32) {
    %c0_i32 = arith.constant 0 : i32
    %c0_i32_0 = arith.constant 0 : i32
    %c0_i32_1 = arith.constant 0 : i32
    return %c0_i32, %c0_i32_0 : i32, i32
  }
  func.func @transform_4(%arg0: i32) -> (i32, i32) {
    %c0_i32 = arith.constant 0 : i32
    %c0_i32_0 = arith.constant 0 : i32
    %c0_i32_1 = arith.constant 0 : i32
    return %c0_i32, %c0_i32_0 : i32, i32
  }
  func.func @transform_5(%arg0: i32) -> (i32, i32) {
    %c0_i32 = arith.constant 0 : i32
    %c0_i32_0 = arith.constant 0 : i32
    %c0_i32_1 = arith.constant 0 : i32
    return %c0_i32, %c0_i32_0 : i32, i32
  }
}

</mosaic_0001>

<llo_original>
// kernel: pooled_projection_pallas.1
$region0: #{pooled_projection_pallas.1}
  #allocation0 [shape = 'u32[]', space=smem, size = 0x4, offset = 0x4, fixed_abs, tag = 'smem constant byte address 0x4 - core index']
  #allocation1 [shape = 'u32[144,128]{1,0:T(1,128)}', space=vmem, size = 0x12000, scoped, tag = 'internal scratch']
  #allocation2 [shape = 'f32[2,256]{1,0:T(2,128)}', space=vmem, size = 0x800, scoped, tag = 'scratch operand']
  #allocation3 [shape = 'f32[2,256]{1,0:T(2,128)}', space=vmem, size = 0x800, scoped, tag = 'scratch operand']
  %s0 = inlined_call_operand.vmem [shape: f32[2,256,64], index: 0, kind: input, shape index: {}]
  %s1 = inlined_call_operand.vmem [shape: f32[2,256,64], index: 1, kind: input, shape index: {}]
  %s2 = inlined_call_operand.vmem [shape: bf16[256,1024], index: 2, kind: input, shape index: {}]
  %s3 = inlined_call_operand.vmem [shape: f32[1,1024], index: 3, kind: input, shape index: {}]
  %s4 = inlined_call_operand.hbm [shape: f32[2,1024], index: 4, kind: output, shape index: {0}]
  %s5 = inlined_call_operand.hbm [shape: f32[2,1024], index: 5, kind: output, shape index: {1}]
  %6 = xla_tuple %s4, %s5
  %s7 = sld [smem:[#allocation0]]
  $region42: #{pooled_projection_pallas.1} parent=0
    _
  %s9 = ssub.s32 1, %s7
  %s10 = scalar_select 0, %s9, %s7
  $region1: #{pooled_projection_pallas.1} parent=0
    #allocation4 [shape = 'u8[8192]{0}', space=vmem, size = 0x2000, scoped, tag = 'output window, operand 0, single buffered']
    #allocation5 [shape = 's32[1]{0}', space=sflag, size = 0x4, scoped, tag = 'scoped memory for pooled_projection_pallas.1']
    #allocation6 [shape = 'u8[8192]{0}', space=vmem, size = 0x2000, scoped, tag = 'output window, operand 1, single buffered']
    #allocation7 [shape = 's32[1]{0}', space=sflag, size = 0x4, scoped, tag = 'scoped memory for pooled_projection_pallas.1']
    %11 = vsyncpa [#allocation5], 0
    %12 = vsyncpa [#allocation7], 0
    // Predicated region
    $region2: #{pooled_projection_pallas.1} parent=1 // pred_check
      _
    $region3: #{pooled_projection_pallas.1} parent=1 // pred_check_branch
      %14 = sbr.rel (0) target = $region5
    $region4: #{pooled_projection_pallas.1} parent=1 // pred_region
      _
    $region5: #{pooled_projection_pallas.1} parent=1 // pred_fallthru
      _
    // Predicated region
    $region6: #{pooled_projection_pallas.1} parent=1 // pred_check
      _
    $region7: #{pooled_projection_pallas.1} parent=1 // pred_check_branch
      %16 = sbr.rel (0) target = $region9
    $region8: #{pooled_projection_pallas.1} parent=1 // pred_region
      _
    $region9: #{pooled_projection_pallas.1} parent=1 // pred_fallthru
      _
    // Predicated region
    $region10: #{pooled_projection_pallas.1} parent=1 // pred_check
      _
    $region11: #{pooled_projection_pallas.1} parent=1 // pred_check_branch
      %18 = sbr.rel (0) target = $region13
    $region12: #{pooled_projection_pallas.1} parent=1 // pred_region
      _
    $region13: #{pooled_projection_pallas.1} parent=1 // pred_fallthru
      _
    // Predicated region
    $region14: #{pooled_projection_pallas.1} parent=1 // pred_check
      _
    $region15: #{pooled_projection_pallas.1} parent=1 // pred_check_branch
      %20 = sbr.rel (0) target = $region17
    $region16: #{pooled_projection_pallas.1} parent=1 // pred_region
      _
    $region17: #{pooled_projection_pallas.1} parent=1 // pred_fallthru
      _
    %p21 = scmp.eq.s32.totalorder 0, 0
    // Predicated region
    $region18: #{pooled_projection_pallas.1} parent=1 // pred_check
      %p22 = pneg %p21
    $region19: #{pooled_projection_pallas.1} parent=1 // pred_check_branch
      %24 = sbr.rel (%p22) target = $region21
    $region20: #{pooled_projection_pallas.1} parent=1 // pred_region
      %25 = vst [vmem:[#allocation2] sm:$0xf] 0.0
      %26 = vst [vmem:[#allocation3] sm:$0xf] 0.0
    $region21: #{pooled_projection_pallas.1} parent=1 // pred_fallthru
      _
    %v27 = vld [vmem:[%s0] sm:$0xff]
    %v28 = vld [vmem:[%s0 + $0x8] sm:$0xff]
    %v29 = vld [vmem:[%s0 + $0x10] sm:$0xff]
    %v30 = vld [vmem:[%s0 + $0x18] sm:$0xff]
    %v31 = vld [vmem:[%s0 + $0x20] sm:$0xff]
    %v32 = vld [vmem:[%s0 + $0x28] sm:$0xff]
    %v33 = vld [vmem:[%s0 + $0x30] sm:$0xff]
    %v34 = vld [vmem:[%s0 + $0x38] sm:$0xff]
    %v35 = vld [vmem:[%s0 + $0x40] sm:$0xff]
    %v36 = vld [vmem:[%s0 + $0x48] sm:$0xff]
    %v37 = vld [vmem:[%s0 + $0x50] sm:$0xff]
    %v38 = vld [vmem:[%s0 + $0x58] sm:$0xff]
    %v39 = vld [vmem:[%s0 + $0x60] sm:$0xff]
    %v40 = vld [vmem:[%s0 + $0x68] sm:$0xff]
    %v41 = vld [vmem:[%s0 + $0x70] sm:$0xff]
    %v42 = vld [vmem:[%s0 + $0x78] sm:$0xff]
    %v43 = vld [vmem:[%s0 + $0x80] sm:$0xff]
    %v44 = vld [vmem:[%s0 + $0x88] sm:$0xff]
    %v45 = vld [vmem:[%s0 + $0x90] sm:$0xff]
    %v46 = vld [vmem:[%s0 + $0x98] sm:$0xff]
    %v47 = vld [vmem:[%s0 + $0xa0] sm:$0xff]
    %v48 = vld [vmem:[%s0 + $0xa8] sm:$0xff]
    %v49 = vld [vmem:[%s0 + $0xb0] sm:$0xff]
    %v50 = vld [vmem:[%s0 + $0xb8] sm:$0xff]
    %v51 = vld [vmem:[%s0 + $0xc0] sm:$0xff]
    %v52 = vld [vmem:[%s0 + $0xc8] sm:$0xff]
    %v53 = vld [vmem:[%s0 + $0xd0] sm:$0xff]
    %v54 = vld [vmem:[%s0 + $0xd8] sm:$0xff]
    %v55 = vld [vmem:[%s0 + $0xe0] sm:$0xff]
    %v56 = vld [vmem:[%s0 + $0xe8] sm:$0xff]
    %v57 = vld [vmem:[%s0 + $0xf0] sm:$0xff]
    %v58 = vld [vmem:[%s0 + $0xf8] sm:$0xff]
    %v59 = vld [vmem:[%s0 + $0x100] sm:$0xff]
    %v60 = vld [vmem:[%s0 + $0x108] sm:$0xff]
    %v61 = vld [vmem:[%s0 + $0x110] sm:$0xff]
    %v62 = vld [vmem:[%s0 + $0x118] sm:$0xff]
    %v63 = vld [vmem:[%s0 + $0x120] sm:$0xff]
    %v64 = vld [vmem:[%s0 + $0x128] sm:$0xff]
    %v65 = vld [vmem:[%s0 + $0x130] sm:$0xff]
    %v66 = vld [vmem:[%s0 + $0x138] sm:$0xff]
    %v67 = vld [vmem:[%s0 + $0x140] sm:$0xff]
    %v68 = vld [vmem:[%s0 + $0x148] sm:$0xff]
    %v69 = vld [vmem:[%s0 + $0x150] sm:$0xff]
    %v70 = vld [vmem:[%s0 + $0x158] sm:$0xff]
    %v71 = vld [vmem:[%s0 + $0x160] sm:$0xff]
    %v72 = vld [vmem:[%s0 + $0x168] sm:$0xff]
    %v73 = vld [vmem:[%s0 + $0x170] sm:$0xff]
    %v74 = vld [vmem:[%s0 + $0x178] sm:$0xff]
    %v75 = vld [vmem:[%s0 + $0x180] sm:$0xff]
    %v76 = vld [vmem:[%s0 + $0x188] sm:$0xff]
    %v77 = vld [vmem:[%s0 + $0x190] sm:$0xff]
    %v78 = vld [vmem:[%s0 + $0x198] sm:$0xff]
    %v79 = vld [vmem:[%s0 + $0x1a0] sm:$0xff]
    %v80 = vld [vmem:[%s0 + $0x1a8] sm:$0xff]
    %v81 = vld [vmem:[%s0 + $0x1b0] sm:$0xff]
    %v82 = vld [vmem:[%s0 + $0x1b8] sm:$0xff]
    %v83 = vld [vmem:[%s0 + $0x1c0] sm:$0xff]
    %v84 = vld [vmem:[%s0 + $0x1c8] sm:$0xff]
    %v85 = vld [vmem:[%s0 + $0x1d0] sm:$0xff]
    %v86 = vld [vmem:[%s0 + $0x1d8] sm:$0xff]
    %v87 = vld [vmem:[%s0 + $0x1e0] sm:$0xff]
    %v88 = vld [vmem:[%s0 + $0x1e8] sm:$0xff]
    %v89 = vld [vmem:[%s0 + $0x1f0] sm:$0xff]
    %v90 = vld [vmem:[%s0 + $0x1f8] sm:$0xff]
    %v91 = vld [vmem:[#allocation2] sm:$0xf]
    %vm92 = vcmask 523264
    %v93 = vsel %vm92, %v27, 0.0
    %94 = vadd.xlane.f32.xlu0 %v93
    %v95 = vpop.xlane.xlu0 %94
    %v96 = vsel %vm92, %v28, 0.0
    %97 = vadd.xlane.f32.xlu0 %v96
    %v98 = vpop.xlane.xlu0 %97
    %v99 = vsel %vm92, %v29, 0.0
    %100 = vadd.xlane.f32.xlu0 %v99
    %v101 = vpop.xlane.xlu0 %100
    %v102 = vsel %vm92, %v30, 0.0
    %103 = vadd.xlane.f32.xlu0 %v102
    %v104 = vpop.xlane.xlu0 %103
    %v105 = vsel %vm92, %v31, 0.0
    %106 = vadd.xlane.f32.xlu0 %v105
    %v107 = vpop.xlane.xlu0 %106
    %v108 = vsel %vm92, %v32, 0.0
    %109 = vadd.xlane.f32.xlu0 %v108
    %v110 = vpop.xlane.xlu0 %109
    %v111 = vsel %vm92, %v33, 0.0
    %112 = vadd.xlane.f32.xlu0 %v111
    %v113 = vpop.xlane.xlu0 %112
    %v114 = vsel %vm92, %v34, 0.0
    %115 = vadd.xlane.f32.xlu0 %v114
    %v116 = vpop.xlane.xlu0 %115
    %v117 = vsel %vm92, %v35, 0.0
    %118 = vadd.xlane.f32.xlu0 %v117
    %v119 = vpop.xlane.xlu0 %118
    %v120 = vsel %vm92, %v36, 0.0
    %121 = vadd.xlane.f32.xlu0 %v120
    %v122 = vpop.xlane.xlu0 %121
    %v123 = vsel %vm92, %v37, 0.0
    %124 = vadd.xlane.f32.xlu0 %v123
    %v125 = vpop.xlane.xlu0 %124
    %v126 = vsel %vm92, %v38, 0.0
    %127 = vadd.xlane.f32.xlu0 %v126
    %v128 = vpop.xlane.xlu0 %127
    %v129 = vsel %vm92, %v39, 0.0
    %130 = vadd.xlane.f32.xlu0 %v129
    %v131 = vpop.xlane.xlu0 %130
    %v132 = vsel %vm92, %v40, 0.0
    %133 = vadd.xlane.f32.xlu0 %v132
    %v134 = vpop.xlane.xlu0 %133
    %v135 = vsel %vm92, %v41, 0.0
    %136 = vadd.xlane.f32.xlu0 %v135
    %v137 = vpop.xlane.xlu0 %136
    %v138 = vsel %vm92, %v42, 0.0
    %139 = vadd.xlane.f32.xlu0 %v138
    %v140 = vpop.xlane.xlu0 %139
    %v141 = vsel %vm92, %v43, 0.0
    %142 = vadd.xlane.f32.xlu0 %v141
    %v143 = vpop.xlane.xlu0 %142
    %v144 = vsel %vm92, %v44, 0.0
    %145 = vadd.xlane.f32.xlu0 %v144
    %v146 = vpop.xlane.xlu0 %145
    %v147 = vsel %vm92, %v45, 0.0
    %148 = vadd.xlane.f32.xlu0 %v147
    %v149 = vpop.xlane.xlu0 %148
    %v150 = vsel %vm92, %v46, 0.0
    %151 = vadd.xlane.f32.xlu0 %v150
    %v152 = vpop.xlane.xlu0 %151
    %v153 = vsel %vm92, %v47, 0.0
    %154 = vadd.xlane.f32.xlu0 %v153
    %v155 = vpop.xlane.xlu0 %154
    %v156 = vsel %vm92, %v48, 0.0
    %157 = vadd.xlane.f32.xlu0 %v156
    %v158 = vpop.xlane.xlu0 %157
    %v159 = vsel %vm92, %v49, 0.0
    %160 = vadd.xlane.f32.xlu0 %v159
    %v161 = vpop.xlane.xlu0 %160
    %v162 = vsel %vm92, %v50, 0.0
    %163 = vadd.xlane.f32.xlu0 %v162
    %v164 = vpop.xlane.xlu0 %163
    %v165 = vsel %vm92, %v51, 0.0
    %166 = vadd.xlane.f32.xlu0 %v165
    %v167 = vpop.xlane.xlu0 %166
    %v168 = vsel %vm92, %v52, 0.0
    %169 = vadd.xlane.f32.xlu0 %v168
    %v170 = vpop.xlane.xlu0 %169
    %v171 = vsel %vm92, %v53, 0.0
    %172 = vadd.xlane.f32.xlu0 %v171
    %v173 = vpop.xlane.xlu0 %172
    %v174 = vsel %vm92, %v54, 0.0
    %175 = vadd.xlane.f32.xlu0 %v174
    %v176 = vpop.xlane.xlu0 %175
    %v177 = vsel %vm92, %v55, 0.0
    %178 = vadd.xlane.f32.xlu0 %v177
    %v179 = vpop.xlane.xlu0 %178
    %v180 = vsel %vm92, %v56, 0.0
    %181 = vadd.xlane.f32.xlu0 %v180
    %v182 = vpop.xlane.xlu0 %181
    %v183 = vsel %vm92, %v57, 0.0
    %184 = vadd.xlane.f32.xlu0 %v183
    %v185 = vpop.xlane.xlu0 %184
    %v186 = vsel %vm92, %v58, 0.0
    %187 = vadd.xlane.f32.xlu0 %v186
    %v188 = vpop.xlane.xlu0 %187
    %v189 = vsel %vm92, %v59, 0.0
    %190 = vadd.xlane.f32.xlu0 %v189
    %v191 = vpop.xlane.xlu0 %190
    %v192 = vsel %vm92, %v60, 0.0
    %193 = vadd.xlane.f32.xlu0 %v192
    %v194 = vpop.xlane.xlu0 %193
    %v195 = vsel %vm92, %v61, 0.0
    %196 = vadd.xlane.f32.xlu0 %v195
    %v197 = vpop.xlane.xlu0 %196
    %v198 = vsel %vm92, %v62, 0.0
    %199 = vadd.xlane.f32.xlu0 %v198
    %v200 = vpop.xlane.xlu0 %199
    %v201 = vsel %vm92, %v63, 0.0
    %202 = vadd.xlane.f32.xlu0 %v201
    %v203 = vpop.xlane.xlu0 %202
    %v204 = vsel %vm92, %v64, 0.0
    %205 = vadd.xlane.f32.xlu0 %v204
    %v206 = vpop.xlane.xlu0 %205
    %v207 = vsel %vm92, %v65, 0.0
    %208 = vadd.xlane.f32.xlu0 %v207
    %v209 = vpop.xlane.xlu0 %208
    %v210 = vsel %vm92, %v66, 0.0
    %211 = vadd.xlane.f32.xlu0 %v210
    %v212 = vpop.xlane.xlu0 %211
    %v213 = vsel %vm92, %v67, 0.0
    %214 = vadd.xlane.f32.xlu0 %v213
    %v215 = vpop.xlane.xlu0 %214
    %v216 = vsel %vm92, %v68, 0.0
    %217 = vadd.xlane.f32.xlu0 %v216
    %v218 = vpop.xlane.xlu0 %217
    %v219 = vsel %vm92, %v69, 0.0
    %220 = vadd.xlane.f32.xlu0 %v219
    %v221 = vpop.xlane.xlu0 %220
    %v222 = vsel %vm92, %v70, 0.0
    %223 = vadd.xlane.f32.xlu0 %v222
    %v224 = vpop.xlane.xlu0 %223
    %v225 = vsel %vm92, %v71, 0.0
    %226 = vadd.xlane.f32.xlu0 %v225
    %v227 = vpop.xlane.xlu0 %226
    %v228 = vsel %vm92, %v72, 0.0
    %229 = vadd.xlane.f32.xlu0 %v228
    %v230 = vpop.xlane.xlu0 %229
    %v231 = vsel %vm92, %v73, 0.0
    %232 = vadd.xlane.f32.xlu0 %v231
    %v233 = vpop.xlane.xlu0 %232
    %v234 = vsel %vm92, %v74, 0.0
    %235 = vadd.xlane.f32.xlu0 %v234
    %v236 = vpop.xlane.xlu0 %235
    %v237 = vsel %vm92, %v75, 0.0
    %238 = vadd.xlane.f32.xlu0 %v237
    %v239 = vpop.xlane.xlu0 %238
    %v240 = vsel %vm92, %v76, 0.0
    %241 = vadd.xlane.f32.xlu0 %v240
    %v242 = vpop.xlane.xlu0 %241
    %v243 = vsel %vm92, %v77, 0.0
    %244 = vadd.xlane.f32.xlu0 %v243
    %v245 = vpop.xlane.xlu0 %244
    %v246 = vsel %vm92, %v78, 0.0
    %247 = vadd.xlane.f32.xlu0 %v246
    %v248 = vpop.xlane.xlu0 %247
    %v249 = vsel %vm92, %v79, 0.0
    %250 = vadd.xlane.f32.xlu0 %v249
    %v251 = vpop.xlane.xlu0 %250
    %v252 = vsel %vm92, %v80, 0.0
    %253 = vadd.xlane.f32.xlu0 %v252
    %v254 = vpop.xlane.xlu0 %253
    %v255 = vsel %vm92, %v81, 0.0
    %256 = vadd.xlane.f32.xlu0 %v255
    %v257 = vpop.xlane.xlu0 %256
    %v258 = vsel %vm92, %v82, 0.0
    %259 = vadd.xlane.f32.xlu0 %v258
    %v260 = vpop.xlane.xlu0 %259
    %v261 = vsel %vm92, %v83, 0.0
    %262 = vadd.xlane.f32.xlu0 %v261
    %v263 = vpop.xlane.xlu0 %262
    %v264 = vsel %vm92, %v84, 0.0
    %265 = vadd.xlane.f32.xlu0 %v264
    %v266 = vpop.xlane.xlu0 %265
    %v267 = vsel %vm92, %v85, 0.0
    %268 = vadd.xlane.f32.xlu0 %v267
    %v269 = vpop.xlane.xlu0 %268
    %v270 = vsel %vm92, %v86, 0.0
    %271 = vadd.xlane.f32.xlu0 %v270
    %v272 = vpop.xlane.xlu0 %271
    %v273 = vsel %vm92, %v87, 0.0
    %274 = vadd.xlane.f32.xlu0 %v273
    %v275 = vpop.xlane.xlu0 %274
    %v276 = vsel %vm92, %v88, 0.0
    %277 = vadd.xlane.f32.xlu0 %v276
    %v278 = vpop.xlane.xlu0 %277
    %v279 = vsel %vm92, %v89, 0.0
    %280 = vadd.xlane.f32.xlu0 %v279
    %v281 = vpop.xlane.xlu0 %280
    %v282 = vsel %vm92, %v90, 0.0
    %283 = vadd.xlane.f32.xlu0 %v282
    %v284 = vpop.xlane.xlu0 %283
    %v350 = vunpack.c.l.s4 269488144
    %v351 = vunpack.c.0.s8 %v350
    %v352 = vlaneseq
    %v353 = vshrl.u32 %v352, 7
    %v354 = vsub.s32 %v351, %v353
    %v355 = vrot.slane %v95, %v354
    %v357 = vunpack.c.l.s4 842150450
    %v358 = vunpack.c.0.s8 %v357
    %v359 = vlaneseq
    %v360 = vshrl.u32 %v359, 7
    %v361 = vsub.s32 %v358, %v360
    %v362 = vrot.slane %v95, %v361
    %v364 = vunpack.c.l.s4 1414812756
    %v365 = vunpack.c.0.s8 %v364
    %v366 = vlaneseq
    %v367 = vshrl.u32 %v366, 7
    %v368 = vsub.s32 %v365, %v367
    %v369 = vrot.slane %v95, %v368
    %v371 = vunpack.c.l.s4 1987475062
    %v372 = vunpack.c.0.s8 %v371
    %v373 = vlaneseq
    %v374 = vshrl.u32 %v373, 7
    %v375 = vsub.s32 %v372, %v374
    %v376 = vrot.slane %v95, %v375
    %v378 = vunpack.c.l.s4 269488144
    %v379 = vunpack.c.0.s8 %v378
    %v380 = vlaneseq
    %v381 = vshrl.u32 %v380, 7
    %v382 = vsub.s32 %v379, %v381
    %v383 = vrot.slane %v98, %v382
    %v385 = vunpack.c.l.s4 842150450
    %v386 = vunpack.c.0.s8 %v385
    %v387 = vlaneseq
    %v388 = vshrl.u32 %v387, 7
    %v389 = vsub.s32 %v386, %v388
    %v390 = vrot.slane %v98, %v389
    %v392 = vunpack.c.l.s4 1414812756
    %v393 = vunpack.c.0.s8 %v392
    %v394 = vlaneseq
    %v395 = vshrl.u32 %v394, 7
    %v396 = vsub.s32 %v393, %v395
    %v397 = vrot.slane %v98, %v396
    %v399 = vunpack.c.l.s4 1987475062
    %v400 = vunpack.c.0.s8 %v399
    %v401 = vlaneseq
    %v402 = vshrl.u32 %v401, 7
    %v403 = vsub.s32 %v400, %v402
    %v404 = vrot.slane %v98, %v403
    %v406 = vunpack.c.l.s4 269488144
    %v407 = vunpack.c.0.s8 %v406
    %v408 = vlaneseq
    %v409 = vshrl.u32 %v408, 7
    %v410 = vsub.s32 %v407, %v409
    %v411 = vrot.slane %v101, %v410
    %v413 = vunpack.c.l.s4 842150450
    %v414 = vunpack.c.0.s8 %v413
    %v415 = vlaneseq
    %v416 = vshrl.u32 %v415, 7
    %v417 = vsub.s32 %v414, %v416
    %v418 = vrot.slane %v101, %v417
    %v420 = vunpack.c.l.s4 1414812756
    %v421 = vunpack.c.0.s8 %v420
    %v422 = vlaneseq
    %v423 = vshrl.u32 %v422, 7
    %v424 = vsub.s32 %v421, %v423
    %v425 = vrot.slane %v101, %v424
    %v427 = vunpack.c.l.s4 1987475062
    %v428 = vunpack.c.0.s8 %v427
    %v429 = vlaneseq
    %v430 = vshrl.u32 %v429, 7
    %v431 = vsub.s32 %v428, %v430
    %v432 = vrot.slane %v101, %v431
    %v434 = vunpack.c.l.s4 269488144
    %v435 = vunpack.c.0.s8 %v434
    %v436 = vlaneseq
    %v437 = vshrl.u32 %v436, 7
    %v438 = vsub.s32 %v435, %v437
    %v439 = vrot.slane %v104, %v438
    %v441 = vunpack.c.l.s4 842150450
    %v442 = vunpack.c.0.s8 %v441
    %v443 = vlaneseq
    %v444 = vshrl.u32 %v443, 7
    %v445 = vsub.s32 %v442, %v444
    %v446 = vrot.slane %v104, %v445
    %v448 = vunpack.c.l.s4 1414812756
    %v449 = vunpack.c.0.s8 %v448
    %v450 = vlaneseq
    %v451 = vshrl.u32 %v450, 7
    %v452 = vsub.s32 %v449, %v451
    %v453 = vrot.slane %v104, %v452
    %v455 = vunpack.c.l.s4 1987475062
    %v456 = vunpack.c.0.s8 %v455
    %v457 = vlaneseq
    %v458 = vshrl.u32 %v457, 7
    %v459 = vsub.s32 %v456, %v458
    %v460 = vrot.slane %v104, %v459
    %v462 = vunpack.c.l.s4 269488144
    %v463 = vunpack.c.0.s8 %v462
    %v464 = vlaneseq
    %v465 = vshrl.u32 %v464, 7
    %v466 = vsub.s32 %v463, %v465
    %v467 = vrot.slane %v107, %v466
    %v469 = vunpack.c.l.s4 842150450
    %v470 = vunpack.c.0.s8 %v469
    %v471 = vlaneseq
    %v472 = vshrl.u32 %v471, 7
    %v473 = vsub.s32 %v470, %v472
    %v474 = vrot.slane %v107, %v473
    %v476 = vunpack.c.l.s4 1414812756
    %v477 = vunpack.c.0.s8 %v476
    %v478 = vlaneseq
    %v479 = vshrl.u32 %v478, 7
    %v480 = vsub.s32 %v477, %v479
    %v481 = vrot.slane %v107, %v480
    %v483 = vunpack.c.l.s4 1987475062
    %v484 = vunpack.c.0.s8 %v483
    %v485 = vlaneseq
    %v486 = vshrl.u32 %v485, 7
    %v487 = vsub.s32 %v484, %v486
    %v488 = vrot.slane %v107, %v487
    %v490 = vunpack.c.l.s4 269488144
    %v491 = vunpack.c.0.s8 %v490
    %v492 = vlaneseq
    %v493 = vshrl.u32 %v492, 7
    %v494 = vsub.s32 %v491, %v493
    %v495 = vrot.slane %v110, %v494
    %v497 = vunpack.c.l.s4 842150450
    %v498 = vunpack.c.0.s8 %v497
    %v499 = vlaneseq
    %v500 = vshrl.u32 %v499, 7
    %v501 = vsub.s32 %v498, %v500
    %v502 = vrot.slane %v110, %v501
    %v504 = vunpack.c.l.s4 1414812756
    %v505 = vunpack.c.0.s8 %v504
    %v506 = vlaneseq
    %v507 = vshrl.u32 %v506, 7
    %v508 = vsub.s32 %v505, %v507
    %v509 = vrot.slane %v110, %v508
    %v511 = vunpack.c.l.s4 1987475062
    %v512 = vunpack.c.0.s8 %v511
    %v513 = vlaneseq
    %v514 = vshrl.u32 %v513, 7
    %v515 = vsub.s32 %v512, %v514
    %v516 = vrot.slane %v110, %v515
    %v518 = vunpack.c.l.s4 269488144
    %v519 = vunpack.c.0.s8 %v518
    %v520 = vlaneseq
    %v521 = vshrl.u32 %v520, 7
    %v522 = vsub.s32 %v519, %v521
    %v523 = vrot.slane %v113, %v522
    %v525 = vunpack.c.l.s4 842150450
    %v526 = vunpack.c.0.s8 %v525
    %v527 = vlaneseq
    %v528 = vshrl.u32 %v527, 7
    %v529 = vsub.s32 %v526, %v528
    %v530 = vrot.slane %v113, %v529
    %v532 = vunpack.c.l.s4 1414812756
    %v533 = vunpack.c.0.s8 %v532
    %v534 = vlaneseq
    %v535 = vshrl.u32 %v534, 7
    %v536 = vsub.s32 %v533, %v535
    %v537 = vrot.slane %v113, %v536
    %v539 = vunpack.c.l.s4 1987475062
    %v540 = vunpack.c.0.s8 %v539
    %v541 = vlaneseq
    %v542 = vshrl.u32 %v541, 7
    %v543 = vsub.s32 %v540, %v542
    %v544 = vrot.slane %v113, %v543
    %v546 = vunpack.c.l.s4 269488144
    %v547 = vunpack.c.0.s8 %v546
    %v548 = vlaneseq
    %v549 = vshrl.u32 %v548, 7
    %v550 = vsub.s32 %v547, %v549
    %v551 = vrot.slane %v116, %v550
    %v553 = vunpack.c.l.s4 842150450
    %v554 = vunpack.c.0.s8 %v553
    %v555 = vlaneseq
    %v556 = vshrl.u32 %v555, 7
    %v557 = vsub.s32 %v554, %v556
    %v558 = vrot.slane %v116, %v557
    %v560 = vunpack.c.l.s4 1414812756
    %v561 = vunpack.c.0.s8 %v560
    %v562 = vlaneseq
    %v563 = vshrl.u32 %v562, 7
    %v564 = vsub.s32 %v561, %v563
    %v565 = vrot.slane %v116, %v564
    %v567 = vunpack.c.l.s4 1987475062
    %v568 = vunpack.c.0.s8 %v567
    %v569 = vlaneseq
    %v570 = vshrl.u32 %v569, 7
    %v571 = vsub.s32 %v568, %v570
    %v572 = vrot.slane %v116, %v571
    %v574 = vunpack.c.l.s4 269488144
    %v575 = vunpack.c.0.s8 %v574
    %v576 = vlaneseq
    %v577 = vshrl.u32 %v576, 7
    %v578 = vsub.s32 %v575, %v577
    %v579 = vrot.slane %v119, %v578
    %v581 = vunpack.c.l.s4 842150450
    %v582 = vunpack.c.0.s8 %v581
    %v583 = vlaneseq
    %v584 = vshrl.u32 %v583, 7
    %v585 = vsub.s32 %v582, %v584
    %v586 = vrot.slane %v119, %v585
    %v588 = vunpack.c.l.s4 1414812756
    %v589 = vunpack.c.0.s8 %v588
    %v590 = vlaneseq
    %v591 = vshrl.u32 %v590, 7
    %v592 = vsub.s32 %v589, %v591
    %v593 = vrot.slane %v119, %v592
    %v595 = vunpack.c.l.s4 1987475062
    %v596 = vunpack.c.0.s8 %v595
    %v597 = vlaneseq
    %v598 = vshrl.u32 %v597, 7
    %v599 = vsub.s32 %v596, %v598
    %v600 = vrot.slane %v119, %v599
    %v602 = vunpack.c.l.s4 269488144
    %v603 = vunpack.c.0.s8 %v602
    %v604 = vlaneseq
    %v605 = vshrl.u32 %v604, 7
    %v606 = vsub.s32 %v603, %v605
    %v607 = vrot.slane %v122, %v606
    %v609 = vunpack.c.l.s4 842150450
    %v610 = vunpack.c.0.s8 %v609
    %v611 = vlaneseq
    %v612 = vshrl.u32 %v611, 7
    %v613 = vsub.s32 %v610, %v612
    %v614 = vrot.slane %v122, %v613
    %v616 = vunpack.c.l.s4 1414812756
    %v617 = vunpack.c.0.s8 %v616
    %v618 = vlaneseq
    %v619 = vshrl.u32 %v618, 7
    %v620 = vsub.s32 %v617, %v619
    %v621 = vrot.slane %v122, %v620
    %v623 = vunpack.c.l.s4 1987475062
    %v624 = vunpack.c.0.s8 %v623
    %v625 = vlaneseq
    %v626 = vshrl.u32 %v625, 7
    %v627 = vsub.s32 %v624, %v626
    %v628 = vrot.slane %v122, %v627
    %v630 = vunpack.c.l.s4 269488144
    %v631 = vunpack.c.0.s8 %v630
    %v632 = vlaneseq
    %v633 = vshrl.u32 %v632, 7
    %v634 = vsub.s32 %v631, %v633
    %v635 = vrot.slane %v125, %v634
    %v637 = vunpack.c.l.s4 842150450
    %v638 = vunpack.c.0.s8 %v637
    %v639 = vlaneseq
    %v640 = vshrl.u32 %v639, 7
    %v641 = vsub.s32 %v638, %v640
    %v642 = vrot.slane %v125, %v641
    %v644 = vunpack.c.l.s4 1414812756
    %v645 = vunpack.c.0.s8 %v644
    %v646 = vlaneseq
    %v647 = vshrl.u32 %v646, 7
    %v648 = vsub.s32 %v645, %v647
    %v649 = vrot.slane %v125, %v648
    %v651 = vunpack.c.l.s4 1987475062
    %v652 = vunpack.c.0.s8 %v651
    %v653 = vlaneseq
    %v654 = vshrl.u32 %v653, 7
    %v655 = vsub.s32 %v652, %v654
    %v656 = vrot.slane %v125, %v655
    %v658 = vunpack.c.l.s4 269488144
    %v659 = vunpack.c.0.s8 %v658
    %v660 = vlaneseq
    %v661 = vshrl.u32 %v660, 7
    %v662 = vsub.s32 %v659, %v661
    %v663 = vrot.slane %v128, %v662
    %v665 = vunpack.c.l.s4 842150450
    %v666 = vunpack.c.0.s8 %v665
    %v667 = vlaneseq
    %v668 = vshrl.u32 %v667, 7
    %v669 = vsub.s32 %v666, %v668
    %v670 = vrot.slane %v128, %v669
    %v672 = vunpack.c.l.s4 1414812756
    %v673 = vunpack.c.0.s8 %v672
    %v674 = vlaneseq
    %v675 = vshrl.u32 %v674, 7
    %v676 = vsub.s32 %v673, %v675
    %v677 = vrot.slane %v128, %v676
    %v679 = vunpack.c.l.s4 1987475062
    %v680 = vunpack.c.0.s8 %v679
    %v681 = vlaneseq
    %v682 = vshrl.u32 %v681, 7
    %v683 = vsub.s32 %v680, %v682
    %v684 = vrot.slane %v128, %v683
    %v686 = vunpack.c.l.s4 269488144
    %v687 = vunpack.c.0.s8 %v686
    %v688 = vlaneseq
    %v689 = vshrl.u32 %v688, 7
    %v690 = vsub.s32 %v687, %v689
    %v691 = vrot.slane %v131, %v690
    %v693 = vunpack.c.l.s4 842150450
    %v694 = vunpack.c.0.s8 %v693
    %v695 = vlaneseq
    %v696 = vshrl.u32 %v695, 7
    %v697 = vsub.s32 %v694, %v696
    %v698 = vrot.slane %v131, %v697
    %v700 = vunpack.c.l.s4 1414812756
    %v701 = vunpack.c.0.s8 %v700
    %v702 = vlaneseq
    %v703 = vshrl.u32 %v702, 7
    %v704 = vsub.s32 %v701, %v703
    %v705 = vrot.slane %v131, %v704
    %v707 = vunpack.c.l.s4 1987475062
    %v708 = vunpack.c.0.s8 %v707
    %v709 = vlaneseq
    %v710 = vshrl.u32 %v709, 7
    %v711 = vsub.s32 %v708, %v710
    %v712 = vrot.slane %v131, %v711
    %v714 = vunpack.c.l.s4 269488144
    %v715 = vunpack.c.0.s8 %v714
    %v716 = vlaneseq
    %v717 = vshrl.u32 %v716, 7
    %v718 = vsub.s32 %v715, %v717
    %v719 = vrot.slane %v134, %v718
    %v721 = vunpack.c.l.s4 842150450
    %v722 = vunpack.c.0.s8 %v721
    %v723 = vlaneseq
    %v724 = vshrl.u32 %v723, 7
    %v725 = vsub.s32 %v722, %v724
    %v726 = vrot.slane %v134, %v725
    %v728 = vunpack.c.l.s4 1414812756
    %v729 = vunpack.c.0.s8 %v728
    %v730 = vlaneseq
    %v731 = vshrl.u32 %v730, 7
    %v732 = vsub.s32 %v729, %v731
    %v733 = vrot.slane %v134, %v732
    %v735 = vunpack.c.l.s4 1987475062
    %v736 = vunpack.c.0.s8 %v735
    %v737 = vlaneseq
    %v738 = vshrl.u32 %v737, 7
    %v739 = vsub.s32 %v736, %v738
    %v740 = vrot.slane %v134, %v739
    %v742 = vunpack.c.l.s4 269488144
    %v743 = vunpack.c.0.s8 %v742
    %v744 = vlaneseq
    %v745 = vshrl.u32 %v744, 7
    %v746 = vsub.s32 %v743, %v745
    %v747 = vrot.slane %v137, %v746
    %v749 = vunpack.c.l.s4 842150450
    %v750 = vunpack.c.0.s8 %v749
    %v751 = vlaneseq
    %v752 = vshrl.u32 %v751, 7
    %v753 = vsub.s32 %v750, %v752
    %v754 = vrot.slane %v137, %v753
    %v756 = vunpack.c.l.s4 1414812756
    %v757 = vunpack.c.0.s8 %v756
    %v758 = vlaneseq
    %v759 = vshrl.u32 %v758, 7
    %v760 = vsub.s32 %v757, %v759
    %v761 = vrot.slane %v137, %v760
    %v763 = vunpack.c.l.s4 1987475062
    %v764 = vunpack.c.0.s8 %v763
    %v765 = vlaneseq
    %v766 = vshrl.u32 %v765, 7
    %v767 = vsub.s32 %v764, %v766
    %v768 = vrot.slane %v137, %v767
    %v770 = vunpack.c.l.s4 269488144
    %v771 = vunpack.c.0.s8 %v770
    %v772 = vlaneseq
    %v773 = vshrl.u32 %v772, 7
    %v774 = vsub.s32 %v771, %v773
    %v775 = vrot.slane %v140, %v774
    %v777 = vunpack.c.l.s4 842150450
    %v778 = vunpack.c.0.s8 %v777
    %v779 = vlaneseq
    %v780 = vshrl.u32 %v779, 7
    %v781 = vsub.s32 %v778, %v780
    %v782 = vrot.slane %v140, %v781
    %v784 = vunpack.c.l.s4 1414812756
    %v785 = vunpack.c.0.s8 %v784
    %v786 = vlaneseq
    %v787 = vshrl.u32 %v786, 7
    %v788 = vsub.s32 %v785, %v787
    %v789 = vrot.slane %v140, %v788
    %v791 = vunpack.c.l.s4 1987475062
    %v792 = vunpack.c.0.s8 %v791
    %v793 = vlaneseq
    %v794 = vshrl.u32 %v793, 7
    %v795 = vsub.s32 %v792, %v794
    %v796 = vrot.slane %v140, %v795
    %v798 = vunpack.c.l.s4 269488144
    %v799 = vunpack.c.0.s8 %v798
    %v800 = vlaneseq
    %v801 = vshrl.u32 %v800, 7
    %v802 = vsub.s32 %v799, %v801
    %v803 = vrot.slane %v143, %v802
    %v805 = vunpack.c.l.s4 842150450
    %v806 = vunpack.c.0.s8 %v805
    %v807 = vlaneseq
    %v808 = vshrl.u32 %v807, 7
    %v809 = vsub.s32 %v806, %v808
    %v810 = vrot.slane %v143, %v809
    %v812 = vunpack.c.l.s4 1414812756
    %v813 = vunpack.c.0.s8 %v812
    %v814 = vlaneseq
    %v815 = vshrl.u32 %v814, 7
    %v816 = vsub.s32 %v813, %v815
    %v817 = vrot.slane %v143, %v816
    %v819 = vunpack.c.l.s4 1987475062
    %v820 = vunpack.c.0.s8 %v819
    %v821 = vlaneseq
    %v822 = vshrl.u32 %v821, 7
    %v823 = vsub.s32 %v820, %v822
    %v824 = vrot.slane %v143, %v823
    %v826 = vunpack.c.l.s4 269488144
    %v827 = vunpack.c.0.s8 %v826
    %v828 = vlaneseq
    %v829 = vshrl.u32 %v828, 7
    %v830 = vsub.s32 %v827, %v829
    %v831 = vrot.slane %v146, %v830
    %v833 = vunpack.c.l.s4 842150450
    %v834 = vunpack.c.0.s8 %v833
    %v835 = vlaneseq
    %v836 = vshrl.u32 %v835, 7
    %v837 = vsub.s32 %v834, %v836
    %v838 = vrot.slane %v146, %v837
    %v840 = vunpack.c.l.s4 1414812756
    %v841 = vunpack.c.0.s8 %v840
    %v842 = vlaneseq
    %v843 = vshrl.u32 %v842, 7
    %v844 = vsub.s32 %v841, %v843
    %v845 = vrot.slane %v146, %v844
    %v847 = vunpack.c.l.s4 1987475062
    %v848 = vunpack.c.0.s8 %v847
    %v849 = vlaneseq
    %v850 = vshrl.u32 %v849, 7
    %v851 = vsub.s32 %v848, %v850
    %v852 = vrot.slane %v146, %v851
    %v854 = vunpack.c.l.s4 269488144
    %v855 = vunpack.c.0.s8 %v854
    %v856 = vlaneseq
    %v857 = vshrl.u32 %v856, 7
    %v858 = vsub.s32 %v855, %v857
    %v859 = vrot.slane %v149, %v858
    %v861 = vunpack.c.l.s4 842150450
    %v862 = vunpack.c.0.s8 %v861
    %v863 = vlaneseq
    %v864 = vshrl.u32 %v863, 7
    %v865 = vsub.s32 %v862, %v864
    %v866 = vrot.slane %v149, %v865
    %v868 = vunpack.c.l.s4 1414812756
    %v869 = vunpack.c.0.s8 %v868
    %v870 = vlaneseq
    %v871 = vshrl.u32 %v870, 7
    %v872 = vsub.s32 %v869, %v871
    %v873 = vrot.slane %v149, %v872
    %v875 = vunpack.c.l.s4 1987475062
    %v876 = vunpack.c.0.s8 %v875
    %v877 = vlaneseq
    %v878 = vshrl.u32 %v877, 7
    %v879 = vsub.s32 %v876, %v878
    %v880 = vrot.slane %v149, %v879
    %v882 = vunpack.c.l.s4 269488144
    %v883 = vunpack.c.0.s8 %v882
    %v884 = vlaneseq
    %v885 = vshrl.u32 %v884, 7
    %v886 = vsub.s32 %v883, %v885
    %v887 = vrot.slane %v152, %v886
    %v889 = vunpack.c.l.s4 842150450
    %v890 = vunpack.c.0.s8 %v889
    %v891 = vlaneseq
    %v892 = vshrl.u32 %v891, 7
    %v893 = vsub.s32 %v890, %v892
    %v894 = vrot.slane %v152, %v893
    %v896 = vunpack.c.l.s4 1414812756
    %v897 = vunpack.c.0.s8 %v896
    %v898 = vlaneseq
    %v899 = vshrl.u32 %v898, 7
    %v900 = vsub.s32 %v897, %v899
    %v901 = vrot.slane %v152, %v900
    %v903 = vunpack.c.l.s4 1987475062
    %v904 = vunpack.c.0.s8 %v903
    %v905 = vlaneseq
    %v906 = vshrl.u32 %v905, 7
    %v907 = vsub.s32 %v904, %v906
    %v908 = vrot.slane %v152, %v907
    %v910 = vunpack.c.l.s4 269488144
    %v911 = vunpack.c.0.s8 %v910
    %v912 = vlaneseq
    %v913 = vshrl.u32 %v912, 7
    %v914 = vsub.s32 %v911, %v913
    %v915 = vrot.slane %v155, %v914
    %v917 = vunpack.c.l.s4 842150450
    %v918 = vunpack.c.0.s8 %v917
    %v919 = vlaneseq
    %v920 = vshrl.u32 %v919, 7
    %v921 = vsub.s32 %v918, %v920
    %v922 = vrot.slane %v155, %v921
    %v924 = vunpack.c.l.s4 1414812756
    %v925 = vunpack.c.0.s8 %v924
    %v926 = vlaneseq
    %v927 = vshrl.u32 %v926, 7
    %v928 = vsub.s32 %v925, %v927
    %v929 = vrot.slane %v155, %v928
    %v931 = vunpack.c.l.s4 1987475062
    %v932 = vunpack.c.0.s8 %v931
    %v933 = vlaneseq
    %v934 = vshrl.u32 %v933, 7
    %v935 = vsub.s32 %v932, %v934
    %v936 = vrot.slane %v155, %v935
    %v938 = vunpack.c.l.s4 269488144
    %v939 = vunpack.c.0.s8 %v938
    %v940 = vlaneseq
    %v941 = vshrl.u32 %v940, 7
    %v942 = vsub.s32 %v939, %v941
    %v943 = vrot.slane %v158, %v942
    %v945 = vunpack.c.l.s4 842150450
    %v946 = vunpack.c.0.s8 %v945
    %v947 = vlaneseq
    %v948 = vshrl.u32 %v947, 7
    %v949 = vsub.s32 %v946, %v948
    %v950 = vrot.slane %v158, %v949
    %v952 = vunpack.c.l.s4 1414812756
    %v953 = vunpack.c.0.s8 %v952
    %v954 = vlaneseq
    %v955 = vshrl.u32 %v954, 7
    %v956 = vsub.s32 %v953, %v955
    %v957 = vrot.slane %v158, %v956
    %v959 = vunpack.c.l.s4 1987475062
    %v960 = vunpack.c.0.s8 %v959
    %v961 = vlaneseq
    %v962 = vshrl.u32 %v961, 7
    %v963 = vsub.s32 %v960, %v962
    %v964 = vrot.slane %v158, %v963
    %v966 = vunpack.c.l.s4 269488144
    %v967 = vunpack.c.0.s8 %v966
    %v968 = vlaneseq
    %v969 = vshrl.u32 %v968, 7
    %v970 = vsub.s32 %v967, %v969
    %v971 = vrot.slane %v161, %v970
    %v973 = vunpack.c.l.s4 842150450
    %v974 = vunpack.c.0.s8 %v973
    %v975 = vlaneseq
    %v976 = vshrl.u32 %v975, 7
    %v977 = vsub.s32 %v974, %v976
    %v978 = vrot.slane %v161, %v977
    %v980 = vunpack.c.l.s4 1414812756
    %v981 = vunpack.c.0.s8 %v980
    %v982 = vlaneseq
    %v983 = vshrl.u32 %v982, 7
    %v984 = vsub.s32 %v981, %v983
    %v985 = vrot.slane %v161, %v984
    %v987 = vunpack.c.l.s4 1987475062
    %v988 = vunpack.c.0.s8 %v987
    %v989 = vlaneseq
    %v990 = vshrl.u32 %v989, 7
    %v991 = vsub.s32 %v988, %v990
    %v992 = vrot.slane %v161, %v991
    %v994 = vunpack.c.l.s4 269488144
    %v995 = vunpack.c.0.s8 %v994
    %v996 = vlaneseq
    %v997 = vshrl.u32 %v996, 7
    %v998 = vsub.s32 %v995, %v997
    %v999 = vrot.slane %v164, %v998
    %v1001 = vunpack.c.l.s4 842150450
    %v1002 = vunpack.c.0.s8 %v1001
    %v1003 = vlaneseq
    %v1004 = vshrl.u32 %v1003, 7
    %v1005 = vsub.s32 %v1002, %v1004
    %v1006 = vrot.slane %v164, %v1005
    %v1008 = vunpack.c.l.s4 1414812756
    %v1009 = vunpack.c.0.s8 %v1008
    %v1010 = vlaneseq
    %v1011 = vshrl.u32 %v1010, 7
    %v1012 = vsub.s32 %v1009, %v1011
    %v1013 = vrot.slane %v164, %v1012
    %v1015 = vunpack.c.l.s4 1987475062
    %v1016 = vunpack.c.0.s8 %v1015
    %v1017 = vlaneseq
    %v1018 = vshrl.u32 %v1017, 7
    %v1019 = vsub.s32 %v1016, %v1018
    %v1020 = vrot.slane %v164, %v1019
    %v1022 = vunpack.c.l.s4 269488144
    %v1023 = vunpack.c.0.s8 %v1022
    %v1024 = vlaneseq
    %v1025 = vshrl.u32 %v1024, 7
    %v1026 = vsub.s32 %v1023, %v1025
    %v1027 = vrot.slane %v167, %v1026
    %v1029 = vunpack.c.l.s4 842150450
    %v1030 = vunpack.c.0.s8 %v1029
    %v1031 = vlaneseq
    %v1032 = vshrl.u32 %v1031, 7
    %v1033 = vsub.s32 %v1030, %v1032
    %v1034 = vrot.slane %v167, %v1033
    %v1036 = vunpack.c.l.s4 1414812756
    %v1037 = vunpack.c.0.s8 %v1036
    %v1038 = vlaneseq
    %v1039 = vshrl.u32 %v1038, 7
    %v1040 = vsub.s32 %v1037, %v1039
    %v1041 = vrot.slane %v167, %v1040
    %v1043 = vunpack.c.l.s4 1987475062
    %v1044 = vunpack.c.0.s8 %v1043
    %v1045 = vlaneseq
    %v1046 = vshrl.u32 %v1045, 7
    %v1047 = vsub.s32 %v1044, %v1046
    %v1048 = vrot.slane %v167, %v1047
    %v1050 = vunpack.c.l.s4 269488144
    %v1051 = vunpack.c.0.s8 %v1050
    %v1052 = vlaneseq
    %v1053 = vshrl.u32 %v1052, 7
    %v1054 = vsub.s32 %v1051, %v1053
    %v1055 = vrot.slane %v170, %v1054
    %v1057 = vunpack.c.l.s4 842150450
    %v1058 = vunpack.c.0.s8 %v1057
    %v1059 = vlaneseq
    %v1060 = vshrl.u32 %v1059, 7
    %v1061 = vsub.s32 %v1058, %v1060
    %v1062 = vrot.slane %v170, %v1061
    %v1064 = vunpack.c.l.s4 1414812756
    %v1065 = vunpack.c.0.s8 %v1064
    %v1066 = vlaneseq
    %v1067 = vshrl.u32 %v1066, 7
    %v1068 = vsub.s32 %v1065, %v1067
    %v1069 = vrot.slane %v170, %v1068
    %v1071 = vunpack.c.l.s4 1987475062
    %v1072 = vunpack.c.0.s8 %v1071
    %v1073 = vlaneseq
    %v1074 = vshrl.u32 %v1073, 7
    %v1075 = vsub.s32 %v1072, %v1074
    %v1076 = vrot.slane %v170, %v1075
    %v1078 = vunpack.c.l.s4 269488144
    %v1079 = vunpack.c.0.s8 %v1078
    %v1080 = vlaneseq
    %v1081 = vshrl.u32 %v1080, 7
    %v1082 = vsub.s32 %v1079, %v1081
    %v1083 = vrot.slane %v173, %v1082
    %v1085 = vunpack.c.l.s4 842150450
    %v1086 = vunpack.c.0.s8 %v1085
    %v1087 = vlaneseq
    %v1088 = vshrl.u32 %v1087, 7
    %v1089 = vsub.s32 %v1086, %v1088
    %v1090 = vrot.slane %v173, %v1089
    %v1092 = vunpack.c.l.s4 1414812756
    %v1093 = vunpack.c.0.s8 %v1092
    %v1094 = vlaneseq
    %v1095 = vshrl.u32 %v1094, 7
    %v1096 = vsub.s32 %v1093, %v1095
    %v1097 = vrot.slane %v173, %v1096
    %v1099 = vunpack.c.l.s4 1987475062
    %v1100 = vunpack.c.0.s8 %v1099
    %v1101 = vlaneseq
    %v1102 = vshrl.u32 %v1101, 7
    %v1103 = vsub.s32 %v1100, %v1102
    %v1104 = vrot.slane %v173, %v1103
    %v1106 = vunpack.c.l.s4 269488144
    %v1107 = vunpack.c.0.s8 %v1106
    %v1108 = vlaneseq
    %v1109 = vshrl.u32 %v1108, 7
    %v1110 = vsub.s32 %v1107, %v1109
    %v1111 = vrot.slane %v176, %v1110
    %v1113 = vunpack.c.l.s4 842150450
    %v1114 = vunpack.c.0.s8 %v1113
    %v1115 = vlaneseq
    %v1116 = vshrl.u32 %v1115, 7
    %v1117 = vsub.s32 %v1114, %v1116
    %v1118 = vrot.slane %v176, %v1117
    %v1120 = vunpack.c.l.s4 1414812756
    %v1121 = vunpack.c.0.s8 %v1120
    %v1122 = vlaneseq
    %v1123 = vshrl.u32 %v1122, 7
    %v1124 = vsub.s32 %v1121, %v1123
    %v1125 = vrot.slane %v176, %v1124
    %v1127 = vunpack.c.l.s4 1987475062
    %v1128 = vunpack.c.0.s8 %v1127
    %v1129 = vlaneseq
    %v1130 = vshrl.u32 %v1129, 7
    %v1131 = vsub.s32 %v1128, %v1130
    %v1132 = vrot.slane %v176, %v1131
    %v1134 = vunpack.c.l.s4 269488144
    %v1135 = vunpack.c.0.s8 %v1134
    %v1136 = vlaneseq
    %v1137 = vshrl.u32 %v1136, 7
    %v1138 = vsub.s32 %v1135, %v1137
    %v1139 = vrot.slane %v179, %v1138
    %v1141 = vunpack.c.l.s4 842150450
    %v1142 = vunpack.c.0.s8 %v1141
    %v1143 = vlaneseq
    %v1144 = vshrl.u32 %v1143, 7
    %v1145 = vsub.s32 %v1142, %v1144
    %v1146 = vrot.slane %v179, %v1145
    %v1148 = vunpack.c.l.s4 1414812756
    %v1149 = vunpack.c.0.s8 %v1148
    %v1150 = vlaneseq
    %v1151 = vshrl.u32 %v1150, 7
    %v1152 = vsub.s32 %v1149, %v1151
    %v1153 = vrot.slane %v179, %v1152
    %v1155 = vunpack.c.l.s4 1987475062
    %v1156 = vunpack.c.0.s8 %v1155
    %v1157 = vlaneseq
    %v1158 = vshrl.u32 %v1157, 7
    %v1159 = vsub.s32 %v1156, %v1158
    %v1160 = vrot.slane %v179, %v1159
    %v1162 = vunpack.c.l.s4 269488144
    %v1163 = vunpack.c.0.s8 %v1162
    %v1164 = vlaneseq
    %v1165 = vshrl.u32 %v1164, 7
    %v1166 = vsub.s32 %v1163, %v1165
    %v1167 = vrot.slane %v182, %v1166
    %v1169 = vunpack.c.l.s4 842150450
    %v1170 = vunpack.c.0.s8 %v1169
    %v1171 = vlaneseq
    %v1172 = vshrl.u32 %v1171, 7
    %v1173 = vsub.s32 %v1170, %v1172
    %v1174 = vrot.slane %v182, %v1173
    %v1176 = vunpack.c.l.s4 1414812756
    %v1177 = vunpack.c.0.s8 %v1176
    %v1178 = vlaneseq
    %v1179 = vshrl.u32 %v1178, 7
    %v1180 = vsub.s32 %v1177, %v1179
    %v1181 = vrot.slane %v182, %v1180
    %v1183 = vunpack.c.l.s4 1987475062
    %v1184 = vunpack.c.0.s8 %v1183
    %v1185 = vlaneseq
    %v1186 = vshrl.u32 %v1185, 7
    %v1187 = vsub.s32 %v1184, %v1186
    %v1188 = vrot.slane %v182, %v1187
    %v1190 = vunpack.c.l.s4 269488144
    %v1191 = vunpack.c.0.s8 %v1190
    %v1192 = vlaneseq
    %v1193 = vshrl.u32 %v1192, 7
    %v1194 = vsub.s32 %v1191, %v1193
    %v1195 = vrot.slane %v185, %v1194
    %v1197 = vunpack.c.l.s4 842150450
    %v1198 = vunpack.c.0.s8 %v1197
    %v1199 = vlaneseq
    %v1200 = vshrl.u32 %v1199, 7
    %v1201 = vsub.s32 %v1198, %v1200
    %v1202 = vrot.slane %v185, %v1201
    %v1204 = vunpack.c.l.s4 1414812756
    %v1205 = vunpack.c.0.s8 %v1204
    %v1206 = vlaneseq
    %v1207 = vshrl.u32 %v1206, 7
    %v1208 = vsub.s32 %v1205, %v1207
    %v1209 = vrot.slane %v185, %v1208
    %v1211 = vunpack.c.l.s4 1987475062
    %v1212 = vunpack.c.0.s8 %v1211
    %v1213 = vlaneseq
    %v1214 = vshrl.u32 %v1213, 7
    %v1215 = vsub.s32 %v1212, %v1214
    %v1216 = vrot.slane %v185, %v1215
    %v1218 = vunpack.c.l.s4 269488144
    %v1219 = vunpack.c.0.s8 %v1218
    %v1220 = vlaneseq
    %v1221 = vshrl.u32 %v1220, 7
    %v1222 = vsub.s32 %v1219, %v1221
    %v1223 = vrot.slane %v188, %v1222
    %v1225 = vunpack.c.l.s4 842150450
    %v1226 = vunpack.c.0.s8 %v1225
    %v1227 = vlaneseq
    %v1228 = vshrl.u32 %v1227, 7
    %v1229 = vsub.s32 %v1226, %v1228
    %v1230 = vrot.slane %v188, %v1229
    %v1232 = vunpack.c.l.s4 1414812756
    %v1233 = vunpack.c.0.s8 %v1232
    %v1234 = vlaneseq
    %v1235 = vshrl.u32 %v1234, 7
    %v1236 = vsub.s32 %v1233, %v1235
    %v1237 = vrot.slane %v188, %v1236
    %v1239 = vunpack.c.l.s4 1987475062
    %v1240 = vunpack.c.0.s8 %v1239
    %v1241 = vlaneseq
    %v1242 = vshrl.u32 %v1241, 7
    %v1243 = vsub.s32 %v1240, %v1242
    %v1244 = vrot.slane %v188, %v1243
    %v1246 = vunpack.c.l.s4 269488144
    %v1247 = vunpack.c.0.s8 %v1246
    %v1248 = vlaneseq
    %v1249 = vshrl.u32 %v1248, 7
    %v1250 = vsub.s32 %v1247, %v1249
    %v1251 = vrot.slane %v191, %v1250
    %v1253 = vunpack.c.l.s4 842150450
    %v1254 = vunpack.c.0.s8 %v1253
    %v1255 = vlaneseq
    %v1256 = vshrl.u32 %v1255, 7
    %v1257 = vsub.s32 %v1254, %v1256
    %v1258 = vrot.slane %v191, %v1257
    %v1260 = vunpack.c.l.s4 1414812756
    %v1261 = vunpack.c.0.s8 %v1260
    %v1262 = vlaneseq
    %v1263 = vshrl.u32 %v1262, 7
    %v1264 = vsub.s32 %v1261, %v1263
    %v1265 = vrot.slane %v191, %v1264
    %v1267 = vunpack.c.l.s4 1987475062
    %v1268 = vunpack.c.0.s8 %v1267
    %v1269 = vlaneseq
    %v1270 = vshrl.u32 %v1269, 7
    %v1271 = vsub.s32 %v1268, %v1270
    %v1272 = vrot.slane %v191, %v1271
    %v1274 = vunpack.c.l.s4 269488144
    %v1275 = vunpack.c.0.s8 %v1274
    %v1276 = vlaneseq
    %v1277 = vshrl.u32 %v1276, 7
    %v1278 = vsub.s32 %v1275, %v1277
    %v1279 = vrot.slane %v194, %v1278
    %v1281 = vunpack.c.l.s4 842150450
    %v1282 = vunpack.c.0.s8 %v1281
    %v1283 = vlaneseq
    %v1284 = vshrl.u32 %v1283, 7
    %v1285 = vsub.s32 %v1282, %v1284
    %v1286 = vrot.slane %v194, %v1285
    %v1288 = vunpack.c.l.s4 1414812756
    %v1289 = vunpack.c.0.s8 %v1288
    %v1290 = vlaneseq
    %v1291 = vshrl.u32 %v1290, 7
    %v1292 = vsub.s32 %v1289, %v1291
    %v1293 = vrot.slane %v194, %v1292
    %v1295 = vunpack.c.l.s4 1987475062
    %v1296 = vunpack.c.0.s8 %v1295
    %v1297 = vlaneseq
    %v1298 = vshrl.u32 %v1297, 7
    %v1299 = vsub.s32 %v1296, %v1298
    %v1300 = vrot.slane %v194, %v1299
    %v1302 = vunpack.c.l.s4 269488144
    %v1303 = vunpack.c.0.s8 %v1302
    %v1304 = vlaneseq
    %v1305 = vshrl.u32 %v1304, 7
    %v1306 = vsub.s32 %v1303, %v1305
    %v1307 = vrot.slane %v197, %v1306
    %v1309 = vunpack.c.l.s4 842150450
    %v1310 = vunpack.c.0.s8 %v1309
    %v1311 = vlaneseq
    %v1312 = vshrl.u32 %v1311, 7
    %v1313 = vsub.s32 %v1310, %v1312
    %v1314 = vrot.slane %v197, %v1313
    %v1316 = vunpack.c.l.s4 1414812756
    %v1317 = vunpack.c.0.s8 %v1316
    %v1318 = vlaneseq
    %v1319 = vshrl.u32 %v1318, 7
    %v1320 = vsub.s32 %v1317, %v1319
    %v1321 = vrot.slane %v197, %v1320
    %v1323 = vunpack.c.l.s4 1987475062
    %v1324 = vunpack.c.0.s8 %v1323
    %v1325 = vlaneseq
    %v1326 = vshrl.u32 %v1325, 7
    %v1327 = vsub.s32 %v1324, %v1326
    %v1328 = vrot.slane %v197, %v1327
    %v1330 = vunpack.c.l.s4 269488144
    %v1331 = vunpack.c.0.s8 %v1330
    %v1332 = vlaneseq
    %v1333 = vshrl.u32 %v1332, 7
    %v1334 = vsub.s32 %v1331, %v1333
    %v1335 = vrot.slane %v200, %v1334
    %v1337 = vunpack.c.l.s4 842150450
    %v1338 = vunpack.c.0.s8 %v1337
    %v1339 = vlaneseq
    %v1340 = vshrl.u32 %v1339, 7
    %v1341 = vsub.s32 %v1338, %v1340
    %v1342 = vrot.slane %v200, %v1341
    %v1344 = vunpack.c.l.s4 1414812756
    %v1345 = vunpack.c.0.s8 %v1344
    %v1346 = vlaneseq
    %v1347 = vshrl.u32 %v1346, 7
    %v1348 = vsub.s32 %v1345, %v1347
    %v1349 = vrot.slane %v200, %v1348
    %v1351 = vunpack.c.l.s4 1987475062
    %v1352 = vunpack.c.0.s8 %v1351
    %v1353 = vlaneseq
    %v1354 = vshrl.u32 %v1353, 7
    %v1355 = vsub.s32 %v1352, %v1354
    %v1356 = vrot.slane %v200, %v1355
    %v1358 = vunpack.c.l.s4 269488144
    %v1359 = vunpack.c.0.s8 %v1358
    %v1360 = vlaneseq
    %v1361 = vshrl.u32 %v1360, 7
    %v1362 = vsub.s32 %v1359, %v1361
    %v1363 = vrot.slane %v203, %v1362
    %v1365 = vunpack.c.l.s4 842150450
    %v1366 = vunpack.c.0.s8 %v1365
    %v1367 = vlaneseq
    %v1368 = vshrl.u32 %v1367, 7
    %v1369 = vsub.s32 %v1366, %v1368
    %v1370 = vrot.slane %v203, %v1369
    %v1372 = vunpack.c.l.s4 1414812756
    %v1373 = vunpack.c.0.s8 %v1372
    %v1374 = vlaneseq
    %v1375 = vshrl.u32 %v1374, 7
    %v1376 = vsub.s32 %v1373, %v1375
    %v1377 = vrot.slane %v203, %v1376
    %v1379 = vunpack.c.l.s4 1987475062
    %v1380 = vunpack.c.0.s8 %v1379
    %v1381 = vlaneseq
    %v1382 = vshrl.u32 %v1381, 7
    %v1383 = vsub.s32 %v1380, %v1382
    %v1384 = vrot.slane %v203, %v1383
    %v1386 = vunpack.c.l.s4 269488144
    %v1387 = vunpack.c.0.s8 %v1386
    %v1388 = vlaneseq
    %v1389 = vshrl.u32 %v1388, 7
    %v1390 = vsub.s32 %v1387, %v1389
    %v1391 = vrot.slane %v206, %v1390
    %v1393 = vunpack.c.l.s4 842150450
    %v1394 = vunpack.c.0.s8 %v1393
    %v1395 = vlaneseq
    %v1396 = vshrl.u32 %v1395, 7
    %v1397 = vsub.s32 %v1394, %v1396
    %v1398 = vrot.slane %v206, %v1397
    %v1400 = vunpack.c.l.s4 1414812756
    %v1401 = vunpack.c.0.s8 %v1400
    %v1402 = vlaneseq
    %v1403 = vshrl.u32 %v1402, 7
    %v1404 = vsub.s32 %v1401, %v1403
    %v1405 = vrot.slane %v206, %v1404
    %v1407 = vunpack.c.l.s4 1987475062
    %v1408 = vunpack.c.0.s8 %v1407
    %v1409 = vlaneseq
    %v1410 = vshrl.u32 %v1409, 7
    %v1411 = vsub.s32 %v1408, %v1410
    %v1412 = vrot.slane %v206, %v1411
    %v1414 = vunpack.c.l.s4 269488144
    %v1415 = vunpack.c.0.s8 %v1414
    %v1416 = vlaneseq
    %v1417 = vshrl.u32 %v1416, 7
    %v1418 = vsub.s32 %v1415, %v1417
    %v1419 = vrot.slane %v209, %v1418
    %v1421 = vunpack.c.l.s4 842150450
    %v1422 = vunpack.c.0.s8 %v1421
    %v1423 = vlaneseq
    %v1424 = vshrl.u32 %v1423, 7
    %v1425 = vsub.s32 %v1422, %v1424
    %v1426 = vrot.slane %v209, %v1425
    %v1428 = vunpack.c.l.s4 1414812756
    %v1429 = vunpack.c.0.s8 %v1428
    %v1430 = vlaneseq
    %v1431 = vshrl.u32 %v1430, 7
    %v1432 = vsub.s32 %v1429, %v1431
    %v1433 = vrot.slane %v209, %v1432
    %v1435 = vunpack.c.l.s4 1987475062
    %v1436 = vunpack.c.0.s8 %v1435
    %v1437 = vlaneseq
    %v1438 = vshrl.u32 %v1437, 7
    %v1439 = vsub.s32 %v1436, %v1438
    %v1440 = vrot.slane %v209, %v1439
    %v1442 = vunpack.c.l.s4 269488144
    %v1443 = vunpack.c.0.s8 %v1442
    %v1444 = vlaneseq
    %v1445 = vshrl.u32 %v1444, 7
    %v1446 = vsub.s32 %v1443, %v1445
    %v1447 = vrot.slane %v212, %v1446
    %v1449 = vunpack.c.l.s4 842150450
    %v1450 = vunpack.c.0.s8 %v1449
    %v1451 = vlaneseq
    %v1452 = vshrl.u32 %v1451, 7
    %v1453 = vsub.s32 %v1450, %v1452
    %v1454 = vrot.slane %v212, %v1453
    %v1456 = vunpack.c.l.s4 1414812756
    %v1457 = vunpack.c.0.s8 %v1456
    %v1458 = vlaneseq
    %v1459 = vshrl.u32 %v1458, 7
    %v1460 = vsub.s32 %v1457, %v1459
    %v1461 = vrot.slane %v212, %v1460
    %v1463 = vunpack.c.l.s4 1987475062
    %v1464 = vunpack.c.0.s8 %v1463
    %v1465 = vlaneseq
    %v1466 = vshrl.u32 %v1465, 7
    %v1467 = vsub.s32 %v1464, %v1466
    %v1468 = vrot.slane %v212, %v1467
    %v1470 = vunpack.c.l.s4 269488144
    %v1471 = vunpack.c.0.s8 %v1470
    %v1472 = vlaneseq
    %v1473 = vshrl.u32 %v1472, 7
    %v1474 = vsub.s32 %v1471, %v1473
    %v1475 = vrot.slane %v215, %v1474
    %v1477 = vunpack.c.l.s4 842150450
    %v1478 = vunpack.c.0.s8 %v1477
    %v1479 = vlaneseq
    %v1480 = vshrl.u32 %v1479, 7
    %v1481 = vsub.s32 %v1478, %v1480
    %v1482 = vrot.slane %v215, %v1481
    %v1484 = vunpack.c.l.s4 1414812756
    %v1485 = vunpack.c.0.s8 %v1484
    %v1486 = vlaneseq
    %v1487 = vshrl.u32 %v1486, 7
    %v1488 = vsub.s32 %v1485, %v1487
    %v1489 = vrot.slane %v215, %v1488
    %v1491 = vunpack.c.l.s4 1987475062
    %v1492 = vunpack.c.0.s8 %v1491
    %v1493 = vlaneseq
    %v1494 = vshrl.u32 %v1493, 7
    %v1495 = vsub.s32 %v1492, %v1494
    %v1496 = vrot.slane %v215, %v1495
    %v1498 = vunpack.c.l.s4 269488144
    %v1499 = vunpack.c.0.s8 %v1498
    %v1500 = vlaneseq
    %v1501 = vshrl.u32 %v1500, 7
    %v1502 = vsub.s32 %v1499, %v1501
    %v1503 = vrot.slane %v218, %v1502
    %v1505 = vunpack.c.l.s4 842150450
    %v1506 = vunpack.c.0.s8 %v1505
    %v1507 = vlaneseq
    %v1508 = vshrl.u32 %v1507, 7
    %v1509 = vsub.s32 %v1506, %v1508
    %v1510 = vrot.slane %v218, %v1509
    %v1512 = vunpack.c.l.s4 1414812756
    %v1513 = vunpack.c.0.s8 %v1512
    %v1514 = vlaneseq
    %v1515 = vshrl.u32 %v1514, 7
    %v1516 = vsub.s32 %v1513, %v1515
    %v1517 = vrot.slane %v218, %v1516
    %v1519 = vunpack.c.l.s4 1987475062
    %v1520 = vunpack.c.0.s8 %v1519
    %v1521 = vlaneseq
    %v1522 = vshrl.u32 %v1521, 7
    %v1523 = vsub.s32 %v1520, %v1522
    %v1524 = vrot.slane %v218, %v1523
    %v1526 = vunpack.c.l.s4 269488144
    %v1527 = vunpack.c.0.s8 %v1526
    %v1528 = vlaneseq
    %v1529 = vshrl.u32 %v1528, 7
    %v1530 = vsub.s32 %v1527, %v1529
    %v1531 = vrot.slane %v221, %v1530
    %v1533 = vunpack.c.l.s4 842150450
    %v1534 = vunpack.c.0.s8 %v1533
    %v1535 = vlaneseq
    %v1536 = vshrl.u32 %v1535, 7
    %v1537 = vsub.s32 %v1534, %v1536
    %v1538 = vrot.slane %v221, %v1537
    %v1540 = vunpack.c.l.s4 1414812756
    %v1541 = vunpack.c.0.s8 %v1540
    %v1542 = vlaneseq
    %v1543 = vshrl.u32 %v1542, 7
    %v1544 = vsub.s32 %v1541, %v1543
    %v1545 = vrot.slane %v221, %v1544
    %v1547 = vunpack.c.l.s4 1987475062
    %v1548 = vunpack.c.0.s8 %v1547
    %v1549 = vlaneseq
    %v1550 = vshrl.u32 %v1549, 7
    %v1551 = vsub.s32 %v1548, %v1550
    %v1552 = vrot.slane %v221, %v1551
    %v1554 = vunpack.c.l.s4 269488144
    %v1555 = vunpack.c.0.s8 %v1554
    %v1556 = vlaneseq
    %v1557 = vshrl.u32 %v1556, 7
    %v1558 = vsub.s32 %v1555, %v1557
    %v1559 = vrot.slane %v224, %v1558
    %v1561 = vunpack.c.l.s4 842150450
    %v1562 = vunpack.c.0.s8 %v1561
    %v1563 = vlaneseq
    %v1564 = vshrl.u32 %v1563, 7
    %v1565 = vsub.s32 %v1562, %v1564
    %v1566 = vrot.slane %v224, %v1565
    %v1568 = vunpack.c.l.s4 1414812756
    %v1569 = vunpack.c.0.s8 %v1568
    %v1570 = vlaneseq
    %v1571 = vshrl.u32 %v1570, 7
    %v1572 = vsub.s32 %v1569, %v1571
    %v1573 = vrot.slane %v224, %v1572
    %v1575 = vunpack.c.l.s4 1987475062
    %v1576 = vunpack.c.0.s8 %v1575
    %v1577 = vlaneseq
    %v1578 = vshrl.u32 %v1577, 7
    %v1579 = vsub.s32 %v1576, %v1578
    %v1580 = vrot.slane %v224, %v1579
    %v1582 = vunpack.c.l.s4 269488144
    %v1583 = vunpack.c.0.s8 %v1582
    %v1584 = vlaneseq
    %v1585 = vshrl.u32 %v1584, 7
    %v1586 = vsub.s32 %v1583, %v1585
    %v1587 = vrot.slane %v227, %v1586
    %v1589 = vunpack.c.l.s4 842150450
    %v1590 = vunpack.c.0.s8 %v1589
    %v1591 = vlaneseq
    %v1592 = vshrl.u32 %v1591, 7
    %v1593 = vsub.s32 %v1590, %v1592
    %v1594 = vrot.slane %v227, %v1593
    %v1596 = vunpack.c.l.s4 1414812756
    %v1597 = vunpack.c.0.s8 %v1596
    %v1598 = vlaneseq
    %v1599 = vshrl.u32 %v1598, 7
    %v1600 = vsub.s32 %v1597, %v1599
    %v1601 = vrot.slane %v227, %v1600
    %v1603 = vunpack.c.l.s4 1987475062
    %v1604 = vunpack.c.0.s8 %v1603
    %v1605 = vlaneseq
    %v1606 = vshrl.u32 %v1605, 7
    %v1607 = vsub.s32 %v1604, %v1606
    %v1608 = vrot.slane %v227, %v1607
    %v1610 = vunpack.c.l.s4 269488144
    %v1611 = vunpack.c.0.s8 %v1610
    %v1612 = vlaneseq
    %v1613 = vshrl.u32 %v1612, 7
    %v1614 = vsub.s32 %v1611, %v1613
    %v1615 = vrot.slane %v230, %v1614
    %v1617 = vunpack.c.l.s4 842150450
    %v1618 = vunpack.c.0.s8 %v1617
    %v1619 = vlaneseq
    %v1620 = vshrl.u32 %v1619, 7
    %v1621 = vsub.s32 %v1618, %v1620
    %v1622 = vrot.slane %v230, %v1621
    %v1624 = vunpack.c.l.s4 1414812756
    %v1625 = vunpack.c.0.s8 %v1624
    %v1626 = vlaneseq
    %v1627 = vshrl.u32 %v1626, 7
    %v1628 = vsub.s32 %v1625, %v1627
    %v1629 = vrot.slane %v230, %v1628
    %v1631 = vunpack.c.l.s4 1987475062
    %v1632 = vunpack.c.0.s8 %v1631
    %v1633 = vlaneseq
    %v1634 = vshrl.u32 %v1633, 7
    %v1635 = vsub.s32 %v1632, %v1634
    %v1636 = vrot.slane %v230, %v1635
    %v1638 = vunpack.c.l.s4 269488144
    %v1639 = vunpack.c.0.s8 %v1638
    %v1640 = vlaneseq
    %v1641 = vshrl.u32 %v1640, 7
    %v1642 = vsub.s32 %v1639, %v1641
    %v1643 = vrot.slane %v233, %v1642
    %v1645 = vunpack.c.l.s4 842150450
    %v1646 = vunpack.c.0.s8 %v1645
    %v1647 = vlaneseq
    %v1648 = vshrl.u32 %v1647, 7
    %v1649 = vsub.s32 %v1646, %v1648
    %v1650 = vrot.slane %v233, %v1649
    %v1652 = vunpack.c.l.s4 1414812756
    %v1653 = vunpack.c.0.s8 %v1652
    %v1654 = vlaneseq
    %v1655 = vshrl.u32 %v1654, 7
    %v1656 = vsub.s32 %v1653, %v1655
    %v1657 = vrot.slane %v233, %v1656
    %v1659 = vunpack.c.l.s4 1987475062
    %v1660 = vunpack.c.0.s8 %v1659
    %v1661 = vlaneseq
    %v1662 = vshrl.u32 %v1661, 7
    %v1663 = vsub.s32 %v1660, %v1662
    %v1664 = vrot.slane %v233, %v1663
    %v1666 = vunpack.c.l.s4 269488144
    %v1667 = vunpack.c.0.s8 %v1666
    %v1668 = vlaneseq
    %v1669 = vshrl.u32 %v1668, 7
    %v1670 = vsub.s32 %v1667, %v1669
    %v1671 = vrot.slane %v236, %v1670
    %v1673 = vunpack.c.l.s4 842150450
    %v1674 = vunpack.c.0.s8 %v1673
    %v1675 = vlaneseq
    %v1676 = vshrl.u32 %v1675, 7
    %v1677 = vsub.s32 %v1674, %v1676
    %v1678 = vrot.slane %v236, %v1677
    %v1680 = vunpack.c.l.s4 1414812756
    %v1681 = vunpack.c.0.s8 %v1680
    %v1682 = vlaneseq
    %v1683 = vshrl.u32 %v1682, 7
    %v1684 = vsub.s32 %v1681, %v1683
    %v1685 = vrot.slane %v236, %v1684
    %v1687 = vunpack.c.l.s4 1987475062
    %v1688 = vunpack.c.0.s8 %v1687
    %v1689 = vlaneseq
    %v1690 = vshrl.u32 %v1689, 7
    %v1691 = vsub.s32 %v1688, %v1690
    %v1692 = vrot.slane %v236, %v1691
    %v1694 = vunpack.c.l.s4 269488144
    %v1695 = vunpack.c.0.s8 %v1694
    %v1696 = vlaneseq
    %v1697 = vshrl.u32 %v1696, 7
    %v1698 = vsub.s32 %v1695, %v1697
    %v1699 = vrot.slane %v239, %v1698
    %v1701 = vunpack.c.l.s4 842150450
    %v1702 = vunpack.c.0.s8 %v1701
    %v1703 = vlaneseq
    %v1704 = vshrl.u32 %v1703, 7
    %v1705 = vsub.s32 %v1702, %v1704
    %v1706 = vrot.slane %v239, %v1705
    %v1708 = vunpack.c.l.s4 1414812756
    %v1709 = vunpack.c.0.s8 %v1708
    %v1710 = vlaneseq
    %v1711 = vshrl.u32 %v1710, 7
    %v1712 = vsub.s32 %v1709, %v1711
    %v1713 = vrot.slane %v239, %v1712
    %v1715 = vunpack.c.l.s4 1987475062
    %v1716 = vunpack.c.0.s8 %v1715
    %v1717 = vlaneseq
    %v1718 = vshrl.u32 %v1717, 7
    %v1719 = vsub.s32 %v1716, %v1718
    %v1720 = vrot.slane %v239, %v1719
    %v1722 = vunpack.c.l.s4 269488144
    %v1723 = vunpack.c.0.s8 %v1722
    %v1724 = vlaneseq
    %v1725 = vshrl.u32 %v1724, 7
    %v1726 = vsub.s32 %v1723, %v1725
    %v1727 = vrot.slane %v242, %v1726
    %v1729 = vunpack.c.l.s4 842150450
    %v1730 = vunpack.c.0.s8 %v1729
    %v1731 = vlaneseq
    %v1732 = vshrl.u32 %v1731, 7
    %v1733 = vsub.s32 %v1730, %v1732
    %v1734 = vrot.slane %v242, %v1733
    %v1736 = vunpack.c.l.s4 1414812756
    %v1737 = vunpack.c.0.s8 %v1736
    %v1738 = vlaneseq
    %v1739 = vshrl.u32 %v1738, 7
    %v1740 = vsub.s32 %v1737, %v1739
    %v1741 = vrot.slane %v242, %v1740
    %v1743 = vunpack.c.l.s4 1987475062
    %v1744 = vunpack.c.0.s8 %v1743
    %v1745 = vlaneseq
    %v1746 = vshrl.u32 %v1745, 7
    %v1747 = vsub.s32 %v1744, %v1746
    %v1748 = vrot.slane %v242, %v1747
    %v1750 = vunpack.c.l.s4 269488144
    %v1751 = vunpack.c.0.s8 %v1750
    %v1752 = vlaneseq
    %v1753 = vshrl.u32 %v1752, 7
    %v1754 = vsub.s32 %v1751, %v1753
    %v1755 = vrot.slane %v245, %v1754
    %v1757 = vunpack.c.l.s4 842150450
    %v1758 = vunpack.c.0.s8 %v1757
    %v1759 = vlaneseq
    %v1760 = vshrl.u32 %v1759, 7
    %v1761 = vsub.s32 %v1758, %v1760
    %v1762 = vrot.slane %v245, %v1761
    %v1764 = vunpack.c.l.s4 1414812756
    %v1765 = vunpack.c.0.s8 %v1764
    %v1766 = vlaneseq
    %v1767 = vshrl.u32 %v1766, 7
    %v1768 = vsub.s32 %v1765, %v1767
    %v1769 = vrot.slane %v245, %v1768
    %v1771 = vunpack.c.l.s4 1987475062
    %v1772 = vunpack.c.0.s8 %v1771
    %v1773 = vlaneseq
    %v1774 = vshrl.u32 %v1773, 7
    %v1775 = vsub.s32 %v1772, %v1774
    %v1776 = vrot.slane %v245, %v1775
    %v1778 = vunpack.c.l.s4 269488144
    %v1779 = vunpack.c.0.s8 %v1778
    %v1780 = vlaneseq
    %v1781 = vshrl.u32 %v1780, 7
    %v1782 = vsub.s32 %v1779, %v1781
    %v1783 = vrot.slane %v248, %v1782
    %v1785 = vunpack.c.l.s4 842150450
    %v1786 = vunpack.c.0.s8 %v1785
    %v1787 = vlaneseq
    %v1788 = vshrl.u32 %v1787, 7
    %v1789 = vsub.s32 %v1786, %v1788
    %v1790 = vrot.slane %v248, %v1789
    %v1792 = vunpack.c.l.s4 1414812756
    %v1793 = vunpack.c.0.s8 %v1792
    %v1794 = vlaneseq
    %v1795 = vshrl.u32 %v1794, 7
    %v1796 = vsub.s32 %v1793, %v1795
    %v1797 = vrot.slane %v248, %v1796
    %v1799 = vunpack.c.l.s4 1987475062
    %v1800 = vunpack.c.0.s8 %v1799
    %v1801 = vlaneseq
    %v1802 = vshrl.u32 %v1801, 7
    %v1803 = vsub.s32 %v1800, %v1802
    %v1804 = vrot.slane %v248, %v1803
    %v1806 = vunpack.c.l.s4 269488144
    %v1807 = vunpack.c.0.s8 %v1806
    %v1808 = vlaneseq
    %v1809 = vshrl.u32 %v1808, 7
    %v1810 = vsub.s32 %v1807, %v1809
    %v1811 = vrot.slane %v251, %v1810
    %v1813 = vunpack.c.l.s4 842150450
    %v1814 = vunpack.c.0.s8 %v1813
    %v1815 = vlaneseq
    %v1816 = vshrl.u32 %v1815, 7
    %v1817 = vsub.s32 %v1814, %v1816
    %v1818 = vrot.slane %v251, %v1817
    %v1820 = vunpack.c.l.s4 1414812756
    %v1821 = vunpack.c.0.s8 %v1820
    %v1822 = vlaneseq
    %v1823 = vshrl.u32 %v1822, 7
    %v1824 = vsub.s32 %v1821, %v1823
    %v1825 = vrot.slane %v251, %v1824
    %v1827 = vunpack.c.l.s4 1987475062
    %v1828 = vunpack.c.0.s8 %v1827
    %v1829 = vlaneseq
    %v1830 = vshrl.u32 %v1829, 7
    %v1831 = vsub.s32 %v1828, %v1830
    %v1832 = vrot.slane %v251, %v1831
    %v1834 = vunpack.c.l.s4 269488144
    %v1835 = vunpack.c.0.s8 %v1834
    %v1836 = vlaneseq
    %v1837 = vshrl.u32 %v1836, 7
    %v1838 = vsub.s32 %v1835, %v1837
    %v1839 = vrot.slane %v254, %v1838
    %v1841 = vunpack.c.l.s4 842150450
    %v1842 = vunpack.c.0.s8 %v1841
    %v1843 = vlaneseq
    %v1844 = vshrl.u32 %v1843, 7
    %v1845 = vsub.s32 %v1842, %v1844
    %v1846 = vrot.slane %v254, %v1845
    %v1848 = vunpack.c.l.s4 1414812756
    %v1849 = vunpack.c.0.s8 %v1848
    %v1850 = vlaneseq
    %v1851 = vshrl.u32 %v1850, 7
    %v1852 = vsub.s32 %v1849, %v1851
    %v1853 = vrot.slane %v254, %v1852
    %v1855 = vunpack.c.l.s4 1987475062
    %v1856 = vunpack.c.0.s8 %v1855
    %v1857 = vlaneseq
    %v1858 = vshrl.u32 %v1857, 7
    %v1859 = vsub.s32 %v1856, %v1858
    %v1860 = vrot.slane %v254, %v1859
    %v1862 = vunpack.c.l.s4 269488144
    %v1863 = vunpack.c.0.s8 %v1862
    %v1864 = vlaneseq
    %v1865 = vshrl.u32 %v1864, 7
    %v1866 = vsub.s32 %v1863, %v1865
    %v1867 = vrot.slane %v257, %v1866
    %v1869 = vunpack.c.l.s4 842150450
    %v1870 = vunpack.c.0.s8 %v1869
    %v1871 = vlaneseq
    %v1872 = vshrl.u32 %v1871, 7
    %v1873 = vsub.s32 %v1870, %v1872
    %v1874 = vrot.slane %v257, %v1873
    %v1876 = vunpack.c.l.s4 1414812756
    %v1877 = vunpack.c.0.s8 %v1876
    %v1878 = vlaneseq
    %v1879 = vshrl.u32 %v1878, 7
    %v1880 = vsub.s32 %v1877, %v1879
    %v1881 = vrot.slane %v257, %v1880
    %v1883 = vunpack.c.l.s4 1987475062
    %v1884 = vunpack.c.0.s8 %v1883
    %v1885 = vlaneseq
    %v1886 = vshrl.u32 %v1885, 7
    %v1887 = vsub.s32 %v1884, %v1886
    %v1888 = vrot.slane %v257, %v1887
    %v1890 = vunpack.c.l.s4 269488144
    %v1891 = vunpack.c.0.s8 %v1890
    %v1892 = vlaneseq
    %v1893 = vshrl.u32 %v1892, 7
    %v1894 = vsub.s32 %v1891, %v1893
    %v1895 = vrot.slane %v260, %v1894
    %v1897 = vunpack.c.l.s4 842150450
    %v1898 = vunpack.c.0.s8 %v1897
    %v1899 = vlaneseq
    %v1900 = vshrl.u32 %v1899, 7
    %v1901 = vsub.s32 %v1898, %v1900
    %v1902 = vrot.slane %v260, %v1901
    %v1904 = vunpack.c.l.s4 1414812756
    %v1905 = vunpack.c.0.s8 %v1904
    %v1906 = vlaneseq
    %v1907 = vshrl.u32 %v1906, 7
    %v1908 = vsub.s32 %v1905, %v1907
    %v1909 = vrot.slane %v260, %v1908
    %v1911 = vunpack.c.l.s4 1987475062
    %v1912 = vunpack.c.0.s8 %v1911
    %v1913 = vlaneseq
    %v1914 = vshrl.u32 %v1913, 7
    %v1915 = vsub.s32 %v1912, %v1914
    %v1916 = vrot.slane %v260, %v1915
    %v1918 = vunpack.c.l.s4 269488144
    %v1919 = vunpack.c.0.s8 %v1918
    %v1920 = vlaneseq
    %v1921 = vshrl.u32 %v1920, 7
    %v1922 = vsub.s32 %v1919, %v1921
    %v1923 = vrot.slane %v263, %v1922
    %v1925 = vunpack.c.l.s4 842150450
    %v1926 = vunpack.c.0.s8 %v1925
    %v1927 = vlaneseq
    %v1928 = vshrl.u32 %v1927, 7
    %v1929 = vsub.s32 %v1926, %v1928
    %v1930 = vrot.slane %v263, %v1929
    %v1932 = vunpack.c.l.s4 1414812756
    %v1933 = vunpack.c.0.s8 %v1932
    %v1934 = vlaneseq
    %v1935 = vshrl.u32 %v1934, 7
    %v1936 = vsub.s32 %v1933, %v1935
    %v1937 = vrot.slane %v263, %v1936
    %v1939 = vunpack.c.l.s4 1987475062
    %v1940 = vunpack.c.0.s8 %v1939
    %v1941 = vlaneseq
    %v1942 = vshrl.u32 %v1941, 7
    %v1943 = vsub.s32 %v1940, %v1942
    %v1944 = vrot.slane %v263, %v1943
    %v1946 = vunpack.c.l.s4 269488144
    %v1947 = vunpack.c.0.s8 %v1946
    %v1948 = vlaneseq
    %v1949 = vshrl.u32 %v1948, 7
    %v1950 = vsub.s32 %v1947, %v1949
    %v1951 = vrot.slane %v266, %v1950
    %v1953 = vunpack.c.l.s4 842150450
    %v1954 = vunpack.c.0.s8 %v1953
    %v1955 = vlaneseq
    %v1956 = vshrl.u32 %v1955, 7
    %v1957 = vsub.s32 %v1954, %v1956
    %v1958 = vrot.slane %v266, %v1957
    %v1960 = vunpack.c.l.s4 1414812756
    %v1961 = vunpack.c.0.s8 %v1960
    %v1962 = vlaneseq
    %v1963 = vshrl.u32 %v1962, 7
    %v1964 = vsub.s32 %v1961, %v1963
    %v1965 = vrot.slane %v266, %v1964
    %v1967 = vunpack.c.l.s4 1987475062
    %v1968 = vunpack.c.0.s8 %v1967
    %v1969 = vlaneseq
    %v1970 = vshrl.u32 %v1969, 7
    %v1971 = vsub.s32 %v1968, %v1970
    %v1972 = vrot.slane %v266, %v1971
    %v1974 = vunpack.c.l.s4 269488144
    %v1975 = vunpack.c.0.s8 %v1974
    %v1976 = vlaneseq
    %v1977 = vshrl.u32 %v1976, 7
    %v1978 = vsub.s32 %v1975, %v1977
    %v1979 = vrot.slane %v269, %v1978
    %v1981 = vunpack.c.l.s4 842150450
    %v1982 = vunpack.c.0.s8 %v1981
    %v1983 = vlaneseq
    %v1984 = vshrl.u32 %v1983, 7
    %v1985 = vsub.s32 %v1982, %v1984
    %v1986 = vrot.slane %v269, %v1985
    %v1988 = vunpack.c.l.s4 1414812756
    %v1989 = vunpack.c.0.s8 %v1988
    %v1990 = vlaneseq
    %v1991 = vshrl.u32 %v1990, 7
    %v1992 = vsub.s32 %v1989, %v1991
    %v1993 = vrot.slane %v269, %v1992
    %v1995 = vunpack.c.l.s4 1987475062
    %v1996 = vunpack.c.0.s8 %v1995
    %v1997 = vlaneseq
    %v1998 = vshrl.u32 %v1997, 7
    %v1999 = vsub.s32 %v1996, %v1998
    %v2000 = vrot.slane %v269, %v1999
    %v2002 = vunpack.c.l.s4 269488144
    %v2003 = vunpack.c.0.s8 %v2002
    %v2004 = vlaneseq
    %v2005 = vshrl.u32 %v2004, 7
    %v2006 = vsub.s32 %v2003, %v2005
    %v2007 = vrot.slane %v272, %v2006
    %v2009 = vunpack.c.l.s4 842150450
    %v2010 = vunpack.c.0.s8 %v2009
    %v2011 = vlaneseq
    %v2012 = vshrl.u32 %v2011, 7
    %v2013 = vsub.s32 %v2010, %v2012
    %v2014 = vrot.slane %v272, %v2013
    %v2016 = vunpack.c.l.s4 1414812756
    %v2017 = vunpack.c.0.s8 %v2016
    %v2018 = vlaneseq
    %v2019 = vshrl.u32 %v2018, 7
    %v2020 = vsub.s32 %v2017, %v2019
    %v2021 = vrot.slane %v272, %v2020
    %v2023 = vunpack.c.l.s4 1987475062
    %v2024 = vunpack.c.0.s8 %v2023
    %v2025 = vlaneseq
    %v2026 = vshrl.u32 %v2025, 7
    %v2027 = vsub.s32 %v2024, %v2026
    %v2028 = vrot.slane %v272, %v2027
    %v2030 = vunpack.c.l.s4 269488144
    %v2031 = vunpack.c.0.s8 %v2030
    %v2032 = vlaneseq
    %v2033 = vshrl.u32 %v2032, 7
    %v2034 = vsub.s32 %v2031, %v2033
    %v2035 = vrot.slane %v275, %v2034
    %v2037 = vunpack.c.l.s4 842150450
    %v2038 = vunpack.c.0.s8 %v2037
    %v2039 = vlaneseq
    %v2040 = vshrl.u32 %v2039, 7
    %v2041 = vsub.s32 %v2038, %v2040
    %v2042 = vrot.slane %v275, %v2041
    %v2044 = vunpack.c.l.s4 1414812756
    %v2045 = vunpack.c.0.s8 %v2044
    %v2046 = vlaneseq
    %v2047 = vshrl.u32 %v2046, 7
    %v2048 = vsub.s32 %v2045, %v2047
    %v2049 = vrot.slane %v275, %v2048
    %v2051 = vunpack.c.l.s4 1987475062
    %v2052 = vunpack.c.0.s8 %v2051
    %v2053 = vlaneseq
    %v2054 = vshrl.u32 %v2053, 7
    %v2055 = vsub.s32 %v2052, %v2054
    %v2056 = vrot.slane %v275, %v2055
    %v2058 = vunpack.c.l.s4 269488144
    %v2059 = vunpack.c.0.s8 %v2058
    %v2060 = vlaneseq
    %v2061 = vshrl.u32 %v2060, 7
    %v2062 = vsub.s32 %v2059, %v2061
    %v2063 = vrot.slane %v278, %v2062
    %v2065 = vunpack.c.l.s4 842150450
    %v2066 = vunpack.c.0.s8 %v2065
    %v2067 = vlaneseq
    %v2068 = vshrl.u32 %v2067, 7
    %v2069 = vsub.s32 %v2066, %v2068
    %v2070 = vrot.slane %v278, %v2069
    %v2072 = vunpack.c.l.s4 1414812756
    %v2073 = vunpack.c.0.s8 %v2072
    %v2074 = vlaneseq
    %v2075 = vshrl.u32 %v2074, 7
    %v2076 = vsub.s32 %v2073, %v2075
    %v2077 = vrot.slane %v278, %v2076
    %v2079 = vunpack.c.l.s4 1987475062
    %v2080 = vunpack.c.0.s8 %v2079
    %v2081 = vlaneseq
    %v2082 = vshrl.u32 %v2081, 7
    %v2083 = vsub.s32 %v2080, %v2082
    %v2084 = vrot.slane %v278, %v2083
    %v2086 = vunpack.c.l.s4 269488144
    %v2087 = vunpack.c.0.s8 %v2086
    %v2088 = vlaneseq
    %v2089 = vshrl.u32 %v2088, 7
    %v2090 = vsub.s32 %v2087, %v2089
    %v2091 = vrot.slane %v281, %v2090
    %v2093 = vunpack.c.l.s4 842150450
    %v2094 = vunpack.c.0.s8 %v2093
    %v2095 = vlaneseq
    %v2096 = vshrl.u32 %v2095, 7
    %v2097 = vsub.s32 %v2094, %v2096
    %v2098 = vrot.slane %v281, %v2097
    %v2100 = vunpack.c.l.s4 1414812756
    %v2101 = vunpack.c.0.s8 %v2100
    %v2102 = vlaneseq
    %v2103 = vshrl.u32 %v2102, 7
    %v2104 = vsub.s32 %v2101, %v2103
    %v2105 = vrot.slane %v281, %v2104
    %v2107 = vunpack.c.l.s4 1987475062
    %v2108 = vunpack.c.0.s8 %v2107
    %v2109 = vlaneseq
    %v2110 = vshrl.u32 %v2109, 7
    %v2111 = vsub.s32 %v2108, %v2110
    %v2112 = vrot.slane %v281, %v2111
    %v2114 = vunpack.c.l.s4 269488144
    %v2115 = vunpack.c.0.s8 %v2114
    %v2116 = vlaneseq
    %v2117 = vshrl.u32 %v2116, 7
    %v2118 = vsub.s32 %v2115, %v2117
    %v2119 = vrot.slane %v284, %v2118
    %v2121 = vunpack.c.l.s4 842150450
    %v2122 = vunpack.c.0.s8 %v2121
    %v2123 = vlaneseq
    %v2124 = vshrl.u32 %v2123, 7
    %v2125 = vsub.s32 %v2122, %v2124
    %v2126 = vrot.slane %v284, %v2125
    %v2128 = vunpack.c.l.s4 1414812756
    %v2129 = vunpack.c.0.s8 %v2128
    %v2130 = vlaneseq
    %v2131 = vshrl.u32 %v2130, 7
    %v2132 = vsub.s32 %v2129, %v2131
    %v2133 = vrot.slane %v284, %v2132
    %v2135 = vunpack.c.l.s4 1987475062
    %v2136 = vunpack.c.0.s8 %v2135
    %v2137 = vlaneseq
    %v2138 = vshrl.u32 %v2137, 7
    %v2139 = vsub.s32 %v2136, %v2138
    %v2140 = vrot.slane %v284, %v2139
    %v2141 = vcombine.low %v355, %v362
    %v2142 = vcombine.low %v369, %v376
    %v2144 = vunpack.c.l.s4 1983009808
    %v2145 = vunpack.c.0.s8 %v2144
    %v2146 = vlaneseq
    %v2147 = vshrl.u32 %v2146, 7
    %v2148 = vsub.s32 %v2145, %v2147
    %v2149 = vrot.slane %v2141, %v2148
    %v2151 = vunpack.c.l.s4 1983009808
    %v2152 = vunpack.c.0.s8 %v2151
    %v2153 = vlaneseq
    %v2154 = vshrl.u32 %v2153, 7
    %v2155 = vsub.s32 %v2152, %v2154
    %v2156 = vrot.slane %v2142, %v2155
    %v2157 = vcombine.low %v2149, %v2156
    %v2158 = vcombine.low %v383, %v390
    %v2159 = vcombine.low %v397, %v404
    %v2161 = vunpack.c.l.s4 1983009808
    %v2162 = vunpack.c.0.s8 %v2161
    %v2163 = vlaneseq
    %v2164 = vshrl.u32 %v2163, 7
    %v2165 = vsub.s32 %v2162, %v2164
    %v2166 = vrot.slane %v2158, %v2165
    %v2168 = vunpack.c.l.s4 1983009808
    %v2169 = vunpack.c.0.s8 %v2168
    %v2170 = vlaneseq
    %v2171 = vshrl.u32 %v2170, 7
    %v2172 = vsub.s32 %v2169, %v2171
    %v2173 = vrot.slane %v2159, %v2172
    %v2174 = vcombine.low %v2166, %v2173
    %v2175 = vcombine.low %v411, %v418
    %v2176 = vcombine.low %v425, %v432
    %v2178 = vunpack.c.l.s4 1983009808
    %v2179 = vunpack.c.0.s8 %v2178
    %v2180 = vlaneseq
    %v2181 = vshrl.u32 %v2180, 7
    %v2182 = vsub.s32 %v2179, %v2181
    %v2183 = vrot.slane %v2175, %v2182
    %v2185 = vunpack.c.l.s4 1983009808
    %v2186 = vunpack.c.0.s8 %v2185
    %v2187 = vlaneseq
    %v2188 = vshrl.u32 %v2187, 7
    %v2189 = vsub.s32 %v2186, %v2188
    %v2190 = vrot.slane %v2176, %v2189
    %v2191 = vcombine.low %v2183, %v2190
    %v2192 = vcombine.low %v439, %v446
    %v2193 = vcombine.low %v453, %v460
    %v2195 = vunpack.c.l.s4 1983009808
    %v2196 = vunpack.c.0.s8 %v2195
    %v2197 = vlaneseq
    %v2198 = vshrl.u32 %v2197, 7
    %v2199 = vsub.s32 %v2196, %v2198
    %v2200 = vrot.slane %v2192, %v2199
    %v2202 = vunpack.c.l.s4 1983009808
    %v2203 = vunpack.c.0.s8 %v2202
    %v2204 = vlaneseq
    %v2205 = vshrl.u32 %v2204, 7
    %v2206 = vsub.s32 %v2203, %v2205
    %v2207 = vrot.slane %v2193, %v2206
    %v2208 = vcombine.low %v2200, %v2207
    %v2209 = vcombine.low %v467, %v474
    %v2210 = vcombine.low %v481, %v488
    %v2212 = vunpack.c.l.s4 1983009808
    %v2213 = vunpack.c.0.s8 %v2212
    %v2214 = vlaneseq
    %v2215 = vshrl.u32 %v2214, 7
    %v2216 = vsub.s32 %v2213, %v2215
    %v2217 = vrot.slane %v2209, %v2216
    %v2219 = vunpack.c.l.s4 1983009808
    %v2220 = vunpack.c.0.s8 %v2219
    %v2221 = vlaneseq
    %v2222 = vshrl.u32 %v2221, 7
    %v2223 = vsub.s32 %v2220, %v2222
    %v2224 = vrot.slane %v2210, %v2223
    %v2225 = vcombine.low %v2217, %v2224
    %v2226 = vcombine.low %v495, %v502
    %v2227 = vcombine.low %v509, %v516
    %v2229 = vunpack.c.l.s4 1983009808
    %v2230 = vunpack.c.0.s8 %v2229
    %v2231 = vlaneseq
    %v2232 = vshrl.u32 %v2231, 7
    %v2233 = vsub.s32 %v2230, %v2232
    %v2234 = vrot.slane %v2226, %v2233
    %v2236 = vunpack.c.l.s4 1983009808
    %v2237 = vunpack.c.0.s8 %v2236
    %v2238 = vlaneseq
    %v2239 = vshrl.u32 %v2238, 7
    %v2240 = vsub.s32 %v2237, %v2239
    %v2241 = vrot.slane %v2227, %v2240
    %v2242 = vcombine.low %v2234, %v2241
    %v2243 = vcombine.low %v523, %v530
    %v2244 = vcombine.low %v537, %v544
    %v2246 = vunpack.c.l.s4 1983009808
    %v2247 = vunpack.c.0.s8 %v2246
    %v2248 = vlaneseq
    %v2249 = vshrl.u32 %v2248, 7
    %v2250 = vsub.s32 %v2247, %v2249
    %v2251 = vrot.slane %v2243, %v2250
    %v2253 = vunpack.c.l.s4 1983009808
    %v2254 = vunpack.c.0.s8 %v2253
    %v2255 = vlaneseq
    %v2256 = vshrl.u32 %v2255, 7
    %v2257 = vsub.s32 %v2254, %v2256
    %v2258 = vrot.slane %v2244, %v2257
    %v2259 = vcombine.low %v2251, %v2258
    %v2260 = vcombine.low %v551, %v558
    %v2261 = vcombine.low %v565, %v572
    %v2263 = vunpack.c.l.s4 1983009808
    %v2264 = vunpack.c.0.s8 %v2263
    %v2265 = vlaneseq
    %v2266 = vshrl.u32 %v2265, 7
    %v2267 = vsub.s32 %v2264, %v2266
    %v2268 = vrot.slane %v2260, %v2267
    %v2270 = vunpack.c.l.s4 1983009808
    %v2271 = vunpack.c.0.s8 %v2270
    %v2272 = vlaneseq
    %v2273 = vshrl.u32 %v2272, 7
    %v2274 = vsub.s32 %v2271, %v2273
    %v2275 = vrot.slane %v2261, %v2274
    %v2276 = vcombine.low %v2268, %v2275
    %v2277 = vcombine.low %v579, %v586
    %v2278 = vcombine.low %v593, %v600
    %v2280 = vunpack.c.l.s4 1983009808
    %v2281 = vunpack.c.0.s8 %v2280
    %v2282 = vlaneseq
    %v2283 = vshrl.u32 %v2282, 7
    %v2284 = vsub.s32 %v2281, %v2283
    %v2285 = vrot.slane %v2277, %v2284
    %v2287 = vunpack.c.l.s4 1983009808
    %v2288 = vunpack.c.0.s8 %v2287
    %v2289 = vlaneseq
    %v2290 = vshrl.u32 %v2289, 7
    %v2291 = vsub.s32 %v2288, %v2290
    %v2292 = vrot.slane %v2278, %v2291
    %v2293 = vcombine.low %v2285, %v2292
    %v2294 = vcombine.low %v607, %v614
    %v2295 = vcombine.low %v621, %v628
    %v2297 = vunpack.c.l.s4 1983009808
    %v2298 = vunpack.c.0.s8 %v2297
    %v2299 = vlaneseq
    %v2300 = vshrl.u32 %v2299, 7
    %v2301 = vsub.s32 %v2298, %v2300
    %v2302 = vrot.slane %v2294, %v2301
    %v2304 = vunpack.c.l.s4 1983009808
    %v2305 = vunpack.c.0.s8 %v2304
    %v2306 = vlaneseq
    %v2307 = vshrl.u32 %v2306, 7
    %v2308 = vsub.s32 %v2305, %v2307
    %v2309 = vrot.slane %v2295, %v2308
    %v2310 = vcombine.low %v2302, %v2309
    %v2311 = vcombine.low %v635, %v642
    %v2312 = vcombine.low %v649, %v656
    %v2314 = vunpack.c.l.s4 1983009808
    %v2315 = vunpack.c.0.s8 %v2314
    %v2316 = vlaneseq
    %v2317 = vshrl.u32 %v2316, 7
    %v2318 = vsub.s32 %v2315, %v2317
    %v2319 = vrot.slane %v2311, %v2318
    %v2321 = vunpack.c.l.s4 1983009808
    %v2322 = vunpack.c.0.s8 %v2321
    %v2323 = vlaneseq
    %v2324 = vshrl.u32 %v2323, 7
    %v2325 = vsub.s32 %v2322, %v2324
    %v2326 = vrot.slane %v2312, %v2325
    %v2327 = vcombine.low %v2319, %v2326
    %v2328 = vcombine.low %v663, %v670
    %v2329 = vcombine.low %v677, %v684
    %v2331 = vunpack.c.l.s4 1983009808
    %v2332 = vunpack.c.0.s8 %v2331
    %v2333 = vlaneseq
    %v2334 = vshrl.u32 %v2333, 7
    %v2335 = vsub.s32 %v2332, %v2334
    %v2336 = vrot.slane %v2328, %v2335
    %v2338 = vunpack.c.l.s4 1983009808
    %v2339 = vunpack.c.0.s8 %v2338
    %v2340 = vlaneseq
    %v2341 = vshrl.u32 %v2340, 7
    %v2342 = vsub.s32 %v2339, %v2341
    %v2343 = vrot.slane %v2329, %v2342
    %v2344 = vcombine.low %v2336, %v2343
    %v2345 = vcombine.low %v691, %v698
    %v2346 = vcombine.low %v705, %v712
    %v2348 = vunpack.c.l.s4 1983009808
    %v2349 = vunpack.c.0.s8 %v2348
    %v2350 = vlaneseq
    %v2351 = vshrl.u32 %v2350, 7
    %v2352 = vsub.s32 %v2349, %v2351
    %v2353 = vrot.slane %v2345, %v2352
    %v2355 = vunpack.c.l.s4 1983009808
    %v2356 = vunpack.c.0.s8 %v2355
    %v2357 = vlaneseq
    %v2358 = vshrl.u32 %v2357, 7
    %v2359 = vsub.s32 %v2356, %v2358
    %v2360 = vrot.slane %v2346, %v2359
    %v2361 = vcombine.low %v2353, %v2360
    %v2362 = vcombine.low %v719, %v726
    %v2363 = vcombine.low %v733, %v740
    %v2365 = vunpack.c.l.s4 1983009808
    %v2366 = vunpack.c.0.s8 %v2365
    %v2367 = vlaneseq
    %v2368 = vshrl.u32 %v2367, 7
    %v2369 = vsub.s32 %v2366, %v2368
    %v2370 = vrot.slane %v2362, %v2369
    %v2372 = vunpack.c.l.s4 1983009808
    %v2373 = vunpack.c.0.s8 %v2372
    %v2374 = vlaneseq
    %v2375 = vshrl.u32 %v2374, 7
    %v2376 = vsub.s32 %v2373, %v2375
    %v2377 = vrot.slane %v2363, %v2376
    %v2378 = vcombine.low %v2370, %v2377
    %v2379 = vcombine.low %v747, %v754
    %v2380 = vcombine.low %v761, %v768
    %v2382 = vunpack.c.l.s4 1983009808
    %v2383 = vunpack.c.0.s8 %v2382
    %v2384 = vlaneseq
    %v2385 = vshrl.u32 %v2384, 7
    %v2386 = vsub.s32 %v2383, %v2385
    %v2387 = vrot.slane %v2379, %v2386
    %v2389 = vunpack.c.l.s4 1983009808
    %v2390 = vunpack.c.0.s8 %v2389
    %v2391 = vlaneseq
    %v2392 = vshrl.u32 %v2391, 7
    %v2393 = vsub.s32 %v2390, %v2392
    %v2394 = vrot.slane %v2380, %v2393
    %v2395 = vcombine.low %v2387, %v2394
    %v2396 = vcombine.low %v775, %v782
    %v2397 = vcombine.low %v789, %v796
    %v2399 = vunpack.c.l.s4 1983009808
    %v2400 = vunpack.c.0.s8 %v2399
    %v2401 = vlaneseq
    %v2402 = vshrl.u32 %v2401, 7
    %v2403 = vsub.s32 %v2400, %v2402
    %v2404 = vrot.slane %v2396, %v2403
    %v2406 = vunpack.c.l.s4 1983009808
    %v2407 = vunpack.c.0.s8 %v2406
    %v2408 = vlaneseq
    %v2409 = vshrl.u32 %v2408, 7
    %v2410 = vsub.s32 %v2407, %v2409
    %v2411 = vrot.slane %v2397, %v2410
    %v2412 = vcombine.low %v2404, %v2411
    %v2413 = vcombine.low %v803, %v810
    %v2414 = vcombine.low %v817, %v824
    %v2416 = vunpack.c.l.s4 1983009808
    %v2417 = vunpack.c.0.s8 %v2416
    %v2418 = vlaneseq
    %v2419 = vshrl.u32 %v2418, 7
    %v2420 = vsub.s32 %v2417, %v2419
    %v2421 = vrot.slane %v2413, %v2420
    %v2423 = vunpack.c.l.s4 1983009808
    %v2424 = vunpack.c.0.s8 %v2423
    %v2425 = vlaneseq
    %v2426 = vshrl.u32 %v2425, 7
    %v2427 = vsub.s32 %v2424, %v2426
    %v2428 = vrot.slane %v2414, %v2427
    %v2429 = vcombine.low %v2421, %v2428
    %v2430 = vcombine.low %v831, %v838
    %v2431 = vcombine.low %v845, %v852
    %v2433 = vunpack.c.l.s4 1983009808
    %v2434 = vunpack.c.0.s8 %v2433
    %v2435 = vlaneseq
    %v2436 = vshrl.u32 %v2435, 7
    %v2437 = vsub.s32 %v2434, %v2436
    %v2438 = vrot.slane %v2430, %v2437
    %v2440 = vunpack.c.l.s4 1983009808
    %v2441 = vunpack.c.0.s8 %v2440
    %v2442 = vlaneseq
    %v2443 = vshrl.u32 %v2442, 7
    %v2444 = vsub.s32 %v2441, %v2443
    %v2445 = vrot.slane %v2431, %v2444
    %v2446 = vcombine.low %v2438, %v2445
    %v2447 = vcombine.low %v859, %v866
    %v2448 = vcombine.low %v873, %v880
    %v2450 = vunpack.c.l.s4 1983009808
    %v2451 = vunpack.c.0.s8 %v2450
    %v2452 = vlaneseq
    %v2453 = vshrl.u32 %v2452, 7
    %v2454 = vsub.s32 %v2451, %v2453
    %v2455 = vrot.slane %v2447, %v2454
    %v2457 = vunpack.c.l.s4 1983009808
    %v2458 = vunpack.c.0.s8 %v2457
    %v2459 = vlaneseq
    %v2460 = vshrl.u32 %v2459, 7
    %v2461 = vsub.s32 %v2458, %v2460
    %v2462 = vrot.slane %v2448, %v2461
    %v2463 = vcombine.low %v2455, %v2462
    %v2464 = vcombine.low %v887, %v894
    %v2465 = vcombine.low %v901, %v908
    %v2467 = vunpack.c.l.s4 1983009808
    %v2468 = vunpack.c.0.s8 %v2467
    %v2469 = vlaneseq
    %v2470 = vshrl.u32 %v2469, 7
    %v2471 = vsub.s32 %v2468, %v2470
    %v2472 = vrot.slane %v2464, %v2471
    %v2474 = vunpack.c.l.s4 1983009808
    %v2475 = vunpack.c.0.s8 %v2474
    %v2476 = vlaneseq
    %v2477 = vshrl.u32 %v2476, 7
    %v2478 = vsub.s32 %v2475, %v2477
    %v2479 = vrot.slane %v2465, %v2478
    %v2480 = vcombine.low %v2472, %v2479
    %v2481 = vcombine.low %v915, %v922
    %v2482 = vcombine.low %v929, %v936
    %v2484 = vunpack.c.l.s4 1983009808
    %v2485 = vunpack.c.0.s8 %v2484
    %v2486 = vlaneseq
    %v2487 = vshrl.u32 %v2486, 7
    %v2488 = vsub.s32 %v2485, %v2487
    %v2489 = vrot.slane %v2481, %v2488
    %v2491 = vunpack.c.l.s4 1983009808
    %v2492 = vunpack.c.0.s8 %v2491
    %v2493 = vlaneseq
    %v2494 = vshrl.u32 %v2493, 7
    %v2495 = vsub.s32 %v2492, %v2494
    %v2496 = vrot.slane %v2482, %v2495
    %v2497 = vcombine.low %v2489, %v2496
    %v2498 = vcombine.low %v943, %v950
    %v2499 = vcombine.low %v957, %v964
    %v2501 = vunpack.c.l.s4 1983009808
    %v2502 = vunpack.c.0.s8 %v2501
    %v2503 = vlaneseq
    %v2504 = vshrl.u32 %v2503, 7
    %v2505 = vsub.s32 %v2502, %v2504
    %v2506 = vrot.slane %v2498, %v2505
    %v2508 = vunpack.c.l.s4 1983009808
    %v2509 = vunpack.c.0.s8 %v2508
    %v2510 = vlaneseq
    %v2511 = vshrl.u32 %v2510, 7
    %v2512 = vsub.s32 %v2509, %v2511
    %v2513 = vrot.slane %v2499, %v2512
    %v2514 = vcombine.low %v2506, %v2513
    %v2515 = vcombine.low %v971, %v978
    %v2516 = vcombine.low %v985, %v992
    %v2518 = vunpack.c.l.s4 1983009808
    %v2519 = vunpack.c.0.s8 %v2518
    %v2520 = vlaneseq
    %v2521 = vshrl.u32 %v2520, 7
    %v2522 = vsub.s32 %v2519, %v2521
    %v2523 = vrot.slane %v2515, %v2522
    %v2525 = vunpack.c.l.s4 1983009808
    %v2526 = vunpack.c.0.s8 %v2525
    %v2527 = vlaneseq
    %v2528 = vshrl.u32 %v2527, 7
    %v2529 = vsub.s32 %v2526, %v2528
    %v2530 = vrot.slane %v2516, %v2529
    %v2531 = vcombine.low %v2523, %v2530
    %v2532 = vcombine.low %v999, %v1006
    %v2533 = vcombine.low %v1013, %v1020
    %v2535 = vunpack.c.l.s4 1983009808
    %v2536 = vunpack.c.0.s8 %v2535
    %v2537 = vlaneseq
    %v2538 = vshrl.u32 %v2537, 7
    %v2539 = vsub.s32 %v2536, %v2538
    %v2540 = vrot.slane %v2532, %v2539
    %v2542 = vunpack.c.l.s4 1983009808
    %v2543 = vunpack.c.0.s8 %v2542
    %v2544 = vlaneseq
    %v2545 = vshrl.u32 %v2544, 7
    %v2546 = vsub.s32 %v2543, %v2545
    %v2547 = vrot.slane %v2533, %v2546
    %v2548 = vcombine.low %v2540, %v2547
    %v2549 = vcombine.low %v1027, %v1034
    %v2550 = vcombine.low %v1041, %v1048
    %v2552 = vunpack.c.l.s4 1983009808
    %v2553 = vunpack.c.0.s8 %v2552
    %v2554 = vlaneseq
    %v2555 = vshrl.u32 %v2554, 7
    %v2556 = vsub.s32 %v2553, %v2555
    %v2557 = vrot.slane %v2549, %v2556
    %v2559 = vunpack.c.l.s4 1983009808
    %v2560 = vunpack.c.0.s8 %v2559
    %v2561 = vlaneseq
    %v2562 = vshrl.u32 %v2561, 7
    %v2563 = vsub.s32 %v2560, %v2562
    %v2564 = vrot.slane %v2550, %v2563
    %v2565 = vcombine.low %v2557, %v2564
    %v2566 = vcombine.low %v1055, %v1062
    %v2567 = vcombine.low %v1069, %v1076
    %v2569 = vunpack.c.l.s4 1983009808
    %v2570 = vunpack.c.0.s8 %v2569
    %v2571 = vlaneseq
    %v2572 = vshrl.u32 %v2571, 7
    %v2573 = vsub.s32 %v2570, %v2572
    %v2574 = vrot.slane %v2566, %v2573
    %v2576 = vunpack.c.l.s4 1983009808
    %v2577 = vunpack.c.0.s8 %v2576
    %v2578 = vlaneseq
    %v2579 = vshrl.u32 %v2578, 7
    %v2580 = vsub.s32 %v2577, %v2579
    %v2581 = vrot.slane %v2567, %v2580
    %v2582 = vcombine.low %v2574, %v2581
    %v2583 = vcombine.low %v1083, %v1090
    %v2584 = vcombine.low %v1097, %v1104
    %v2586 = vunpack.c.l.s4 1983009808
    %v2587 = vunpack.c.0.s8 %v2586
    %v2588 = vlaneseq
    %v2589 = vshrl.u32 %v2588, 7
    %v2590 = vsub.s32 %v2587, %v2589
    %v2591 = vrot.slane %v2583, %v2590
    %v2593 = vunpack.c.l.s4 1983009808
    %v2594 = vunpack.c.0.s8 %v2593
    %v2595 = vlaneseq
    %v2596 = vshrl.u32 %v2595, 7
    %v2597 = vsub.s32 %v2594, %v2596
    %v2598 = vrot.slane %v2584, %v2597
    %v2599 = vcombine.low %v2591, %v2598
    %v2600 = vcombine.low %v1111, %v1118
    %v2601 = vcombine.low %v1125, %v1132
    %v2603 = vunpack.c.l.s4 1983009808
    %v2604 = vunpack.c.0.s8 %v2603
    %v2605 = vlaneseq
    %v2606 = vshrl.u32 %v2605, 7
    %v2607 = vsub.s32 %v2604, %v2606
    %v2608 = vrot.slane %v2600, %v2607
    %v2610 = vunpack.c.l.s4 1983009808
    %v2611 = vunpack.c.0.s8 %v2610
    %v2612 = vlaneseq
    %v2613 = vshrl.u32 %v2612, 7
    %v2614 = vsub.s32 %v2611, %v2613
    %v2615 = vrot.slane %v2601, %v2614
    %v2616 = vcombine.low %v2608, %v2615
    %v2617 = vcombine.low %v1139, %v1146
    %v2618 = vcombine.low %v1153, %v1160
    %v2620 = vunpack.c.l.s4 1983009808
    %v2621 = vunpack.c.0.s8 %v2620
    %v2622 = vlaneseq
    %v2623 = vshrl.u32 %v2622, 7
    %v2624 = vsub.s32 %v2621, %v2623
    %v2625 = vrot.slane %v2617, %v2624
    %v2627 = vunpack.c.l.s4 1983009808
    %v2628 = vunpack.c.0.s8 %v2627
    %v2629 = vlaneseq
    %v2630 = vshrl.u32 %v2629, 7
    %v2631 = vsub.s32 %v2628, %v2630
    %v2632 = vrot.slane %v2618, %v2631
    %v2633 = vcombine.low %v2625, %v2632
    %v2634 = vcombine.low %v1167, %v1174
    %v2635 = vcombine.low %v1181, %v1188
    %v2637 = vunpack.c.l.s4 1983009808
    %v2638 = vunpack.c.0.s8 %v2637
    %v2639 = vlaneseq
    %v2640 = vshrl.u32 %v2639, 7
    %v2641 = vsub.s32 %v2638, %v2640
    %v2642 = vrot.slane %v2634, %v2641
    %v2644 = vunpack.c.l.s4 1983009808
    %v2645 = vunpack.c.0.s8 %v2644
    %v2646 = vlaneseq
    %v2647 = vshrl.u32 %v2646, 7
    %v2648 = vsub.s32 %v2645, %v2647
    %v2649 = vrot.slane %v2635, %v2648
    %v2650 = vcombine.low %v2642, %v2649
    %v2651 = vcombine.low %v1195, %v1202
    %v2652 = vcombine.low %v1209, %v1216
    %v2654 = vunpack.c.l.s4 1983009808
    %v2655 = vunpack.c.0.s8 %v2654
    %v2656 = vlaneseq
    %v2657 = vshrl.u32 %v2656, 7
    %v2658 = vsub.s32 %v2655, %v2657
    %v2659 = vrot.slane %v2651, %v2658
    %v2661 = vunpack.c.l.s4 1983009808
    %v2662 = vunpack.c.0.s8 %v2661
    %v2663 = vlaneseq
    %v2664 = vshrl.u32 %v2663, 7
    %v2665 = vsub.s32 %v2662, %v2664
    %v2666 = vrot.slane %v2652, %v2665
    %v2667 = vcombine.low %v2659, %v2666
    %v2668 = vcombine.low %v1223, %v1230
    %v2669 = vcombine.low %v1237, %v1244
    %v2671 = vunpack.c.l.s4 1983009808
    %v2672 = vunpack.c.0.s8 %v2671
    %v2673 = vlaneseq
    %v2674 = vshrl.u32 %v2673, 7
    %v2675 = vsub.s32 %v2672, %v2674
    %v2676 = vrot.slane %v2668, %v2675
    %v2678 = vunpack.c.l.s4 1983009808
    %v2679 = vunpack.c.0.s8 %v2678
    %v2680 = vlaneseq
    %v2681 = vshrl.u32 %v2680, 7
    %v2682 = vsub.s32 %v2679, %v2681
    %v2683 = vrot.slane %v2669, %v2682
    %v2684 = vcombine.low %v2676, %v2683
    %v2685 = vcombine.low %v1251, %v1258
    %v2686 = vcombine.low %v1265, %v1272
    %v2688 = vunpack.c.l.s4 1983009808
    %v2689 = vunpack.c.0.s8 %v2688
    %v2690 = vlaneseq
    %v2691 = vshrl.u32 %v2690, 7
    %v2692 = vsub.s32 %v2689, %v2691
    %v2693 = vrot.slane %v2685, %v2692
    %v2695 = vunpack.c.l.s4 1983009808
    %v2696 = vunpack.c.0.s8 %v2695
    %v2697 = vlaneseq
    %v2698 = vshrl.u32 %v2697, 7
    %v2699 = vsub.s32 %v2696, %v2698
    %v2700 = vrot.slane %v2686, %v2699
    %v2701 = vcombine.low %v2693, %v2700
    %v2702 = vcombine.low %v1279, %v1286
    %v2703 = vcombine.low %v1293, %v1300
    %v2705 = vunpack.c.l.s4 1983009808
    %v2706 = vunpack.c.0.s8 %v2705
    %v2707 = vlaneseq
    %v2708 = vshrl.u32 %v2707, 7
    %v2709 = vsub.s32 %v2706, %v2708
    %v2710 = vrot.slane %v2702, %v2709
    %v2712 = vunpack.c.l.s4 1983009808
    %v2713 = vunpack.c.0.s8 %v2712
    %v2714 = vlaneseq
    %v2715 = vshrl.u32 %v2714, 7
    %v2716 = vsub.s32 %v2713, %v2715
    %v2717 = vrot.slane %v2703, %v2716
    %v2718 = vcombine.low %v2710, %v2717
    %v2719 = vcombine.low %v1307, %v1314
    %v2720 = vcombine.low %v1321, %v1328
    %v2722 = vunpack.c.l.s4 1983009808
    %v2723 = vunpack.c.0.s8 %v2722
    %v2724 = vlaneseq
    %v2725 = vshrl.u32 %v2724, 7
    %v2726 = vsub.s32 %v2723, %v2725
    %v2727 = vrot.slane %v2719, %v2726
    %v2729 = vunpack.c.l.s4 1983009808
    %v2730 = vunpack.c.0.s8 %v2729
    %v2731 = vlaneseq
    %v2732 = vshrl.u32 %v2731, 7
    %v2733 = vsub.s32 %v2730, %v2732
    %v2734 = vrot.slane %v2720, %v2733
    %v2735 = vcombine.low %v2727, %v2734
    %v2736 = vcombine.low %v1335, %v1342
    %v2737 = vcombine.low %v1349, %v1356
    %v2739 = vunpack.c.l.s4 1983009808
    %v2740 = vunpack.c.0.s8 %v2739
    %v2741 = vlaneseq
    %v2742 = vshrl.u32 %v2741, 7
    %v2743 = vsub.s32 %v2740, %v2742
    %v2744 = vrot.slane %v2736, %v2743
    %v2746 = vunpack.c.l.s4 1983009808
    %v2747 = vunpack.c.0.s8 %v2746
    %v2748 = vlaneseq
    %v2749 = vshrl.u32 %v2748, 7
    %v2750 = vsub.s32 %v2747, %v2749
    %v2751 = vrot.slane %v2737, %v2750
    %v2752 = vcombine.low %v2744, %v2751
    %v2753 = vcombine.low %v1363, %v1370
    %v2754 = vcombine.low %v1377, %v1384
    %v2756 = vunpack.c.l.s4 1983009808
    %v2757 = vunpack.c.0.s8 %v2756
    %v2758 = vlaneseq
    %v2759 = vshrl.u32 %v2758, 7
    %v2760 = vsub.s32 %v2757, %v2759
    %v2761 = vrot.slane %v2753, %v2760
    %v2763 = vunpack.c.l.s4 1983009808
    %v2764 = vunpack.c.0.s8 %v2763
    %v2765 = vlaneseq
    %v2766 = vshrl.u32 %v2765, 7
    %v2767 = vsub.s32 %v2764, %v2766
    %v2768 = vrot.slane %v2754, %v2767
    %v2769 = vcombine.low %v2761, %v2768
    %v2770 = vcombine.low %v1391, %v1398
    %v2771 = vcombine.low %v1405, %v1412
    %v2773 = vunpack.c.l.s4 1983009808
    %v2774 = vunpack.c.0.s8 %v2773
    %v2775 = vlaneseq
    %v2776 = vshrl.u32 %v2775, 7
    %v2777 = vsub.s32 %v2774, %v2776
    %v2778 = vrot.slane %v2770, %v2777
    %v2780 = vunpack.c.l.s4 1983009808
    %v2781 = vunpack.c.0.s8 %v2780
    %v2782 = vlaneseq
    %v2783 = vshrl.u32 %v2782, 7
    %v2784 = vsub.s32 %v2781, %v2783
    %v2785 = vrot.slane %v2771, %v2784
    %v2786 = vcombine.low %v2778, %v2785
    %v2787 = vcombine.low %v1419, %v1426
    %v2788 = vcombine.low %v1433, %v1440
    %v2790 = vunpack.c.l.s4 1983009808
    %v2791 = vunpack.c.0.s8 %v2790
    %v2792 = vlaneseq
    %v2793 = vshrl.u32 %v2792, 7
    %v2794 = vsub.s32 %v2791, %v2793
    %v2795 = vrot.slane %v2787, %v2794
    %v2797 = vunpack.c.l.s4 1983009808
    %v2798 = vunpack.c.0.s8 %v2797
    %v2799 = vlaneseq
    %v2800 = vshrl.u32 %v2799, 7
    %v2801 = vsub.s32 %v2798, %v2800
    %v2802 = vrot.slane %v2788, %v2801
    %v2803 = vcombine.low %v2795, %v2802
    %v2804 = vcombine.low %v1447, %v1454
    %v2805 = vcombine.low %v1461, %v1468
    %v2807 = vunpack.c.l.s4 1983009808
    %v2808 = vunpack.c.0.s8 %v2807
    %v2809 = vlaneseq
    %v2810 = vshrl.u32 %v2809, 7
    %v2811 = vsub.s32 %v2808, %v2810
    %v2812 = vrot.slane %v2804, %v2811
    %v2814 = vunpack.c.l.s4 1983009808
    %v2815 = vunpack.c.0.s8 %v2814
    %v2816 = vlaneseq
    %v2817 = vshrl.u32 %v2816, 7
    %v2818 = vsub.s32 %v2815, %v2817
    %v2819 = vrot.slane %v2805, %v2818
    %v2820 = vcombine.low %v2812, %v2819
    %v2821 = vcombine.low %v1475, %v1482
    %v2822 = vcombine.low %v1489, %v1496
    %v2824 = vunpack.c.l.s4 1983009808
    %v2825 = vunpack.c.0.s8 %v2824
    %v2826 = vlaneseq
    %v2827 = vshrl.u32 %v2826, 7
    %v2828 = vsub.s32 %v2825, %v2827
    %v2829 = vrot.slane %v2821, %v2828
    %v2831 = vunpack.c.l.s4 1983009808
    %v2832 = vunpack.c.0.s8 %v2831
    %v2833 = vlaneseq
    %v2834 = vshrl.u32 %v2833, 7
    %v2835 = vsub.s32 %v2832, %v2834
    %v2836 = vrot.slane %v2822, %v2835
    %v2837 = vcombine.low %v2829, %v2836
    %v2838 = vcombine.low %v1503, %v1510
    %v2839 = vcombine.low %v1517, %v1524
    %v2841 = vunpack.c.l.s4 1983009808
    %v2842 = vunpack.c.0.s8 %v2841
    %v2843 = vlaneseq
    %v2844 = vshrl.u32 %v2843, 7
    %v2845 = vsub.s32 %v2842, %v2844
    %v2846 = vrot.slane %v2838, %v2845
    %v2848 = vunpack.c.l.s4 1983009808
    %v2849 = vunpack.c.0.s8 %v2848
    %v2850 = vlaneseq
    %v2851 = vshrl.u32 %v2850, 7
    %v2852 = vsub.s32 %v2849, %v2851
    %v2853 = vrot.slane %v2839, %v2852
    %v2854 = vcombine.low %v2846, %v2853
    %v2855 = vcombine.low %v1531, %v1538
    %v2856 = vcombine.low %v1545, %v1552
    %v2858 = vunpack.c.l.s4 1983009808
    %v2859 = vunpack.c.0.s8 %v2858
    %v2860 = vlaneseq
    %v2861 = vshrl.u32 %v2860, 7
    %v2862 = vsub.s32 %v2859, %v2861
    %v2863 = vrot.slane %v2855, %v2862
    %v2865 = vunpack.c.l.s4 1983009808
    %v2866 = vunpack.c.0.s8 %v2865
    %v2867 = vlaneseq
    %v2868 = vshrl.u32 %v2867, 7
    %v2869 = vsub.s32 %v2866, %v2868
    %v2870 = vrot.slane %v2856, %v2869
    %v2871 = vcombine.low %v2863, %v2870
    %v2872 = vcombine.low %v1559, %v1566
    %v2873 = vcombine.low %v1573, %v1580
    %v2875 = vunpack.c.l.s4 1983009808
    %v2876 = vunpack.c.0.s8 %v2875
    %v2877 = vlaneseq
    %v2878 = vshrl.u32 %v2877, 7
    %v2879 = vsub.s32 %v2876, %v2878
    %v2880 = vrot.slane %v2872, %v2879
    %v2882 = vunpack.c.l.s4 1983009808
    %v2883 = vunpack.c.0.s8 %v2882
    %v2884 = vlaneseq
    %v2885 = vshrl.u32 %v2884, 7
    %v2886 = vsub.s32 %v2883, %v2885
    %v2887 = vrot.slane %v2873, %v2886
    %v2888 = vcombine.low %v2880, %v2887
    %v2889 = vcombine.low %v1587, %v1594
    %v2890 = vcombine.low %v1601, %v1608
    %v2892 = vunpack.c.l.s4 1983009808
    %v2893 = vunpack.c.0.s8 %v2892
    %v2894 = vlaneseq
    %v2895 = vshrl.u32 %v2894, 7
    %v2896 = vsub.s32 %v2893, %v2895
    %v2897 = vrot.slane %v2889, %v2896
    %v2899 = vunpack.c.l.s4 1983009808
    %v2900 = vunpack.c.0.s8 %v2899
    %v2901 = vlaneseq
    %v2902 = vshrl.u32 %v2901, 7
    %v2903 = vsub.s32 %v2900, %v2902
    %v2904 = vrot.slane %v2890, %v2903
    %v2905 = vcombine.low %v2897, %v2904
    %v2906 = vcombine.low %v1615, %v1622
    %v2907 = vcombine.low %v1629, %v1636
    %v2909 = vunpack.c.l.s4 1983009808
    %v2910 = vunpack.c.0.s8 %v2909
    %v2911 = vlaneseq
    %v2912 = vshrl.u32 %v2911, 7
    %v2913 = vsub.s32 %v2910, %v2912
    %v2914 = vrot.slane %v2906, %v2913
    %v2916 = vunpack.c.l.s4 1983009808
    %v2917 = vunpack.c.0.s8 %v2916
    %v2918 = vlaneseq
    %v2919 = vshrl.u32 %v2918, 7
    %v2920 = vsub.s32 %v2917, %v2919
    %v2921 = vrot.slane %v2907, %v2920
    %v2922 = vcombine.low %v2914, %v2921
    %v2923 = vcombine.low %v1643, %v1650
    %v2924 = vcombine.low %v1657, %v1664
    %v2926 = vunpack.c.l.s4 1983009808
    %v2927 = vunpack.c.0.s8 %v2926
    %v2928 = vlaneseq
    %v2929 = vshrl.u32 %v2928, 7
    %v2930 = vsub.s32 %v2927, %v2929
    %v2931 = vrot.slane %v2923, %v2930
    %v2933 = vunpack.c.l.s4 1983009808
    %v2934 = vunpack.c.0.s8 %v2933
    %v2935 = vlaneseq
    %v2936 = vshrl.u32 %v2935, 7
    %v2937 = vsub.s32 %v2934, %v2936
    %v2938 = vrot.slane %v2924, %v2937
    %v2939 = vcombine.low %v2931, %v2938
    %v2940 = vcombine.low %v1671, %v1678
    %v2941 = vcombine.low %v1685, %v1692
    %v2943 = vunpack.c.l.s4 1983009808
    %v2944 = vunpack.c.0.s8 %v2943
    %v2945 = vlaneseq
    %v2946 = vshrl.u32 %v2945, 7
    %v2947 = vsub.s32 %v2944, %v2946
    %v2948 = vrot.slane %v2940, %v2947
    %v2950 = vunpack.c.l.s4 1983009808
    %v2951 = vunpack.c.0.s8 %v2950
    %v2952 = vlaneseq
    %v2953 = vshrl.u32 %v2952, 7
    %v2954 = vsub.s32 %v2951, %v2953
    %v2955 = vrot.slane %v2941, %v2954
    %v2956 = vcombine.low %v2948, %v2955
    %v2957 = vcombine.low %v1699, %v1706
    %v2958 = vcombine.low %v1713, %v1720
    %v2960 = vunpack.c.l.s4 1983009808
    %v2961 = vunpack.c.0.s8 %v2960
    %v2962 = vlaneseq
    %v2963 = vshrl.u32 %v2962, 7
    %v2964 = vsub.s32 %v2961, %v2963
    %v2965 = vrot.slane %v2957, %v2964
    %v2967 = vunpack.c.l.s4 1983009808
    %v2968 = vunpack.c.0.s8 %v2967
    %v2969 = vlaneseq
    %v2970 = vshrl.u32 %v2969, 7
    %v2971 = vsub.s32 %v2968, %v2970
    %v2972 = vrot.slane %v2958, %v2971
    %v2973 = vcombine.low %v2965, %v2972
    %v2974 = vcombine.low %v1727, %v1734
    %v2975 = vcombine.low %v1741, %v1748
    %v2977 = vunpack.c.l.s4 1983009808
    %v2978 = vunpack.c.0.s8 %v2977
    %v2979 = vlaneseq
    %v2980 = vshrl.u32 %v2979, 7
    %v2981 = vsub.s32 %v2978, %v2980
    %v2982 = vrot.slane %v2974, %v2981
    %v2984 = vunpack.c.l.s4 1983009808
    %v2985 = vunpack.c.0.s8 %v2984
    %v2986 = vlaneseq
    %v2987 = vshrl.u32 %v2986, 7
    %v2988 = vsub.s32 %v2985, %v2987
    %v2989 = vrot.slane %v2975, %v2988
    %v2990 = vcombine.low %v2982, %v2989
    %v2991 = vcombine.low %v1755, %v1762
    %v2992 = vcombine.low %v1769, %v1776
    %v2994 = vunpack.c.l.s4 1983009808
    %v2995 = vunpack.c.0.s8 %v2994
    %v2996 = vlaneseq
    %v2997 = vshrl.u32 %v2996, 7
    %v2998 = vsub.s32 %v2995, %v2997
    %v2999 = vrot.slane %v2991, %v2998
    %v3001 = vunpack.c.l.s4 1983009808
    %v3002 = vunpack.c.0.s8 %v3001
    %v3003 = vlaneseq
    %v3004 = vshrl.u32 %v3003, 7
    %v3005 = vsub.s32 %v3002, %v3004
    %v3006 = vrot.slane %v2992, %v3005
    %v3007 = vcombine.low %v2999, %v3006
    %v3008 = vcombine.low %v1783, %v1790
    %v3009 = vcombine.low %v1797, %v1804
    %v3011 = vunpack.c.l.s4 1983009808
    %v3012 = vunpack.c.0.s8 %v3011
    %v3013 = vlaneseq
    %v3014 = vshrl.u32 %v3013, 7
    %v3015 = vsub.s32 %v3012, %v3014
    %v3016 = vrot.slane %v3008, %v3015
    %v3018 = vunpack.c.l.s4 1983009808
    %v3019 = vunpack.c.0.s8 %v3018
    %v3020 = vlaneseq
    %v3021 = vshrl.u32 %v3020, 7
    %v3022 = vsub.s32 %v3019, %v3021
    %v3023 = vrot.slane %v3009, %v3022
    %v3024 = vcombine.low %v3016, %v3023
    %v3025 = vcombine.low %v1811, %v1818
    %v3026 = vcombine.low %v1825, %v1832
    %v3028 = vunpack.c.l.s4 1983009808
    %v3029 = vunpack.c.0.s8 %v3028
    %v3030 = vlaneseq
    %v3031 = vshrl.u32 %v3030, 7
    %v3032 = vsub.s32 %v3029, %v3031
    %v3033 = vrot.slane %v3025, %v3032
    %v3035 = vunpack.c.l.s4 1983009808
    %v3036 = vunpack.c.0.s8 %v3035
    %v3037 = vlaneseq
    %v3038 = vshrl.u32 %v3037, 7
    %v3039 = vsub.s32 %v3036, %v3038
    %v3040 = vrot.slane %v3026, %v3039
    %v3041 = vcombine.low %v3033, %v3040
    %v3042 = vcombine.low %v1839, %v1846
    %v3043 = vcombine.low %v1853, %v1860
    %v3045 = vunpack.c.l.s4 1983009808
    %v3046 = vunpack.c.0.s8 %v3045
    %v3047 = vlaneseq
    %v3048 = vshrl.u32 %v3047, 7
    %v3049 = vsub.s32 %v3046, %v3048
    %v3050 = vrot.slane %v3042, %v3049
    %v3052 = vunpack.c.l.s4 1983009808
    %v3053 = vunpack.c.0.s8 %v3052
    %v3054 = vlaneseq
    %v3055 = vshrl.u32 %v3054, 7
    %v3056 = vsub.s32 %v3053, %v3055
    %v3057 = vrot.slane %v3043, %v3056
    %v3058 = vcombine.low %v3050, %v3057
    %v3059 = vcombine.low %v1867, %v1874
    %v3060 = vcombine.low %v1881, %v1888
    %v3062 = vunpack.c.l.s4 1983009808
    %v3063 = vunpack.c.0.s8 %v3062
    %v3064 = vlaneseq
    %v3065 = vshrl.u32 %v3064, 7
    %v3066 = vsub.s32 %v3063, %v3065
    %v3067 = vrot.slane %v3059, %v3066
    %v3069 = vunpack.c.l.s4 1983009808
    %v3070 = vunpack.c.0.s8 %v3069
    %v3071 = vlaneseq
    %v3072 = vshrl.u32 %v3071, 7
    %v3073 = vsub.s32 %v3070, %v3072
    %v3074 = vrot.slane %v3060, %v3073
    %v3075 = vcombine.low %v3067, %v3074
    %v3076 = vcombine.low %v1895, %v1902
    %v3077 = vcombine.low %v1909, %v1916
    %v3079 = vunpack.c.l.s4 1983009808
    %v3080 = vunpack.c.0.s8 %v3079
    %v3081 = vlaneseq
    %v3082 = vshrl.u32 %v3081, 7
    %v3083 = vsub.s32 %v3080, %v3082
    %v3084 = vrot.slane %v3076, %v3083
    %v3086 = vunpack.c.l.s4 1983009808
    %v3087 = vunpack.c.0.s8 %v3086
    %v3088 = vlaneseq
    %v3089 = vshrl.u32 %v3088, 7
    %v3090 = vsub.s32 %v3087, %v3089
    %v3091 = vrot.slane %v3077, %v3090
    %v3092 = vcombine.low %v3084, %v3091
    %v3093 = vcombine.low %v1923, %v1930
    %v3094 = vcombine.low %v1937, %v1944
    %v3096 = vunpack.c.l.s4 1983009808
    %v3097 = vunpack.c.0.s8 %v3096
    %v3098 = vlaneseq
    %v3099 = vshrl.u32 %v3098, 7
    %v3100 = vsub.s32 %v3097, %v3099
    %v3101 = vrot.slane %v3093, %v3100
    %v3103 = vunpack.c.l.s4 1983009808
    %v3104 = vunpack.c.0.s8 %v3103
    %v3105 = vlaneseq
    %v3106 = vshrl.u32 %v3105, 7
    %v3107 = vsub.s32 %v3104, %v3106
    %v3108 = vrot.slane %v3094, %v3107
    %v3109 = vcombine.low %v3101, %v3108
    %v3110 = vcombine.low %v1951, %v1958
    %v3111 = vcombine.low %v1965, %v1972
    %v3113 = vunpack.c.l.s4 1983009808
    %v3114 = vunpack.c.0.s8 %v3113
    %v3115 = vlaneseq
    %v3116 = vshrl.u32 %v3115, 7
    %v3117 = vsub.s32 %v3114, %v3116
    %v3118 = vrot.slane %v3110, %v3117
    %v3120 = vunpack.c.l.s4 1983009808
    %v3121 = vunpack.c.0.s8 %v3120
    %v3122 = vlaneseq
    %v3123 = vshrl.u32 %v3122, 7
    %v3124 = vsub.s32 %v3121, %v3123
    %v3125 = vrot.slane %v3111, %v3124
    %v3126 = vcombine.low %v3118, %v3125
    %v3127 = vcombine.low %v1979, %v1986
    %v3128 = vcombine.low %v1993, %v2000
    %v3130 = vunpack.c.l.s4 1983009808
    %v3131 = vunpack.c.0.s8 %v3130
    %v3132 = vlaneseq
    %v3133 = vshrl.u32 %v3132, 7
    %v3134 = vsub.s32 %v3131, %v3133
    %v3135 = vrot.slane %v3127, %v3134
    %v3137 = vunpack.c.l.s4 1983009808
    %v3138 = vunpack.c.0.s8 %v3137
    %v3139 = vlaneseq
    %v3140 = vshrl.u32 %v3139, 7
    %v3141 = vsub.s32 %v3138, %v3140
    %v3142 = vrot.slane %v3128, %v3141
    %v3143 = vcombine.low %v3135, %v3142
    %v3144 = vcombine.low %v2007, %v2014
    %v3145 = vcombine.low %v2021, %v2028
    %v3147 = vunpack.c.l.s4 1983009808
    %v3148 = vunpack.c.0.s8 %v3147
    %v3149 = vlaneseq
    %v3150 = vshrl.u32 %v3149, 7
    %v3151 = vsub.s32 %v3148, %v3150
    %v3152 = vrot.slane %v3144, %v3151
    %v3154 = vunpack.c.l.s4 1983009808
    %v3155 = vunpack.c.0.s8 %v3154
    %v3156 = vlaneseq
    %v3157 = vshrl.u32 %v3156, 7
    %v3158 = vsub.s32 %v3155, %v3157
    %v3159 = vrot.slane %v3145, %v3158
    %v3160 = vcombine.low %v3152, %v3159
    %v3161 = vcombine.low %v2035, %v2042
    %v3162 = vcombine.low %v2049, %v2056
    %v3164 = vunpack.c.l.s4 1983009808
    %v3165 = vunpack.c.0.s8 %v3164
    %v3166 = vlaneseq
    %v3167 = vshrl.u32 %v3166, 7
    %v3168 = vsub.s32 %v3165, %v3167
    %v3169 = vrot.slane %v3161, %v3168
    %v3171 = vunpack.c.l.s4 1983009808
    %v3172 = vunpack.c.0.s8 %v3171
    %v3173 = vlaneseq
    %v3174 = vshrl.u32 %v3173, 7
    %v3175 = vsub.s32 %v3172, %v3174
    %v3176 = vrot.slane %v3162, %v3175
    %v3177 = vcombine.low %v3169, %v3176
    %v3178 = vcombine.low %v2063, %v2070
    %v3179 = vcombine.low %v2077, %v2084
    %v3181 = vunpack.c.l.s4 1983009808
    %v3182 = vunpack.c.0.s8 %v3181
    %v3183 = vlaneseq
    %v3184 = vshrl.u32 %v3183, 7
    %v3185 = vsub.s32 %v3182, %v3184
    %v3186 = vrot.slane %v3178, %v3185
    %v3188 = vunpack.c.l.s4 1983009808
    %v3189 = vunpack.c.0.s8 %v3188
    %v3190 = vlaneseq
    %v3191 = vshrl.u32 %v3190, 7
    %v3192 = vsub.s32 %v3189, %v3191
    %v3193 = vrot.slane %v3179, %v3192
    %v3194 = vcombine.low %v3186, %v3193
    %v3195 = vcombine.low %v2091, %v2098
    %v3196 = vcombine.low %v2105, %v2112
    %v3198 = vunpack.c.l.s4 1983009808
    %v3199 = vunpack.c.0.s8 %v3198
    %v3200 = vlaneseq
    %v3201 = vshrl.u32 %v3200, 7
    %v3202 = vsub.s32 %v3199, %v3201
    %v3203 = vrot.slane %v3195, %v3202
    %v3205 = vunpack.c.l.s4 1983009808
    %v3206 = vunpack.c.0.s8 %v3205
    %v3207 = vlaneseq
    %v3208 = vshrl.u32 %v3207, 7
    %v3209 = vsub.s32 %v3206, %v3208
    %v3210 = vrot.slane %v3196, %v3209
    %v3211 = vcombine.low %v3203, %v3210
    %v3212 = vcombine.low %v2119, %v2126
    %v3213 = vcombine.low %v2133, %v2140
    %v3215 = vunpack.c.l.s4 1983009808
    %v3216 = vunpack.c.0.s8 %v3215
    %v3217 = vlaneseq
    %v3218 = vshrl.u32 %v3217, 7
    %v3219 = vsub.s32 %v3216, %v3218
    %v3220 = vrot.slane %v3212, %v3219
    %v3222 = vunpack.c.l.s4 1983009808
    %v3223 = vunpack.c.0.s8 %v3222
    %v3224 = vlaneseq
    %v3225 = vshrl.u32 %v3224, 7
    %v3226 = vsub.s32 %v3223, %v3225
    %v3227 = vrot.slane %v3213, %v3226
    %v3228 = vcombine.low %v3220, %v3227
    %3229 = vset.pattern.permute.xlu0 0
    %3230 = vperm.xlu0 %3229, %v2157
    %v3231 = vpop.permute.xlu0 %3230
    %3232 = vset.pattern.permute.xlu0 0
    %3233 = vperm.xlu0 %3232, %v2174
    %v3234 = vpop.permute.xlu0 %3233
    %3235 = vset.pattern.permute.xlu0 0
    %3236 = vperm.xlu0 %3235, %v2191
    %v3237 = vpop.permute.xlu0 %3236
    %3238 = vset.pattern.permute.xlu0 0
    %3239 = vperm.xlu0 %3238, %v2208
    %v3240 = vpop.permute.xlu0 %3239
    %3241 = vset.pattern.permute.xlu0 0
    %3242 = vperm.xlu0 %3241, %v2225
    %v3243 = vpop.permute.xlu0 %3242
    %3244 = vset.pattern.permute.xlu0 0
    %3245 = vperm.xlu0 %3244, %v2242
    %v3246 = vpop.permute.xlu0 %3245
    %3247 = vset.pattern.permute.xlu0 0
    %3248 = vperm.xlu0 %3247, %v2259
    %v3249 = vpop.permute.xlu0 %3248
    %3250 = vset.pattern.permute.xlu0 0
    %3251 = vperm.xlu0 %3250, %v2276
    %v3252 = vpop.permute.xlu0 %3251
    %3253 = vset.pattern.permute.xlu0 0
    %3254 = vperm.xlu0 %3253, %v2293
    %v3255 = vpop.permute.xlu0 %3254
    %3256 = vset.pattern.permute.xlu0 0
    %3257 = vperm.xlu0 %3256, %v2310
    %v3258 = vpop.permute.xlu0 %3257
    %3259 = vset.pattern.permute.xlu0 0
    %3260 = vperm.xlu0 %3259, %v2327
    %v3261 = vpop.permute.xlu0 %3260
    %3262 = vset.pattern.permute.xlu0 0
    %3263 = vperm.xlu0 %3262, %v2344
    %v3264 = vpop.permute.xlu0 %3263
    %3265 = vset.pattern.permute.xlu0 0
    %3266 = vperm.xlu0 %3265, %v2361
    %v3267 = vpop.permute.xlu0 %3266
    %3268 = vset.pattern.permute.xlu0 0
    %3269 = vperm.xlu0 %3268, %v2378
    %v3270 = vpop.permute.xlu0 %3269
    %3271 = vset.pattern.permute.xlu0 0
    %3272 = vperm.xlu0 %3271, %v2395
    %v3273 = vpop.permute.xlu0 %3272
    %3274 = vset.pattern.permute.xlu0 0
    %3275 = vperm.xlu0 %3274, %v2412
    %v3276 = vpop.permute.xlu0 %3275
    %3277 = vset.pattern.permute.xlu0 0
    %3278 = vperm.xlu0 %3277, %v2429
    %v3279 = vpop.permute.xlu0 %3278
    %3280 = vset.pattern.permute.xlu0 0
    %3281 = vperm.xlu0 %3280, %v2446
    %v3282 = vpop.permute.xlu0 %3281
    %3283 = vset.pattern.permute.xlu0 0
    %3284 = vperm.xlu0 %3283, %v2463
    %v3285 = vpop.permute.xlu0 %3284
    %3286 = vset.pattern.permute.xlu0 0
    %3287 = vperm.xlu0 %3286, %v2480
    %v3288 = vpop.permute.xlu0 %3287
    %3289 = vset.pattern.permute.xlu0 0
    %3290 = vperm.xlu0 %3289, %v2497
    %v3291 = vpop.permute.xlu0 %3290
    %3292 = vset.pattern.permute.xlu0 0
    %3293 = vperm.xlu0 %3292, %v2514
    %v3294 = vpop.permute.xlu0 %3293
    %3295 = vset.pattern.permute.xlu0 0
    %3296 = vperm.xlu0 %3295, %v2531
    %v3297 = vpop.permute.xlu0 %3296
    %3298 = vset.pattern.permute.xlu0 0
    %3299 = vperm.xlu0 %3298, %v2548
    %v3300 = vpop.permute.xlu0 %3299
    %3301 = vset.pattern.permute.xlu0 0
    %3302 = vperm.xlu0 %3301, %v2565
    %v3303 = vpop.permute.xlu0 %3302
    %3304 = vset.pattern.permute.xlu0 0
    %3305 = vperm.xlu0 %3304, %v2582
    %v3306 = vpop.permute.xlu0 %3305
    %3307 = vset.pattern.permute.xlu0 0
    %3308 = vperm.xlu0 %3307, %v2599
    %v3309 = vpop.permute.xlu0 %3308
    %3310 = vset.pattern.permute.xlu0 0
    %3311 = vperm.xlu0 %3310, %v2616
    %v3312 = vpop.permute.xlu0 %3311
    %3313 = vset.pattern.permute.xlu0 0
    %3314 = vperm.xlu0 %3313, %v2633
    %v3315 = vpop.permute.xlu0 %3314
    %3316 = vset.pattern.permute.xlu0 0
    %3317 = vperm.xlu0 %3316, %v2650
    %v3318 = vpop.permute.xlu0 %3317
    %3319 = vset.pattern.permute.xlu0 0
    %3320 = vperm.xlu0 %3319, %v2667
    %v3321 = vpop.permute.xlu0 %3320
    %3322 = vset.pattern.permute.xlu0 0
    %3323 = vperm.xlu0 %3322, %v2684
    %v3324 = vpop.permute.xlu0 %3323
    %3325 = vset.pattern.permute.xlu0 0
    %3326 = vperm.xlu0 %3325, %v2701
    %v3327 = vpop.permute.xlu0 %3326
    %3328 = vset.pattern.permute.xlu0 0
    %3329 = vperm.xlu0 %3328, %v2718
    %v3330 = vpop.permute.xlu0 %3329
    %3331 = vset.pattern.permute.xlu0 0
    %3332 = vperm.xlu0 %3331, %v2735
    %v3333 = vpop.permute.xlu0 %3332
    %3334 = vset.pattern.permute.xlu0 0
    %3335 = vperm.xlu0 %3334, %v2752
    %v3336 = vpop.permute.xlu0 %3335
    %3337 = vset.pattern.permute.xlu0 0
    %3338 = vperm.xlu0 %3337, %v2769
    %v3339 = vpop.permute.xlu0 %3338
    %3340 = vset.pattern.permute.xlu0 0
    %3341 = vperm.xlu0 %3340, %v2786
    %v3342 = vpop.permute.xlu0 %3341
    %3343 = vset.pattern.permute.xlu0 0
    %3344 = vperm.xlu0 %3343, %v2803
    %v3345 = vpop.permute.xlu0 %3344
    %3346 = vset.pattern.permute.xlu0 0
    %3347 = vperm.xlu0 %3346, %v2820
    %v3348 = vpop.permute.xlu0 %3347
    %3349 = vset.pattern.permute.xlu0 0
    %3350 = vperm.xlu0 %3349, %v2837
    %v3351 = vpop.permute.xlu0 %3350
    %3352 = vset.pattern.permute.xlu0 0
    %3353 = vperm.xlu0 %3352, %v2854
    %v3354 = vpop.permute.xlu0 %3353
    %3355 = vset.pattern.permute.xlu0 0
    %3356 = vperm.xlu0 %3355, %v2871
    %v3357 = vpop.permute.xlu0 %3356
    %3358 = vset.pattern.permute.xlu0 0
    %3359 = vperm.xlu0 %3358, %v2888
    %v3360 = vpop.permute.xlu0 %3359
    %3361 = vset.pattern.permute.xlu0 0
    %3362 = vperm.xlu0 %3361, %v2905
    %v3363 = vpop.permute.xlu0 %3362
    %3364 = vset.pattern.permute.xlu0 0
    %3365 = vperm.xlu0 %3364, %v2922
    %v3366 = vpop.permute.xlu0 %3365
    %3367 = vset.pattern.permute.xlu0 0
    %3368 = vperm.xlu0 %3367, %v2939
    %v3369 = vpop.permute.xlu0 %3368
    %3370 = vset.pattern.permute.xlu0 0
    %3371 = vperm.xlu0 %3370, %v2956
    %v3372 = vpop.permute.xlu0 %3371
    %3373 = vset.pattern.permute.xlu0 0
    %3374 = vperm.xlu0 %3373, %v2973
    %v3375 = vpop.permute.xlu0 %3374
    %3376 = vset.pattern.permute.xlu0 0
    %3377 = vperm.xlu0 %3376, %v2990
    %v3378 = vpop.permute.xlu0 %3377
    %3379 = vset.pattern.permute.xlu0 0
    %3380 = vperm.xlu0 %3379, %v3007
    %v3381 = vpop.permute.xlu0 %3380
    %3382 = vset.pattern.permute.xlu0 0
    %3383 = vperm.xlu0 %3382, %v3024
    %v3384 = vpop.permute.xlu0 %3383
    %3385 = vset.pattern.permute.xlu0 0
    %3386 = vperm.xlu0 %3385, %v3041
    %v3387 = vpop.permute.xlu0 %3386
    %3388 = vset.pattern.permute.xlu0 0
    %3389 = vperm.xlu0 %3388, %v3058
    %v3390 = vpop.permute.xlu0 %3389
    %3391 = vset.pattern.permute.xlu0 0
    %3392 = vperm.xlu0 %3391, %v3075
    %v3393 = vpop.permute.xlu0 %3392
    %3394 = vset.pattern.permute.xlu0 0
    %3395 = vperm.xlu0 %3394, %v3092
    %v3396 = vpop.permute.xlu0 %3395
    %3397 = vset.pattern.permute.xlu0 0
    %3398 = vperm.xlu0 %3397, %v3109
    %v3399 = vpop.permute.xlu0 %3398
    %3400 = vset.pattern.permute.xlu0 0
    %3401 = vperm.xlu0 %3400, %v3126
    %v3402 = vpop.permute.xlu0 %3401
    %3403 = vset.pattern.permute.xlu0 0
    %3404 = vperm.xlu0 %3403, %v3143
    %v3405 = vpop.permute.xlu0 %3404
    %3406 = vset.pattern.permute.xlu0 0
    %3407 = vperm.xlu0 %3406, %v3160
    %v3408 = vpop.permute.xlu0 %3407
    %3409 = vset.pattern.permute.xlu0 0
    %3410 = vperm.xlu0 %3409, %v3177
    %v3411 = vpop.permute.xlu0 %3410
    %3412 = vset.pattern.permute.xlu0 0
    %3413 = vperm.xlu0 %3412, %v3194
    %v3414 = vpop.permute.xlu0 %3413
    %3415 = vset.pattern.permute.xlu0 0
    %3416 = vperm.xlu0 %3415, %v3211
    %v3417 = vpop.permute.xlu0 %3416
    %3418 = vset.pattern.permute.xlu0 0
    %3419 = vperm.xlu0 %3418, %v3228
    %v3420 = vpop.permute.xlu0 %3419
    %v3421 = vlaneseq
    %v3422 = vand.u32 %v3421, 127
    %v3423 = vlaneseq
    %v3424 = vshrl.u32 %v3423, 7
    %v3425 = vsub.s32 %v3422, %v3424
    %v3426 = vrot.slane %v3231, %v3425
    %v3427 = vadd.s32 %v3422, 4294967288
    %v3428 = vlaneseq
    %v3429 = vshrl.u32 %v3428, 7
    %v3430 = vsub.s32 %v3427, %v3429
    %v3431 = vrot.slane %v3234, %v3430
    %vm3432 = vcmask 130112
    %v3433 = vsel %vm3432, %v3431, %v3426
    %v3434 = vadd.s32 %v3422, 4294967280
    %v3435 = vlaneseq
    %v3436 = vshrl.u32 %v3435, 7
    %v3437 = vsub.s32 %v3434, %v3436
    %v3438 = vrot.slane %v3237, %v3437
    %vm3439 = vcmask 195712
    %v3440 = vsel %vm3439, %v3438, %v3433
    %v3441 = vadd.s32 %v3422, 4294967272
    %v3442 = vlaneseq
    %v3443 = vshrl.u32 %v3442, 7
    %v3444 = vsub.s32 %v3441, %v3443
    %v3445 = vrot.slane %v3240, %v3444
    %vm3446 = vcmask 261312
    %v3447 = vsel %vm3446, %v3445, %v3440
    %v3448 = vadd.s32 %v3422, 4294967264
    %v3449 = vlaneseq
    %v3450 = vshrl.u32 %v3449, 7
    %v3451 = vsub.s32 %v3448, %v3450
    %v3452 = vrot.slane %v3243, %v3451
    %vm3453 = vcmask 326912
    %v3454 = vsel %vm3453, %v3452, %v3447
    %v3455 = vadd.s32 %v3422, 4294967256
    %v3456 = vlaneseq
    %v3457 = vshrl.u32 %v3456, 7
    %v3458 = vsub.s32 %v3455, %v3457
    %v3459 = vrot.slane %v3246, %v3458
    %vm3460 = vcmask 392512
    %v3461 = vsel %vm3460, %v3459, %v3454
    %v3462 = vadd.s32 %v3422, 4294967248
    %v3463 = vlaneseq
    %v3464 = vshrl.u32 %v3463, 7
    %v3465 = vsub.s32 %v3462, %v3464
    %v3466 = vrot.slane %v3249, %v3465
    %vm3467 = vcmask 458112
    %v3468 = vsel %vm3467, %v3466, %v3461
    %v3469 = vadd.s32 %v3422, 4294967240
    %v3470 = vlaneseq
    %v3471 = vshrl.u32 %v3470, 7
    %v3472 = vsub.s32 %v3469, %v3471
    %v3473 = vrot.slane %v3252, %v3472
    %vm3474 = vcmask 523712
    %v3475 = vsel %vm3474, %v3473, %v3468
    %v3476 = vadd.s32 %v3422, 4294967232
    %v3477 = vlaneseq
    %v3478 = vshrl.u32 %v3477, 7
    %v3479 = vsub.s32 %v3476, %v3478
    %v3480 = vrot.slane %v3255, %v3479
    %vm3481 = vcmask 589312
    %v3482 = vsel %vm3481, %v3480, %v3475
    %v3483 = vadd.s32 %v3422, 4294967224
    %v3484 = vlaneseq
    %v3485 = vshrl.u32 %v3484, 7
    %v3486 = vsub.s32 %v3483, %v3485
    %v3487 = vrot.slane %v3258, %v3486
    %vm3488 = vcmask 654912
    %v3489 = vsel %vm3488, %v3487, %v3482
    %v3490 = vadd.s32 %v3422, 4294967216
    %v3491 = vlaneseq
    %v3492 = vshrl.u32 %v3491, 7
    %v3493 = vsub.s32 %v3490, %v3492
    %v3494 = vrot.slane %v3261, %v3493
    %vm3495 = vcmask 720512
    %v3496 = vsel %vm3495, %v3494, %v3489
    %v3497 = vadd.s32 %v3422, 4294967208
    %v3498 = vlaneseq
    %v3499 = vshrl.u32 %v3498, 7
    %v3500 = vsub.s32 %v3497, %v3499
    %v3501 = vrot.slane %v3264, %v3500
    %vm3502 = vcmask 786112
    %v3503 = vsel %vm3502, %v3501, %v3496
    %v3504 = vadd.s32 %v3422, 4294967200
    %v3505 = vlaneseq
    %v3506 = vshrl.u32 %v3505, 7
    %v3507 = vsub.s32 %v3504, %v3506
    %v3508 = vrot.slane %v3267, %v3507
    %vm3509 = vcmask 851712
    %v3510 = vsel %vm3509, %v3508, %v3503
    %v3511 = vadd.s32 %v3422, 4294967192
    %v3512 = vlaneseq
    %v3513 = vshrl.u32 %v3512, 7
    %v3514 = vsub.s32 %v3511, %v3513
    %v3515 = vrot.slane %v3270, %v3514
    %vm3516 = vcmask 917312
    %v3517 = vsel %vm3516, %v3515, %v3510
    %v3518 = vadd.s32 %v3422, 4294967184
    %v3519 = vlaneseq
    %v3520 = vshrl.u32 %v3519, 7
    %v3521 = vsub.s32 %v3518, %v3520
    %v3522 = vrot.slane %v3273, %v3521
    %vm3523 = vcmask 982912
    %v3524 = vsel %vm3523, %v3522, %v3517
    %v3525 = vadd.s32 %v3422, 4294967176
    %v3526 = vlaneseq
    %v3527 = vshrl.u32 %v3526, 7
    %v3528 = vsub.s32 %v3525, %v3527
    %v3529 = vrot.slane %v3276, %v3528
    %vm3530 = vcmask 1048512
    %v3531 = vsel %vm3530, %v3529, %v3524
    %v3532 = vlaneseq
    %v3533 = vshrl.u32 %v3532, 7
    %v3534 = vsub.s32 %v3422, %v3533
    %v3535 = vrot.slane %v3279, %v3534
    %v3536 = vlaneseq
    %v3537 = vshrl.u32 %v3536, 7
    %v3538 = vsub.s32 %v3427, %v3537
    %v3539 = vrot.slane %v3282, %v3538
    %v3540 = vsel %vm3432, %v3539, %v3535
    %v3541 = vlaneseq
    %v3542 = vshrl.u32 %v3541, 7
    %v3543 = vsub.s32 %v3434, %v3542
    %v3544 = vrot.slane %v3285, %v3543
    %v3545 = vsel %vm3439, %v3544, %v3540
    %v3546 = vlaneseq
    %v3547 = vshrl.u32 %v3546, 7
    %v3548 = vsub.s32 %v3441, %v3547
    %v3549 = vrot.slane %v3288, %v3548
    %v3550 = vsel %vm3446, %v3549, %v3545
    %v3551 = vlaneseq
    %v3552 = vshrl.u32 %v3551, 7
    %v3553 = vsub.s32 %v3448, %v3552
    %v3554 = vrot.slane %v3291, %v3553
    %v3555 = vsel %vm3453, %v3554, %v3550
    %v3556 = vlaneseq
    %v3557 = vshrl.u32 %v3556, 7
    %v3558 = vsub.s32 %v3455, %v3557
    %v3559 = vrot.slane %v3294, %v3558
    %v3560 = vsel %vm3460, %v3559, %v3555
    %v3561 = vlaneseq
    %v3562 = vshrl.u32 %v3561, 7
    %v3563 = vsub.s32 %v3462, %v3562
    %v3564 = vrot.slane %v3297, %v3563
    %v3565 = vsel %vm3467, %v3564, %v3560
    %v3566 = vlaneseq
    %v3567 = vshrl.u32 %v3566, 7
    %v3568 = vsub.s32 %v3469, %v3567
    %v3569 = vrot.slane %v3300, %v3568
    %v3570 = vsel %vm3474, %v3569, %v3565
    %v3571 = vlaneseq
    %v3572 = vshrl.u32 %v3571, 7
    %v3573 = vsub.s32 %v3476, %v3572
    %v3574 = vrot.slane %v3303, %v3573
    %v3575 = vsel %vm3481, %v3574, %v3570
    %v3576 = vlaneseq
    %v3577 = vshrl.u32 %v3576, 7
    %v3578 = vsub.s32 %v3483, %v3577
    %v3579 = vrot.slane %v3306, %v3578
    %v3580 = vsel %vm3488, %v3579, %v3575
    %v3581 = vlaneseq
    %v3582 = vshrl.u32 %v3581, 7
    %v3583 = vsub.s32 %v3490, %v3582
    %v3584 = vrot.slane %v3309, %v3583
    %v3585 = vsel %vm3495, %v3584, %v3580
    %v3586 = vlaneseq
    %v3587 = vshrl.u32 %v3586, 7
    %v3588 = vsub.s32 %v3497, %v3587
    %v3589 = vrot.slane %v3312, %v3588
    %v3590 = vsel %vm3502, %v3589, %v3585
    %v3591 = vlaneseq
    %v3592 = vshrl.u32 %v3591, 7
    %v3593 = vsub.s32 %v3504, %v3592
    %v3594 = vrot.slane %v3315, %v3593
    %v3595 = vsel %vm3509, %v3594, %v3590
    %v3596 = vlaneseq
    %v3597 = vshrl.u32 %v3596, 7
    %v3598 = vsub.s32 %v3511, %v3597
    %v3599 = vrot.slane %v3318, %v3598
    %v3600 = vsel %vm3516, %v3599, %v3595
    %v3601 = vlaneseq
    %v3602 = vshrl.u32 %v3601, 7
    %v3603 = vsub.s32 %v3518, %v3602
    %v3604 = vrot.slane %v3321, %v3603
    %v3605 = vsel %vm3523, %v3604, %v3600
    %v3606 = vlaneseq
    %v3607 = vshrl.u32 %v3606, 7
    %v3608 = vsub.s32 %v3525, %v3607
    %v3609 = vrot.slane %v3324, %v3608
    %v3610 = vsel %vm3530, %v3609, %v3605
    %v3611 = vlaneseq
    %v3612 = vshrl.u32 %v3611, 7
    %v3613 = vsub.s32 %v3422, %v3612
    %v3614 = vrot.slane %v3327, %v3613
    %v3615 = vlaneseq
    %v3616 = vshrl.u32 %v3615, 7
    %v3617 = vsub.s32 %v3427, %v3616
    %v3618 = vrot.slane %v3330, %v3617
    %v3619 = vsel %vm3432, %v3618, %v3614
    %v3620 = vlaneseq
    %v3621 = vshrl.u32 %v3620, 7
    %v3622 = vsub.s32 %v3434, %v3621
    %v3623 = vrot.slane %v3333, %v3622
    %v3624 = vsel %vm3439, %v3623, %v3619
    %v3625 = vlaneseq
    %v3626 = vshrl.u32 %v3625, 7
    %v3627 = vsub.s32 %v3441, %v3626
    %v3628 = vrot.slane %v3336, %v3627
    %v3629 = vsel %vm3446, %v3628, %v3624
    %v3630 = vlaneseq
    %v3631 = vshrl.u32 %v3630, 7
    %v3632 = vsub.s32 %v3448, %v3631
    %v3633 = vrot.slane %v3339, %v3632
    %v3634 = vsel %vm3453, %v3633, %v3629
    %v3635 = vlaneseq
    %v3636 = vshrl.u32 %v3635, 7
    %v3637 = vsub.s32 %v3455, %v3636
    %v3638 = vrot.slane %v3342, %v3637
    %v3639 = vsel %vm3460, %v3638, %v3634
    %v3640 = vlaneseq
    %v3641 = vshrl.u32 %v3640, 7
    %v3642 = vsub.s32 %v3462, %v3641
    %v3643 = vrot.slane %v3345, %v3642
    %v3644 = vsel %vm3467, %v3643, %v3639
    %v3645 = vlaneseq
    %v3646 = vshrl.u32 %v3645, 7
    %v3647 = vsub.s32 %v3469, %v3646
    %v3648 = vrot.slane %v3348, %v3647
    %v3649 = vsel %vm3474, %v3648, %v3644
    %v3650 = vlaneseq
    %v3651 = vshrl.u32 %v3650, 7
    %v3652 = vsub.s32 %v3476, %v3651
    %v3653 = vrot.slane %v3351, %v3652
    %v3654 = vsel %vm3481, %v3653, %v3649
    %v3655 = vlaneseq
    %v3656 = vshrl.u32 %v3655, 7
    %v3657 = vsub.s32 %v3483, %v3656
    %v3658 = vrot.slane %v3354, %v3657
    %v3659 = vsel %vm3488, %v3658, %v3654
    %v3660 = vlaneseq
    %v3661 = vshrl.u32 %v3660, 7
    %v3662 = vsub.s32 %v3490, %v3661
    %v3663 = vrot.slane %v3357, %v3662
    %v3664 = vsel %vm3495, %v3663, %v3659
    %v3665 = vlaneseq
    %v3666 = vshrl.u32 %v3665, 7
    %v3667 = vsub.s32 %v3497, %v3666
    %v3668 = vrot.slane %v3360, %v3667
    %v3669 = vsel %vm3502, %v3668, %v3664
    %v3670 = vlaneseq
    %v3671 = vshrl.u32 %v3670, 7
    %v3672 = vsub.s32 %v3504, %v3671
    %v3673 = vrot.slane %v3363, %v3672
    %v3674 = vsel %vm3509, %v3673, %v3669
    %v3675 = vlaneseq
    %v3676 = vshrl.u32 %v3675, 7
    %v3677 = vsub.s32 %v3511, %v3676
    %v3678 = vrot.slane %v3366, %v3677
    %v3679 = vsel %vm3516, %v3678, %v3674
    %v3680 = vlaneseq
    %v3681 = vshrl.u32 %v3680, 7
    %v3682 = vsub.s32 %v3518, %v3681
    %v3683 = vrot.slane %v3369, %v3682
    %v3684 = vsel %vm3523, %v3683, %v3679
    %v3685 = vlaneseq
    %v3686 = vshrl.u32 %v3685, 7
    %v3687 = vsub.s32 %v3525, %v3686
    %v3688 = vrot.slane %v3372, %v3687
    %v3689 = vsel %vm3530, %v3688, %v3684
    %v3690 = vlaneseq
    %v3691 = vshrl.u32 %v3690, 7
    %v3692 = vsub.s32 %v3422, %v3691
    %v3693 = vrot.slane %v3375, %v3692
    %v3694 = vlaneseq
    %v3695 = vshrl.u32 %v3694, 7
    %v3696 = vsub.s32 %v3427, %v3695
    %v3697 = vrot.slane %v3378, %v3696
    %v3698 = vsel %vm3432, %v3697, %v3693
    %v3699 = vlaneseq
    %v3700 = vshrl.u32 %v3699, 7
    %v3701 = vsub.s32 %v3434, %v3700
    %v3702 = vrot.slane %v3381, %v3701
    %v3703 = vsel %vm3439, %v3702, %v3698
    %v3704 = vlaneseq
    %v3705 = vshrl.u32 %v3704, 7
    %v3706 = vsub.s32 %v3441, %v3705
    %v3707 = vrot.slane %v3384, %v3706
    %v3708 = vsel %vm3446, %v3707, %v3703
    %v3709 = vlaneseq
    %v3710 = vshrl.u32 %v3709, 7
    %v3711 = vsub.s32 %v3448, %v3710
    %v3712 = vrot.slane %v3387, %v3711
    %v3713 = vsel %vm3453, %v3712, %v3708
    %v3714 = vlaneseq
    %v3715 = vshrl.u32 %v3714, 7
    %v3716 = vsub.s32 %v3455, %v3715
    %v3717 = vrot.slane %v3390, %v3716
    %v3718 = vsel %vm3460, %v3717, %v3713
    %v3719 = vlaneseq
    %v3720 = vshrl.u32 %v3719, 7
    %v3721 = vsub.s32 %v3462, %v3720
    %v3722 = vrot.slane %v3393, %v3721
    %v3723 = vsel %vm3467, %v3722, %v3718
    %v3724 = vlaneseq
    %v3725 = vshrl.u32 %v3724, 7
    %v3726 = vsub.s32 %v3469, %v3725
    %v3727 = vrot.slane %v3396, %v3726
    %v3728 = vsel %vm3474, %v3727, %v3723
    %v3729 = vlaneseq
    %v3730 = vshrl.u32 %v3729, 7
    %v3731 = vsub.s32 %v3476, %v3730
    %v3732 = vrot.slane %v3399, %v3731
    %v3733 = vsel %vm3481, %v3732, %v3728
    %v3734 = vlaneseq
    %v3735 = vshrl.u32 %v3734, 7
    %v3736 = vsub.s32 %v3483, %v3735
    %v3737 = vrot.slane %v3402, %v3736
    %v3738 = vsel %vm3488, %v3737, %v3733
    %v3739 = vlaneseq
    %v3740 = vshrl.u32 %v3739, 7
    %v3741 = vsub.s32 %v3490, %v3740
    %v3742 = vrot.slane %v3405, %v3741
    %v3743 = vsel %vm3495, %v3742, %v3738
    %v3744 = vlaneseq
    %v3745 = vshrl.u32 %v3744, 7
    %v3746 = vsub.s32 %v3497, %v3745
    %v3747 = vrot.slane %v3408, %v3746
    %v3748 = vsel %vm3502, %v3747, %v3743
    %v3749 = vlaneseq
    %v3750 = vshrl.u32 %v3749, 7
    %v3751 = vsub.s32 %v3504, %v3750
    %v3752 = vrot.slane %v3411, %v3751
    %v3753 = vsel %vm3509, %v3752, %v3748
    %v3754 = vlaneseq
    %v3755 = vshrl.u32 %v3754, 7
    %v3756 = vsub.s32 %v3511, %v3755
    %v3757 = vrot.slane %v3414, %v3756
    %v3758 = vsel %vm3516, %v3757, %v3753
    %v3759 = vlaneseq
    %v3760 = vshrl.u32 %v3759, 7
    %v3761 = vsub.s32 %v3518, %v3760
    %v3762 = vrot.slane %v3417, %v3761
    %v3763 = vsel %vm3523, %v3762, %v3758
    %v3764 = vlaneseq
    %v3765 = vshrl.u32 %v3764, 7
    %v3766 = vsub.s32 %v3525, %v3765
    %v3767 = vrot.slane %v3420, %v3766
    %v3768 = vsel %vm3530, %v3767, %v3763
    %vm3769 = vcmask 1041409
    %v3770 = vsel %vm3769, %v3689, %v3531
    %v3771 = vsel %vm3769, %v3768, %v3610
    %v3772 = vcombine.low %v3770, %v3771
    %v3774 = vunpack.c.l.s4 1983009808
    %v3775 = vunpack.c.0.s8 %v3774
    %v3776 = vlaneseq
    %v3777 = vshrl.u32 %v3776, 7
    %v3778 = vsub.s32 %v3775, %v3777
    %v3779 = vrot.slane %v3772, %v3778
    %v3781 = vadd.f32 %v91, %v3779
    %3782 = vst [vmem:[#allocation2] sm:$0xf] %v3781
    %v3783 = vld [vmem:[%s1] sm:$0xff]
    %v3784 = vld [vmem:[%s1 + $0x8] sm:$0xff]
    %v3785 = vld [vmem:[%s1 + $0x10] sm:$0xff]
    %v3786 = vld [vmem:[%s1 + $0x18] sm:$0xff]
    %v3787 = vld [vmem:[%s1 + $0x20] sm:$0xff]
    %v3788 = vld [vmem:[%s1 + $0x28] sm:$0xff]
    %v3789 = vld [vmem:[%s1 + $0x30] sm:$0xff]
    %v3790 = vld [vmem:[%s1 + $0x38] sm:$0xff]
    %v3791 = vld [vmem:[%s1 + $0x40] sm:$0xff]
    %v3792 = vld [vmem:[%s1 + $0x48] sm:$0xff]
    %v3793 = vld [vmem:[%s1 + $0x50] sm:$0xff]
    %v3794 = vld [vmem:[%s1 + $0x58] sm:$0xff]
    %v3795 = vld [vmem:[%s1 + $0x60] sm:$0xff]
    %v3796 = vld [vmem:[%s1 + $0x68] sm:$0xff]
    %v3797 = vld [vmem:[%s1 + $0x70] sm:$0xff]
    %v3798 = vld [vmem:[%s1 + $0x78] sm:$0xff]
    %v3799 = vld [vmem:[%s1 + $0x80] sm:$0xff]
    %v3800 = vld [vmem:[%s1 + $0x88] sm:$0xff]
    %v3801 = vld [vmem:[%s1 + $0x90] sm:$0xff]
    %v3802 = vld [vmem:[%s1 + $0x98] sm:$0xff]
    %v3803 = vld [vmem:[%s1 + $0xa0] sm:$0xff]
    %v3804 = vld [vmem:[%s1 + $0xa8] sm:$0xff]
    %v3805 = vld [vmem:[%s1 + $0xb0] sm:$0xff]
    %v3806 = vld [vmem:[%s1 + $0xb8] sm:$0xff]
    %v3807 = vld [vmem:[%s1 + $0xc0] sm:$0xff]
    %v3808 = vld [vmem:[%s1 + $0xc8] sm:$0xff]
    %v3809 = vld [vmem:[%s1 + $0xd0] sm:$0xff]
    %v3810 = vld [vmem:[%s1 + $0xd8] sm:$0xff]
    %v3811 = vld [vmem:[%s1 + $0xe0] sm:$0xff]
    %v3812 = vld [vmem:[%s1 + $0xe8] sm:$0xff]
    %v3813 = vld [vmem:[%s1 + $0xf0] sm:$0xff]
    %v3814 = vld [vmem:[%s1 + $0xf8] sm:$0xff]
    %v3815 = vld [vmem:[%s1 + $0x100] sm:$0xff]
    %v3816 = vld [vmem:[%s1 + $0x108] sm:$0xff]
    %v3817 = vld [vmem:[%s1 + $0x110] sm:$0xff]
    %v3818 = vld [vmem:[%s1 + $0x118] sm:$0xff]
    %v3819 = vld [vmem:[%s1 + $0x120] sm:$0xff]
    %v3820 = vld [vmem:[%s1 + $0x128] sm:$0xff]
    %v3821 = vld [vmem:[%s1 + $0x130] sm:$0xff]
    %v3822 = vld [vmem:[%s1 + $0x138] sm:$0xff]
    %v3823 = vld [vmem:[%s1 + $0x140] sm:$0xff]
    %v3824 = vld [vmem:[%s1 + $0x148] sm:$0xff]
    %v3825 = vld [vmem:[%s1 + $0x150] sm:$0xff]
    %v3826 = vld [vmem:[%s1 + $0x158] sm:$0xff]
    %v3827 = vld [vmem:[%s1 + $0x160] sm:$0xff]
    %v3828 = vld [vmem:[%s1 + $0x168] sm:$0xff]
    %v3829 = vld [vmem:[%s1 + $0x170] sm:$0xff]
    %v3830 = vld [vmem:[%s1 + $0x178] sm:$0xff]
    %v3831 = vld [vmem:[%s1 + $0x180] sm:$0xff]
    %v3832 = vld [vmem:[%s1 + $0x188] sm:$0xff]
    %v3833 = vld [vmem:[%s1 + $0x190] sm:$0xff]
    %v3834 = vld [vmem:[%s1 + $0x198] sm:$0xff]
    %v3835 = vld [vmem:[%s1 + $0x1a0] sm:$0xff]
    %v3836 = vld [vmem:[%s1 + $0x1a8] sm:$0xff]
    %v3837 = vld [vmem:[%s1 + $0x1b0] sm:$0xff]
    %v3838 = vld [vmem:[%s1 + $0x1b8] sm:$0xff]
    %v3839 = vld [vmem:[%s1 + $0x1c0] sm:$0xff]
    %v3840 = vld [vmem:[%s1 + $0x1c8] sm:$0xff]
    %v3841 = vld [vmem:[%s1 + $0x1d0] sm:$0xff]
    %v3842 = vld [vmem:[%s1 + $0x1d8] sm:$0xff]
    %v3843 = vld [vmem:[%s1 + $0x1e0] sm:$0xff]
    %v3844 = vld [vmem:[%s1 + $0x1e8] sm:$0xff]
    %v3845 = vld [vmem:[%s1 + $0x1f0] sm:$0xff]
    %v3846 = vld [vmem:[%s1 + $0x1f8] sm:$0xff]
    %v3847 = vld [vmem:[#allocation3] sm:$0xf]
    %v3848 = vsel %vm92, %v3783, 0.0
    %3849 = vadd.xlane.f32.xlu0 %v3848
    %v3850 = vpop.xlane.xlu0 %3849
    %v3851 = vsel %vm92, %v3784, 0.0
    %3852 = vadd.xlane.f32.xlu0 %v3851
    %v3853 = vpop.xlane.xlu0 %3852
    %v3854 = vsel %vm92, %v3785, 0.0
    %3855 = vadd.xlane.f32.xlu0 %v3854
    %v3856 = vpop.xlane.xlu0 %3855
    %v3857 = vsel %vm92, %v3786, 0.0
    %3858 = vadd.xlane.f32.xlu0 %v3857
    %v3859 = vpop.xlane.xlu0 %3858
    %v3860 = vsel %vm92, %v3787, 0.0
    %3861 = vadd.xlane.f32.xlu0 %v3860
    %v3862 = vpop.xlane.xlu0 %3861
    %v3863 = vsel %vm92, %v3788, 0.0
    %3864 = vadd.xlane.f32.xlu0 %v3863
    %v3865 = vpop.xlane.xlu0 %3864
    %v3866 = vsel %vm92, %v3789, 0.0
    %3867 = vadd.xlane.f32.xlu0 %v3866
    %v3868 = vpop.xlane.xlu0 %3867
    %v3869 = vsel %vm92, %v3790, 0.0
    %3870 = vadd.xlane.f32.xlu0 %v3869
    %v3871 = vpop.xlane.xlu0 %3870
    %v3872 = vsel %vm92, %v3791, 0.0
    %3873 = vadd.xlane.f32.xlu0 %v3872
    %v3874 = vpop.xlane.xlu0 %3873
    %v3875 = vsel %vm92, %v3792, 0.0
    %3876 = vadd.xlane.f32.xlu0 %v3875
    %v3877 = vpop.xlane.xlu0 %3876
    %v3878 = vsel %vm92, %v3793, 0.0
    %3879 = vadd.xlane.f32.xlu0 %v3878
    %v3880 = vpop.xlane.xlu0 %3879
    %v3881 = vsel %vm92, %v3794, 0.0
    %3882 = vadd.xlane.f32.xlu0 %v3881
    %v3883 = vpop.xlane.xlu0 %3882
    %v3884 = vsel %vm92, %v3795, 0.0
    %3885 = vadd.xlane.f32.xlu0 %v3884
    %v3886 = vpop.xlane.xlu0 %3885
    %v3887 = vsel %vm92, %v3796, 0.0
    %3888 = vadd.xlane.f32.xlu0 %v3887
    %v3889 = vpop.xlane.xlu0 %3888
    %v3890 = vsel %vm92, %v3797, 0.0
    %3891 = vadd.xlane.f32.xlu0 %v3890
    %v3892 = vpop.xlane.xlu0 %3891
    %v3893 = vsel %vm92, %v3798, 0.0
    %3894 = vadd.xlane.f32.xlu0 %v3893
    %v3895 = vpop.xlane.xlu0 %3894
    %v3896 = vsel %vm92, %v3799, 0.0
    %3897 = vadd.xlane.f32.xlu0 %v3896
    %v3898 = vpop.xlane.xlu0 %3897
    %v3899 = vsel %vm92, %v3800, 0.0
    %3900 = vadd.xlane.f32.xlu0 %v3899
    %v3901 = vpop.xlane.xlu0 %3900
    %v3902 = vsel %vm92, %v3801, 0.0
    %3903 = vadd.xlane.f32.xlu0 %v3902
    %v3904 = vpop.xlane.xlu0 %3903
    %v3905 = vsel %vm92, %v3802, 0.0
    %3906 = vadd.xlane.f32.xlu0 %v3905
    %v3907 = vpop.xlane.xlu0 %3906
    %v3908 = vsel %vm92, %v3803, 0.0
    %3909 = vadd.xlane.f32.xlu0 %v3908
    %v3910 = vpop.xlane.xlu0 %3909
    %v3911 = vsel %vm92, %v3804, 0.0
    %3912 = vadd.xlane.f32.xlu0 %v3911
    %v3913 = vpop.xlane.xlu0 %3912
    %v3914 = vsel %vm92, %v3805, 0.0
    %3915 = vadd.xlane.f32.xlu0 %v3914
    %v3916 = vpop.xlane.xlu0 %3915
    %v3917 = vsel %vm92, %v3806, 0.0
    %3918 = vadd.xlane.f32.xlu0 %v3917
    %v3919 = vpop.xlane.xlu0 %3918
    %v3920 = vsel %vm92, %v3807, 0.0
    %3921 = vadd.xlane.f32.xlu0 %v3920
    %v3922 = vpop.xlane.xlu0 %3921
    %v3923 = vsel %vm92, %v3808, 0.0
    %3924 = vadd.xlane.f32.xlu0 %v3923
    %v3925 = vpop.xlane.xlu0 %3924
    %v3926 = vsel %vm92, %v3809, 0.0
    %3927 = vadd.xlane.f32.xlu0 %v3926
    %v3928 = vpop.xlane.xlu0 %3927
    %v3929 = vsel %vm92, %v3810, 0.0
    %3930 = vadd.xlane.f32.xlu0 %v3929
    %v3931 = vpop.xlane.xlu0 %3930
    %v3932 = vsel %vm92, %v3811, 0.0
    %3933 = vadd.xlane.f32.xlu0 %v3932
    %v3934 = vpop.xlane.xlu0 %3933
    %v3935 = vsel %vm92, %v3812, 0.0
    %3936 = vadd.xlane.f32.xlu0 %v3935
    %v3937 = vpop.xlane.xlu0 %3936
    %v3938 = vsel %vm92, %v3813, 0.0
    %3939 = vadd.xlane.f32.xlu0 %v3938
    %v3940 = vpop.xlane.xlu0 %3939
    %v3941 = vsel %vm92, %v3814, 0.0
    %3942 = vadd.xlane.f32.xlu0 %v3941
    %v3943 = vpop.xlane.xlu0 %3942
    %v3944 = vsel %vm92, %v3815, 0.0
    %3945 = vadd.xlane.f32.xlu0 %v3944
    %v3946 = vpop.xlane.xlu0 %3945
    %v3947 = vsel %vm92, %v3816, 0.0
    %3948 = vadd.xlane.f32.xlu0 %v3947
    %v3949 = vpop.xlane.xlu0 %3948
    %v3950 = vsel %vm92, %v3817, 0.0
    %3951 = vadd.xlane.f32.xlu0 %v3950
    %v3952 = vpop.xlane.xlu0 %3951
    %v3953 = vsel %vm92, %v3818, 0.0
    %3954 = vadd.xlane.f32.xlu0 %v3953
    %v3955 = vpop.xlane.xlu0 %3954
    %v3956 = vsel %vm92, %v3819, 0.0
    %3957 = vadd.xlane.f32.xlu0 %v3956
    %v3958 = vpop.xlane.xlu0 %3957
    %v3959 = vsel %vm92, %v3820, 0.0
    %3960 = vadd.xlane.f32.xlu0 %v3959
    %v3961 = vpop.xlane.xlu0 %3960
    %v3962 = vsel %vm92, %v3821, 0.0
    %3963 = vadd.xlane.f32.xlu0 %v3962
    %v3964 = vpop.xlane.xlu0 %3963
    %v3965 = vsel %vm92, %v3822, 0.0
    %3966 = vadd.xlane.f32.xlu0 %v3965
    %v3967 = vpop.xlane.xlu0 %3966
    %v3968 = vsel %vm92, %v3823, 0.0
    %3969 = vadd.xlane.f32.xlu0 %v3968
    %v3970 = vpop.xlane.xlu0 %3969
    %v3971 = vsel %vm92, %v3824, 0.0
    %3972 = vadd.xlane.f32.xlu0 %v3971
    %v3973 = vpop.xlane.xlu0 %3972
    %v3974 = vsel %vm92, %v3825, 0.0
    %3975 = vadd.xlane.f32.xlu0 %v3974
    %v3976 = vpop.xlane.xlu0 %3975
    %v3977 = vsel %vm92, %v3826, 0.0
    %3978 = vadd.xlane.f32.xlu0 %v3977
    %v3979 = vpop.xlane.xlu0 %3978
    %v3980 = vsel %vm92, %v3827, 0.0
    %3981 = vadd.xlane.f32.xlu0 %v3980
    %v3982 = vpop.xlane.xlu0 %3981
    %v3983 = vsel %vm92, %v3828, 0.0
    %3984 = vadd.xlane.f32.xlu0 %v3983
    %v3985 = vpop.xlane.xlu0 %3984
    %v3986 = vsel %vm92, %v3829, 0.0
    %3987 = vadd.xlane.f32.xlu0 %v3986
    %v3988 = vpop.xlane.xlu0 %3987
    %v3989 = vsel %vm92, %v3830, 0.0
    %3990 = vadd.xlane.f32.xlu0 %v3989
    %v3991 = vpop.xlane.xlu0 %3990
    %v3992 = vsel %vm92, %v3831, 0.0
    %3993 = vadd.xlane.f32.xlu0 %v3992
    %v3994 = vpop.xlane.xlu0 %3993
    %v3995 = vsel %vm92, %v3832, 0.0
    %3996 = vadd.xlane.f32.xlu0 %v3995
    %v3997 = vpop.xlane.xlu0 %3996
    %v3998 = vsel %vm92, %v3833, 0.0
    %3999 = vadd.xlane.f32.xlu0 %v3998
    %v4000 = vpop.xlane.xlu0 %3999
    %v4001 = vsel %vm92, %v3834, 0.0
    %4002 = vadd.xlane.f32.xlu0 %v4001
    %v4003 = vpop.xlane.xlu0 %4002
    %v4004 = vsel %vm92, %v3835, 0.0
    %4005 = vadd.xlane.f32.xlu0 %v4004
    %v4006 = vpop.xlane.xlu0 %4005
    %v4007 = vsel %vm92, %v3836, 0.0
    %4008 = vadd.xlane.f32.xlu0 %v4007
    %v4009 = vpop.xlane.xlu0 %4008
    %v4010 = vsel %vm92, %v3837, 0.0
    %4011 = vadd.xlane.f32.xlu0 %v4010
    %v4012 = vpop.xlane.xlu0 %4011
    %v4013 = vsel %vm92, %v3838, 0.0
    %4014 = vadd.xlane.f32.xlu0 %v4013
    %v4015 = vpop.xlane.xlu0 %4014
    %v4016 = vsel %vm92, %v3839, 0.0
    %4017 = vadd.xlane.f32.xlu0 %v4016
    %v4018 = vpop.xlane.xlu0 %4017
    %v4019 = vsel %vm92, %v3840, 0.0
    %4020 = vadd.xlane.f32.xlu0 %v4019
    %v4021 = vpop.xlane.xlu0 %4020
    %v4022 = vsel %vm92, %v3841, 0.0
    %4023 = vadd.xlane.f32.xlu0 %v4022
    %v4024 = vpop.xlane.xlu0 %4023
    %v4025 = vsel %vm92, %v3842, 0.0
    %4026 = vadd.xlane.f32.xlu0 %v4025
    %v4027 = vpop.xlane.xlu0 %4026
    %v4028 = vsel %vm92, %v3843, 0.0
    %4029 = vadd.xlane.f32.xlu0 %v4028
    %v4030 = vpop.xlane.xlu0 %4029
    %v4031 = vsel %vm92, %v3844, 0.0
    %4032 = vadd.xlane.f32.xlu0 %v4031
    %v4033 = vpop.xlane.xlu0 %4032
    %v4034 = vsel %vm92, %v3845, 0.0
    %4035 = vadd.xlane.f32.xlu0 %v4034
    %v4036 = vpop.xlane.xlu0 %4035
    %v4037 = vsel %vm92, %v3846, 0.0
    %4038 = vadd.xlane.f32.xlu0 %v4037
    %v4039 = vpop.xlane.xlu0 %4038
    %v4105 = vunpack.c.l.s4 269488144
    %v4106 = vunpack.c.0.s8 %v4105
    %v4107 = vlaneseq
    %v4108 = vshrl.u32 %v4107, 7
    %v4109 = vsub.s32 %v4106, %v4108
    %v4110 = vrot.slane %v3850, %v4109
    %v4112 = vunpack.c.l.s4 842150450
    %v4113 = vunpack.c.0.s8 %v4112
    %v4114 = vlaneseq
    %v4115 = vshrl.u32 %v4114, 7
    %v4116 = vsub.s32 %v4113, %v4115
    %v4117 = vrot.slane %v3850, %v4116
    %v4119 = vunpack.c.l.s4 1414812756
    %v4120 = vunpack.c.0.s8 %v4119
    %v4121 = vlaneseq
    %v4122 = vshrl.u32 %v4121, 7
    %v4123 = vsub.s32 %v4120, %v4122
    %v4124 = vrot.slane %v3850, %v4123
    %v4126 = vunpack.c.l.s4 1987475062
    %v4127 = vunpack.c.0.s8 %v4126
    %v4128 = vlaneseq
    %v4129 = vshrl.u32 %v4128, 7
    %v4130 = vsub.s32 %v4127, %v4129
    %v4131 = vrot.slane %v3850, %v4130
    %v4133 = vunpack.c.l.s4 269488144
    %v4134 = vunpack.c.0.s8 %v4133
    %v4135 = vlaneseq
    %v4136 = vshrl.u32 %v4135, 7
    %v4137 = vsub.s32 %v4134, %v4136
    %v4138 = vrot.slane %v3853, %v4137
    %v4140 = vunpack.c.l.s4 842150450
    %v4141 = vunpack.c.0.s8 %v4140
    %v4142 = vlaneseq
    %v4143 = vshrl.u32 %v4142, 7
    %v4144 = vsub.s32 %v4141, %v4143
    %v4145 = vrot.slane %v3853, %v4144
    %v4147 = vunpack.c.l.s4 1414812756
    %v4148 = vunpack.c.0.s8 %v4147
    %v4149 = vlaneseq
    %v4150 = vshrl.u32 %v4149, 7
    %v4151 = vsub.s32 %v4148, %v4150
    %v4152 = vrot.slane %v3853, %v4151
    %v4154 = vunpack.c.l.s4 1987475062
    %v4155 = vunpack.c.0.s8 %v4154
    %v4156 = vlaneseq
    %v4157 = vshrl.u32 %v4156, 7
    %v4158 = vsub.s32 %v4155, %v4157
    %v4159 = vrot.slane %v3853, %v4158
    %v4161 = vunpack.c.l.s4 269488144
    %v4162 = vunpack.c.0.s8 %v4161
    %v4163 = vlaneseq
    %v4164 = vshrl.u32 %v4163, 7
    %v4165 = vsub.s32 %v4162, %v4164
    %v4166 = vrot.slane %v3856, %v4165
    %v4168 = vunpack.c.l.s4 842150450
    %v4169 = vunpack.c.0.s8 %v4168
    %v4170 = vlaneseq
    %v4171 = vshrl.u32 %v4170, 7
    %v4172 = vsub.s32 %v4169, %v4171
    %v4173 = vrot.slane %v3856, %v4172
    %v4175 = vunpack.c.l.s4 1414812756
    %v4176 = vunpack.c.0.s8 %v4175
    %v4177 = vlaneseq
    %v4178 = vshrl.u32 %v4177, 7
    %v4179 = vsub.s32 %v4176, %v4178
    %v4180 = vrot.slane %v3856, %v4179
    %v4182 = vunpack.c.l.s4 1987475062
    %v4183 = vunpack.c.0.s8 %v4182
    %v4184 = vlaneseq
    %v4185 = vshrl.u32 %v4184, 7
    %v4186 = vsub.s32 %v4183, %v4185
    %v4187 = vrot.slane %v3856, %v4186
    %v4189 = vunpack.c.l.s4 269488144
    %v4190 = vunpack.c.0.s8 %v4189
    %v4191 = vlaneseq
    %v4192 = vshrl.u32 %v4191, 7
    %v4193 = vsub.s32 %v4190, %v4192
    %v4194 = vrot.slane %v3859, %v4193
    %v4196 = vunpack.c.l.s4 842150450
    %v4197 = vunpack.c.0.s8 %v4196
    %v4198 = vlaneseq
    %v4199 = vshrl.u32 %v4198, 7
    %v4200 = vsub.s32 %v4197, %v4199
    %v4201 = vrot.slane %v3859, %v4200
    %v4203 = vunpack.c.l.s4 1414812756
    %v4204 = vunpack.c.0.s8 %v4203
    %v4205 = vlaneseq
    %v4206 = vshrl.u32 %v4205, 7
    %v4207 = vsub.s32 %v4204, %v4206
    %v4208 = vrot.slane %v3859, %v4207
    %v4210 = vunpack.c.l.s4 1987475062
    %v4211 = vunpack.c.0.s8 %v4210
    %v4212 = vlaneseq
    %v4213 = vshrl.u32 %v4212, 7
    %v4214 = vsub.s32 %v4211, %v4213
    %v4215 = vrot.slane %v3859, %v4214
    %v4217 = vunpack.c.l.s4 269488144
    %v4218 = vunpack.c.0.s8 %v4217
    %v4219 = vlaneseq
    %v4220 = vshrl.u32 %v4219, 7
    %v4221 = vsub.s32 %v4218, %v4220
    %v4222 = vrot.slane %v3862, %v4221
    %v4224 = vunpack.c.l.s4 842150450
    %v4225 = vunpack.c.0.s8 %v4224
    %v4226 = vlaneseq
    %v4227 = vshrl.u32 %v4226, 7
    %v4228 = vsub.s32 %v4225, %v4227
    %v4229 = vrot.slane %v3862, %v4228
    %v4231 = vunpack.c.l.s4 1414812756
    %v4232 = vunpack.c.0.s8 %v4231
    %v4233 = vlaneseq
    %v4234 = vshrl.u32 %v4233, 7
    %v4235 = vsub.s32 %v4232, %v4234
    %v4236 = vrot.slane %v3862, %v4235
    %v4238 = vunpack.c.l.s4 1987475062
    %v4239 = vunpack.c.0.s8 %v4238
    %v4240 = vlaneseq
    %v4241 = vshrl.u32 %v4240, 7
    %v4242 = vsub.s32 %v4239, %v4241
    %v4243 = vrot.slane %v3862, %v4242
    %v4245 = vunpack.c.l.s4 269488144
    %v4246 = vunpack.c.0.s8 %v4245
    %v4247 = vlaneseq
    %v4248 = vshrl.u32 %v4247, 7
    %v4249 = vsub.s32 %v4246, %v4248
    %v4250 = vrot.slane %v3865, %v4249
    %v4252 = vunpack.c.l.s4 842150450
    %v4253 = vunpack.c.0.s8 %v4252
    %v4254 = vlaneseq
    %v4255 = vshrl.u32 %v4254, 7
    %v4256 = vsub.s32 %v4253, %v4255
    %v4257 = vrot.slane %v3865, %v4256
    %v4259 = vunpack.c.l.s4 1414812756
    %v4260 = vunpack.c.0.s8 %v4259
    %v4261 = vlaneseq
    %v4262 = vshrl.u32 %v4261, 7
    %v4263 = vsub.s32 %v4260, %v4262
    %v4264 = vrot.slane %v3865, %v4263
    %v4266 = vunpack.c.l.s4 1987475062
    %v4267 = vunpack.c.0.s8 %v4266
    %v4268 = vlaneseq
    %v4269 = vshrl.u32 %v4268, 7
    %v4270 = vsub.s32 %v4267, %v4269
    %v4271 = vrot.slane %v3865, %v4270
    %v4273 = vunpack.c.l.s4 269488144
    %v4274 = vunpack.c.0.s8 %v4273
    %v4275 = vlaneseq
    %v4276 = vshrl.u32 %v4275, 7
    %v4277 = vsub.s32 %v4274, %v4276
    %v4278 = vrot.slane %v3868, %v4277
    %v4280 = vunpack.c.l.s4 842150450
    %v4281 = vunpack.c.0.s8 %v4280
    %v4282 = vlaneseq
    %v4283 = vshrl.u32 %v4282, 7
    %v4284 = vsub.s32 %v4281, %v4283
    %v4285 = vrot.slane %v3868, %v4284
    %v4287 = vunpack.c.l.s4 1414812756
    %v4288 = vunpack.c.0.s8 %v4287
    %v4289 = vlaneseq
    %v4290 = vshrl.u32 %v4289, 7
    %v4291 = vsub.s32 %v4288, %v4290
    %v4292 = vrot.slane %v3868, %v4291
    %v4294 = vunpack.c.l.s4 1987475062
    %v4295 = vunpack.c.0.s8 %v4294
    %v4296 = vlaneseq
    %v4297 = vshrl.u32 %v4296, 7
    %v4298 = vsub.s32 %v4295, %v4297
    %v4299 = vrot.slane %v3868, %v4298
    %v4301 = vunpack.c.l.s4 269488144
    %v4302 = vunpack.c.0.s8 %v4301
    %v4303 = vlaneseq
    %v4304 = vshrl.u32 %v4303, 7
    %v4305 = vsub.s32 %v4302, %v4304
    %v4306 = vrot.slane %v3871, %v4305
    %v4308 = vunpack.c.l.s4 842150450
    %v4309 = vunpack.c.0.s8 %v4308
    %v4310 = vlaneseq
    %v4311 = vshrl.u32 %v4310, 7
    %v4312 = vsub.s32 %v4309, %v4311
    %v4313 = vrot.slane %v3871, %v4312
    %v4315 = vunpack.c.l.s4 1414812756
    %v4316 = vunpack.c.0.s8 %v4315
    %v4317 = vlaneseq
    %v4318 = vshrl.u32 %v4317, 7
    %v4319 = vsub.s32 %v4316, %v4318
    %v4320 = vrot.slane %v3871, %v4319
    %v4322 = vunpack.c.l.s4 1987475062
    %v4323 = vunpack.c.0.s8 %v4322
    %v4324 = vlaneseq
    %v4325 = vshrl.u32 %v4324, 7
    %v4326 = vsub.s32 %v4323, %v4325
    %v4327 = vrot.slane %v3871, %v4326
    %v4329 = vunpack.c.l.s4 269488144
    %v4330 = vunpack.c.0.s8 %v4329
    %v4331 = vlaneseq
    %v4332 = vshrl.u32 %v4331, 7
    %v4333 = vsub.s32 %v4330, %v4332
    %v4334 = vrot.slane %v3874, %v4333
    %v4336 = vunpack.c.l.s4 842150450
    %v4337 = vunpack.c.0.s8 %v4336
    %v4338 = vlaneseq
    %v4339 = vshrl.u32 %v4338, 7
    %v4340 = vsub.s32 %v4337, %v4339
    %v4341 = vrot.slane %v3874, %v4340
    %v4343 = vunpack.c.l.s4 1414812756
    %v4344 = vunpack.c.0.s8 %v4343
    %v4345 = vlaneseq
    %v4346 = vshrl.u32 %v4345, 7
    %v4347 = vsub.s32 %v4344, %v4346
    %v4348 = vrot.slane %v3874, %v4347
    %v4350 = vunpack.c.l.s4 1987475062
    %v4351 = vunpack.c.0.s8 %v4350
    %v4352 = vlaneseq
    %v4353 = vshrl.u32 %v4352, 7
    %v4354 = vsub.s32 %v4351, %v4353
    %v4355 = vrot.slane %v3874, %v4354
    %v4357 = vunpack.c.l.s4 269488144
    %v4358 = vunpack.c.0.s8 %v4357
    %v4359 = vlaneseq
    %v4360 = vshrl.u32 %v4359, 7
    %v4361 = vsub.s32 %v4358, %v4360
    %v4362 = vrot.slane %v3877, %v4361
    %v4364 = vunpack.c.l.s4 842150450
    %v4365 = vunpack.c.0.s8 %v4364
    %v4366 = vlaneseq
    %v4367 = vshrl.u32 %v4366, 7
    %v4368 = vsub.s32 %v4365, %v4367
    %v4369 = vrot.slane %v3877, %v4368
    %v4371 = vunpack.c.l.s4 1414812756
    %v4372 = vunpack.c.0.s8 %v4371
    %v4373 = vlaneseq
    %v4374 = vshrl.u32 %v4373, 7
    %v4375 = vsub.s32 %v4372, %v4374
    %v4376 = vrot.slane %v3877, %v4375
    %v4378 = vunpack.c.l.s4 1987475062
    %v4379 = vunpack.c.0.s8 %v4378
    %v4380 = vlaneseq
    %v4381 = vshrl.u32 %v4380, 7
    %v4382 = vsub.s32 %v4379, %v4381
    %v4383 = vrot.slane %v3877, %v4382
    %v4385 = vunpack.c.l.s4 269488144
    %v4386 = vunpack.c.0.s8 %v4385
    %v4387 = vlaneseq
    %v4388 = vshrl.u32 %v4387, 7
    %v4389 = vsub.s32 %v4386, %v4388
    %v4390 = vrot.slane %v3880, %v4389
    %v4392 = vunpack.c.l.s4 842150450
    %v4393 = vunpack.c.0.s8 %v4392
    %v4394 = vlaneseq
    %v4395 = vshrl.u32 %v4394, 7
    %v4396 = vsub.s32 %v4393, %v4395
    %v4397 = vrot.slane %v3880, %v4396
    %v4399 = vunpack.c.l.s4 1414812756
    %v4400 = vunpack.c.0.s8 %v4399
    %v4401 = vlaneseq
    %v4402 = vshrl.u32 %v4401, 7
    %v4403 = vsub.s32 %v4400, %v4402
    %v4404 = vrot.slane %v3880, %v4403
    %v4406 = vunpack.c.l.s4 1987475062
    %v4407 = vunpack.c.0.s8 %v4406
    %v4408 = vlaneseq
    %v4409 = vshrl.u32 %v4408, 7
    %v4410 = vsub.s32 %v4407, %v4409
    %v4411 = vrot.slane %v3880, %v4410
    %v4413 = vunpack.c.l.s4 269488144
    %v4414 = vunpack.c.0.s8 %v4413
    %v4415 = vlaneseq
    %v4416 = vshrl.u32 %v4415, 7
    %v4417 = vsub.s32 %v4414, %v4416
    %v4418 = vrot.slane %v3883, %v4417
    %v4420 = vunpack.c.l.s4 842150450
    %v4421 = vunpack.c.0.s8 %v4420
    %v4422 = vlaneseq
    %v4423 = vshrl.u32 %v4422, 7
    %v4424 = vsub.s32 %v4421, %v4423
    %v4425 = vrot.slane %v3883, %v4424
    %v4427 = vunpack.c.l.s4 1414812756
    %v4428 = vunpack.c.0.s8 %v4427
    %v4429 = vlaneseq
    %v4430 = vshrl.u32 %v4429, 7
    %v4431 = vsub.s32 %v4428, %v4430
    %v4432 = vrot.slane %v3883, %v4431
    %v4434 = vunpack.c.l.s4 1987475062
    %v4435 = vunpack.c.0.s8 %v4434
    %v4436 = vlaneseq
    %v4437 = vshrl.u32 %v4436, 7
    %v4438 = vsub.s32 %v4435, %v4437
    %v4439 = vrot.slane %v3883, %v4438
    %v4441 = vunpack.c.l.s4 269488144
    %v4442 = vunpack.c.0.s8 %v4441
    %v4443 = vlaneseq
    %v4444 = vshrl.u32 %v4443, 7
    %v4445 = vsub.s32 %v4442, %v4444
    %v4446 = vrot.slane %v3886, %v4445
    %v4448 = vunpack.c.l.s4 842150450
    %v4449 = vunpack.c.0.s8 %v4448
    %v4450 = vlaneseq
    %v4451 = vshrl.u32 %v4450, 7
    %v4452 = vsub.s32 %v4449, %v4451
    %v4453 = vrot.slane %v3886, %v4452
    %v4455 = vunpack.c.l.s4 1414812756
    %v4456 = vunpack.c.0.s8 %v4455
    %v4457 = vlaneseq
    %v4458 = vshrl.u32 %v4457, 7
    %v4459 = vsub.s32 %v4456, %v4458
    %v4460 = vrot.slane %v3886, %v4459
    %v4462 = vunpack.c.l.s4 1987475062
    %v4463 = vunpack.c.0.s8 %v4462
    %v4464 = vlaneseq
    %v4465 = vshrl.u32 %v4464, 7
    %v4466 = vsub.s32 %v4463, %v4465
    %v4467 = vrot.slane %v3886, %v4466
    %v4469 = vunpack.c.l.s4 269488144
    %v4470 = vunpack.c.0.s8 %v4469
    %v4471 = vlaneseq
    %v4472 = vshrl.u32 %v4471, 7
    %v4473 = vsub.s32 %v4470, %v4472
    %v4474 = vrot.slane %v3889, %v4473
    %v4476 = vunpack.c.l.s4 842150450
    %v4477 = vunpack.c.0.s8 %v4476
    %v4478 = vlaneseq
    %v4479 = vshrl.u32 %v4478, 7
    %v4480 = vsub.s32 %v4477, %v4479
    %v4481 = vrot.slane %v3889, %v4480
    %v4483 = vunpack.c.l.s4 1414812756
    %v4484 = vunpack.c.0.s8 %v4483
    %v4485 = vlaneseq
    %v4486 = vshrl.u32 %v4485, 7
    %v4487 = vsub.s32 %v4484, %v4486
    %v4488 = vrot.slane %v3889, %v4487
    %v4490 = vunpack.c.l.s4 1987475062
    %v4491 = vunpack.c.0.s8 %v4490
    %v4492 = vlaneseq
    %v4493 = vshrl.u32 %v4492, 7
    %v4494 = vsub.s32 %v4491, %v4493
    %v4495 = vrot.slane %v3889, %v4494
    %v4497 = vunpack.c.l.s4 269488144
    %v4498 = vunpack.c.0.s8 %v4497
    %v4499 = vlaneseq
    %v4500 = vshrl.u32 %v4499, 7
    %v4501 = vsub.s32 %v4498, %v4500
    %v4502 = vrot.slane %v3892, %v4501
    %v4504 = vunpack.c.l.s4 842150450
    %v4505 = vunpack.c.0.s8 %v4504
    %v4506 = vlaneseq
    %v4507 = vshrl.u32 %v4506, 7
    %v4508 = vsub.s32 %v4505, %v4507
    %v4509 = vrot.slane %v3892, %v4508
    %v4511 = vunpack.c.l.s4 1414812756
    %v4512 = vunpack.c.0.s8 %v4511
    %v4513 = vlaneseq
    %v4514 = vshrl.u32 %v4513, 7
    %v4515 = vsub.s32 %v4512, %v4514
    %v4516 = vrot.slane %v3892, %v4515
    %v4518 = vunpack.c.l.s4 1987475062
    %v4519 = vunpack.c.0.s8 %v4518
    %v4520 = vlaneseq
    %v4521 = vshrl.u32 %v4520, 7
    %v4522 = vsub.s32 %v4519, %v4521
    %v4523 = vrot.slane %v3892, %v4522
    %v4525 = vunpack.c.l.s4 269488144
    %v4526 = vunpack.c.0.s8 %v4525
    %v4527 = vlaneseq
    %v4528 = vshrl.u32 %v4527, 7
    %v4529 = vsub.s32 %v4526, %v4528
    %v4530 = vrot.slane %v3895, %v4529
    %v4532 = vunpack.c.l.s4 842150450
    %v4533 = vunpack.c.0.s8 %v4532
    %v4534 = vlaneseq
    %v4535 = vshrl.u32 %v4534, 7
    %v4536 = vsub.s32 %v4533, %v4535
    %v4537 = vrot.slane %v3895, %v4536
    %v4539 = vunpack.c.l.s4 1414812756
    %v4540 = vunpack.c.0.s8 %v4539
    %v4541 = vlaneseq
    %v4542 = vshrl.u32 %v4541, 7
    %v4543 = vsub.s32 %v4540, %v4542
    %v4544 = vrot.slane %v3895, %v4543
    %v4546 = vunpack.c.l.s4 1987475062
    %v4547 = vunpack.c.0.s8 %v4546
    %v4548 = vlaneseq
    %v4549 = vshrl.u32 %v4548, 7
    %v4550 = vsub.s32 %v4547, %v4549
    %v4551 = vrot.slane %v3895, %v4550
    %v4553 = vunpack.c.l.s4 269488144
    %v4554 = vunpack.c.0.s8 %v4553
    %v4555 = vlaneseq
    %v4556 = vshrl.u32 %v4555, 7
    %v4557 = vsub.s32 %v4554, %v4556
    %v4558 = vrot.slane %v3898, %v4557
    %v4560 = vunpack.c.l.s4 842150450
    %v4561 = vunpack.c.0.s8 %v4560
    %v4562 = vlaneseq
    %v4563 = vshrl.u32 %v4562, 7
    %v4564 = vsub.s32 %v4561, %v4563
    %v4565 = vrot.slane %v3898, %v4564
    %v4567 = vunpack.c.l.s4 1414812756
    %v4568 = vunpack.c.0.s8 %v4567
    %v4569 = vlaneseq
    %v4570 = vshrl.u32 %v4569, 7
    %v4571 = vsub.s32 %v4568, %v4570
    %v4572 = vrot.slane %v3898, %v4571
    %v4574 = vunpack.c.l.s4 1987475062
    %v4575 = vunpack.c.0.s8 %v4574
    %v4576 = vlaneseq
    %v4577 = vshrl.u32 %v4576, 7
    %v4578 = vsub.s32 %v4575, %v4577
    %v4579 = vrot.slane %v3898, %v4578
    %v4581 = vunpack.c.l.s4 269488144
    %v4582 = vunpack.c.0.s8 %v4581
    %v4583 = vlaneseq
    %v4584 = vshrl.u32 %v4583, 7
    %v4585 = vsub.s32 %v4582, %v4584
    %v4586 = vrot.slane %v3901, %v4585
    %v4588 = vunpack.c.l.s4 842150450
    %v4589 = vunpack.c.0.s8 %v4588
    %v4590 = vlaneseq
    %v4591 = vshrl.u32 %v4590, 7
    %v4592 = vsub.s32 %v4589, %v4591
    %v4593 = vrot.slane %v3901, %v4592
    %v4595 = vunpack.c.l.s4 1414812756
    %v4596 = vunpack.c.0.s8 %v4595
    %v4597 = vlaneseq
    %v4598 = vshrl.u32 %v4597, 7
    %v4599 = vsub.s32 %v4596, %v4598
    %v4600 = vrot.slane %v3901, %v4599
    %v4602 = vunpack.c.l.s4 1987475062
    %v4603 = vunpack.c.0.s8 %v4602
    %v4604 = vlaneseq
    %v4605 = vshrl.u32 %v4604, 7
    %v4606 = vsub.s32 %v4603, %v4605
    %v4607 = vrot.slane %v3901, %v4606
    %v4609 = vunpack.c.l.s4 269488144
    %v4610 = vunpack.c.0.s8 %v4609
    %v4611 = vlaneseq
    %v4612 = vshrl.u32 %v4611, 7
    %v4613 = vsub.s32 %v4610, %v4612
    %v4614 = vrot.slane %v3904, %v4613
    %v4616 = vunpack.c.l.s4 842150450
    %v4617 = vunpack.c.0.s8 %v4616
    %v4618 = vlaneseq
    %v4619 = vshrl.u32 %v4618, 7
    %v4620 = vsub.s32 %v4617, %v4619
    %v4621 = vrot.slane %v3904, %v4620
    %v4623 = vunpack.c.l.s4 1414812756
    %v4624 = vunpack.c.0.s8 %v4623
    %v4625 = vlaneseq
    %v4626 = vshrl.u32 %v4625, 7
    %v4627 = vsub.s32 %v4624, %v4626
    %v4628 = vrot.slane %v3904, %v4627
    %v4630 = vunpack.c.l.s4 1987475062
    %v4631 = vunpack.c.0.s8 %v4630
    %v4632 = vlaneseq
    %v4633 = vshrl.u32 %v4632, 7
    %v4634 = vsub.s32 %v4631, %v4633
    %v4635 = vrot.slane %v3904, %v4634
    %v4637 = vunpack.c.l.s4 269488144
    %v4638 = vunpack.c.0.s8 %v4637
    %v4639 = vlaneseq
    %v4640 = vshrl.u32 %v4639, 7
    %v4641 = vsub.s32 %v4638, %v4640
    %v4642 = vrot.slane %v3907, %v4641
    %v4644 = vunpack.c.l.s4 842150450
    %v4645 = vunpack.c.0.s8 %v4644
    %v4646 = vlaneseq
    %v4647 = vshrl.u32 %v4646, 7
    %v4648 = vsub.s32 %v4645, %v4647
    %v4649 = vrot.slane %v3907, %v4648
    %v4651 = vunpack.c.l.s4 1414812756
    %v4652 = vunpack.c.0.s8 %v4651
    %v4653 = vlaneseq
    %v4654 = vshrl.u32 %v4653, 7
    %v4655 = vsub.s32 %v4652, %v4654
    %v4656 = vrot.slane %v3907, %v4655
    %v4658 = vunpack.c.l.s4 1987475062
    %v4659 = vunpack.c.0.s8 %v4658
    %v4660 = vlaneseq
    %v4661 = vshrl.u32 %v4660, 7
    %v4662 = vsub.s32 %v4659, %v4661
    %v4663 = vrot.slane %v3907, %v4662
    %v4665 = vunpack.c.l.s4 269488144
    %v4666 = vunpack.c.0.s8 %v4665
    %v4667 = vlaneseq
    %v4668 = vshrl.u32 %v4667, 7
    %v4669 = vsub.s32 %v4666, %v4668
    %v4670 = vrot.slane %v3910, %v4669
    %v4672 = vunpack.c.l.s4 842150450
    %v4673 = vunpack.c.0.s8 %v4672
    %v4674 = vlaneseq
    %v4675 = vshrl.u32 %v4674, 7
    %v4676 = vsub.s32 %v4673, %v4675
    %v4677 = vrot.slane %v3910, %v4676
    %v4679 = vunpack.c.l.s4 1414812756
    %v4680 = vunpack.c.0.s8 %v4679
    %v4681 = vlaneseq
    %v4682 = vshrl.u32 %v4681, 7
    %v4683 = vsub.s32 %v4680, %v4682
    %v4684 = vrot.slane %v3910, %v4683
    %v4686 = vunpack.c.l.s4 1987475062
    %v4687 = vunpack.c.0.s8 %v4686
    %v4688 = vlaneseq
    %v4689 = vshrl.u32 %v4688, 7
    %v4690 = vsub.s32 %v4687, %v4689
    %v4691 = vrot.slane %v3910, %v4690
    %v4693 = vunpack.c.l.s4 269488144
    %v4694 = vunpack.c.0.s8 %v4693
    %v4695 = vlaneseq
    %v4696 = vshrl.u32 %v4695, 7
    %v4697 = vsub.s32 %v4694, %v4696
    %v4698 = vrot.slane %v3913, %v4697
    %v4700 = vunpack.c.l.s4 842150450
    %v4701 = vunpack.c.0.s8 %v4700
    %v4702 = vlaneseq
    %v4703 = vshrl.u32 %v4702, 7
    %v4704 = vsub.s32 %v4701, %v4703
    %v4705 = vrot.slane %v3913, %v4704
    %v4707 = vunpack.c.l.s4 1414812756
    %v4708 = vunpack.c.0.s8 %v4707
    %v4709 = vlaneseq
    %v4710 = vshrl.u32 %v4709, 7
    %v4711 = vsub.s32 %v4708, %v4710
    %v4712 = vrot.slane %v3913, %v4711
    %v4714 = vunpack.c.l.s4 1987475062
    %v4715 = vunpack.c.0.s8 %v4714
    %v4716 = vlaneseq
    %v4717 = vshrl.u32 %v4716, 7
    %v4718 = vsub.s32 %v4715, %v4717
    %v4719 = vrot.slane %v3913, %v4718
    %v4721 = vunpack.c.l.s4 269488144
    %v4722 = vunpack.c.0.s8 %v4721
    %v4723 = vlaneseq
    %v4724 = vshrl.u32 %v4723, 7
    %v4725 = vsub.s32 %v4722, %v4724
    %v4726 = vrot.slane %v3916, %v4725
    %v4728 = vunpack.c.l.s4 842150450
    %v4729 = vunpack.c.0.s8 %v4728
    %v4730 = vlaneseq
    %v4731 = vshrl.u32 %v4730, 7
    %v4732 = vsub.s32 %v4729, %v4731
    %v4733 = vrot.slane %v3916, %v4732
    %v4735 = vunpack.c.l.s4 1414812756
    %v4736 = vunpack.c.0.s8 %v4735
    %v4737 = vlaneseq
    %v4738 = vshrl.u32 %v4737, 7
    %v4739 = vsub.s32 %v4736, %v4738
    %v4740 = vrot.slane %v3916, %v4739
    %v4742 = vunpack.c.l.s4 1987475062
    %v4743 = vunpack.c.0.s8 %v4742
    %v4744 = vlaneseq
    %v4745 = vshrl.u32 %v4744, 7
    %v4746 = vsub.s32 %v4743, %v4745
    %v4747 = vrot.slane %v3916, %v4746
    %v4749 = vunpack.c.l.s4 269488144
    %v4750 = vunpack.c.0.s8 %v4749
    %v4751 = vlaneseq
    %v4752 = vshrl.u32 %v4751, 7
    %v4753 = vsub.s32 %v4750, %v4752
    %v4754 = vrot.slane %v3919, %v4753
    %v4756 = vunpack.c.l.s4 842150450
    %v4757 = vunpack.c.0.s8 %v4756
    %v4758 = vlaneseq
    %v4759 = vshrl.u32 %v4758, 7
    %v4760 = vsub.s32 %v4757, %v4759
    %v4761 = vrot.slane %v3919, %v4760
    %v4763 = vunpack.c.l.s4 1414812756
    %v4764 = vunpack.c.0.s8 %v4763
    %v4765 = vlaneseq
    %v4766 = vshrl.u32 %v4765, 7
    %v4767 = vsub.s32 %v4764, %v4766
    %v4768 = vrot.slane %v3919, %v4767
    %v4770 = vunpack.c.l.s4 1987475062
    %v4771 = vunpack.c.0.s8 %v4770
    %v4772 = vlaneseq
    %v4773 = vshrl.u32 %v4772, 7
    %v4774 = vsub.s32 %v4771, %v4773
    %v4775 = vrot.slane %v3919, %v4774
    %v4777 = vunpack.c.l.s4 269488144
    %v4778 = vunpack.c.0.s8 %v4777
    %v4779 = vlaneseq
    %v4780 = vshrl.u32 %v4779, 7
    %v4781 = vsub.s32 %v4778, %v4780
    %v4782 = vrot.slane %v3922, %v4781
    %v4784 = vunpack.c.l.s4 842150450
    %v4785 = vunpack.c.0.s8 %v4784
    %v4786 = vlaneseq
    %v4787 = vshrl.u32 %v4786, 7
    %v4788 = vsub.s32 %v4785, %v4787
    %v4789 = vrot.slane %v3922, %v4788
    %v4791 = vunpack.c.l.s4 1414812756
    %v4792 = vunpack.c.0.s8 %v4791
    %v4793 = vlaneseq
    %v4794 = vshrl.u32 %v4793, 7
    %v4795 = vsub.s32 %v4792, %v4794
    %v4796 = vrot.slane %v3922, %v4795
    %v4798 = vunpack.c.l.s4 1987475062
    %v4799 = vunpack.c.0.s8 %v4798
    %v4800 = vlaneseq
    %v4801 = vshrl.u32 %v4800, 7
    %v4802 = vsub.s32 %v4799, %v4801
    %v4803 = vrot.slane %v3922, %v4802
    %v4805 = vunpack.c.l.s4 269488144
    %v4806 = vunpack.c.0.s8 %v4805
    %v4807 = vlaneseq
    %v4808 = vshrl.u32 %v4807, 7
    %v4809 = vsub.s32 %v4806, %v4808
    %v4810 = vrot.slane %v3925, %v4809
    %v4812 = vunpack.c.l.s4 842150450
    %v4813 = vunpack.c.0.s8 %v4812
    %v4814 = vlaneseq
    %v4815 = vshrl.u32 %v4814, 7
    %v4816 = vsub.s32 %v4813, %v4815
    %v4817 = vrot.slane %v3925, %v4816
    %v4819 = vunpack.c.l.s4 1414812756
    %v4820 = vunpack.c.0.s8 %v4819
    %v4821 = vlaneseq
    %v4822 = vshrl.u32 %v4821, 7
    %v4823 = vsub.s32 %v4820, %v4822
    %v4824 = vrot.slane %v3925, %v4823
    %v4826 = vunpack.c.l.s4 1987475062
    %v4827 = vunpack.c.0.s8 %v4826
    %v4828 = vlaneseq
    %v4829 = vshrl.u32 %v4828, 7
    %v4830 = vsub.s32 %v4827, %v4829
    %v4831 = vrot.slane %v3925, %v4830
    %v4833 = vunpack.c.l.s4 269488144
    %v4834 = vunpack.c.0.s8 %v4833
    %v4835 = vlaneseq
    %v4836 = vshrl.u32 %v4835, 7
    %v4837 = vsub.s32 %v4834, %v4836
    %v4838 = vrot.slane %v3928, %v4837
    %v4840 = vunpack.c.l.s4 842150450
    %v4841 = vunpack.c.0.s8 %v4840
    %v4842 = vlaneseq
    %v4843 = vshrl.u32 %v4842, 7
    %v4844 = vsub.s32 %v4841, %v4843
    %v4845 = vrot.slane %v3928, %v4844
    %v4847 = vunpack.c.l.s4 1414812756
    %v4848 = vunpack.c.0.s8 %v4847
    %v4849 = vlaneseq
    %v4850 = vshrl.u32 %v4849, 7
    %v4851 = vsub.s32 %v4848, %v4850
    %v4852 = vrot.slane %v3928, %v4851
    %v4854 = vunpack.c.l.s4 1987475062
    %v4855 = vunpack.c.0.s8 %v4854
    %v4856 = vlaneseq
    %v4857 = vshrl.u32 %v4856, 7
    %v4858 = vsub.s32 %v4855, %v4857
    %v4859 = vrot.slane %v3928, %v4858
    %v4861 = vunpack.c.l.s4 269488144
    %v4862 = vunpack.c.0.s8 %v4861
    %v4863 = vlaneseq
    %v4864 = vshrl.u32 %v4863, 7
    %v4865 = vsub.s32 %v4862, %v4864
    %v4866 = vrot.slane %v3931, %v4865
    %v4868 = vunpack.c.l.s4 842150450
    %v4869 = vunpack.c.0.s8 %v4868
    %v4870 = vlaneseq
    %v4871 = vshrl.u32 %v4870, 7
    %v4872 = vsub.s32 %v4869, %v4871
    %v4873 = vrot.slane %v3931, %v4872
    %v4875 = vunpack.c.l.s4 1414812756
    %v4876 = vunpack.c.0.s8 %v4875
    %v4877 = vlaneseq
    %v4878 = vshrl.u32 %v4877, 7
    %v4879 = vsub.s32 %v4876, %v4878
    %v4880 = vrot.slane %v3931, %v4879
    %v4882 = vunpack.c.l.s4 1987475062
    %v4883 = vunpack.c.0.s8 %v4882
    %v4884 = vlaneseq
    %v4885 = vshrl.u32 %v4884, 7
    %v4886 = vsub.s32 %v4883, %v4885
    %v4887 = vrot.slane %v3931, %v4886
    %v4889 = vunpack.c.l.s4 269488144
    %v4890 = vunpack.c.0.s8 %v4889
    %v4891 = vlaneseq
    %v4892 = vshrl.u32 %v4891, 7
    %v4893 = vsub.s32 %v4890, %v4892
    %v4894 = vrot.slane %v3934, %v4893
    %v4896 = vunpack.c.l.s4 842150450
    %v4897 = vunpack.c.0.s8 %v4896
    %v4898 = vlaneseq
    %v4899 = vshrl.u32 %v4898, 7
    %v4900 = vsub.s32 %v4897, %v4899
    %v4901 = vrot.slane %v3934, %v4900
    %v4903 = vunpack.c.l.s4 1414812756
    %v4904 = vunpack.c.0.s8 %v4903
    %v4905 = vlaneseq
    %v4906 = vshrl.u32 %v4905, 7
    %v4907 = vsub.s32 %v4904, %v4906
    %v4908 = vrot.slane %v3934, %v4907
    %v4910 = vunpack.c.l.s4 1987475062
    %v4911 = vunpack.c.0.s8 %v4910
    %v4912 = vlaneseq
    %v4913 = vshrl.u32 %v4912, 7
    %v4914 = vsub.s32 %v4911, %v4913
    %v4915 = vrot.slane %v3934, %v4914
    %v4917 = vunpack.c.l.s4 269488144
    %v4918 = vunpack.c.0.s8 %v4917
    %v4919 = vlaneseq
    %v4920 = vshrl.u32 %v4919, 7
    %v4921 = vsub.s32 %v4918, %v4920
    %v4922 = vrot.slane %v3937, %v4921
    %v4924 = vunpack.c.l.s4 842150450
    %v4925 = vunpack.c.0.s8 %v4924
    %v4926 = vlaneseq
    %v4927 = vshrl.u32 %v4926, 7
    %v4928 = vsub.s32 %v4925, %v4927
    %v4929 = vrot.slane %v3937, %v4928
    %v4931 = vunpack.c.l.s4 1414812756
    %v4932 = vunpack.c.0.s8 %v4931
    %v4933 = vlaneseq
    %v4934 = vshrl.u32 %v4933, 7
    %v4935 = vsub.s32 %v4932, %v4934
    %v4936 = vrot.slane %v3937, %v4935
    %v4938 = vunpack.c.l.s4 1987475062
    %v4939 = vunpack.c.0.s8 %v4938
    %v4940 = vlaneseq
    %v4941 = vshrl.u32 %v4940, 7
    %v4942 = vsub.s32 %v4939, %v4941
    %v4943 = vrot.slane %v3937, %v4942
    %v4945 = vunpack.c.l.s4 269488144
    %v4946 = vunpack.c.0.s8 %v4945
    %v4947 = vlaneseq
    %v4948 = vshrl.u32 %v4947, 7
    %v4949 = vsub.s32 %v4946, %v4948
    %v4950 = vrot.slane %v3940, %v4949
    %v4952 = vunpack.c.l.s4 842150450
    %v4953 = vunpack.c.0.s8 %v4952
    %v4954 = vlaneseq
    %v4955 = vshrl.u32 %v4954, 7
    %v4956 = vsub.s32 %v4953, %v4955
    %v4957 = vrot.slane %v3940, %v4956
    %v4959 = vunpack.c.l.s4 1414812756
    %v4960 = vunpack.c.0.s8 %v4959
    %v4961 = vlaneseq
    %v4962 = vshrl.u32 %v4961, 7
    %v4963 = vsub.s32 %v4960, %v4962
    %v4964 = vrot.slane %v3940, %v4963
    %v4966 = vunpack.c.l.s4 1987475062
    %v4967 = vunpack.c.0.s8 %v4966
    %v4968 = vlaneseq
    %v4969 = vshrl.u32 %v4968, 7
    %v4970 = vsub.s32 %v4967, %v4969
    %v4971 = vrot.slane %v3940, %v4970
    %v4973 = vunpack.c.l.s4 269488144
    %v4974 = vunpack.c.0.s8 %v4973
    %v4975 = vlaneseq
    %v4976 = vshrl.u32 %v4975, 7
    %v4977 = vsub.s32 %v4974, %v4976
    %v4978 = vrot.slane %v3943, %v4977
    %v4980 = vunpack.c.l.s4 842150450
    %v4981 = vunpack.c.0.s8 %v4980
    %v4982 = vlaneseq
    %v4983 = vshrl.u32 %v4982, 7
    %v4984 = vsub.s32 %v4981, %v4983
    %v4985 = vrot.slane %v3943, %v4984
    %v4987 = vunpack.c.l.s4 1414812756
    %v4988 = vunpack.c.0.s8 %v4987
    %v4989 = vlaneseq
    %v4990 = vshrl.u32 %v4989, 7
    %v4991 = vsub.s32 %v4988, %v4990
    %v4992 = vrot.slane %v3943, %v4991
    %v4994 = vunpack.c.l.s4 1987475062
    %v4995 = vunpack.c.0.s8 %v4994
    %v4996 = vlaneseq
    %v4997 = vshrl.u32 %v4996, 7
    %v4998 = vsub.s32 %v4995, %v4997
    %v4999 = vrot.slane %v3943, %v4998
    %v5001 = vunpack.c.l.s4 269488144
    %v5002 = vunpack.c.0.s8 %v5001
    %v5003 = vlaneseq
    %v5004 = vshrl.u32 %v5003, 7
    %v5005 = vsub.s32 %v5002, %v5004
    %v5006 = vrot.slane %v3946, %v5005
    %v5008 = vunpack.c.l.s4 842150450
    %v5009 = vunpack.c.0.s8 %v5008
    %v5010 = vlaneseq
    %v5011 = vshrl.u32 %v5010, 7
    %v5012 = vsub.s32 %v5009, %v5011
    %v5013 = vrot.slane %v3946, %v5012
    %v5015 = vunpack.c.l.s4 1414812756
    %v5016 = vunpack.c.0.s8 %v5015
    %v5017 = vlaneseq
    %v5018 = vshrl.u32 %v5017, 7
    %v5019 = vsub.s32 %v5016, %v5018
    %v5020 = vrot.slane %v3946, %v5019
    %v5022 = vunpack.c.l.s4 1987475062
    %v5023 = vunpack.c.0.s8 %v5022
    %v5024 = vlaneseq
    %v5025 = vshrl.u32 %v5024, 7
    %v5026 = vsub.s32 %v5023, %v5025
    %v5027 = vrot.slane %v3946, %v5026
    %v5029 = vunpack.c.l.s4 269488144
    %v5030 = vunpack.c.0.s8 %v5029
    %v5031 = vlaneseq
    %v5032 = vshrl.u32 %v5031, 7
    %v5033 = vsub.s32 %v5030, %v5032
    %v5034 = vrot.slane %v3949, %v5033
    %v5036 = vunpack.c.l.s4 842150450
    %v5037 = vunpack.c.0.s8 %v5036
    %v5038 = vlaneseq
    %v5039 = vshrl.u32 %v5038, 7
    %v5040 = vsub.s32 %v5037, %v5039
    %v5041 = vrot.slane %v3949, %v5040
    %v5043 = vunpack.c.l.s4 1414812756
    %v5044 = vunpack.c.0.s8 %v5043
    %v5045 = vlaneseq
    %v5046 = vshrl.u32 %v5045, 7
    %v5047 = vsub.s32 %v5044, %v5046
    %v5048 = vrot.slane %v3949, %v5047
    %v5050 = vunpack.c.l.s4 1987475062
    %v5051 = vunpack.c.0.s8 %v5050
    %v5052 = vlaneseq
    %v5053 = vshrl.u32 %v5052, 7
    %v5054 = vsub.s32 %v5051, %v5053
    %v5055 = vrot.slane %v3949, %v5054
    %v5057 = vunpack.c.l.s4 269488144
    %v5058 = vunpack.c.0.s8 %v5057
    %v5059 = vlaneseq
    %v5060 = vshrl.u32 %v5059, 7
    %v5061 = vsub.s32 %v5058, %v5060
    %v5062 = vrot.slane %v3952, %v5061
    %v5064 = vunpack.c.l.s4 842150450
    %v5065 = vunpack.c.0.s8 %v5064
    %v5066 = vlaneseq
    %v5067 = vshrl.u32 %v5066, 7
    %v5068 = vsub.s32 %v5065, %v5067
    %v5069 = vrot.slane %v3952, %v5068
    %v5071 = vunpack.c.l.s4 1414812756
    %v5072 = vunpack.c.0.s8 %v5071
    %v5073 = vlaneseq
    %v5074 = vshrl.u32 %v5073, 7
    %v5075 = vsub.s32 %v5072, %v5074
    %v5076 = vrot.slane %v3952, %v5075
    %v5078 = vunpack.c.l.s4 1987475062
    %v5079 = vunpack.c.0.s8 %v5078
    %v5080 = vlaneseq
    %v5081 = vshrl.u32 %v5080, 7
    %v5082 = vsub.s32 %v5079, %v5081
    %v5083 = vrot.slane %v3952, %v5082
    %v5085 = vunpack.c.l.s4 269488144
    %v5086 = vunpack.c.0.s8 %v5085
    %v5087 = vlaneseq
    %v5088 = vshrl.u32 %v5087, 7
    %v5089 = vsub.s32 %v5086, %v5088
    %v5090 = vrot.slane %v3955, %v5089
    %v5092 = vunpack.c.l.s4 842150450
    %v5093 = vunpack.c.0.s8 %v5092
    %v5094 = vlaneseq
    %v5095 = vshrl.u32 %v5094, 7
    %v5096 = vsub.s32 %v5093, %v5095
    %v5097 = vrot.slane %v3955, %v5096
    %v5099 = vunpack.c.l.s4 1414812756
    %v5100 = vunpack.c.0.s8 %v5099
    %v5101 = vlaneseq
    %v5102 = vshrl.u32 %v5101, 7
    %v5103 = vsub.s32 %v5100, %v5102
    %v5104 = vrot.slane %v3955, %v5103
    %v5106 = vunpack.c.l.s4 1987475062
    %v5107 = vunpack.c.0.s8 %v5106
    %v5108 = vlaneseq
    %v5109 = vshrl.u32 %v5108, 7
    %v5110 = vsub.s32 %v5107, %v5109
    %v5111 = vrot.slane %v3955, %v5110
    %v5113 = vunpack.c.l.s4 269488144
    %v5114 = vunpack.c.0.s8 %v5113
    %v5115 = vlaneseq
    %v5116 = vshrl.u32 %v5115, 7
    %v5117 = vsub.s32 %v5114, %v5116
    %v5118 = vrot.slane %v3958, %v5117
    %v5120 = vunpack.c.l.s4 842150450
    %v5121 = vunpack.c.0.s8 %v5120
    %v5122 = vlaneseq
    %v5123 = vshrl.u32 %v5122, 7
    %v5124 = vsub.s32 %v5121, %v5123
    %v5125 = vrot.slane %v3958, %v5124
    %v5127 = vunpack.c.l.s4 1414812756
    %v5128 = vunpack.c.0.s8 %v5127
    %v5129 = vlaneseq
    %v5130 = vshrl.u32 %v5129, 7
    %v5131 = vsub.s32 %v5128, %v5130
    %v5132 = vrot.slane %v3958, %v5131
    %v5134 = vunpack.c.l.s4 1987475062
    %v5135 = vunpack.c.0.s8 %v5134
    %v5136 = vlaneseq
    %v5137 = vshrl.u32 %v5136, 7
    %v5138 = vsub.s32 %v5135, %v5137
    %v5139 = vrot.slane %v3958, %v5138
    %v5141 = vunpack.c.l.s4 269488144
    %v5142 = vunpack.c.0.s8 %v5141
    %v5143 = vlaneseq
    %v5144 = vshrl.u32 %v5143, 7
    %v5145 = vsub.s32 %v5142, %v5144
    %v5146 = vrot.slane %v3961, %v5145
    %v5148 = vunpack.c.l.s4 842150450
    %v5149 = vunpack.c.0.s8 %v5148
    %v5150 = vlaneseq
    %v5151 = vshrl.u32 %v5150, 7
    %v5152 = vsub.s32 %v5149, %v5151
    %v5153 = vrot.slane %v3961, %v5152
    %v5155 = vunpack.c.l.s4 1414812756
    %v5156 = vunpack.c.0.s8 %v5155
    %v5157 = vlaneseq
    %v5158 = vshrl.u32 %v5157, 7
    %v5159 = vsub.s32 %v5156, %v5158
    %v5160 = vrot.slane %v3961, %v5159
    %v5162 = vunpack.c.l.s4 1987475062
    %v5163 = vunpack.c.0.s8 %v5162
    %v5164 = vlaneseq
    %v5165 = vshrl.u32 %v5164, 7
    %v5166 = vsub.s32 %v5163, %v5165
    %v5167 = vrot.slane %v3961, %v5166
    %v5169 = vunpack.c.l.s4 269488144
    %v5170 = vunpack.c.0.s8 %v5169
    %v5171 = vlaneseq
    %v5172 = vshrl.u32 %v5171, 7
    %v5173 = vsub.s32 %v5170, %v5172
    %v5174 = vrot.slane %v3964, %v5173
    %v5176 = vunpack.c.l.s4 842150450
    %v5177 = vunpack.c.0.s8 %v5176
    %v5178 = vlaneseq
    %v5179 = vshrl.u32 %v5178, 7
    %v5180 = vsub.s32 %v5177, %v5179
    %v5181 = vrot.slane %v3964, %v5180
    %v5183 = vunpack.c.l.s4 1414812756
    %v5184 = vunpack.c.0.s8 %v5183
    %v5185 = vlaneseq
    %v5186 = vshrl.u32 %v5185, 7
    %v5187 = vsub.s32 %v5184, %v5186
    %v5188 = vrot.slane %v3964, %v5187
    %v5190 = vunpack.c.l.s4 1987475062
    %v5191 = vunpack.c.0.s8 %v5190
    %v5192 = vlaneseq
    %v5193 = vshrl.u32 %v5192, 7
    %v5194 = vsub.s32 %v5191, %v5193
    %v5195 = vrot.slane %v3964, %v5194
    %v5197 = vunpack.c.l.s4 269488144
    %v5198 = vunpack.c.0.s8 %v5197
    %v5199 = vlaneseq
    %v5200 = vshrl.u32 %v5199, 7
    %v5201 = vsub.s32 %v5198, %v5200
    %v5202 = vrot.slane %v3967, %v5201
    %v5204 = vunpack.c.l.s4 842150450
    %v5205 = vunpack.c.0.s8 %v5204
    %v5206 = vlaneseq
    %v5207 = vshrl.u32 %v5206, 7
    %v5208 = vsub.s32 %v5205, %v5207
    %v5209 = vrot.slane %v3967, %v5208
    %v5211 = vunpack.c.l.s4 1414812756
    %v5212 = vunpack.c.0.s8 %v5211
    %v5213 = vlaneseq
    %v5214 = vshrl.u32 %v5213, 7
    %v5215 = vsub.s32 %v5212, %v5214
    %v5216 = vrot.slane %v3967, %v5215
    %v5218 = vunpack.c.l.s4 1987475062
    %v5219 = vunpack.c.0.s8 %v5218
    %v5220 = vlaneseq
    %v5221 = vshrl.u32 %v5220, 7
    %v5222 = vsub.s32 %v5219, %v5221
    %v5223 = vrot.slane %v3967, %v5222
    %v5225 = vunpack.c.l.s4 269488144
    %v5226 = vunpack.c.0.s8 %v5225
    %v5227 = vlaneseq
    %v5228 = vshrl.u32 %v5227, 7
    %v5229 = vsub.s32 %v5226, %v5228
    %v5230 = vrot.slane %v3970, %v5229
    %v5232 = vunpack.c.l.s4 842150450
    %v5233 = vunpack.c.0.s8 %v5232
    %v5234 = vlaneseq
    %v5235 = vshrl.u32 %v5234, 7
    %v5236 = vsub.s32 %v5233, %v5235
    %v5237 = vrot.slane %v3970, %v5236
    %v5239 = vunpack.c.l.s4 1414812756
    %v5240 = vunpack.c.0.s8 %v5239
    %v5241 = vlaneseq
    %v5242 = vshrl.u32 %v5241, 7
    %v5243 = vsub.s32 %v5240, %v5242
    %v5244 = vrot.slane %v3970, %v5243
    %v5246 = vunpack.c.l.s4 1987475062
    %v5247 = vunpack.c.0.s8 %v5246
    %v5248 = vlaneseq
    %v5249 = vshrl.u32 %v5248, 7
    %v5250 = vsub.s32 %v5247, %v5249
    %v5251 = vrot.slane %v3970, %v5250
    %v5253 = vunpack.c.l.s4 269488144
    %v5254 = vunpack.c.0.s8 %v5253
    %v5255 = vlaneseq
    %v5256 = vshrl.u32 %v5255, 7
    %v5257 = vsub.s32 %v5254, %v5256
    %v5258 = vrot.slane %v3973, %v5257
    %v5260 = vunpack.c.l.s4 842150450
    %v5261 = vunpack.c.0.s8 %v5260
    %v5262 = vlaneseq
    %v5263 = vshrl.u32 %v5262, 7
    %v5264 = vsub.s32 %v5261, %v5263
    %v5265 = vrot.slane %v3973, %v5264
    %v5267 = vunpack.c.l.s4 1414812756
    %v5268 = vunpack.c.0.s8 %v5267
    %v5269 = vlaneseq
    %v5270 = vshrl.u32 %v5269, 7
    %v5271 = vsub.s32 %v5268, %v5270
    %v5272 = vrot.slane %v3973, %v5271
    %v5274 = vunpack.c.l.s4 1987475062
    %v5275 = vunpack.c.0.s8 %v5274
    %v5276 = vlaneseq
    %v5277 = vshrl.u32 %v5276, 7
    %v5278 = vsub.s32 %v5275, %v5277
    %v5279 = vrot.slane %v3973, %v5278
    %v5281 = vunpack.c.l.s4 269488144
    %v5282 = vunpack.c.0.s8 %v5281
    %v5283 = vlaneseq
    %v5284 = vshrl.u32 %v5283, 7
    %v5285 = vsub.s32 %v5282, %v5284
    %v5286 = vrot.slane %v3976, %v5285
    %v5288 = vunpack.c.l.s4 842150450
    %v5289 = vunpack.c.0.s8 %v5288
    %v5290 = vlaneseq
    %v5291 = vshrl.u32 %v5290, 7
    %v5292 = vsub.s32 %v5289, %v5291
    %v5293 = vrot.slane %v3976, %v5292
    %v5295 = vunpack.c.l.s4 1414812756
    %v5296 = vunpack.c.0.s8 %v5295
    %v5297 = vlaneseq
    %v5298 = vshrl.u32 %v5297, 7
    %v5299 = vsub.s32 %v5296, %v5298
    %v5300 = vrot.slane %v3976, %v5299
    %v5302 = vunpack.c.l.s4 1987475062
    %v5303 = vunpack.c.0.s8 %v5302
    %v5304 = vlaneseq
    %v5305 = vshrl.u32 %v5304, 7
    %v5306 = vsub.s32 %v5303, %v5305
    %v5307 = vrot.slane %v3976, %v5306
    %v5309 = vunpack.c.l.s4 269488144
    %v5310 = vunpack.c.0.s8 %v5309
    %v5311 = vlaneseq
    %v5312 = vshrl.u32 %v5311, 7
    %v5313 = vsub.s32 %v5310, %v5312
    %v5314 = vrot.slane %v3979, %v5313
    %v5316 = vunpack.c.l.s4 842150450
    %v5317 = vunpack.c.0.s8 %v5316
    %v5318 = vlaneseq
    %v5319 = vshrl.u32 %v5318, 7
    %v5320 = vsub.s32 %v5317, %v5319
    %v5321 = vrot.slane %v3979, %v5320
    %v5323 = vunpack.c.l.s4 1414812756
    %v5324 = vunpack.c.0.s8 %v5323
    %v5325 = vlaneseq
    %v5326 = vshrl.u32 %v5325, 7
    %v5327 = vsub.s32 %v5324, %v5326
    %v5328 = vrot.slane %v3979, %v5327
    %v5330 = vunpack.c.l.s4 1987475062
    %v5331 = vunpack.c.0.s8 %v5330
    %v5332 = vlaneseq
    %v5333 = vshrl.u32 %v5332, 7
    %v5334 = vsub.s32 %v5331, %v5333
    %v5335 = vrot.slane %v3979, %v5334
    %v5337 = vunpack.c.l.s4 269488144
    %v5338 = vunpack.c.0.s8 %v5337
    %v5339 = vlaneseq
    %v5340 = vshrl.u32 %v5339, 7
    %v5341 = vsub.s32 %v5338, %v5340
    %v5342 = vrot.slane %v3982, %v5341
    %v5344 = vunpack.c.l.s4 842150450
    %v5345 = vunpack.c.0.s8 %v5344
    %v5346 = vlaneseq
    %v5347 = vshrl.u32 %v5346, 7
    %v5348 = vsub.s32 %v5345, %v5347
    %v5349 = vrot.slane %v3982, %v5348
    %v5351 = vunpack.c.l.s4 1414812756
    %v5352 = vunpack.c.0.s8 %v5351
    %v5353 = vlaneseq
    %v5354 = vshrl.u32 %v5353, 7
    %v5355 = vsub.s32 %v5352, %v5354
    %v5356 = vrot.slane %v3982, %v5355
    %v5358 = vunpack.c.l.s4 1987475062
    %v5359 = vunpack.c.0.s8 %v5358
    %v5360 = vlaneseq
    %v5361 = vshrl.u32 %v5360, 7
    %v5362 = vsub.s32 %v5359, %v5361
    %v5363 = vrot.slane %v3982, %v5362
    %v5365 = vunpack.c.l.s4 269488144
    %v5366 = vunpack.c.0.s8 %v5365
    %v5367 = vlaneseq
    %v5368 = vshrl.u32 %v5367, 7
    %v5369 = vsub.s32 %v5366, %v5368
    %v5370 = vrot.slane %v3985, %v5369
    %v5372 = vunpack.c.l.s4 842150450
    %v5373 = vunpack.c.0.s8 %v5372
    %v5374 = vlaneseq
    %v5375 = vshrl.u32 %v5374, 7
    %v5376 = vsub.s32 %v5373, %v5375
    %v5377 = vrot.slane %v3985, %v5376
    %v5379 = vunpack.c.l.s4 1414812756
    %v5380 = vunpack.c.0.s8 %v5379
    %v5381 = vlaneseq
    %v5382 = vshrl.u32 %v5381, 7
    %v5383 = vsub.s32 %v5380, %v5382
    %v5384 = vrot.slane %v3985, %v5383
    %v5386 = vunpack.c.l.s4 1987475062
    %v5387 = vunpack.c.0.s8 %v5386
    %v5388 = vlaneseq
    %v5389 = vshrl.u32 %v5388, 7
    %v5390 = vsub.s32 %v5387, %v5389
    %v5391 = vrot.slane %v3985, %v5390
    %v5393 = vunpack.c.l.s4 269488144
    %v5394 = vunpack.c.0.s8 %v5393
    %v5395 = vlaneseq
    %v5396 = vshrl.u32 %v5395, 7
    %v5397 = vsub.s32 %v5394, %v5396
    %v5398 = vrot.slane %v3988, %v5397
    %v5400 = vunpack.c.l.s4 842150450
    %v5401 = vunpack.c.0.s8 %v5400
    %v5402 = vlaneseq
    %v5403 = vshrl.u32 %v5402, 7
    %v5404 = vsub.s32 %v5401, %v5403
    %v5405 = vrot.slane %v3988, %v5404
    %v5407 = vunpack.c.l.s4 1414812756
    %v5408 = vunpack.c.0.s8 %v5407
    %v5409 = vlaneseq
    %v5410 = vshrl.u32 %v5409, 7
    %v5411 = vsub.s32 %v5408, %v5410
    %v5412 = vrot.slane %v3988, %v5411
    %v5414 = vunpack.c.l.s4 1987475062
    %v5415 = vunpack.c.0.s8 %v5414
    %v5416 = vlaneseq
    %v5417 = vshrl.u32 %v5416, 7
    %v5418 = vsub.s32 %v5415, %v5417
    %v5419 = vrot.slane %v3988, %v5418
    %v5421 = vunpack.c.l.s4 269488144
    %v5422 = vunpack.c.0.s8 %v5421
    %v5423 = vlaneseq
    %v5424 = vshrl.u32 %v5423, 7
    %v5425 = vsub.s32 %v5422, %v5424
    %v5426 = vrot.slane %v3991, %v5425
    %v5428 = vunpack.c.l.s4 842150450
    %v5429 = vunpack.c.0.s8 %v5428
    %v5430 = vlaneseq
    %v5431 = vshrl.u32 %v5430, 7
    %v5432 = vsub.s32 %v5429, %v5431
    %v5433 = vrot.slane %v3991, %v5432
    %v5435 = vunpack.c.l.s4 1414812756
    %v5436 = vunpack.c.0.s8 %v5435
    %v5437 = vlaneseq
    %v5438 = vshrl.u32 %v5437, 7
    %v5439 = vsub.s32 %v5436, %v5438
    %v5440 = vrot.slane %v3991, %v5439
    %v5442 = vunpack.c.l.s4 1987475062
    %v5443 = vunpack.c.0.s8 %v5442
    %v5444 = vlaneseq
    %v5445 = vshrl.u32 %v5444, 7
    %v5446 = vsub.s32 %v5443, %v5445
    %v5447 = vrot.slane %v3991, %v5446
    %v5449 = vunpack.c.l.s4 269488144
    %v5450 = vunpack.c.0.s8 %v5449
    %v5451 = vlaneseq
    %v5452 = vshrl.u32 %v5451, 7
    %v5453 = vsub.s32 %v5450, %v5452
    %v5454 = vrot.slane %v3994, %v5453
    %v5456 = vunpack.c.l.s4 842150450
    %v5457 = vunpack.c.0.s8 %v5456
    %v5458 = vlaneseq
    %v5459 = vshrl.u32 %v5458, 7
    %v5460 = vsub.s32 %v5457, %v5459
    %v5461 = vrot.slane %v3994, %v5460
    %v5463 = vunpack.c.l.s4 1414812756
    %v5464 = vunpack.c.0.s8 %v5463
    %v5465 = vlaneseq
    %v5466 = vshrl.u32 %v5465, 7
    %v5467 = vsub.s32 %v5464, %v5466
    %v5468 = vrot.slane %v3994, %v5467
    %v5470 = vunpack.c.l.s4 1987475062
    %v5471 = vunpack.c.0.s8 %v5470
    %v5472 = vlaneseq
    %v5473 = vshrl.u32 %v5472, 7
    %v5474 = vsub.s32 %v5471, %v5473
    %v5475 = vrot.slane %v3994, %v5474
    %v5477 = vunpack.c.l.s4 269488144
    %v5478 = vunpack.c.0.s8 %v5477
    %v5479 = vlaneseq
    %v5480 = vshrl.u32 %v5479, 7
    %v5481 = vsub.s32 %v5478, %v5480
    %v5482 = vrot.slane %v3997, %v5481
    %v5484 = vunpack.c.l.s4 842150450
    %v5485 = vunpack.c.0.s8 %v5484
    %v5486 = vlaneseq
    %v5487 = vshrl.u32 %v5486, 7
    %v5488 = vsub.s32 %v5485, %v5487
    %v5489 = vrot.slane %v3997, %v5488
    %v5491 = vunpack.c.l.s4 1414812756
    %v5492 = vunpack.c.0.s8 %v5491
    %v5493 = vlaneseq
    %v5494 = vshrl.u32 %v5493, 7
    %v5495 = vsub.s32 %v5492, %v5494
    %v5496 = vrot.slane %v3997, %v5495
    %v5498 = vunpack.c.l.s4 1987475062
    %v5499 = vunpack.c.0.s8 %v5498
    %v5500 = vlaneseq
    %v5501 = vshrl.u32 %v5500, 7
    %v5502 = vsub.s32 %v5499, %v5501
    %v5503 = vrot.slane %v3997, %v5502
    %v5505 = vunpack.c.l.s4 269488144
    %v5506 = vunpack.c.0.s8 %v5505
    %v5507 = vlaneseq
    %v5508 = vshrl.u32 %v5507, 7
    %v5509 = vsub.s32 %v5506, %v5508
    %v5510 = vrot.slane %v4000, %v5509
    %v5512 = vunpack.c.l.s4 842150450
    %v5513 = vunpack.c.0.s8 %v5512
    %v5514 = vlaneseq
    %v5515 = vshrl.u32 %v5514, 7
    %v5516 = vsub.s32 %v5513, %v5515
    %v5517 = vrot.slane %v4000, %v5516
    %v5519 = vunpack.c.l.s4 1414812756
    %v5520 = vunpack.c.0.s8 %v5519
    %v5521 = vlaneseq
    %v5522 = vshrl.u32 %v5521, 7
    %v5523 = vsub.s32 %v5520, %v5522
    %v5524 = vrot.slane %v4000, %v5523
    %v5526 = vunpack.c.l.s4 1987475062
    %v5527 = vunpack.c.0.s8 %v5526
    %v5528 = vlaneseq
    %v5529 = vshrl.u32 %v5528, 7
    %v5530 = vsub.s32 %v5527, %v5529
    %v5531 = vrot.slane %v4000, %v5530
    %v5533 = vunpack.c.l.s4 269488144
    %v5534 = vunpack.c.0.s8 %v5533
    %v5535 = vlaneseq
    %v5536 = vshrl.u32 %v5535, 7
    %v5537 = vsub.s32 %v5534, %v5536
    %v5538 = vrot.slane %v4003, %v5537
    %v5540 = vunpack.c.l.s4 842150450
    %v5541 = vunpack.c.0.s8 %v5540
    %v5542 = vlaneseq
    %v5543 = vshrl.u32 %v5542, 7
    %v5544 = vsub.s32 %v5541, %v5543
    %v5545 = vrot.slane %v4003, %v5544
    %v5547 = vunpack.c.l.s4 1414812756
    %v5548 = vunpack.c.0.s8 %v5547
    %v5549 = vlaneseq
    %v5550 = vshrl.u32 %v5549, 7
    %v5551 = vsub.s32 %v5548, %v5550
    %v5552 = vrot.slane %v4003, %v5551
    %v5554 = vunpack.c.l.s4 1987475062
    %v5555 = vunpack.c.0.s8 %v5554
    %v5556 = vlaneseq
    %v5557 = vshrl.u32 %v5556, 7
    %v5558 = vsub.s32 %v5555, %v5557
    %v5559 = vrot.slane %v4003, %v5558
    %v5561 = vunpack.c.l.s4 269488144
    %v5562 = vunpack.c.0.s8 %v5561
    %v5563 = vlaneseq
    %v5564 = vshrl.u32 %v5563, 7
    %v5565 = vsub.s32 %v5562, %v5564
    %v5566 = vrot.slane %v4006, %v5565
    %v5568 = vunpack.c.l.s4 842150450
    %v5569 = vunpack.c.0.s8 %v5568
    %v5570 = vlaneseq
    %v5571 = vshrl.u32 %v5570, 7
    %v5572 = vsub.s32 %v5569, %v5571
    %v5573 = vrot.slane %v4006, %v5572
    %v5575 = vunpack.c.l.s4 1414812756
    %v5576 = vunpack.c.0.s8 %v5575
    %v5577 = vlaneseq
    %v5578 = vshrl.u32 %v5577, 7
    %v5579 = vsub.s32 %v5576, %v5578
    %v5580 = vrot.slane %v4006, %v5579
    %v5582 = vunpack.c.l.s4 1987475062
    %v5583 = vunpack.c.0.s8 %v5582
    %v5584 = vlaneseq
    %v5585 = vshrl.u32 %v5584, 7
    %v5586 = vsub.s32 %v5583, %v5585
    %v5587 = vrot.slane %v4006, %v5586
    %v5589 = vunpack.c.l.s4 269488144
    %v5590 = vunpack.c.0.s8 %v5589
    %v5591 = vlaneseq
    %v5592 = vshrl.u32 %v5591, 7
    %v5593 = vsub.s32 %v5590, %v5592
    %v5594 = vrot.slane %v4009, %v5593
    %v5596 = vunpack.c.l.s4 842150450
    %v5597 = vunpack.c.0.s8 %v5596
    %v5598 = vlaneseq
    %v5599 = vshrl.u32 %v5598, 7
    %v5600 = vsub.s32 %v5597, %v5599
    %v5601 = vrot.slane %v4009, %v5600
    %v5603 = vunpack.c.l.s4 1414812756
    %v5604 = vunpack.c.0.s8 %v5603
    %v5605 = vlaneseq
    %v5606 = vshrl.u32 %v5605, 7
    %v5607 = vsub.s32 %v5604, %v5606
    %v5608 = vrot.slane %v4009, %v5607
    %v5610 = vunpack.c.l.s4 1987475062
    %v5611 = vunpack.c.0.s8 %v5610
    %v5612 = vlaneseq
    %v5613 = vshrl.u32 %v5612, 7
    %v5614 = vsub.s32 %v5611, %v5613
    %v5615 = vrot.slane %v4009, %v5614
    %v5617 = vunpack.c.l.s4 269488144
    %v5618 = vunpack.c.0.s8 %v5617
    %v5619 = vlaneseq
    %v5620 = vshrl.u32 %v5619, 7
    %v5621 = vsub.s32 %v5618, %v5620
    %v5622 = vrot.slane %v4012, %v5621
    %v5624 = vunpack.c.l.s4 842150450
    %v5625 = vunpack.c.0.s8 %v5624
    %v5626 = vlaneseq
    %v5627 = vshrl.u32 %v5626, 7
    %v5628 = vsub.s32 %v5625, %v5627
    %v5629 = vrot.slane %v4012, %v5628
    %v5631 = vunpack.c.l.s4 1414812756
    %v5632 = vunpack.c.0.s8 %v5631
    %v5633 = vlaneseq
    %v5634 = vshrl.u32 %v5633, 7
    %v5635 = vsub.s32 %v5632, %v5634
    %v5636 = vrot.slane %v4012, %v5635
    %v5638 = vunpack.c.l.s4 1987475062
    %v5639 = vunpack.c.0.s8 %v5638
    %v5640 = vlaneseq
    %v5641 = vshrl.u32 %v5640, 7
    %v5642 = vsub.s32 %v5639, %v5641
    %v5643 = vrot.slane %v4012, %v5642
    %v5645 = vunpack.c.l.s4 269488144
    %v5646 = vunpack.c.0.s8 %v5645
    %v5647 = vlaneseq
    %v5648 = vshrl.u32 %v5647, 7
    %v5649 = vsub.s32 %v5646, %v5648
    %v5650 = vrot.slane %v4015, %v5649
    %v5652 = vunpack.c.l.s4 842150450
    %v5653 = vunpack.c.0.s8 %v5652
    %v5654 = vlaneseq
    %v5655 = vshrl.u32 %v5654, 7
    %v5656 = vsub.s32 %v5653, %v5655
    %v5657 = vrot.slane %v4015, %v5656
    %v5659 = vunpack.c.l.s4 1414812756
    %v5660 = vunpack.c.0.s8 %v5659
    %v5661 = vlaneseq
    %v5662 = vshrl.u32 %v5661, 7
    %v5663 = vsub.s32 %v5660, %v5662
    %v5664 = vrot.slane %v4015, %v5663
    %v5666 = vunpack.c.l.s4 1987475062
    %v5667 = vunpack.c.0.s8 %v5666
    %v5668 = vlaneseq
    %v5669 = vshrl.u32 %v5668, 7
    %v5670 = vsub.s32 %v5667, %v5669
    %v5671 = vrot.slane %v4015, %v5670
    %v5673 = vunpack.c.l.s4 269488144
    %v5674 = vunpack.c.0.s8 %v5673
    %v5675 = vlaneseq
    %v5676 = vshrl.u32 %v5675, 7
    %v5677 = vsub.s32 %v5674, %v5676
    %v5678 = vrot.slane %v4018, %v5677
    %v5680 = vunpack.c.l.s4 842150450
    %v5681 = vunpack.c.0.s8 %v5680
    %v5682 = vlaneseq
    %v5683 = vshrl.u32 %v5682, 7
    %v5684 = vsub.s32 %v5681, %v5683
    %v5685 = vrot.slane %v4018, %v5684
    %v5687 = vunpack.c.l.s4 1414812756
    %v5688 = vunpack.c.0.s8 %v5687
    %v5689 = vlaneseq
    %v5690 = vshrl.u32 %v5689, 7
    %v5691 = vsub.s32 %v5688, %v5690
    %v5692 = vrot.slane %v4018, %v5691
    %v5694 = vunpack.c.l.s4 1987475062
    %v5695 = vunpack.c.0.s8 %v5694
    %v5696 = vlaneseq
    %v5697 = vshrl.u32 %v5696, 7
    %v5698 = vsub.s32 %v5695, %v5697
    %v5699 = vrot.slane %v4018, %v5698
    %v5701 = vunpack.c.l.s4 269488144
    %v5702 = vunpack.c.0.s8 %v5701
    %v5703 = vlaneseq
    %v5704 = vshrl.u32 %v5703, 7
    %v5705 = vsub.s32 %v5702, %v5704
    %v5706 = vrot.slane %v4021, %v5705
    %v5708 = vunpack.c.l.s4 842150450
    %v5709 = vunpack.c.0.s8 %v5708
    %v5710 = vlaneseq
    %v5711 = vshrl.u32 %v5710, 7
    %v5712 = vsub.s32 %v5709, %v5711
    %v5713 = vrot.slane %v4021, %v5712
    %v5715 = vunpack.c.l.s4 1414812756
    %v5716 = vunpack.c.0.s8 %v5715
    %v5717 = vlaneseq
    %v5718 = vshrl.u32 %v5717, 7
    %v5719 = vsub.s32 %v5716, %v5718
    %v5720 = vrot.slane %v4021, %v5719
    %v5722 = vunpack.c.l.s4 1987475062
    %v5723 = vunpack.c.0.s8 %v5722
    %v5724 = vlaneseq
    %v5725 = vshrl.u32 %v5724, 7
    %v5726 = vsub.s32 %v5723, %v5725
    %v5727 = vrot.slane %v4021, %v5726
    %v5729 = vunpack.c.l.s4 269488144
    %v5730 = vunpack.c.0.s8 %v5729
    %v5731 = vlaneseq
    %v5732 = vshrl.u32 %v5731, 7
    %v5733 = vsub.s32 %v5730, %v5732
    %v5734 = vrot.slane %v4024, %v5733
    %v5736 = vunpack.c.l.s4 842150450
    %v5737 = vunpack.c.0.s8 %v5736
    %v5738 = vlaneseq
    %v5739 = vshrl.u32 %v5738, 7
    %v5740 = vsub.s32 %v5737, %v5739
    %v5741 = vrot.slane %v4024, %v5740
    %v5743 = vunpack.c.l.s4 1414812756
    %v5744 = vunpack.c.0.s8 %v5743
    %v5745 = vlaneseq
    %v5746 = vshrl.u32 %v5745, 7
    %v5747 = vsub.s32 %v5744, %v5746
    %v5748 = vrot.slane %v4024, %v5747
    %v5750 = vunpack.c.l.s4 1987475062
    %v5751 = vunpack.c.0.s8 %v5750
    %v5752 = vlaneseq
    %v5753 = vshrl.u32 %v5752, 7
    %v5754 = vsub.s32 %v5751, %v5753
    %v5755 = vrot.slane %v4024, %v5754
    %v5757 = vunpack.c.l.s4 269488144
    %v5758 = vunpack.c.0.s8 %v5757
    %v5759 = vlaneseq
    %v5760 = vshrl.u32 %v5759, 7
    %v5761 = vsub.s32 %v5758, %v5760
    %v5762 = vrot.slane %v4027, %v5761
    %v5764 = vunpack.c.l.s4 842150450
    %v5765 = vunpack.c.0.s8 %v5764
    %v5766 = vlaneseq
    %v5767 = vshrl.u32 %v5766, 7
    %v5768 = vsub.s32 %v5765, %v5767
    %v5769 = vrot.slane %v4027, %v5768
    %v5771 = vunpack.c.l.s4 1414812756
    %v5772 = vunpack.c.0.s8 %v5771
    %v5773 = vlaneseq
    %v5774 = vshrl.u32 %v5773, 7
    %v5775 = vsub.s32 %v5772, %v5774
    %v5776 = vrot.slane %v4027, %v5775
    %v5778 = vunpack.c.l.s4 1987475062
    %v5779 = vunpack.c.0.s8 %v5778
    %v5780 = vlaneseq
    %v5781 = vshrl.u32 %v5780, 7
    %v5782 = vsub.s32 %v5779, %v5781
    %v5783 = vrot.slane %v4027, %v5782
    %v5785 = vunpack.c.l.s4 269488144
    %v5786 = vunpack.c.0.s8 %v5785
    %v5787 = vlaneseq
    %v5788 = vshrl.u32 %v5787, 7
    %v5789 = vsub.s32 %v5786, %v5788
    %v5790 = vrot.slane %v4030, %v5789
    %v5792 = vunpack.c.l.s4 842150450
    %v5793 = vunpack.c.0.s8 %v5792
    %v5794 = vlaneseq
    %v5795 = vshrl.u32 %v5794, 7
    %v5796 = vsub.s32 %v5793, %v5795
    %v5797 = vrot.slane %v4030, %v5796
    %v5799 = vunpack.c.l.s4 1414812756
    %v5800 = vunpack.c.0.s8 %v5799
    %v5801 = vlaneseq
    %v5802 = vshrl.u32 %v5801, 7
    %v5803 = vsub.s32 %v5800, %v5802
    %v5804 = vrot.slane %v4030, %v5803
    %v5806 = vunpack.c.l.s4 1987475062
    %v5807 = vunpack.c.0.s8 %v5806
    %v5808 = vlaneseq
    %v5809 = vshrl.u32 %v5808, 7
    %v5810 = vsub.s32 %v5807, %v5809
    %v5811 = vrot.slane %v4030, %v5810
    %v5813 = vunpack.c.l.s4 269488144
    %v5814 = vunpack.c.0.s8 %v5813
    %v5815 = vlaneseq
    %v5816 = vshrl.u32 %v5815, 7
    %v5817 = vsub.s32 %v5814, %v5816
    %v5818 = vrot.slane %v4033, %v5817
    %v5820 = vunpack.c.l.s4 842150450
    %v5821 = vunpack.c.0.s8 %v5820
    %v5822 = vlaneseq
    %v5823 = vshrl.u32 %v5822, 7
    %v5824 = vsub.s32 %v5821, %v5823
    %v5825 = vrot.slane %v4033, %v5824
    %v5827 = vunpack.c.l.s4 1414812756
    %v5828 = vunpack.c.0.s8 %v5827
    %v5829 = vlaneseq
    %v5830 = vshrl.u32 %v5829, 7
    %v5831 = vsub.s32 %v5828, %v5830
    %v5832 = vrot.slane %v4033, %v5831
    %v5834 = vunpack.c.l.s4 1987475062
    %v5835 = vunpack.c.0.s8 %v5834
    %v5836 = vlaneseq
    %v5837 = vshrl.u32 %v5836, 7
    %v5838 = vsub.s32 %v5835, %v5837
    %v5839 = vrot.slane %v4033, %v5838
    %v5841 = vunpack.c.l.s4 269488144
    %v5842 = vunpack.c.0.s8 %v5841
    %v5843 = vlaneseq
    %v5844 = vshrl.u32 %v5843, 7
    %v5845 = vsub.s32 %v5842, %v5844
    %v5846 = vrot.slane %v4036, %v5845
    %v5848 = vunpack.c.l.s4 842150450
    %v5849 = vunpack.c.0.s8 %v5848
    %v5850 = vlaneseq
    %v5851 = vshrl.u32 %v5850, 7
    %v5852 = vsub.s32 %v5849, %v5851
    %v5853 = vrot.slane %v4036, %v5852
    %v5855 = vunpack.c.l.s4 1414812756
    %v5856 = vunpack.c.0.s8 %v5855
    %v5857 = vlaneseq
    %v5858 = vshrl.u32 %v5857, 7
    %v5859 = vsub.s32 %v5856, %v5858
    %v5860 = vrot.slane %v4036, %v5859
    %v5862 = vunpack.c.l.s4 1987475062
    %v5863 = vunpack.c.0.s8 %v5862
    %v5864 = vlaneseq
    %v5865 = vshrl.u32 %v5864, 7
    %v5866 = vsub.s32 %v5863, %v5865
    %v5867 = vrot.slane %v4036, %v5866
    %v5869 = vunpack.c.l.s4 269488144
    %v5870 = vunpack.c.0.s8 %v5869
    %v5871 = vlaneseq
    %v5872 = vshrl.u32 %v5871, 7
    %v5873 = vsub.s32 %v5870, %v5872
    %v5874 = vrot.slane %v4039, %v5873
    %v5876 = vunpack.c.l.s4 842150450
    %v5877 = vunpack.c.0.s8 %v5876
    %v5878 = vlaneseq
    %v5879 = vshrl.u32 %v5878, 7
    %v5880 = vsub.s32 %v5877, %v5879
    %v5881 = vrot.slane %v4039, %v5880
    %v5883 = vunpack.c.l.s4 1414812756
    %v5884 = vunpack.c.0.s8 %v5883
    %v5885 = vlaneseq
    %v5886 = vshrl.u32 %v5885, 7
    %v5887 = vsub.s32 %v5884, %v5886
    %v5888 = vrot.slane %v4039, %v5887
    %v5890 = vunpack.c.l.s4 1987475062
    %v5891 = vunpack.c.0.s8 %v5890
    %v5892 = vlaneseq
    %v5893 = vshrl.u32 %v5892, 7
    %v5894 = vsub.s32 %v5891, %v5893
    %v5895 = vrot.slane %v4039, %v5894
    %v5896 = vcombine.low %v4110, %v4117
    %v5897 = vcombine.low %v4124, %v4131
    %v5899 = vunpack.c.l.s4 1983009808
    %v5900 = vunpack.c.0.s8 %v5899
    %v5901 = vlaneseq
    %v5902 = vshrl.u32 %v5901, 7
    %v5903 = vsub.s32 %v5900, %v5902
    %v5904 = vrot.slane %v5896, %v5903
    %v5906 = vunpack.c.l.s4 1983009808
    %v5907 = vunpack.c.0.s8 %v5906
    %v5908 = vlaneseq
    %v5909 = vshrl.u32 %v5908, 7
    %v5910 = vsub.s32 %v5907, %v5909
    %v5911 = vrot.slane %v5897, %v5910
    %v5912 = vcombine.low %v5904, %v5911
    %v5913 = vcombine.low %v4138, %v4145
    %v5914 = vcombine.low %v4152, %v4159
    %v5916 = vunpack.c.l.s4 1983009808
    %v5917 = vunpack.c.0.s8 %v5916
    %v5918 = vlaneseq
    %v5919 = vshrl.u32 %v5918, 7
    %v5920 = vsub.s32 %v5917, %v5919
    %v5921 = vrot.slane %v5913, %v5920
    %v5923 = vunpack.c.l.s4 1983009808
    %v5924 = vunpack.c.0.s8 %v5923
    %v5925 = vlaneseq
    %v5926 = vshrl.u32 %v5925, 7
    %v5927 = vsub.s32 %v5924, %v5926
    %v5928 = vrot.slane %v5914, %v5927
    %v5929 = vcombine.low %v5921, %v5928
    %v5930 = vcombine.low %v4166, %v4173
    %v5931 = vcombine.low %v4180, %v4187
    %v5933 = vunpack.c.l.s4 1983009808
    %v5934 = vunpack.c.0.s8 %v5933
    %v5935 = vlaneseq
    %v5936 = vshrl.u32 %v5935, 7
    %v5937 = vsub.s32 %v5934, %v5936
    %v5938 = vrot.slane %v5930, %v5937
    %v5940 = vunpack.c.l.s4 1983009808
    %v5941 = vunpack.c.0.s8 %v5940
    %v5942 = vlaneseq
    %v5943 = vshrl.u32 %v5942, 7
    %v5944 = vsub.s32 %v5941, %v5943
    %v5945 = vrot.slane %v5931, %v5944
    %v5946 = vcombine.low %v5938, %v5945
    %v5947 = vcombine.low %v4194, %v4201
    %v5948 = vcombine.low %v4208, %v4215
    %v5950 = vunpack.c.l.s4 1983009808
    %v5951 = vunpack.c.0.s8 %v5950
    %v5952 = vlaneseq
    %v5953 = vshrl.u32 %v5952, 7
    %v5954 = vsub.s32 %v5951, %v5953
    %v5955 = vrot.slane %v5947, %v5954
    %v5957 = vunpack.c.l.s4 1983009808
    %v5958 = vunpack.c.0.s8 %v5957
    %v5959 = vlaneseq
    %v5960 = vshrl.u32 %v5959, 7
    %v5961 = vsub.s32 %v5958, %v5960
    %v5962 = vrot.slane %v5948, %v5961
    %v5963 = vcombine.low %v5955, %v5962
    %v5964 = vcombine.low %v4222, %v4229
    %v5965 = vcombine.low %v4236, %v4243
    %v5967 = vunpack.c.l.s4 1983009808
    %v5968 = vunpack.c.0.s8 %v5967
    %v5969 = vlaneseq
    %v5970 = vshrl.u32 %v5969, 7
    %v5971 = vsub.s32 %v5968, %v5970
    %v5972 = vrot.slane %v5964, %v5971
    %v5974 = vunpack.c.l.s4 1983009808
    %v5975 = vunpack.c.0.s8 %v5974
    %v5976 = vlaneseq
    %v5977 = vshrl.u32 %v5976, 7
    %v5978 = vsub.s32 %v5975, %v5977
    %v5979 = vrot.slane %v5965, %v5978
    %v5980 = vcombine.low %v5972, %v5979
    %v5981 = vcombine.low %v4250, %v4257
    %v5982 = vcombine.low %v4264, %v4271
    %v5984 = vunpack.c.l.s4 1983009808
    %v5985 = vunpack.c.0.s8 %v5984
    %v5986 = vlaneseq
    %v5987 = vshrl.u32 %v5986, 7
    %v5988 = vsub.s32 %v5985, %v5987
    %v5989 = vrot.slane %v5981, %v5988
    %v5991 = vunpack.c.l.s4 1983009808
    %v5992 = vunpack.c.0.s8 %v5991
    %v5993 = vlaneseq
    %v5994 = vshrl.u32 %v5993, 7
    %v5995 = vsub.s32 %v5992, %v5994
    %v5996 = vrot.slane %v5982, %v5995
    %v5997 = vcombine.low %v5989, %v5996
    %v5998 = vcombine.low %v4278, %v4285
    %v5999 = vcombine.low %v4292, %v4299
    %v6001 = vunpack.c.l.s4 1983009808
    %v6002 = vunpack.c.0.s8 %v6001
    %v6003 = vlaneseq
    %v6004 = vshrl.u32 %v6003, 7
    %v6005 = vsub.s32 %v6002, %v6004
    %v6006 = vrot.slane %v5998, %v6005
    %v6008 = vunpack.c.l.s4 1983009808
    %v6009 = vunpack.c.0.s8 %v6008
    %v6010 = vlaneseq
    %v6011 = vshrl.u32 %v6010, 7
    %v6012 = vsub.s32 %v6009, %v6011
    %v6013 = vrot.slane %v5999, %v6012
    %v6014 = vcombine.low %v6006, %v6013
    %v6015 = vcombine.low %v4306, %v4313
    %v6016 = vcombine.low %v4320, %v4327
    %v6018 = vunpack.c.l.s4 1983009808
    %v6019 = vunpack.c.0.s8 %v6018
    %v6020 = vlaneseq
    %v6021 = vshrl.u32 %v6020, 7
    %v6022 = vsub.s32 %v6019, %v6021
    %v6023 = vrot.slane %v6015, %v6022
    %v6025 = vunpack.c.l.s4 1983009808
    %v6026 = vunpack.c.0.s8 %v6025
    %v6027 = vlaneseq
    %v6028 = vshrl.u32 %v6027, 7
    %v6029 = vsub.s32 %v6026, %v6028
    %v6030 = vrot.slane %v6016, %v6029
    %v6031 = vcombine.low %v6023, %v6030
    %v6032 = vcombine.low %v4334, %v4341
    %v6033 = vcombine.low %v4348, %v4355
    %v6035 = vunpack.c.l.s4 1983009808
    %v6036 = vunpack.c.0.s8 %v6035
    %v6037 = vlaneseq
    %v6038 = vshrl.u32 %v6037, 7
    %v6039 = vsub.s32 %v6036, %v6038
    %v6040 = vrot.slane %v6032, %v6039
    %v6042 = vunpack.c.l.s4 1983009808
    %v6043 = vunpack.c.0.s8 %v6042
    %v6044 = vlaneseq
    %v6045 = vshrl.u32 %v6044, 7
    %v6046 = vsub.s32 %v6043, %v6045
    %v6047 = vrot.slane %v6033, %v6046
    %v6048 = vcombine.low %v6040, %v6047
    %v6049 = vcombine.low %v4362, %v4369
    %v6050 = vcombine.low %v4376, %v4383
    %v6052 = vunpack.c.l.s4 1983009808
    %v6053 = vunpack.c.0.s8 %v6052
    %v6054 = vlaneseq
    %v6055 = vshrl.u32 %v6054, 7
    %v6056 = vsub.s32 %v6053, %v6055
    %v6057 = vrot.slane %v6049, %v6056
    %v6059 = vunpack.c.l.s4 1983009808
    %v6060 = vunpack.c.0.s8 %v6059
    %v6061 = vlaneseq
    %v6062 = vshrl.u32 %v6061, 7
    %v6063 = vsub.s32 %v6060, %v6062
    %v6064 = vrot.slane %v6050, %v6063
    %v6065 = vcombine.low %v6057, %v6064
    %v6066 = vcombine.low %v4390, %v4397
    %v6067 = vcombine.low %v4404, %v4411
    %v6069 = vunpack.c.l.s4 1983009808
    %v6070 = vunpack.c.0.s8 %v6069
    %v6071 = vlaneseq
    %v6072 = vshrl.u32 %v6071, 7
    %v6073 = vsub.s32 %v6070, %v6072
    %v6074 = vrot.slane %v6066, %v6073
    %v6076 = vunpack.c.l.s4 1983009808
    %v6077 = vunpack.c.0.s8 %v6076
    %v6078 = vlaneseq
    %v6079 = vshrl.u32 %v6078, 7
    %v6080 = vsub.s32 %v6077, %v6079
    %v6081 = vrot.slane %v6067, %v6080
    %v6082 = vcombine.low %v6074, %v6081
    %v6083 = vcombine.low %v4418, %v4425
    %v6084 = vcombine.low %v4432, %v4439
    %v6086 = vunpack.c.l.s4 1983009808
    %v6087 = vunpack.c.0.s8 %v6086
    %v6088 = vlaneseq
    %v6089 = vshrl.u32 %v6088, 7
    %v6090 = vsub.s32 %v6087, %v6089
    %v6091 = vrot.slane %v6083, %v6090
    %v6093 = vunpack.c.l.s4 1983009808
    %v6094 = vunpack.c.0.s8 %v6093
    %v6095 = vlaneseq
    %v6096 = vshrl.u32 %v6095, 7
    %v6097 = vsub.s32 %v6094, %v6096
    %v6098 = vrot.slane %v6084, %v6097
    %v6099 = vcombine.low %v6091, %v6098
    %v6100 = vcombine.low %v4446, %v4453
    %v6101 = vcombine.low %v4460, %v4467
    %v6103 = vunpack.c.l.s4 1983009808
    %v6104 = vunpack.c.0.s8 %v6103
    %v6105 = vlaneseq
    %v6106 = vshrl.u32 %v6105, 7
    %v6107 = vsub.s32 %v6104, %v6106
    %v6108 = vrot.slane %v6100, %v6107
    %v6110 = vunpack.c.l.s4 1983009808
    %v6111 = vunpack.c.0.s8 %v6110
    %v6112 = vlaneseq
    %v6113 = vshrl.u32 %v6112, 7
    %v6114 = vsub.s32 %v6111, %v6113
    %v6115 = vrot.slane %v6101, %v6114
    %v6116 = vcombine.low %v6108, %v6115
    %v6117 = vcombine.low %v4474, %v4481
    %v6118 = vcombine.low %v4488, %v4495
    %v6120 = vunpack.c.l.s4 1983009808
    %v6121 = vunpack.c.0.s8 %v6120
    %v6122 = vlaneseq
    %v6123 = vshrl.u32 %v6122, 7
    %v6124 = vsub.s32 %v6121, %v6123
    %v6125 = vrot.slane %v6117, %v6124
    %v6127 = vunpack.c.l.s4 1983009808
    %v6128 = vunpack.c.0.s8 %v6127
    %v6129 = vlaneseq
    %v6130 = vshrl.u32 %v6129, 7
    %v6131 = vsub.s32 %v6128, %v6130
    %v6132 = vrot.slane %v6118, %v6131
    %v6133 = vcombine.low %v6125, %v6132
    %v6134 = vcombine.low %v4502, %v4509
    %v6135 = vcombine.low %v4516, %v4523
    %v6137 = vunpack.c.l.s4 1983009808
    %v6138 = vunpack.c.0.s8 %v6137
    %v6139 = vlaneseq
    %v6140 = vshrl.u32 %v6139, 7
    %v6141 = vsub.s32 %v6138, %v6140
    %v6142 = vrot.slane %v6134, %v6141
    %v6144 = vunpack.c.l.s4 1983009808
    %v6145 = vunpack.c.0.s8 %v6144
    %v6146 = vlaneseq
    %v6147 = vshrl.u32 %v6146, 7
    %v6148 = vsub.s32 %v6145, %v6147
    %v6149 = vrot.slane %v6135, %v6148
    %v6150 = vcombine.low %v6142, %v6149
    %v6151 = vcombine.low %v4530, %v4537
    %v6152 = vcombine.low %v4544, %v4551
    %v6154 = vunpack.c.l.s4 1983009808
    %v6155 = vunpack.c.0.s8 %v6154
    %v6156 = vlaneseq
    %v6157 = vshrl.u32 %v6156, 7
    %v6158 = vsub.s32 %v6155, %v6157
    %v6159 = vrot.slane %v6151, %v6158
    %v6161 = vunpack.c.l.s4 1983009808
    %v6162 = vunpack.c.0.s8 %v6161
    %v6163 = vlaneseq
    %v6164 = vshrl.u32 %v6163, 7
    %v6165 = vsub.s32 %v6162, %v6164
    %v6166 = vrot.slane %v6152, %v6165
    %v6167 = vcombine.low %v6159, %v6166
    %v6168 = vcombine.low %v4558, %v4565
    %v6169 = vcombine.low %v4572, %v4579
    %v6171 = vunpack.c.l.s4 1983009808
    %v6172 = vunpack.c.0.s8 %v6171
    %v6173 = vlaneseq
    %v6174 = vshrl.u32 %v6173, 7
    %v6175 = vsub.s32 %v6172, %v6174
    %v6176 = vrot.slane %v6168, %v6175
    %v6178 = vunpack.c.l.s4 1983009808
    %v6179 = vunpack.c.0.s8 %v6178
    %v6180 = vlaneseq
    %v6181 = vshrl.u32 %v6180, 7
    %v6182 = vsub.s32 %v6179, %v6181
    %v6183 = vrot.slane %v6169, %v6182
    %v6184 = vcombine.low %v6176, %v6183
    %v6185 = vcombine.low %v4586, %v4593
    %v6186 = vcombine.low %v4600, %v4607
    %v6188 = vunpack.c.l.s4 1983009808
    %v6189 = vunpack.c.0.s8 %v6188
    %v6190 = vlaneseq
    %v6191 = vshrl.u32 %v6190, 7
    %v6192 = vsub.s32 %v6189, %v6191
    %v6193 = vrot.slane %v6185, %v6192
    %v6195 = vunpack.c.l.s4 1983009808
    %v6196 = vunpack.c.0.s8 %v6195
    %v6197 = vlaneseq
    %v6198 = vshrl.u32 %v6197, 7
    %v6199 = vsub.s32 %v6196, %v6198
    %v6200 = vrot.slane %v6186, %v6199
    %v6201 = vcombine.low %v6193, %v6200
    %v6202 = vcombine.low %v4614, %v4621
    %v6203 = vcombine.low %v4628, %v4635
    %v6205 = vunpack.c.l.s4 1983009808
    %v6206 = vunpack.c.0.s8 %v6205
    %v6207 = vlaneseq
    %v6208 = vshrl.u32 %v6207, 7
    %v6209 = vsub.s32 %v6206, %v6208
    %v6210 = vrot.slane %v6202, %v6209
    %v6212 = vunpack.c.l.s4 1983009808
    %v6213 = vunpack.c.0.s8 %v6212
    %v6214 = vlaneseq
    %v6215 = vshrl.u32 %v6214, 7
    %v6216 = vsub.s32 %v6213, %v6215
    %v6217 = vrot.slane %v6203, %v6216
    %v6218 = vcombine.low %v6210, %v6217
    %v6219 = vcombine.low %v4642, %v4649
    %v6220 = vcombine.low %v4656, %v4663
    %v6222 = vunpack.c.l.s4 1983009808
    %v6223 = vunpack.c.0.s8 %v6222
    %v6224 = vlaneseq
    %v6225 = vshrl.u32 %v6224, 7
    %v6226 = vsub.s32 %v6223, %v6225
    %v6227 = vrot.slane %v6219, %v6226
    %v6229 = vunpack.c.l.s4 1983009808
    %v6230 = vunpack.c.0.s8 %v6229
    %v6231 = vlaneseq
    %v6232 = vshrl.u32 %v6231, 7
    %v6233 = vsub.s32 %v6230, %v6232
    %v6234 = vrot.slane %v6220, %v6233
    %v6235 = vcombine.low %v6227, %v6234
    %v6236 = vcombine.low %v4670, %v4677
    %v6237 = vcombine.low %v4684, %v4691
    %v6239 = vunpack.c.l.s4 1983009808
    %v6240 = vunpack.c.0.s8 %v6239
    %v6241 = vlaneseq
    %v6242 = vshrl.u32 %v6241, 7
    %v6243 = vsub.s32 %v6240, %v6242
    %v6244 = vrot.slane %v6236, %v6243
    %v6246 = vunpack.c.l.s4 1983009808
    %v6247 = vunpack.c.0.s8 %v6246
    %v6248 = vlaneseq
    %v6249 = vshrl.u32 %v6248, 7
    %v6250 = vsub.s32 %v6247, %v6249
    %v6251 = vrot.slane %v6237, %v6250
    %v6252 = vcombine.low %v6244, %v6251
    %v6253 = vcombine.low %v4698, %v4705
    %v6254 = vcombine.low %v4712, %v4719
    %v6256 = vunpack.c.l.s4 1983009808
    %v6257 = vunpack.c.0.s8 %v6256
    %v6258 = vlaneseq
    %v6259 = vshrl.u32 %v6258, 7
    %v6260 = vsub.s32 %v6257, %v6259
    %v6261 = vrot.slane %v6253, %v6260
    %v6263 = vunpack.c.l.s4 1983009808
    %v6264 = vunpack.c.0.s8 %v6263
    %v6265 = vlaneseq
    %v6266 = vshrl.u32 %v6265, 7
    %v6267 = vsub.s32 %v6264, %v6266
    %v6268 = vrot.slane %v6254, %v6267
    %v6269 = vcombine.low %v6261, %v6268
    %v6270 = vcombine.low %v4726, %v4733
    %v6271 = vcombine.low %v4740, %v4747
    %v6273 = vunpack.c.l.s4 1983009808
    %v6274 = vunpack.c.0.s8 %v6273
    %v6275 = vlaneseq
    %v6276 = vshrl.u32 %v6275, 7
    %v6277 = vsub.s32 %v6274, %v6276
    %v6278 = vrot.slane %v6270, %v6277
    %v6280 = vunpack.c.l.s4 1983009808
    %v6281 = vunpack.c.0.s8 %v6280
    %v6282 = vlaneseq
    %v6283 = vshrl.u32 %v6282, 7
    %v6284 = vsub.s32 %v6281, %v6283
    %v6285 = vrot.slane %v6271, %v6284
    %v6286 = vcombine.low %v6278, %v6285
    %v6287 = vcombine.low %v4754, %v4761
    %v6288 = vcombine.low %v4768, %v4775
    %v6290 = vunpack.c.l.s4 1983009808
    %v6291 = vunpack.c.0.s8 %v6290
    %v6292 = vlaneseq
    %v6293 = vshrl.u32 %v6292, 7
    %v6294 = vsub.s32 %v6291, %v6293
    %v6295 = vrot.slane %v6287, %v6294
    %v6297 = vunpack.c.l.s4 1983009808
    %v6298 = vunpack.c.0.s8 %v6297
    %v6299 = vlaneseq
    %v6300 = vshrl.u32 %v6299, 7
    %v6301 = vsub.s32 %v6298, %v6300
    %v6302 = vrot.slane %v6288, %v6301
    %v6303 = vcombine.low %v6295, %v6302
    %v6304 = vcombine.low %v4782, %v4789
    %v6305 = vcombine.low %v4796, %v4803
    %v6307 = vunpack.c.l.s4 1983009808
    %v6308 = vunpack.c.0.s8 %v6307
    %v6309 = vlaneseq
    %v6310 = vshrl.u32 %v6309, 7
    %v6311 = vsub.s32 %v6308, %v6310
    %v6312 = vrot.slane %v6304, %v6311
    %v6314 = vunpack.c.l.s4 1983009808
    %v6315 = vunpack.c.0.s8 %v6314
    %v6316 = vlaneseq
    %v6317 = vshrl.u32 %v6316, 7
    %v6318 = vsub.s32 %v6315, %v6317
    %v6319 = vrot.slane %v6305, %v6318
    %v6320 = vcombine.low %v6312, %v6319
    %v6321 = vcombine.low %v4810, %v4817
    %v6322 = vcombine.low %v4824, %v4831
    %v6324 = vunpack.c.l.s4 1983009808
    %v6325 = vunpack.c.0.s8 %v6324
    %v6326 = vlaneseq
    %v6327 = vshrl.u32 %v6326, 7
    %v6328 = vsub.s32 %v6325, %v6327
    %v6329 = vrot.slane %v6321, %v6328
    %v6331 = vunpack.c.l.s4 1983009808
    %v6332 = vunpack.c.0.s8 %v6331
    %v6333 = vlaneseq
    %v6334 = vshrl.u32 %v6333, 7
    %v6335 = vsub.s32 %v6332, %v6334
    %v6336 = vrot.slane %v6322, %v6335
    %v6337 = vcombine.low %v6329, %v6336
    %v6338 = vcombine.low %v4838, %v4845
    %v6339 = vcombine.low %v4852, %v4859
    %v6341 = vunpack.c.l.s4 1983009808
    %v6342 = vunpack.c.0.s8 %v6341
    %v6343 = vlaneseq
    %v6344 = vshrl.u32 %v6343, 7
    %v6345 = vsub.s32 %v6342, %v6344
    %v6346 = vrot.slane %v6338, %v6345
    %v6348 = vunpack.c.l.s4 1983009808
    %v6349 = vunpack.c.0.s8 %v6348
    %v6350 = vlaneseq
    %v6351 = vshrl.u32 %v6350, 7
    %v6352 = vsub.s32 %v6349, %v6351
    %v6353 = vrot.slane %v6339, %v6352
    %v6354 = vcombine.low %v6346, %v6353
    %v6355 = vcombine.low %v4866, %v4873
    %v6356 = vcombine.low %v4880, %v4887
    %v6358 = vunpack.c.l.s4 1983009808
    %v6359 = vunpack.c.0.s8 %v6358
    %v6360 = vlaneseq
    %v6361 = vshrl.u32 %v6360, 7
    %v6362 = vsub.s32 %v6359, %v6361
    %v6363 = vrot.slane %v6355, %v6362
    %v6365 = vunpack.c.l.s4 1983009808
    %v6366 = vunpack.c.0.s8 %v6365
    %v6367 = vlaneseq
    %v6368 = vshrl.u32 %v6367, 7
    %v6369 = vsub.s32 %v6366, %v6368
    %v6370 = vrot.slane %v6356, %v6369
    %v6371 = vcombine.low %v6363, %v6370
    %v6372 = vcombine.low %v4894, %v4901
    %v6373 = vcombine.low %v4908, %v4915
    %v6375 = vunpack.c.l.s4 1983009808
    %v6376 = vunpack.c.0.s8 %v6375
    %v6377 = vlaneseq
    %v6378 = vshrl.u32 %v6377, 7
    %v6379 = vsub.s32 %v6376, %v6378
    %v6380 = vrot.slane %v6372, %v6379
    %v6382 = vunpack.c.l.s4 1983009808
    %v6383 = vunpack.c.0.s8 %v6382
    %v6384 = vlaneseq
    %v6385 = vshrl.u32 %v6384, 7
    %v6386 = vsub.s32 %v6383, %v6385
    %v6387 = vrot.slane %v6373, %v6386
    %v6388 = vcombine.low %v6380, %v6387
    %v6389 = vcombine.low %v4922, %v4929
    %v6390 = vcombine.low %v4936, %v4943
    %v6392 = vunpack.c.l.s4 1983009808
    %v6393 = vunpack.c.0.s8 %v6392
    %v6394 = vlaneseq
    %v6395 = vshrl.u32 %v6394, 7
    %v6396 = vsub.s32 %v6393, %v6395
    %v6397 = vrot.slane %v6389, %v6396
    %v6399 = vunpack.c.l.s4 1983009808
    %v6400 = vunpack.c.0.s8 %v6399
    %v6401 = vlaneseq
    %v6402 = vshrl.u32 %v6401, 7
    %v6403 = vsub.s32 %v6400, %v6402
    %v6404 = vrot.slane %v6390, %v6403
    %v6405 = vcombine.low %v6397, %v6404
    %v6406 = vcombine.low %v4950, %v4957
    %v6407 = vcombine.low %v4964, %v4971
    %v6409 = vunpack.c.l.s4 1983009808
    %v6410 = vunpack.c.0.s8 %v6409
    %v6411 = vlaneseq
    %v6412 = vshrl.u32 %v6411, 7
    %v6413 = vsub.s32 %v6410, %v6412
    %v6414 = vrot.slane %v6406, %v6413
    %v6416 = vunpack.c.l.s4 1983009808
    %v6417 = vunpack.c.0.s8 %v6416
    %v6418 = vlaneseq
    %v6419 = vshrl.u32 %v6418, 7
    %v6420 = vsub.s32 %v6417, %v6419
    %v6421 = vrot.slane %v6407, %v6420
    %v6422 = vcombine.low %v6414, %v6421
    %v6423 = vcombine.low %v4978, %v4985
    %v6424 = vcombine.low %v4992, %v4999
    %v6426 = vunpack.c.l.s4 1983009808
    %v6427 = vunpack.c.0.s8 %v6426
    %v6428 = vlaneseq
    %v6429 = vshrl.u32 %v6428, 7
    %v6430 = vsub.s32 %v6427, %v6429
    %v6431 = vrot.slane %v6423, %v6430
    %v6433 = vunpack.c.l.s4 1983009808
    %v6434 = vunpack.c.0.s8 %v6433
    %v6435 = vlaneseq
    %v6436 = vshrl.u32 %v6435, 7
    %v6437 = vsub.s32 %v6434, %v6436
    %v6438 = vrot.slane %v6424, %v6437
    %v6439 = vcombine.low %v6431, %v6438
    %v6440 = vcombine.low %v5006, %v5013
    %v6441 = vcombine.low %v5020, %v5027
    %v6443 = vunpack.c.l.s4 1983009808
    %v6444 = vunpack.c.0.s8 %v6443
    %v6445 = vlaneseq
    %v6446 = vshrl.u32 %v6445, 7
    %v6447 = vsub.s32 %v6444, %v6446
    %v6448 = vrot.slane %v6440, %v6447
    %v6450 = vunpack.c.l.s4 1983009808
    %v6451 = vunpack.c.0.s8 %v6450
    %v6452 = vlaneseq
    %v6453 = vshrl.u32 %v6452, 7
    %v6454 = vsub.s32 %v6451, %v6453
    %v6455 = vrot.slane %v6441, %v6454
    %v6456 = vcombine.low %v6448, %v6455
    %v6457 = vcombine.low %v5034, %v5041
    %v6458 = vcombine.low %v5048, %v5055
    %v6460 = vunpack.c.l.s4 1983009808
    %v6461 = vunpack.c.0.s8 %v6460
    %v6462 = vlaneseq
    %v6463 = vshrl.u32 %v6462, 7
    %v6464 = vsub.s32 %v6461, %v6463
    %v6465 = vrot.slane %v6457, %v6464
    %v6467 = vunpack.c.l.s4 1983009808
    %v6468 = vunpack.c.0.s8 %v6467
    %v6469 = vlaneseq
    %v6470 = vshrl.u32 %v6469, 7
    %v6471 = vsub.s32 %v6468, %v6470
    %v6472 = vrot.slane %v6458, %v6471
    %v6473 = vcombine.low %v6465, %v6472
    %v6474 = vcombine.low %v5062, %v5069
    %v6475 = vcombine.low %v5076, %v5083
    %v6477 = vunpack.c.l.s4 1983009808
    %v6478 = vunpack.c.0.s8 %v6477
    %v6479 = vlaneseq
    %v6480 = vshrl.u32 %v6479, 7
    %v6481 = vsub.s32 %v6478, %v6480
    %v6482 = vrot.slane %v6474, %v6481
    %v6484 = vunpack.c.l.s4 1983009808
    %v6485 = vunpack.c.0.s8 %v6484
    %v6486 = vlaneseq
    %v6487 = vshrl.u32 %v6486, 7
    %v6488 = vsub.s32 %v6485, %v6487
    %v6489 = vrot.slane %v6475, %v6488
    %v6490 = vcombine.low %v6482, %v6489
    %v6491 = vcombine.low %v5090, %v5097
    %v6492 = vcombine.low %v5104, %v5111
    %v6494 = vunpack.c.l.s4 1983009808
    %v6495 = vunpack.c.0.s8 %v6494
    %v6496 = vlaneseq
    %v6497 = vshrl.u32 %v6496, 7
    %v6498 = vsub.s32 %v6495, %v6497
    %v6499 = vrot.slane %v6491, %v6498
    %v6501 = vunpack.c.l.s4 1983009808
    %v6502 = vunpack.c.0.s8 %v6501
    %v6503 = vlaneseq
    %v6504 = vshrl.u32 %v6503, 7
    %v6505 = vsub.s32 %v6502, %v6504
    %v6506 = vrot.slane %v6492, %v6505
    %v6507 = vcombine.low %v6499, %v6506
    %v6508 = vcombine.low %v5118, %v5125
    %v6509 = vcombine.low %v5132, %v5139
    %v6511 = vunpack.c.l.s4 1983009808
    %v6512 = vunpack.c.0.s8 %v6511
    %v6513 = vlaneseq
    %v6514 = vshrl.u32 %v6513, 7
    %v6515 = vsub.s32 %v6512, %v6514
    %v6516 = vrot.slane %v6508, %v6515
    %v6518 = vunpack.c.l.s4 1983009808
    %v6519 = vunpack.c.0.s8 %v6518
    %v6520 = vlaneseq
    %v6521 = vshrl.u32 %v6520, 7
    %v6522 = vsub.s32 %v6519, %v6521
    %v6523 = vrot.slane %v6509, %v6522
    %v6524 = vcombine.low %v6516, %v6523
    %v6525 = vcombine.low %v5146, %v5153
    %v6526 = vcombine.low %v5160, %v5167
    %v6528 = vunpack.c.l.s4 1983009808
    %v6529 = vunpack.c.0.s8 %v6528
    %v6530 = vlaneseq
    %v6531 = vshrl.u32 %v6530, 7
    %v6532 = vsub.s32 %v6529, %v6531
    %v6533 = vrot.slane %v6525, %v6532
    %v6535 = vunpack.c.l.s4 1983009808
    %v6536 = vunpack.c.0.s8 %v6535
    %v6537 = vlaneseq
    %v6538 = vshrl.u32 %v6537, 7
    %v6539 = vsub.s32 %v6536, %v6538
    %v6540 = vrot.slane %v6526, %v6539
    %v6541 = vcombine.low %v6533, %v6540
    %v6542 = vcombine.low %v5174, %v5181
    %v6543 = vcombine.low %v5188, %v5195
    %v6545 = vunpack.c.l.s4 1983009808
    %v6546 = vunpack.c.0.s8 %v6545
    %v6547 = vlaneseq
    %v6548 = vshrl.u32 %v6547, 7
    %v6549 = vsub.s32 %v6546, %v6548
    %v6550 = vrot.slane %v6542, %v6549
    %v6552 = vunpack.c.l.s4 1983009808
    %v6553 = vunpack.c.0.s8 %v6552
    %v6554 = vlaneseq
    %v6555 = vshrl.u32 %v6554, 7
    %v6556 = vsub.s32 %v6553, %v6555
    %v6557 = vrot.slane %v6543, %v6556
    %v6558 = vcombine.low %v6550, %v6557
    %v6559 = vcombine.low %v5202, %v5209
    %v6560 = vcombine.low %v5216, %v5223
    %v6562 = vunpack.c.l.s4 1983009808
    %v6563 = vunpack.c.0.s8 %v6562
    %v6564 = vlaneseq
    %v6565 = vshrl.u32 %v6564, 7
    %v6566 = vsub.s32 %v6563, %v6565
    %v6567 = vrot.slane %v6559, %v6566
    %v6569 = vunpack.c.l.s4 1983009808
    %v6570 = vunpack.c.0.s8 %v6569
    %v6571 = vlaneseq
    %v6572 = vshrl.u32 %v6571, 7
    %v6573 = vsub.s32 %v6570, %v6572
    %v6574 = vrot.slane %v6560, %v6573
    %v6575 = vcombine.low %v6567, %v6574
    %v6576 = vcombine.low %v5230, %v5237
    %v6577 = vcombine.low %v5244, %v5251
    %v6579 = vunpack.c.l.s4 1983009808
    %v6580 = vunpack.c.0.s8 %v6579
    %v6581 = vlaneseq
    %v6582 = vshrl.u32 %v6581, 7
    %v6583 = vsub.s32 %v6580, %v6582
    %v6584 = vrot.slane %v6576, %v6583
    %v6586 = vunpack.c.l.s4 1983009808
    %v6587 = vunpack.c.0.s8 %v6586
    %v6588 = vlaneseq
    %v6589 = vshrl.u32 %v6588, 7
    %v6590 = vsub.s32 %v6587, %v6589
    %v6591 = vrot.slane %v6577, %v6590
    %v6592 = vcombine.low %v6584, %v6591
    %v6593 = vcombine.low %v5258, %v5265
    %v6594 = vcombine.low %v5272, %v5279
    %v6596 = vunpack.c.l.s4 1983009808
    %v6597 = vunpack.c.0.s8 %v6596
    %v6598 = vlaneseq
    %v6599 = vshrl.u32 %v6598, 7
    %v6600 = vsub.s32 %v6597, %v6599
    %v6601 = vrot.slane %v6593, %v6600
    %v6603 = vunpack.c.l.s4 1983009808
    %v6604 = vunpack.c.0.s8 %v6603
    %v6605 = vlaneseq
    %v6606 = vshrl.u32 %v6605, 7
    %v6607 = vsub.s32 %v6604, %v6606
    %v6608 = vrot.slane %v6594, %v6607
    %v6609 = vcombine.low %v6601, %v6608
    %v6610 = vcombine.low %v5286, %v5293
    %v6611 = vcombine.low %v5300, %v5307
    %v6613 = vunpack.c.l.s4 1983009808
    %v6614 = vunpack.c.0.s8 %v6613
    %v6615 = vlaneseq
    %v6616 = vshrl.u32 %v6615, 7
    %v6617 = vsub.s32 %v6614, %v6616
    %v6618 = vrot.slane %v6610, %v6617
    %v6620 = vunpack.c.l.s4 1983009808
    %v6621 = vunpack.c.0.s8 %v6620
    %v6622 = vlaneseq
    %v6623 = vshrl.u32 %v6622, 7
    %v6624 = vsub.s32 %v6621, %v6623
    %v6625 = vrot.slane %v6611, %v6624
    %v6626 = vcombine.low %v6618, %v6625
    %v6627 = vcombine.low %v5314, %v5321
    %v6628 = vcombine.low %v5328, %v5335
    %v6630 = vunpack.c.l.s4 1983009808
    %v6631 = vunpack.c.0.s8 %v6630
    %v6632 = vlaneseq
    %v6633 = vshrl.u32 %v6632, 7
    %v6634 = vsub.s32 %v6631, %v6633
    %v6635 = vrot.slane %v6627, %v6634
    %v6637 = vunpack.c.l.s4 1983009808
    %v6638 = vunpack.c.0.s8 %v6637
    %v6639 = vlaneseq
    %v6640 = vshrl.u32 %v6639, 7
    %v6641 = vsub.s32 %v6638, %v6640
    %v6642 = vrot.slane %v6628, %v6641
    %v6643 = vcombine.low %v6635, %v6642
    %v6644 = vcombine.low %v5342, %v5349
    %v6645 = vcombine.low %v5356, %v5363
    %v6647 = vunpack.c.l.s4 1983009808
    %v6648 = vunpack.c.0.s8 %v6647
    %v6649 = vlaneseq
    %v6650 = vshrl.u32 %v6649, 7
    %v6651 = vsub.s32 %v6648, %v6650
    %v6652 = vrot.slane %v6644, %v6651
    %v6654 = vunpack.c.l.s4 1983009808
    %v6655 = vunpack.c.0.s8 %v6654
    %v6656 = vlaneseq
    %v6657 = vshrl.u32 %v6656, 7
    %v6658 = vsub.s32 %v6655, %v6657
    %v6659 = vrot.slane %v6645, %v6658
    %v6660 = vcombine.low %v6652, %v6659
    %v6661 = vcombine.low %v5370, %v5377
    %v6662 = vcombine.low %v5384, %v5391
    %v6664 = vunpack.c.l.s4 1983009808
    %v6665 = vunpack.c.0.s8 %v6664
    %v6666 = vlaneseq
    %v6667 = vshrl.u32 %v6666, 7
    %v6668 = vsub.s32 %v6665, %v6667
    %v6669 = vrot.slane %v6661, %v6668
    %v6671 = vunpack.c.l.s4 1983009808
    %v6672 = vunpack.c.0.s8 %v6671
    %v6673 = vlaneseq
    %v6674 = vshrl.u32 %v6673, 7
    %v6675 = vsub.s32 %v6672, %v6674
    %v6676 = vrot.slane %v6662, %v6675
    %v6677 = vcombine.low %v6669, %v6676
    %v6678 = vcombine.low %v5398, %v5405
    %v6679 = vcombine.low %v5412, %v5419
    %v6681 = vunpack.c.l.s4 1983009808
    %v6682 = vunpack.c.0.s8 %v6681
    %v6683 = vlaneseq
    %v6684 = vshrl.u32 %v6683, 7
    %v6685 = vsub.s32 %v6682, %v6684
    %v6686 = vrot.slane %v6678, %v6685
    %v6688 = vunpack.c.l.s4 1983009808
    %v6689 = vunpack.c.0.s8 %v6688
    %v6690 = vlaneseq
    %v6691 = vshrl.u32 %v6690, 7
    %v6692 = vsub.s32 %v6689, %v6691
    %v6693 = vrot.slane %v6679, %v6692
    %v6694 = vcombine.low %v6686, %v6693
    %v6695 = vcombine.low %v5426, %v5433
    %v6696 = vcombine.low %v5440, %v5447
    %v6698 = vunpack.c.l.s4 1983009808
    %v6699 = vunpack.c.0.s8 %v6698
    %v6700 = vlaneseq
    %v6701 = vshrl.u32 %v6700, 7
    %v6702 = vsub.s32 %v6699, %v6701
    %v6703 = vrot.slane %v6695, %v6702
    %v6705 = vunpack.c.l.s4 1983009808
    %v6706 = vunpack.c.0.s8 %v6705
    %v6707 = vlaneseq
    %v6708 = vshrl.u32 %v6707, 7
    %v6709 = vsub.s32 %v6706, %v6708
    %v6710 = vrot.slane %v6696, %v6709
    %v6711 = vcombine.low %v6703, %v6710
    %v6712 = vcombine.low %v5454, %v5461
    %v6713 = vcombine.low %v5468, %v5475
    %v6715 = vunpack.c.l.s4 1983009808
    %v6716 = vunpack.c.0.s8 %v6715
    %v6717 = vlaneseq
    %v6718 = vshrl.u32 %v6717, 7
    %v6719 = vsub.s32 %v6716, %v6718
    %v6720 = vrot.slane %v6712, %v6719
    %v6722 = vunpack.c.l.s4 1983009808
    %v6723 = vunpack.c.0.s8 %v6722
    %v6724 = vlaneseq
    %v6725 = vshrl.u32 %v6724, 7
    %v6726 = vsub.s32 %v6723, %v6725
    %v6727 = vrot.slane %v6713, %v6726
    %v6728 = vcombine.low %v6720, %v6727
    %v6729 = vcombine.low %v5482, %v5489
    %v6730 = vcombine.low %v5496, %v5503
    %v6732 = vunpack.c.l.s4 1983009808
    %v6733 = vunpack.c.0.s8 %v6732
    %v6734 = vlaneseq
    %v6735 = vshrl.u32 %v6734, 7
    %v6736 = vsub.s32 %v6733, %v6735
    %v6737 = vrot.slane %v6729, %v6736
    %v6739 = vunpack.c.l.s4 1983009808
    %v6740 = vunpack.c.0.s8 %v6739
    %v6741 = vlaneseq
    %v6742 = vshrl.u32 %v6741, 7
    %v6743 = vsub.s32 %v6740, %v6742
    %v6744 = vrot.slane %v6730, %v6743
    %v6745 = vcombine.low %v6737, %v6744
    %v6746 = vcombine.low %v5510, %v5517
    %v6747 = vcombine.low %v5524, %v5531
    %v6749 = vunpack.c.l.s4 1983009808
    %v6750 = vunpack.c.0.s8 %v6749
    %v6751 = vlaneseq
    %v6752 = vshrl.u32 %v6751, 7
    %v6753 = vsub.s32 %v6750, %v6752
    %v6754 = vrot.slane %v6746, %v6753
    %v6756 = vunpack.c.l.s4 1983009808
    %v6757 = vunpack.c.0.s8 %v6756
    %v6758 = vlaneseq
    %v6759 = vshrl.u32 %v6758, 7
    %v6760 = vsub.s32 %v6757, %v6759
    %v6761 = vrot.slane %v6747, %v6760
    %v6762 = vcombine.low %v6754, %v6761
    %v6763 = vcombine.low %v5538, %v5545
    %v6764 = vcombine.low %v5552, %v5559
    %v6766 = vunpack.c.l.s4 1983009808
    %v6767 = vunpack.c.0.s8 %v6766
    %v6768 = vlaneseq
    %v6769 = vshrl.u32 %v6768, 7
    %v6770 = vsub.s32 %v6767, %v6769
    %v6771 = vrot.slane %v6763, %v6770
    %v6773 = vunpack.c.l.s4 1983009808
    %v6774 = vunpack.c.0.s8 %v6773
    %v6775 = vlaneseq
    %v6776 = vshrl.u32 %v6775, 7
    %v6777 = vsub.s32 %v6774, %v6776
    %v6778 = vrot.slane %v6764, %v6777
    %v6779 = vcombine.low %v6771, %v6778
    %v6780 = vcombine.low %v5566, %v5573
    %v6781 = vcombine.low %v5580, %v5587
    %v6783 = vunpack.c.l.s4 1983009808
    %v6784 = vunpack.c.0.s8 %v6783
    %v6785 = vlaneseq
    %v6786 = vshrl.u32 %v6785, 7
    %v6787 = vsub.s32 %v6784, %v6786
    %v6788 = vrot.slane %v6780, %v6787
    %v6790 = vunpack.c.l.s4 1983009808
    %v6791 = vunpack.c.0.s8 %v6790
    %v6792 = vlaneseq
    %v6793 = vshrl.u32 %v6792, 7
    %v6794 = vsub.s32 %v6791, %v6793
    %v6795 = vrot.slane %v6781, %v6794
    %v6796 = vcombine.low %v6788, %v6795
    %v6797 = vcombine.low %v5594, %v5601
    %v6798 = vcombine.low %v5608, %v5615
    %v6800 = vunpack.c.l.s4 1983009808
    %v6801 = vunpack.c.0.s8 %v6800
    %v6802 = vlaneseq
    %v6803 = vshrl.u32 %v6802, 7
    %v6804 = vsub.s32 %v6801, %v6803
    %v6805 = vrot.slane %v6797, %v6804
    %v6807 = vunpack.c.l.s4 1983009808
    %v6808 = vunpack.c.0.s8 %v6807
    %v6809 = vlaneseq
    %v6810 = vshrl.u32 %v6809, 7
    %v6811 = vsub.s32 %v6808, %v6810
    %v6812 = vrot.slane %v6798, %v6811
    %v6813 = vcombine.low %v6805, %v6812
    %v6814 = vcombine.low %v5622, %v5629
    %v6815 = vcombine.low %v5636, %v5643
    %v6817 = vunpack.c.l.s4 1983009808
    %v6818 = vunpack.c.0.s8 %v6817
    %v6819 = vlaneseq
    %v6820 = vshrl.u32 %v6819, 7
    %v6821 = vsub.s32 %v6818, %v6820
    %v6822 = vrot.slane %v6814, %v6821
    %v6824 = vunpack.c.l.s4 1983009808
    %v6825 = vunpack.c.0.s8 %v6824
    %v6826 = vlaneseq
    %v6827 = vshrl.u32 %v6826, 7
    %v6828 = vsub.s32 %v6825, %v6827
    %v6829 = vrot.slane %v6815, %v6828
    %v6830 = vcombine.low %v6822, %v6829
    %v6831 = vcombine.low %v5650, %v5657
    %v6832 = vcombine.low %v5664, %v5671
    %v6834 = vunpack.c.l.s4 1983009808
    %v6835 = vunpack.c.0.s8 %v6834
    %v6836 = vlaneseq
    %v6837 = vshrl.u32 %v6836, 7
    %v6838 = vsub.s32 %v6835, %v6837
    %v6839 = vrot.slane %v6831, %v6838
    %v6841 = vunpack.c.l.s4 1983009808
    %v6842 = vunpack.c.0.s8 %v6841
    %v6843 = vlaneseq
    %v6844 = vshrl.u32 %v6843, 7
    %v6845 = vsub.s32 %v6842, %v6844
    %v6846 = vrot.slane %v6832, %v6845
    %v6847 = vcombine.low %v6839, %v6846
    %v6848 = vcombine.low %v5678, %v5685
    %v6849 = vcombine.low %v5692, %v5699
    %v6851 = vunpack.c.l.s4 1983009808
    %v6852 = vunpack.c.0.s8 %v6851
    %v6853 = vlaneseq
    %v6854 = vshrl.u32 %v6853, 7
    %v6855 = vsub.s32 %v6852, %v6854
    %v6856 = vrot.slane %v6848, %v6855
    %v6858 = vunpack.c.l.s4 1983009808
    %v6859 = vunpack.c.0.s8 %v6858
    %v6860 = vlaneseq
    %v6861 = vshrl.u32 %v6860, 7
    %v6862 = vsub.s32 %v6859, %v6861
    %v6863 = vrot.slane %v6849, %v6862
    %v6864 = vcombine.low %v6856, %v6863
    %v6865 = vcombine.low %v5706, %v5713
    %v6866 = vcombine.low %v5720, %v5727
    %v6868 = vunpack.c.l.s4 1983009808
    %v6869 = vunpack.c.0.s8 %v6868
    %v6870 = vlaneseq
    %v6871 = vshrl.u32 %v6870, 7
    %v6872 = vsub.s32 %v6869, %v6871
    %v6873 = vrot.slane %v6865, %v6872
    %v6875 = vunpack.c.l.s4 1983009808
    %v6876 = vunpack.c.0.s8 %v6875
    %v6877 = vlaneseq
    %v6878 = vshrl.u32 %v6877, 7
    %v6879 = vsub.s32 %v6876, %v6878
    %v6880 = vrot.slane %v6866, %v6879
    %v6881 = vcombine.low %v6873, %v6880
    %v6882 = vcombine.low %v5734, %v5741
    %v6883 = vcombine.low %v5748, %v5755
    %v6885 = vunpack.c.l.s4 1983009808
    %v6886 = vunpack.c.0.s8 %v6885
    %v6887 = vlaneseq
    %v6888 = vshrl.u32 %v6887, 7
    %v6889 = vsub.s32 %v6886, %v6888
    %v6890 = vrot.slane %v6882, %v6889
    %v6892 = vunpack.c.l.s4 1983009808
    %v6893 = vunpack.c.0.s8 %v6892
    %v6894 = vlaneseq
    %v6895 = vshrl.u32 %v6894, 7
    %v6896 = vsub.s32 %v6893, %v6895
    %v6897 = vrot.slane %v6883, %v6896
    %v6898 = vcombine.low %v6890, %v6897
    %v6899 = vcombine.low %v5762, %v5769
    %v6900 = vcombine.low %v5776, %v5783
    %v6902 = vunpack.c.l.s4 1983009808
    %v6903 = vunpack.c.0.s8 %v6902
    %v6904 = vlaneseq
    %v6905 = vshrl.u32 %v6904, 7
    %v6906 = vsub.s32 %v6903, %v6905
    %v6907 = vrot.slane %v6899, %v6906
    %v6909 = vunpack.c.l.s4 1983009808
    %v6910 = vunpack.c.0.s8 %v6909
    %v6911 = vlaneseq
    %v6912 = vshrl.u32 %v6911, 7
    %v6913 = vsub.s32 %v6910, %v6912
    %v6914 = vrot.slane %v6900, %v6913
    %v6915 = vcombine.low %v6907, %v6914
    %v6916 = vcombine.low %v5790, %v5797
    %v6917 = vcombine.low %v5804, %v5811
    %v6919 = vunpack.c.l.s4 1983009808
    %v6920 = vunpack.c.0.s8 %v6919
    %v6921 = vlaneseq
    %v6922 = vshrl.u32 %v6921, 7
    %v6923 = vsub.s32 %v6920, %v6922
    %v6924 = vrot.slane %v6916, %v6923
    %v6926 = vunpack.c.l.s4 1983009808
    %v6927 = vunpack.c.0.s8 %v6926
    %v6928 = vlaneseq
    %v6929 = vshrl.u32 %v6928, 7
    %v6930 = vsub.s32 %v6927, %v6929
    %v6931 = vrot.slane %v6917, %v6930
    %v6932 = vcombine.low %v6924, %v6931
    %v6933 = vcombine.low %v5818, %v5825
    %v6934 = vcombine.low %v5832, %v5839
    %v6936 = vunpack.c.l.s4 1983009808
    %v6937 = vunpack.c.0.s8 %v6936
    %v6938 = vlaneseq
    %v6939 = vshrl.u32 %v6938, 7
    %v6940 = vsub.s32 %v6937, %v6939
    %v6941 = vrot.slane %v6933, %v6940
    %v6943 = vunpack.c.l.s4 1983009808
    %v6944 = vunpack.c.0.s8 %v6943
    %v6945 = vlaneseq
    %v6946 = vshrl.u32 %v6945, 7
    %v6947 = vsub.s32 %v6944, %v6946
    %v6948 = vrot.slane %v6934, %v6947
    %v6949 = vcombine.low %v6941, %v6948
    %v6950 = vcombine.low %v5846, %v5853
    %v6951 = vcombine.low %v5860, %v5867
    %v6953 = vunpack.c.l.s4 1983009808
    %v6954 = vunpack.c.0.s8 %v6953
    %v6955 = vlaneseq
    %v6956 = vshrl.u32 %v6955, 7
    %v6957 = vsub.s32 %v6954, %v6956
    %v6958 = vrot.slane %v6950, %v6957
    %v6960 = vunpack.c.l.s4 1983009808
    %v6961 = vunpack.c.0.s8 %v6960
    %v6962 = vlaneseq
    %v6963 = vshrl.u32 %v6962, 7
    %v6964 = vsub.s32 %v6961, %v6963
    %v6965 = vrot.slane %v6951, %v6964
    %v6966 = vcombine.low %v6958, %v6965
    %v6967 = vcombine.low %v5874, %v5881
    %v6968 = vcombine.low %v5888, %v5895
    %v6970 = vunpack.c.l.s4 1983009808
    %v6971 = vunpack.c.0.s8 %v6970
    %v6972 = vlaneseq
    %v6973 = vshrl.u32 %v6972, 7
    %v6974 = vsub.s32 %v6971, %v6973
    %v6975 = vrot.slane %v6967, %v6974
    %v6977 = vunpack.c.l.s4 1983009808
    %v6978 = vunpack.c.0.s8 %v6977
    %v6979 = vlaneseq
    %v6980 = vshrl.u32 %v6979, 7
    %v6981 = vsub.s32 %v6978, %v6980
    %v6982 = vrot.slane %v6968, %v6981
    %v6983 = vcombine.low %v6975, %v6982
    %6984 = vset.pattern.permute.xlu0 0
    %6985 = vperm.xlu0 %6984, %v5912
    %v6986 = vpop.permute.xlu0 %6985
    %6987 = vset.pattern.permute.xlu0 0
    %6988 = vperm.xlu0 %6987, %v5929
    %v6989 = vpop.permute.xlu0 %6988
    %6990 = vset.pattern.permute.xlu0 0
    %6991 = vperm.xlu0 %6990, %v5946
    %v6992 = vpop.permute.xlu0 %6991
    %6993 = vset.pattern.permute.xlu0 0
    %6994 = vperm.xlu0 %6993, %v5963
    %v6995 = vpop.permute.xlu0 %6994
    %6996 = vset.pattern.permute.xlu0 0
    %6997 = vperm.xlu0 %6996, %v5980
    %v6998 = vpop.permute.xlu0 %6997
    %6999 = vset.pattern.permute.xlu0 0
    %7000 = vperm.xlu0 %6999, %v5997
    %v7001 = vpop.permute.xlu0 %7000
    %7002 = vset.pattern.permute.xlu0 0
    %7003 = vperm.xlu0 %7002, %v6014
    %v7004 = vpop.permute.xlu0 %7003
    %7005 = vset.pattern.permute.xlu0 0
    %7006 = vperm.xlu0 %7005, %v6031
    %v7007 = vpop.permute.xlu0 %7006
    %7008 = vset.pattern.permute.xlu0 0
    %7009 = vperm.xlu0 %7008, %v6048
    %v7010 = vpop.permute.xlu0 %7009
    %7011 = vset.pattern.permute.xlu0 0
    %7012 = vperm.xlu0 %7011, %v6065
    %v7013 = vpop.permute.xlu0 %7012
    %7014 = vset.pattern.permute.xlu0 0
    %7015 = vperm.xlu0 %7014, %v6082
    %v7016 = vpop.permute.xlu0 %7015
    %7017 = vset.pattern.permute.xlu0 0
    %7018 = vperm.xlu0 %7017, %v6099
    %v7019 = vpop.permute.xlu0 %7018
    %7020 = vset.pattern.permute.xlu0 0
    %7021 = vperm.xlu0 %7020, %v6116
    %v7022 = vpop.permute.xlu0 %7021
    %7023 = vset.pattern.permute.xlu0 0
    %7024 = vperm.xlu0 %7023, %v6133
    %v7025 = vpop.permute.xlu0 %7024
    %7026 = vset.pattern.permute.xlu0 0
    %7027 = vperm.xlu0 %7026, %v6150
    %v7028 = vpop.permute.xlu0 %7027
    %7029 = vset.pattern.permute.xlu0 0
    %7030 = vperm.xlu0 %7029, %v6167
    %v7031 = vpop.permute.xlu0 %7030
    %7032 = vset.pattern.permute.xlu0 0
    %7033 = vperm.xlu0 %7032, %v6184
    %v7034 = vpop.permute.xlu0 %7033
    %7035 = vset.pattern.permute.xlu0 0
    %7036 = vperm.xlu0 %7035, %v6201
    %v7037 = vpop.permute.xlu0 %7036
    %7038 = vset.pattern.permute.xlu0 0
    %7039 = vperm.xlu0 %7038, %v6218
    %v7040 = vpop.permute.xlu0 %7039
    %7041 = vset.pattern.permute.xlu0 0
    %7042 = vperm.xlu0 %7041, %v6235
    %v7043 = vpop.permute.xlu0 %7042
    %7044 = vset.pattern.permute.xlu0 0
    %7045 = vperm.xlu0 %7044, %v6252
    %v7046 = vpop.permute.xlu0 %7045
    %7047 = vset.pattern.permute.xlu0 0
    %7048 = vperm.xlu0 %7047, %v6269
    %v7049 = vpop.permute.xlu0 %7048
    %7050 = vset.pattern.permute.xlu0 0
    %7051 = vperm.xlu0 %7050, %v6286
    %v7052 = vpop.permute.xlu0 %7051
    %7053 = vset.pattern.permute.xlu0 0
    %7054 = vperm.xlu0 %7053, %v6303
    %v7055 = vpop.permute.xlu0 %7054
    %7056 = vset.pattern.permute.xlu0 0
    %7057 = vperm.xlu0 %7056, %v6320
    %v7058 = vpop.permute.xlu0 %7057
    %7059 = vset.pattern.permute.xlu0 0
    %7060 = vperm.xlu0 %7059, %v6337
    %v7061 = vpop.permute.xlu0 %7060
    %7062 = vset.pattern.permute.xlu0 0
    %7063 = vperm.xlu0 %7062, %v6354
    %v7064 = vpop.permute.xlu0 %7063
    %7065 = vset.pattern.permute.xlu0 0
    %7066 = vperm.xlu0 %7065, %v6371
    %v7067 = vpop.permute.xlu0 %7066
    %7068 = vset.pattern.permute.xlu0 0
    %7069 = vperm.xlu0 %7068, %v6388
    %v7070 = vpop.permute.xlu0 %7069
    %7071 = vset.pattern.permute.xlu0 0
    %7072 = vperm.xlu0 %7071, %v6405
    %v7073 = vpop.permute.xlu0 %7072
    %7074 = vset.pattern.permute.xlu0 0
    %7075 = vperm.xlu0 %7074, %v6422
    %v7076 = vpop.permute.xlu0 %7075
    %7077 = vset.pattern.permute.xlu0 0
    %7078 = vperm.xlu0 %7077, %v6439
    %v7079 = vpop.permute.xlu0 %7078
    %7080 = vset.pattern.permute.xlu0 0
    %7081 = vperm.xlu0 %7080, %v6456
    %v7082 = vpop.permute.xlu0 %7081
    %7083 = vset.pattern.permute.xlu0 0
    %7084 = vperm.xlu0 %7083, %v6473
    %v7085 = vpop.permute.xlu0 %7084
    %7086 = vset.pattern.permute.xlu0 0
    %7087 = vperm.xlu0 %7086, %v6490
    %v7088 = vpop.permute.xlu0 %7087
    %7089 = vset.pattern.permute.xlu0 0
    %7090 = vperm.xlu0 %7089, %v6507
    %v7091 = vpop.permute.xlu0 %7090
    %7092 = vset.pattern.permute.xlu0 0
    %7093 = vperm.xlu0 %7092, %v6524
    %v7094 = vpop.permute.xlu0 %7093
    %7095 = vset.pattern.permute.xlu0 0
    %7096 = vperm.xlu0 %7095, %v6541
    %v7097 = vpop.permute.xlu0 %7096
    %7098 = vset.pattern.permute.xlu0 0
    %7099 = vperm.xlu0 %7098, %v6558
    %v7100 = vpop.permute.xlu0 %7099
    %7101 = vset.pattern.permute.xlu0 0
    %7102 = vperm.xlu0 %7101, %v6575
    %v7103 = vpop.permute.xlu0 %7102
    %7104 = vset.pattern.permute.xlu0 0
    %7105 = vperm.xlu0 %7104, %v6592
    %v7106 = vpop.permute.xlu0 %7105
    %7107 = vset.pattern.permute.xlu0 0
    %7108 = vperm.xlu0 %7107, %v6609
    %v7109 = vpop.permute.xlu0 %7108
    %7110 = vset.pattern.permute.xlu0 0
    %7111 = vperm.xlu0 %7110, %v6626
    %v7112 = vpop.permute.xlu0 %7111
    %7113 = vset.pattern.permute.xlu0 0
    %7114 = vperm.xlu0 %7113, %v6643
    %v7115 = vpop.permute.xlu0 %7114
    %7116 = vset.pattern.permute.xlu0 0
    %7117 = vperm.xlu0 %7116, %v6660
    %v7118 = vpop.permute.xlu0 %7117
    %7119 = vset.pattern.permute.xlu0 0
    %7120 = vperm.xlu0 %7119, %v6677
    %v7121 = vpop.permute.xlu0 %7120
    %7122 = vset.pattern.permute.xlu0 0
    %7123 = vperm.xlu0 %7122, %v6694
    %v7124 = vpop.permute.xlu0 %7123
    %7125 = vset.pattern.permute.xlu0 0
    %7126 = vperm.xlu0 %7125, %v6711
    %v7127 = vpop.permute.xlu0 %7126
    %7128 = vset.pattern.permute.xlu0 0
    %7129 = vperm.xlu0 %7128, %v6728
    %v7130 = vpop.permute.xlu0 %7129
    %7131 = vset.pattern.permute.xlu0 0
    %7132 = vperm.xlu0 %7131, %v6745
    %v7133 = vpop.permute.xlu0 %7132
    %7134 = vset.pattern.permute.xlu0 0
    %7135 = vperm.xlu0 %7134, %v6762
    %v7136 = vpop.permute.xlu0 %7135
    %7137 = vset.pattern.permute.xlu0 0
    %7138 = vperm.xlu0 %7137, %v6779
    %v7139 = vpop.permute.xlu0 %7138
    %7140 = vset.pattern.permute.xlu0 0
    %7141 = vperm.xlu0 %7140, %v6796
    %v7142 = vpop.permute.xlu0 %7141
    %7143 = vset.pattern.permute.xlu0 0
    %7144 = vperm.xlu0 %7143, %v6813
    %v7145 = vpop.permute.xlu0 %7144
    %7146 = vset.pattern.permute.xlu0 0
    %7147 = vperm.xlu0 %7146, %v6830
    %v7148 = vpop.permute.xlu0 %7147
    %7149 = vset.pattern.permute.xlu0 0
    %7150 = vperm.xlu0 %7149, %v6847
    %v7151 = vpop.permute.xlu0 %7150
    %7152 = vset.pattern.permute.xlu0 0
    %7153 = vperm.xlu0 %7152, %v6864
    %v7154 = vpop.permute.xlu0 %7153
    %7155 = vset.pattern.permute.xlu0 0
    %7156 = vperm.xlu0 %7155, %v6881
    %v7157 = vpop.permute.xlu0 %7156
    %7158 = vset.pattern.permute.xlu0 0
    %7159 = vperm.xlu0 %7158, %v6898
    %v7160 = vpop.permute.xlu0 %7159
    %7161 = vset.pattern.permute.xlu0 0
    %7162 = vperm.xlu0 %7161, %v6915
    %v7163 = vpop.permute.xlu0 %7162
    %7164 = vset.pattern.permute.xlu0 0
    %7165 = vperm.xlu0 %7164, %v6932
    %v7166 = vpop.permute.xlu0 %7165
    %7167 = vset.pattern.permute.xlu0 0
    %7168 = vperm.xlu0 %7167, %v6949
    %v7169 = vpop.permute.xlu0 %7168
    %7170 = vset.pattern.permute.xlu0 0
    %7171 = vperm.xlu0 %7170, %v6966
    %v7172 = vpop.permute.xlu0 %7171
    %7173 = vset.pattern.permute.xlu0 0
    %7174 = vperm.xlu0 %7173, %v6983
    %v7175 = vpop.permute.xlu0 %7174
    %v7176 = vlaneseq
    %v7177 = vshrl.u32 %v7176, 7
    %v7178 = vsub.s32 %v3422, %v7177
    %v7179 = vrot.slane %v6986, %v7178
    %v7180 = vlaneseq
    %v7181 = vshrl.u32 %v7180, 7
    %v7182 = vsub.s32 %v3427, %v7181
    %v7183 = vrot.slane %v6989, %v7182
    %v7184 = vsel %vm3432, %v7183, %v7179
    %v7185 = vlaneseq
    %v7186 = vshrl.u32 %v7185, 7
    %v7187 = vsub.s32 %v3434, %v7186
    %v7188 = vrot.slane %v6992, %v7187
    %v7189 = vsel %vm3439, %v7188, %v7184
    %v7190 = vlaneseq
    %v7191 = vshrl.u32 %v7190, 7
    %v7192 = vsub.s32 %v3441, %v7191
    %v7193 = vrot.slane %v6995, %v7192
    %v7194 = vsel %vm3446, %v7193, %v7189
    %v7195 = vlaneseq
    %v7196 = vshrl.u32 %v7195, 7
    %v7197 = vsub.s32 %v3448, %v7196
    %v7198 = vrot.slane %v6998, %v7197
    %v7199 = vsel %vm3453, %v7198, %v7194
    %v7200 = vlaneseq
    %v7201 = vshrl.u32 %v7200, 7
    %v7202 = vsub.s32 %v3455, %v7201
    %v7203 = vrot.slane %v7001, %v7202
    %v7204 = vsel %vm3460, %v7203, %v7199
    %v7205 = vlaneseq
    %v7206 = vshrl.u32 %v7205, 7
    %v7207 = vsub.s32 %v3462, %v7206
    %v7208 = vrot.slane %v7004, %v7207
    %v7209 = vsel %vm3467, %v7208, %v7204
    %v7210 = vlaneseq
    %v7211 = vshrl.u32 %v7210, 7
    %v7212 = vsub.s32 %v3469, %v7211
    %v7213 = vrot.slane %v7007, %v7212
    %v7214 = vsel %vm3474, %v7213, %v7209
    %v7215 = vlaneseq
    %v7216 = vshrl.u32 %v7215, 7
    %v7217 = vsub.s32 %v3476, %v7216
    %v7218 = vrot.slane %v7010, %v7217
    %v7219 = vsel %vm3481, %v7218, %v7214
    %v7220 = vlaneseq
    %v7221 = vshrl.u32 %v7220, 7
    %v7222 = vsub.s32 %v3483, %v7221
    %v7223 = vrot.slane %v7013, %v7222
    %v7224 = vsel %vm3488, %v7223, %v7219
    %v7225 = vlaneseq
    %v7226 = vshrl.u32 %v7225, 7
    %v7227 = vsub.s32 %v3490, %v7226
    %v7228 = vrot.slane %v7016, %v7227
    %v7229 = vsel %vm3495, %v7228, %v7224
    %v7230 = vlaneseq
    %v7231 = vshrl.u32 %v7230, 7
    %v7232 = vsub.s32 %v3497, %v7231
    %v7233 = vrot.slane %v7019, %v7232
    %v7234 = vsel %vm3502, %v7233, %v7229
    %v7235 = vlaneseq
    %v7236 = vshrl.u32 %v7235, 7
    %v7237 = vsub.s32 %v3504, %v7236
    %v7238 = vrot.slane %v7022, %v7237
    %v7239 = vsel %vm3509, %v7238, %v7234
    %v7240 = vlaneseq
    %v7241 = vshrl.u32 %v7240, 7
    %v7242 = vsub.s32 %v3511, %v7241
    %v7243 = vrot.slane %v7025, %v7242
    %v7244 = vsel %vm3516, %v7243, %v7239
    %v7245 = vlaneseq
    %v7246 = vshrl.u32 %v7245, 7
    %v7247 = vsub.s32 %v3518, %v7246
    %v7248 = vrot.slane %v7028, %v7247
    %v7249 = vsel %vm3523, %v7248, %v7244
    %v7250 = vlaneseq
    %v7251 = vshrl.u32 %v7250, 7
    %v7252 = vsub.s32 %v3525, %v7251
    %v7253 = vrot.slane %v7031, %v7252
    %v7254 = vsel %vm3530, %v7253, %v7249
    %v7255 = vlaneseq
    %v7256 = vshrl.u32 %v7255, 7
    %v7257 = vsub.s32 %v3422, %v7256
    %v7258 = vrot.slane %v7034, %v7257
    %v7259 = vlaneseq
    %v7260 = vshrl.u32 %v7259, 7
    %v7261 = vsub.s32 %v3427, %v7260
    %v7262 = vrot.slane %v7037, %v7261
    %v7263 = vsel %vm3432, %v7262, %v7258
    %v7264 = vlaneseq
    %v7265 = vshrl.u32 %v7264, 7
    %v7266 = vsub.s32 %v3434, %v7265
    %v7267 = vrot.slane %v7040, %v7266
    %v7268 = vsel %vm3439, %v7267, %v7263
    %v7269 = vlaneseq
    %v7270 = vshrl.u32 %v7269, 7
    %v7271 = vsub.s32 %v3441, %v7270
    %v7272 = vrot.slane %v7043, %v7271
    %v7273 = vsel %vm3446, %v7272, %v7268
    %v7274 = vlaneseq
    %v7275 = vshrl.u32 %v7274, 7
    %v7276 = vsub.s32 %v3448, %v7275
    %v7277 = vrot.slane %v7046, %v7276
    %v7278 = vsel %vm3453, %v7277, %v7273
    %v7279 = vlaneseq
    %v7280 = vshrl.u32 %v7279, 7
    %v7281 = vsub.s32 %v3455, %v7280
    %v7282 = vrot.slane %v7049, %v7281
    %v7283 = vsel %vm3460, %v7282, %v7278
    %v7284 = vlaneseq
    %v7285 = vshrl.u32 %v7284, 7
    %v7286 = vsub.s32 %v3462, %v7285
    %v7287 = vrot.slane %v7052, %v7286
    %v7288 = vsel %vm3467, %v7287, %v7283
    %v7289 = vlaneseq
    %v7290 = vshrl.u32 %v7289, 7
    %v7291 = vsub.s32 %v3469, %v7290
    %v7292 = vrot.slane %v7055, %v7291
    %v7293 = vsel %vm3474, %v7292, %v7288
    %v7294 = vlaneseq
    %v7295 = vshrl.u32 %v7294, 7
    %v7296 = vsub.s32 %v3476, %v7295
    %v7297 = vrot.slane %v7058, %v7296
    %v7298 = vsel %vm3481, %v7297, %v7293
    %v7299 = vlaneseq
    %v7300 = vshrl.u32 %v7299, 7
    %v7301 = vsub.s32 %v3483, %v7300
    %v7302 = vrot.slane %v7061, %v7301
    %v7303 = vsel %vm3488, %v7302, %v7298
    %v7304 = vlaneseq
    %v7305 = vshrl.u32 %v7304, 7
    %v7306 = vsub.s32 %v3490, %v7305
    %v7307 = vrot.slane %v7064, %v7306
    %v7308 = vsel %vm3495, %v7307, %v7303
    %v7309 = vlaneseq
    %v7310 = vshrl.u32 %v7309, 7
    %v7311 = vsub.s32 %v3497, %v7310
    %v7312 = vrot.slane %v7067, %v7311
    %v7313 = vsel %vm3502, %v7312, %v7308
    %v7314 = vlaneseq
    %v7315 = vshrl.u32 %v7314, 7
    %v7316 = vsub.s32 %v3504, %v7315
    %v7317 = vrot.slane %v7070, %v7316
    %v7318 = vsel %vm3509, %v7317, %v7313
    %v7319 = vlaneseq
    %v7320 = vshrl.u32 %v7319, 7
    %v7321 = vsub.s32 %v3511, %v7320
    %v7322 = vrot.slane %v7073, %v7321
    %v7323 = vsel %vm3516, %v7322, %v7318
    %v7324 = vlaneseq
    %v7325 = vshrl.u32 %v7324, 7
    %v7326 = vsub.s32 %v3518, %v7325
    %v7327 = vrot.slane %v7076, %v7326
    %v7328 = vsel %vm3523, %v7327, %v7323
    %v7329 = vlaneseq
    %v7330 = vshrl.u32 %v7329, 7
    %v7331 = vsub.s32 %v3525, %v7330
    %v7332 = vrot.slane %v7079, %v7331
    %v7333 = vsel %vm3530, %v7332, %v7328
    %v7334 = vlaneseq
    %v7335 = vshrl.u32 %v7334, 7
    %v7336 = vsub.s32 %v3422, %v7335
    %v7337 = vrot.slane %v7082, %v7336
    %v7338 = vlaneseq
    %v7339 = vshrl.u32 %v7338, 7
    %v7340 = vsub.s32 %v3427, %v7339
    %v7341 = vrot.slane %v7085, %v7340
    %v7342 = vsel %vm3432, %v7341, %v7337
    %v7343 = vlaneseq
    %v7344 = vshrl.u32 %v7343, 7
    %v7345 = vsub.s32 %v3434, %v7344
    %v7346 = vrot.slane %v7088, %v7345
    %v7347 = vsel %vm3439, %v7346, %v7342
    %v7348 = vlaneseq
    %v7349 = vshrl.u32 %v7348, 7
    %v7350 = vsub.s32 %v3441, %v7349
    %v7351 = vrot.slane %v7091, %v7350
    %v7352 = vsel %vm3446, %v7351, %v7347
    %v7353 = vlaneseq
    %v7354 = vshrl.u32 %v7353, 7
    %v7355 = vsub.s32 %v3448, %v7354
    %v7356 = vrot.slane %v7094, %v7355
    %v7357 = vsel %vm3453, %v7356, %v7352
    %v7358 = vlaneseq
    %v7359 = vshrl.u32 %v7358, 7
    %v7360 = vsub.s32 %v3455, %v7359
    %v7361 = vrot.slane %v7097, %v7360
    %v7362 = vsel %vm3460, %v7361, %v7357
    %v7363 = vlaneseq
    %v7364 = vshrl.u32 %v7363, 7
    %v7365 = vsub.s32 %v3462, %v7364
    %v7366 = vrot.slane %v7100, %v7365
    %v7367 = vsel %vm3467, %v7366, %v7362
    %v7368 = vlaneseq
    %v7369 = vshrl.u32 %v7368, 7
    %v7370 = vsub.s32 %v3469, %v7369
    %v7371 = vrot.slane %v7103, %v7370
    %v7372 = vsel %vm3474, %v7371, %v7367
    %v7373 = vlaneseq
    %v7374 = vshrl.u32 %v7373, 7
    %v7375 = vsub.s32 %v3476, %v7374
    %v7376 = vrot.slane %v7106, %v7375
    %v7377 = vsel %vm3481, %v7376, %v7372
    %v7378 = vlaneseq
    %v7379 = vshrl.u32 %v7378, 7
    %v7380 = vsub.s32 %v3483, %v7379
    %v7381 = vrot.slane %v7109, %v7380
    %v7382 = vsel %vm3488, %v7381, %v7377
    %v7383 = vlaneseq
    %v7384 = vshrl.u32 %v7383, 7
    %v7385 = vsub.s32 %v3490, %v7384
    %v7386 = vrot.slane %v7112, %v7385
    %v7387 = vsel %vm3495, %v7386, %v7382
    %v7388 = vlaneseq
    %v7389 = vshrl.u32 %v7388, 7
    %v7390 = vsub.s32 %v3497, %v7389
    %v7391 = vrot.slane %v7115, %v7390
    %v7392 = vsel %vm3502, %v7391, %v7387
    %v7393 = vlaneseq
    %v7394 = vshrl.u32 %v7393, 7
    %v7395 = vsub.s32 %v3504, %v7394
    %v7396 = vrot.slane %v7118, %v7395
    %v7397 = vsel %vm3509, %v7396, %v7392
    %v7398 = vlaneseq
    %v7399 = vshrl.u32 %v7398, 7
    %v7400 = vsub.s32 %v3511, %v7399
    %v7401 = vrot.slane %v7121, %v7400
    %v7402 = vsel %vm3516, %v7401, %v7397
    %v7403 = vlaneseq
    %v7404 = vshrl.u32 %v7403, 7
    %v7405 = vsub.s32 %v3518, %v7404
    %v7406 = vrot.slane %v7124, %v7405
    %v7407 = vsel %vm3523, %v7406, %v7402
    %v7408 = vlaneseq
    %v7409 = vshrl.u32 %v7408, 7
    %v7410 = vsub.s32 %v3525, %v7409
    %v7411 = vrot.slane %v7127, %v7410
    %v7412 = vsel %vm3530, %v7411, %v7407
    %v7413 = vlaneseq
    %v7414 = vshrl.u32 %v7413, 7
    %v7415 = vsub.s32 %v3422, %v7414
    %v7416 = vrot.slane %v7130, %v7415
    %v7417 = vlaneseq
    %v7418 = vshrl.u32 %v7417, 7
    %v7419 = vsub.s32 %v3427, %v7418
    %v7420 = vrot.slane %v7133, %v7419
    %v7421 = vsel %vm3432, %v7420, %v7416
    %v7422 = vlaneseq
    %v7423 = vshrl.u32 %v7422, 7
    %v7424 = vsub.s32 %v3434, %v7423
    %v7425 = vrot.slane %v7136, %v7424
    %v7426 = vsel %vm3439, %v7425, %v7421
    %v7427 = vlaneseq
    %v7428 = vshrl.u32 %v7427, 7
    %v7429 = vsub.s32 %v3441, %v7428
    %v7430 = vrot.slane %v7139, %v7429
    %v7431 = vsel %vm3446, %v7430, %v7426
    %v7432 = vlaneseq
    %v7433 = vshrl.u32 %v7432, 7
    %v7434 = vsub.s32 %v3448, %v7433
    %v7435 = vrot.slane %v7142, %v7434
    %v7436 = vsel %vm3453, %v7435, %v7431
    %v7437 = vlaneseq
    %v7438 = vshrl.u32 %v7437, 7
    %v7439 = vsub.s32 %v3455, %v7438
    %v7440 = vrot.slane %v7145, %v7439
    %v7441 = vsel %vm3460, %v7440, %v7436
    %v7442 = vlaneseq
    %v7443 = vshrl.u32 %v7442, 7
    %v7444 = vsub.s32 %v3462, %v7443
    %v7445 = vrot.slane %v7148, %v7444
    %v7446 = vsel %vm3467, %v7445, %v7441
    %v7447 = vlaneseq
    %v7448 = vshrl.u32 %v7447, 7
    %v7449 = vsub.s32 %v3469, %v7448
    %v7450 = vrot.slane %v7151, %v7449
    %v7451 = vsel %vm3474, %v7450, %v7446
    %v7452 = vlaneseq
    %v7453 = vshrl.u32 %v7452, 7
    %v7454 = vsub.s32 %v3476, %v7453
    %v7455 = vrot.slane %v7154, %v7454
    %v7456 = vsel %vm3481, %v7455, %v7451
    %v7457 = vlaneseq
    %v7458 = vshrl.u32 %v7457, 7
    %v7459 = vsub.s32 %v3483, %v7458
    %v7460 = vrot.slane %v7157, %v7459
    %v7461 = vsel %vm3488, %v7460, %v7456
    %v7462 = vlaneseq
    %v7463 = vshrl.u32 %v7462, 7
    %v7464 = vsub.s32 %v3490, %v7463
    %v7465 = vrot.slane %v7160, %v7464
    %v7466 = vsel %vm3495, %v7465, %v7461
    %v7467 = vlaneseq
    %v7468 = vshrl.u32 %v7467, 7
    %v7469 = vsub.s32 %v3497, %v7468
    %v7470 = vrot.slane %v7163, %v7469
    %v7471 = vsel %vm3502, %v7470, %v7466
    %v7472 = vlaneseq
    %v7473 = vshrl.u32 %v7472, 7
    %v7474 = vsub.s32 %v3504, %v7473
    %v7475 = vrot.slane %v7166, %v7474
    %v7476 = vsel %vm3509, %v7475, %v7471
    %v7477 = vlaneseq
    %v7478 = vshrl.u32 %v7477, 7
    %v7479 = vsub.s32 %v3511, %v7478
    %v7480 = vrot.slane %v7169, %v7479
    %v7481 = vsel %vm3516, %v7480, %v7476
    %v7482 = vlaneseq
    %v7483 = vshrl.u32 %v7482, 7
    %v7484 = vsub.s32 %v3518, %v7483
    %v7485 = vrot.slane %v7172, %v7484
    %v7486 = vsel %vm3523, %v7485, %v7481
    %v7487 = vlaneseq
    %v7488 = vshrl.u32 %v7487, 7
    %v7489 = vsub.s32 %v3525, %v7488
    %v7490 = vrot.slane %v7175, %v7489
    %v7491 = vsel %vm3530, %v7490, %v7486
    %v7492 = vsel %vm3769, %v7412, %v7254
    %v7493 = vsel %vm3769, %v7491, %v7333
    %v7494 = vcombine.low %v7492, %v7493
    %v7496 = vunpack.c.l.s4 1983009808
    %v7497 = vunpack.c.0.s8 %v7496
    %v7498 = vlaneseq
    %v7499 = vshrl.u32 %v7498, 7
    %v7500 = vsub.s32 %v7497, %v7499
    %v7501 = vrot.slane %v7494, %v7500
    %v7503 = vadd.f32 %v3847, %v7501
    %7504 = vst [vmem:[#allocation3] sm:$0xf] %v7503
    // Predicated region
    $region22: #{pooled_projection_pallas.1} parent=1 // pred_check
      %p7505 = pneg %p21
    $region23: #{pooled_projection_pallas.1} parent=1 // pred_check_branch
      %7507 = sbr.rel (%p7505) target = $region25
    $region24: #{pooled_projection_pallas.1} parent=1 // pred_region
      %v7508 = vld [vmem:[%s2] sm:$0xff]
      %v7509 = vld [vmem:[%s2 + $0x8] sm:$0xff]
      %v7510 = vld [vmem:[%s2 + $0x10] sm:$0xff]
      %v7511 = vld [vmem:[%s2 + $0x18] sm:$0xff]
      %v7512 = vld [vmem:[%s2 + $0x20] sm:$0xff]
      %v7513 = vld [vmem:[%s2 + $0x28] sm:$0xff]
      %v7514 = vld [vmem:[%s2 + $0x30] sm:$0xff]
      %v7515 = vld [vmem:[%s2 + $0x38] sm:$0xff]
      %v7516 = vld [vmem:[%s2 + $0x40] sm:$0xff]
      %v7517 = vld [vmem:[%s2 + $0x48] sm:$0xff]
      %v7518 = vld [vmem:[%s2 + $0x50] sm:$0xff]
      %v7519 = vld [vmem:[%s2 + $0x58] sm:$0xff]
      %v7520 = vld [vmem:[%s2 + $0x60] sm:$0xff]
      %v7521 = vld [vmem:[%s2 + $0x68] sm:$0xff]
      %v7522 = vld [vmem:[%s2 + $0x70] sm:$0xff]
      %v7523 = vld [vmem:[%s2 + $0x78] sm:$0xff]
      %v7524 = vld [vmem:[%s2 + $0x80] sm:$0xff]
      %v7525 = vld [vmem:[%s2 + $0x88] sm:$0xff]
      %v7526 = vld [vmem:[%s2 + $0x90] sm:$0xff]
      %v7527 = vld [vmem:[%s2 + $0x98] sm:$0xff]
      %v7528 = vld [vmem:[%s2 + $0xa0] sm:$0xff]
      %v7529 = vld [vmem:[%s2 + $0xa8] sm:$0xff]
      %v7530 = vld [vmem:[%s2 + $0xb0] sm:$0xff]
      %v7531 = vld [vmem:[%s2 + $0xb8] sm:$0xff]
      %v7532 = vld [vmem:[%s2 + $0xc0] sm:$0xff]
      %v7533 = vld [vmem:[%s2 + $0xc8] sm:$0xff]
      %v7534 = vld [vmem:[%s2 + $0xd0] sm:$0xff]
      %v7535 = vld [vmem:[%s2 + $0xd8] sm:$0xff]
      %v7536 = vld [vmem:[%s2 + $0xe0] sm:$0xff]
      %v7537 = vld [vmem:[%s2 + $0xe8] sm:$0xff]
      %v7538 = vld [vmem:[%s2 + $0xf0] sm:$0xff]
      %v7539 = vld [vmem:[%s2 + $0xf8] sm:$0xff]
      %v7540 = vld [vmem:[%s2 + $0x100] sm:$0xff]
      %v7541 = vld [vmem:[%s2 + $0x108] sm:$0xff]
      %v7542 = vld [vmem:[%s2 + $0x110] sm:$0xff]
      %v7543 = vld [vmem:[%s2 + $0x118] sm:$0xff]
      %v7544 = vld [vmem:[%s2 + $0x120] sm:$0xff]
      %v7545 = vld [vmem:[%s2 + $0x128] sm:$0xff]
      %v7546 = vld [vmem:[%s2 + $0x130] sm:$0xff]
      %v7547 = vld [vmem:[%s2 + $0x138] sm:$0xff]
      %v7548 = vld [vmem:[%s2 + $0x140] sm:$0xff]
      %v7549 = vld [vmem:[%s2 + $0x148] sm:$0xff]
      %v7550 = vld [vmem:[%s2 + $0x150] sm:$0xff]
      %v7551 = vld [vmem:[%s2 + $0x158] sm:$0xff]
      %v7552 = vld [vmem:[%s2 + $0x160] sm:$0xff]
      %v7553 = vld [vmem:[%s2 + $0x168] sm:$0xff]
      %v7554 = vld [vmem:[%s2 + $0x170] sm:$0xff]
      %v7555 = vld [vmem:[%s2 + $0x178] sm:$0xff]
      %v7556 = vld [vmem:[%s2 + $0x180] sm:$0xff]
      %v7557 = vld [vmem:[%s2 + $0x188] sm:$0xff]
      %v7558 = vld [vmem:[%s2 + $0x190] sm:$0xff]
      %v7559 = vld [vmem:[%s2 + $0x198] sm:$0xff]
      %v7560 = vld [vmem:[%s2 + $0x1a0] sm:$0xff]
      %v7561 = vld [vmem:[%s2 + $0x1a8] sm:$0xff]
      %v7562 = vld [vmem:[%s2 + $0x1b0] sm:$0xff]
      %v7563 = vld [vmem:[%s2 + $0x1b8] sm:$0xff]
      %v7564 = vld [vmem:[%s2 + $0x1c0] sm:$0xff]
      %v7565 = vld [vmem:[%s2 + $0x1c8] sm:$0xff]
      %v7566 = vld [vmem:[%s2 + $0x1d0] sm:$0xff]
      %v7567 = vld [vmem:[%s2 + $0x1d8] sm:$0xff]
      %v7568 = vld [vmem:[%s2 + $0x1e0] sm:$0xff]
      %v7569 = vld [vmem:[%s2 + $0x1e8] sm:$0xff]
      %v7570 = vld [vmem:[%s2 + $0x1f0] sm:$0xff]
      %v7571 = vld [vmem:[%s2 + $0x1f8] sm:$0xff]
      %v7572 = vld [vmem:[%s2 + $0x200] sm:$0xff]
      %v7573 = vld [vmem:[%s2 + $0x208] sm:$0xff]
      %v7574 = vld [vmem:[%s2 + $0x210] sm:$0xff]
      %v7575 = vld [vmem:[%s2 + $0x218] sm:$0xff]
      %v7576 = vld [vmem:[%s2 + $0x220] sm:$0xff]
      %v7577 = vld [vmem:[%s2 + $0x228] sm:$0xff]
      %v7578 = vld [vmem:[%s2 + $0x230] sm:$0xff]
      %v7579 = vld [vmem:[%s2 + $0x238] sm:$0xff]
      %v7580 = vld [vmem:[%s2 + $0x240] sm:$0xff]
      %v7581 = vld [vmem:[%s2 + $0x248] sm:$0xff]
      %v7582 = vld [vmem:[%s2 + $0x250] sm:$0xff]
      %v7583 = vld [vmem:[%s2 + $0x258] sm:$0xff]
      %v7584 = vld [vmem:[%s2 + $0x260] sm:$0xff]
      %v7585 = vld [vmem:[%s2 + $0x268] sm:$0xff]
      %v7586 = vld [vmem:[%s2 + $0x270] sm:$0xff]
      %v7587 = vld [vmem:[%s2 + $0x278] sm:$0xff]
      %v7588 = vld [vmem:[%s2 + $0x280] sm:$0xff]
      %v7589 = vld [vmem:[%s2 + $0x288] sm:$0xff]
      %v7590 = vld [vmem:[%s2 + $0x290] sm:$0xff]
      %v7591 = vld [vmem:[%s2 + $0x298] sm:$0xff]
      %v7592 = vld [vmem:[%s2 + $0x2a0] sm:$0xff]
      %v7593 = vld [vmem:[%s2 + $0x2a8] sm:$0xff]
      %v7594 = vld [vmem:[%s2 + $0x2b0] sm:$0xff]
      %v7595 = vld [vmem:[%s2 + $0x2b8] sm:$0xff]
      %v7596 = vld [vmem:[%s2 + $0x2c0] sm:$0xff]
      %v7597 = vld [vmem:[%s2 + $0x2c8] sm:$0xff]
      %v7598 = vld [vmem:[%s2 + $0x2d0] sm:$0xff]
      %v7599 = vld [vmem:[%s2 + $0x2d8] sm:$0xff]
      %v7600 = vld [vmem:[%s2 + $0x2e0] sm:$0xff]
      %v7601 = vld [vmem:[%s2 + $0x2e8] sm:$0xff]
      %v7602 = vld [vmem:[%s2 + $0x2f0] sm:$0xff]
      %v7603 = vld [vmem:[%s2 + $0x2f8] sm:$0xff]
      %v7604 = vld [vmem:[%s2 + $0x300] sm:$0xff]
      %v7605 = vld [vmem:[%s2 + $0x308] sm:$0xff]
      %v7606 = vld [vmem:[%s2 + $0x310] sm:$0xff]
      %v7607 = vld [vmem:[%s2 + $0x318] sm:$0xff]
      %v7608 = vld [vmem:[%s2 + $0x320] sm:$0xff]
      %v7609 = vld [vmem:[%s2 + $0x328] sm:$0xff]
      %v7610 = vld [vmem:[%s2 + $0x330] sm:$0xff]
      %v7611 = vld [vmem:[%s2 + $0x338] sm:$0xff]
      %v7612 = vld [vmem:[%s2 + $0x340] sm:$0xff]
      %v7613 = vld [vmem:[%s2 + $0x348] sm:$0xff]
      %v7614 = vld [vmem:[%s2 + $0x350] sm:$0xff]
      %v7615 = vld [vmem:[%s2 + $0x358] sm:$0xff]
      %v7616 = vld [vmem:[%s2 + $0x360] sm:$0xff]
      %v7617 = vld [vmem:[%s2 + $0x368] sm:$0xff]
      %v7618 = vld [vmem:[%s2 + $0x370] sm:$0xff]
      %v7619 = vld [vmem:[%s2 + $0x378] sm:$0xff]
      %v7620 = vld [vmem:[%s2 + $0x380] sm:$0xff]
      %v7621 = vld [vmem:[%s2 + $0x388] sm:$0xff]
      %v7622 = vld [vmem:[%s2 + $0x390] sm:$0xff]
      %v7623 = vld [vmem:[%s2 + $0x398] sm:$0xff]
      %v7624 = vld [vmem:[%s2 + $0x3a0] sm:$0xff]
      %v7625 = vld [vmem:[%s2 + $0x3a8] sm:$0xff]
      %v7626 = vld [vmem:[%s2 + $0x3b0] sm:$0xff]
      %v7627 = vld [vmem:[%s2 + $0x3b8] sm:$0xff]
      %v7628 = vld [vmem:[%s2 + $0x3c0] sm:$0xff]
      %v7629 = vld [vmem:[%s2 + $0x3c8] sm:$0xff]
      %v7630 = vld [vmem:[%s2 + $0x3d0] sm:$0xff]
      %v7631 = vld [vmem:[%s2 + $0x3d8] sm:$0xff]
      %v7632 = vld [vmem:[%s2 + $0x3e0] sm:$0xff]
      %v7633 = vld [vmem:[%s2 + $0x3e8] sm:$0xff]
      %v7634 = vld [vmem:[%s2 + $0x3f0] sm:$0xff]
      %v7635 = vld [vmem:[%s2 + $0x3f8] sm:$0xff]
      %v7636 = vld [vmem:[%s3] sm:$0xff]
      %v7637 = vld [vmem:[#allocation2] sm:$0xf]
      %v7638 = vmul.f32 %v7637, 0.015625
      %v7641 = vunpack.c.l.s4 1983009808
      %v7642 = vunpack.c.0.s8 %v7641
      %v7643 = vlaneseq
      %v7644 = vshrl.u32 %v7643, 7
      %v7645 = vsub.s32 %v7642, %v7644
      %v7646 = vrot.slane %v7638, %v7645
      %v7647 = vcombine.high %v7646, %v7646
      %v7650 = vpack.c.bf16 %v7646, %v7646
      %v7651 = vpack.c.bf16 %v7647, %v7647
      %v7653 = vlaneseq
      %v7654 = vshrl.u32 %v7653, 7
      %v7655 = vsub.s32 0, %v7654
      %v7656 = vrot.slane %v7636, %v7655
      %v7657 = vlaneseq
      %v7658 = vshrl.u32 %v7657, 7
      %v7659 = vsub.s32 1, %v7658
      %v7660 = vrot.slane %v7636, %v7659
      %v7661 = vlaneseq
      %v7662 = vshrl.u32 %v7661, 7
      %v7663 = vsub.s32 2, %v7662
      %v7664 = vrot.slane %v7636, %v7663
      %v7665 = vlaneseq
      %v7666 = vshrl.u32 %v7665, 7
      %v7667 = vsub.s32 3, %v7666
      %v7668 = vrot.slane %v7636, %v7667
      %v7669 = vlaneseq
      %v7670 = vshrl.u32 %v7669, 7
      %v7671 = vsub.s32 4, %v7670
      %v7672 = vrot.slane %v7636, %v7671
      %v7673 = vlaneseq
      %v7674 = vshrl.u32 %v7673, 7
      %v7675 = vsub.s32 5, %v7674
      %v7676 = vrot.slane %v7636, %v7675
      %v7677 = vlaneseq
      %v7678 = vshrl.u32 %v7677, 7
      %v7679 = vsub.s32 6, %v7678
      %v7680 = vrot.slane %v7636, %v7679
      %v7681 = vlaneseq
      %v7682 = vshrl.u32 %v7681, 7
      %v7683 = vsub.s32 7, %v7682
      %v7684 = vrot.slane %v7636, %v7683
      %v7821 = vunpack.c.l.b16 %v7508
      %v7822 = vunpack.c.h.b16 %v7508
      %v7823 = vunpack.c.l.b16 %v7509
      %v7824 = vunpack.c.h.b16 %v7509
      %v7825 = vunpack.c.l.b16 %v7510
      %v7826 = vunpack.c.h.b16 %v7510
      %v7827 = vunpack.c.l.b16 %v7511
      %v7828 = vunpack.c.h.b16 %v7511
      %v7829 = vunpack.c.l.b16 %v7512
      %v7830 = vunpack.c.h.b16 %v7512
      %v7831 = vunpack.c.l.b16 %v7513
      %v7832 = vunpack.c.h.b16 %v7513
      %v7833 = vunpack.c.l.b16 %v7514
      %v7834 = vunpack.c.h.b16 %v7514
      %v7835 = vunpack.c.l.b16 %v7515
      %v7836 = vunpack.c.h.b16 %v7515
      %v7837 = vunpack.c.l.b16 %v7516
      %v7838 = vunpack.c.h.b16 %v7516
      %v7839 = vunpack.c.l.b16 %v7517
      %v7840 = vunpack.c.h.b16 %v7517
      %v7841 = vunpack.c.l.b16 %v7518
      %v7842 = vunpack.c.h.b16 %v7518
      %v7843 = vunpack.c.l.b16 %v7519
      %v7844 = vunpack.c.h.b16 %v7519
      %v7845 = vunpack.c.l.b16 %v7520
      %v7846 = vunpack.c.h.b16 %v7520
      %v7847 = vunpack.c.l.b16 %v7521
      %v7848 = vunpack.c.h.b16 %v7521
      %v7849 = vunpack.c.l.b16 %v7522
      %v7850 = vunpack.c.h.b16 %v7522
      %v7851 = vunpack.c.l.b16 %v7523
      %v7852 = vunpack.c.h.b16 %v7523
      %v7853 = vunpack.c.l.b16 %v7524
      %v7854 = vunpack.c.h.b16 %v7524
      %v7855 = vunpack.c.l.b16 %v7525
      %v7856 = vunpack.c.h.b16 %v7525
      %v7857 = vunpack.c.l.b16 %v7526
      %v7858 = vunpack.c.h.b16 %v7526
      %v7859 = vunpack.c.l.b16 %v7527
      %v7860 = vunpack.c.h.b16 %v7527
      %v7861 = vunpack.c.l.b16 %v7528
      %v7862 = vunpack.c.h.b16 %v7528
      %v7863 = vunpack.c.l.b16 %v7529
      %v7864 = vunpack.c.h.b16 %v7529
      %v7865 = vunpack.c.l.b16 %v7530
      %v7866 = vunpack.c.h.b16 %v7530
      %v7867 = vunpack.c.l.b16 %v7531
      %v7868 = vunpack.c.h.b16 %v7531
      %v7869 = vunpack.c.l.b16 %v7532
      %v7870 = vunpack.c.h.b16 %v7532
      %v7871 = vunpack.c.l.b16 %v7533
      %v7872 = vunpack.c.h.b16 %v7533
      %v7873 = vunpack.c.l.b16 %v7534
      %v7874 = vunpack.c.h.b16 %v7534
      %v7875 = vunpack.c.l.b16 %v7535
      %v7876 = vunpack.c.h.b16 %v7535
      %v7877 = vunpack.c.l.b16 %v7536
      %v7878 = vunpack.c.h.b16 %v7536
      %v7879 = vunpack.c.l.b16 %v7537
      %v7880 = vunpack.c.h.b16 %v7537
      %v7881 = vunpack.c.l.b16 %v7538
      %v7882 = vunpack.c.h.b16 %v7538
      %v7883 = vunpack.c.l.b16 %v7539
      %v7884 = vunpack.c.h.b16 %v7539
      %v7885 = vunpack.c.l.b16 %v7540
      %v7886 = vunpack.c.h.b16 %v7540
      %v7887 = vunpack.c.l.b16 %v7541
      %v7888 = vunpack.c.h.b16 %v7541
      %v7889 = vunpack.c.l.b16 %v7542
      %v7890 = vunpack.c.h.b16 %v7542
      %v7891 = vunpack.c.l.b16 %v7543
      %v7892 = vunpack.c.h.b16 %v7543
      %v7893 = vunpack.c.l.b16 %v7544
      %v7894 = vunpack.c.h.b16 %v7544
      %v7895 = vunpack.c.l.b16 %v7545
      %v7896 = vunpack.c.h.b16 %v7545
      %v7897 = vunpack.c.l.b16 %v7546
      %v7898 = vunpack.c.h.b16 %v7546
      %v7899 = vunpack.c.l.b16 %v7547
      %v7900 = vunpack.c.h.b16 %v7547
      %v7901 = vunpack.c.l.b16 %v7548
      %v7902 = vunpack.c.h.b16 %v7548
      %v7903 = vunpack.c.l.b16 %v7549
      %v7904 = vunpack.c.h.b16 %v7549
      %v7905 = vunpack.c.l.b16 %v7550
      %v7906 = vunpack.c.h.b16 %v7550
      %v7907 = vunpack.c.l.b16 %v7551
      %v7908 = vunpack.c.h.b16 %v7551
      %v7909 = vunpack.c.l.b16 %v7552
      %v7910 = vunpack.c.h.b16 %v7552
      %v7911 = vunpack.c.l.b16 %v7553
      %v7912 = vunpack.c.h.b16 %v7553
      %v7913 = vunpack.c.l.b16 %v7554
      %v7914 = vunpack.c.h.b16 %v7554
      %v7915 = vunpack.c.l.b16 %v7555
      %v7916 = vunpack.c.h.b16 %v7555
      %v7917 = vunpack.c.l.b16 %v7556
      %v7918 = vunpack.c.h.b16 %v7556
      %v7919 = vunpack.c.l.b16 %v7557
      %v7920 = vunpack.c.h.b16 %v7557
      %v7921 = vunpack.c.l.b16 %v7558
      %v7922 = vunpack.c.h.b16 %v7558
      %v7923 = vunpack.c.l.b16 %v7559
      %v7924 = vunpack.c.h.b16 %v7559
      %v7925 = vunpack.c.l.b16 %v7560
      %v7926 = vunpack.c.h.b16 %v7560
      %v7927 = vunpack.c.l.b16 %v7561
      %v7928 = vunpack.c.h.b16 %v7561
      %v7929 = vunpack.c.l.b16 %v7562
      %v7930 = vunpack.c.h.b16 %v7562
      %v7931 = vunpack.c.l.b16 %v7563
      %v7932 = vunpack.c.h.b16 %v7563
      %v7933 = vunpack.c.l.b16 %v7564
      %v7934 = vunpack.c.h.b16 %v7564
      %v7935 = vunpack.c.l.b16 %v7565
      %v7936 = vunpack.c.h.b16 %v7565
      %v7937 = vunpack.c.l.b16 %v7566
      %v7938 = vunpack.c.h.b16 %v7566
      %v7939 = vunpack.c.l.b16 %v7567
      %v7940 = vunpack.c.h.b16 %v7567
      %v7941 = vunpack.c.l.b16 %v7568
      %v7942 = vunpack.c.h.b16 %v7568
      %v7943 = vunpack.c.l.b16 %v7569
      %v7944 = vunpack.c.h.b16 %v7569
      %v7945 = vunpack.c.l.b16 %v7570
      %v7946 = vunpack.c.h.b16 %v7570
      %v7947 = vunpack.c.l.b16 %v7571
      %v7948 = vunpack.c.h.b16 %v7571
      %v7949 = vunpack.c.l.b16 %v7572
      %v7950 = vunpack.c.h.b16 %v7572
      %v7951 = vunpack.c.l.b16 %v7573
      %v7952 = vunpack.c.h.b16 %v7573
      %v7953 = vunpack.c.l.b16 %v7574
      %v7954 = vunpack.c.h.b16 %v7574
      %v7955 = vunpack.c.l.b16 %v7575
      %v7956 = vunpack.c.h.b16 %v7575
      %v7957 = vunpack.c.l.b16 %v7576
      %v7958 = vunpack.c.h.b16 %v7576
      %v7959 = vunpack.c.l.b16 %v7577
      %v7960 = vunpack.c.h.b16 %v7577
      %v7961 = vunpack.c.l.b16 %v7578
      %v7962 = vunpack.c.h.b16 %v7578
      %v7963 = vunpack.c.l.b16 %v7579
      %v7964 = vunpack.c.h.b16 %v7579
      %v7965 = vunpack.c.l.b16 %v7580
      %v7966 = vunpack.c.h.b16 %v7580
      %v7967 = vunpack.c.l.b16 %v7581
      %v7968 = vunpack.c.h.b16 %v7581
      %v7969 = vunpack.c.l.b16 %v7582
      %v7970 = vunpack.c.h.b16 %v7582
      %v7971 = vunpack.c.l.b16 %v7583
      %v7972 = vunpack.c.h.b16 %v7583
      %v7973 = vunpack.c.l.b16 %v7584
      %v7974 = vunpack.c.h.b16 %v7584
      %v7975 = vunpack.c.l.b16 %v7585
      %v7976 = vunpack.c.h.b16 %v7585
      %v7977 = vunpack.c.l.b16 %v7586
      %v7978 = vunpack.c.h.b16 %v7586
      %v7979 = vunpack.c.l.b16 %v7587
      %v7980 = vunpack.c.h.b16 %v7587
      %v7981 = vunpack.c.l.b16 %v7588
      %v7982 = vunpack.c.h.b16 %v7588
      %v7983 = vunpack.c.l.b16 %v7589
      %v7984 = vunpack.c.h.b16 %v7589
      %v7985 = vunpack.c.l.b16 %v7590
      %v7986 = vunpack.c.h.b16 %v7590
      %v7987 = vunpack.c.l.b16 %v7591
      %v7988 = vunpack.c.h.b16 %v7591
      %v7989 = vunpack.c.l.b16 %v7592
      %v7990 = vunpack.c.h.b16 %v7592
      %v7991 = vunpack.c.l.b16 %v7593
      %v7992 = vunpack.c.h.b16 %v7593
      %v7993 = vunpack.c.l.b16 %v7594
      %v7994 = vunpack.c.h.b16 %v7594
      %v7995 = vunpack.c.l.b16 %v7595
      %v7996 = vunpack.c.h.b16 %v7595
      %v7997 = vunpack.c.l.b16 %v7596
      %v7998 = vunpack.c.h.b16 %v7596
      %v7999 = vunpack.c.l.b16 %v7597
      %v8000 = vunpack.c.h.b16 %v7597
      %v8001 = vunpack.c.l.b16 %v7598
      %v8002 = vunpack.c.h.b16 %v7598
      %v8003 = vunpack.c.l.b16 %v7599
      %v8004 = vunpack.c.h.b16 %v7599
      %v8005 = vunpack.c.l.b16 %v7600
      %v8006 = vunpack.c.h.b16 %v7600
      %v8007 = vunpack.c.l.b16 %v7601
      %v8008 = vunpack.c.h.b16 %v7601
      %v8009 = vunpack.c.l.b16 %v7602
      %v8010 = vunpack.c.h.b16 %v7602
      %v8011 = vunpack.c.l.b16 %v7603
      %v8012 = vunpack.c.h.b16 %v7603
      %v8013 = vunpack.c.l.b16 %v7604
      %v8014 = vunpack.c.h.b16 %v7604
      %v8015 = vunpack.c.l.b16 %v7605
      %v8016 = vunpack.c.h.b16 %v7605
      %v8017 = vunpack.c.l.b16 %v7606
      %v8018 = vunpack.c.h.b16 %v7606
      %v8019 = vunpack.c.l.b16 %v7607
      %v8020 = vunpack.c.h.b16 %v7607
      %v8021 = vunpack.c.l.b16 %v7608
      %v8022 = vunpack.c.h.b16 %v7608
      %v8023 = vunpack.c.l.b16 %v7609
      %v8024 = vunpack.c.h.b16 %v7609
      %v8025 = vunpack.c.l.b16 %v7610
      %v8026 = vunpack.c.h.b16 %v7610
      %v8027 = vunpack.c.l.b16 %v7611
      %v8028 = vunpack.c.h.b16 %v7611
      %v8029 = vunpack.c.l.b16 %v7612
      %v8030 = vunpack.c.h.b16 %v7612
      %v8031 = vunpack.c.l.b16 %v7613
      %v8032 = vunpack.c.h.b16 %v7613
      %v8033 = vunpack.c.l.b16 %v7614
      %v8034 = vunpack.c.h.b16 %v7614
      %v8035 = vunpack.c.l.b16 %v7615
      %v8036 = vunpack.c.h.b16 %v7615
      %v8037 = vunpack.c.l.b16 %v7616
      %v8038 = vunpack.c.h.b16 %v7616
      %v8039 = vunpack.c.l.b16 %v7617
      %v8040 = vunpack.c.h.b16 %v7617
      %v8041 = vunpack.c.l.b16 %v7618
      %v8042 = vunpack.c.h.b16 %v7618
      %v8043 = vunpack.c.l.b16 %v7619
      %v8044 = vunpack.c.h.b16 %v7619
      %v8045 = vunpack.c.l.b16 %v7620
      %v8046 = vunpack.c.h.b16 %v7620
      %v8047 = vunpack.c.l.b16 %v7621
      %v8048 = vunpack.c.h.b16 %v7621
      %v8049 = vunpack.c.l.b16 %v7622
      %v8050 = vunpack.c.h.b16 %v7622
      %v8051 = vunpack.c.l.b16 %v7623
      %v8052 = vunpack.c.h.b16 %v7623
      %v8053 = vunpack.c.l.b16 %v7624
      %v8054 = vunpack.c.h.b16 %v7624
      %v8055 = vunpack.c.l.b16 %v7625
      %v8056 = vunpack.c.h.b16 %v7625
      %v8057 = vunpack.c.l.b16 %v7626
      %v8058 = vunpack.c.h.b16 %v7626
      %v8059 = vunpack.c.l.b16 %v7627
      %v8060 = vunpack.c.h.b16 %v7627
      %v8061 = vunpack.c.l.b16 %v7628
      %v8062 = vunpack.c.h.b16 %v7628
      %v8063 = vunpack.c.l.b16 %v7629
      %v8064 = vunpack.c.h.b16 %v7629
      %v8065 = vunpack.c.l.b16 %v7630
      %v8066 = vunpack.c.h.b16 %v7630
      %v8067 = vunpack.c.l.b16 %v7631
      %v8068 = vunpack.c.h.b16 %v7631
      %v8069 = vunpack.c.l.b16 %v7632
      %v8070 = vunpack.c.h.b16 %v7632
      %v8071 = vunpack.c.l.b16 %v7633
      %v8072 = vunpack.c.h.b16 %v7633
      %v8073 = vunpack.c.l.b16 %v7634
      %v8074 = vunpack.c.h.b16 %v7634
      %v8075 = vunpack.c.l.b16 %v7635
      %v8076 = vunpack.c.h.b16 %v7635
      %v8077 = vpack.c.b16 %v7829, %v7821
      %v8078 = vpack.c.b16 %v7830, %v7822
      %v8079 = vpack.c.b16 %v7831, %v7823
      %v8080 = vpack.c.b16 %v7832, %v7824
      %v8081 = vpack.c.b16 %v7833, %v7825
      %v8082 = vpack.c.b16 %v7834, %v7826
      %v8083 = vpack.c.b16 %v7835, %v7827
      %v8084 = vpack.c.b16 %v7836, %v7828
      %v8085 = vpack.c.b16 %v7845, %v7837
      %v8086 = vpack.c.b16 %v7846, %v7838
      %v8087 = vpack.c.b16 %v7847, %v7839
      %v8088 = vpack.c.b16 %v7848, %v7840
      %v8089 = vpack.c.b16 %v7849, %v7841
      %v8090 = vpack.c.b16 %v7850, %v7842
      %v8091 = vpack.c.b16 %v7851, %v7843
      %v8092 = vpack.c.b16 %v7852, %v7844
      %v8093 = vpack.c.b16 %v7861, %v7853
      %v8094 = vpack.c.b16 %v7862, %v7854
      %v8095 = vpack.c.b16 %v7863, %v7855
      %v8096 = vpack.c.b16 %v7864, %v7856
      %v8097 = vpack.c.b16 %v7865, %v7857
      %v8098 = vpack.c.b16 %v7866, %v7858
      %v8099 = vpack.c.b16 %v7867, %v7859
      %v8100 = vpack.c.b16 %v7868, %v7860
      %v8101 = vpack.c.b16 %v7877, %v7869
      %v8102 = vpack.c.b16 %v7878, %v7870
      %v8103 = vpack.c.b16 %v7879, %v7871
      %v8104 = vpack.c.b16 %v7880, %v7872
      %v8105 = vpack.c.b16 %v7881, %v7873
      %v8106 = vpack.c.b16 %v7882, %v7874
      %v8107 = vpack.c.b16 %v7883, %v7875
      %v8108 = vpack.c.b16 %v7884, %v7876
      %v8109 = vpack.c.b16 %v7893, %v7885
      %v8110 = vpack.c.b16 %v7894, %v7886
      %v8111 = vpack.c.b16 %v7895, %v7887
      %v8112 = vpack.c.b16 %v7896, %v7888
      %v8113 = vpack.c.b16 %v7897, %v7889
      %v8114 = vpack.c.b16 %v7898, %v7890
      %v8115 = vpack.c.b16 %v7899, %v7891
      %v8116 = vpack.c.b16 %v7900, %v7892
      %v8117 = vpack.c.b16 %v7909, %v7901
      %v8118 = vpack.c.b16 %v7910, %v7902
      %v8119 = vpack.c.b16 %v7911, %v7903
      %v8120 = vpack.c.b16 %v7912, %v7904
      %v8121 = vpack.c.b16 %v7913, %v7905
      %v8122 = vpack.c.b16 %v7914, %v7906
      %v8123 = vpack.c.b16 %v7915, %v7907
      %v8124 = vpack.c.b16 %v7916, %v7908
      %v8125 = vpack.c.b16 %v7925, %v7917
      %v8126 = vpack.c.b16 %v7926, %v7918
      %v8127 = vpack.c.b16 %v7927, %v7919
      %v8128 = vpack.c.b16 %v7928, %v7920
      %v8129 = vpack.c.b16 %v7929, %v7921
      %v8130 = vpack.c.b16 %v7930, %v7922
      %v8131 = vpack.c.b16 %v7931, %v7923
      %v8132 = vpack.c.b16 %v7932, %v7924
      %v8133 = vpack.c.b16 %v7941, %v7933
      %v8134 = vpack.c.b16 %v7942, %v7934
      %v8135 = vpack.c.b16 %v7943, %v7935
      %v8136 = vpack.c.b16 %v7944, %v7936
      %v8137 = vpack.c.b16 %v7945, %v7937
      %v8138 = vpack.c.b16 %v7946, %v7938
      %v8139 = vpack.c.b16 %v7947, %v7939
      %v8140 = vpack.c.b16 %v7948, %v7940
      %v8141 = vpack.c.b16 %v7957, %v7949
      %v8142 = vpack.c.b16 %v7958, %v7950
      %v8143 = vpack.c.b16 %v7959, %v7951
      %v8144 = vpack.c.b16 %v7960, %v7952
      %v8145 = vpack.c.b16 %v7961, %v7953
      %v8146 = vpack.c.b16 %v7962, %v7954
      %v8147 = vpack.c.b16 %v7963, %v7955
      %v8148 = vpack.c.b16 %v7964, %v7956
      %v8149 = vpack.c.b16 %v7973, %v7965
      %v8150 = vpack.c.b16 %v7974, %v7966
      %v8151 = vpack.c.b16 %v7975, %v7967
      %v8152 = vpack.c.b16 %v7976, %v7968
      %v8153 = vpack.c.b16 %v7977, %v7969
      %v8154 = vpack.c.b16 %v7978, %v7970
      %v8155 = vpack.c.b16 %v7979, %v7971
      %v8156 = vpack.c.b16 %v7980, %v7972
      %v8157 = vpack.c.b16 %v7989, %v7981
      %v8158 = vpack.c.b16 %v7990, %v7982
      %v8159 = vpack.c.b16 %v7991, %v7983
      %v8160 = vpack.c.b16 %v7992, %v7984
      %v8161 = vpack.c.b16 %v7993, %v7985
      %v8162 = vpack.c.b16 %v7994, %v7986
      %v8163 = vpack.c.b16 %v7995, %v7987
      %v8164 = vpack.c.b16 %v7996, %v7988
      %v8165 = vpack.c.b16 %v8005, %v7997
      %v8166 = vpack.c.b16 %v8006, %v7998
      %v8167 = vpack.c.b16 %v8007, %v7999
      %v8168 = vpack.c.b16 %v8008, %v8000
      %v8169 = vpack.c.b16 %v8009, %v8001
      %v8170 = vpack.c.b16 %v8010, %v8002
      %v8171 = vpack.c.b16 %v8011, %v8003
      %v8172 = vpack.c.b16 %v8012, %v8004
      %v8173 = vpack.c.b16 %v8021, %v8013
      %v8174 = vpack.c.b16 %v8022, %v8014
      %v8175 = vpack.c.b16 %v8023, %v8015
      %v8176 = vpack.c.b16 %v8024, %v8016
      %v8177 = vpack.c.b16 %v8025, %v8017
      %v8178 = vpack.c.b16 %v8026, %v8018
      %v8179 = vpack.c.b16 %v8027, %v8019
      %v8180 = vpack.c.b16 %v8028, %v8020
      %v8181 = vpack.c.b16 %v8037, %v8029
      %v8182 = vpack.c.b16 %v8038, %v8030
      %v8183 = vpack.c.b16 %v8039, %v8031
      %v8184 = vpack.c.b16 %v8040, %v8032
      %v8185 = vpack.c.b16 %v8041, %v8033
      %v8186 = vpack.c.b16 %v8042, %v8034
      %v8187 = vpack.c.b16 %v8043, %v8035
      %v8188 = vpack.c.b16 %v8044, %v8036
      %v8189 = vpack.c.b16 %v8053, %v8045
      %v8190 = vpack.c.b16 %v8054, %v8046
      %v8191 = vpack.c.b16 %v8055, %v8047
      %v8192 = vpack.c.b16 %v8056, %v8048
      %v8193 = vpack.c.b16 %v8057, %v8049
      %v8194 = vpack.c.b16 %v8058, %v8050
      %v8195 = vpack.c.b16 %v8059, %v8051
      %v8196 = vpack.c.b16 %v8060, %v8052
      %v8197 = vpack.c.b16 %v8069, %v8061
      %v8198 = vpack.c.b16 %v8070, %v8062
      %v8199 = vpack.c.b16 %v8071, %v8063
      %v8200 = vpack.c.b16 %v8072, %v8064
      %v8201 = vpack.c.b16 %v8073, %v8065
      %v8202 = vpack.c.b16 %v8074, %v8066
      %v8203 = vpack.c.b16 %v8075, %v8067
      %v8204 = vpack.c.b16 %v8076, %v8068
      %8333 = vmatprep.subr.bf16.mxu0 %v8078
      %8334 = vmatpush1.bf16.msra.mxu0 %v8077
      %8335 = vmatprep.subr.bf16.mxu0 %v8086
      %8336 = vmatpush1.bf16.msra.mxu0 %v8085
      %8337 = vmatprep.subr.bf16.mxu0 %v8094
      %8338 = vmatpush1.bf16.msra.mxu0 %v8093
      %8339 = vmatprep.subr.bf16.mxu0 %v8102
      %8340 = vmatpush1.bf16.msra.mxu0 %v8101
      %8341 = vmatprep.subr.bf16.mxu0 %v8110
      %8342 = vmatpush1.bf16.msra.mxu0 %v8109
      %8343 = vmatprep.subr.bf16.mxu0 %v8118
      %8344 = vmatpush1.bf16.msra.mxu0 %v8117
      %8345 = vmatprep.subr.bf16.mxu0 %v8126
      %8346 = vmatpush1.bf16.msra.mxu0 %v8125
      %8347 = vmatprep.subr.bf16.mxu0 %v8134
      %8348 = vmatpush1.bf16.msra.mxu0 %v8133
      %8349 = vmatprep.subr.bf16.mxu0 %v8142
      %8350 = vmatpush1.bf16.msra.mxu0 %v8141
      %8351 = vmatprep.subr.bf16.mxu0 %v8150
      %8352 = vmatpush1.bf16.msra.mxu0 %v8149
      %8353 = vmatprep.subr.bf16.mxu0 %v8158
      %8354 = vmatpush1.bf16.msra.mxu0 %v8157
      %8355 = vmatprep.subr.bf16.mxu0 %v8166
      %8356 = vmatpush1.bf16.msra.mxu0 %v8165
      %8357 = vmatprep.subr.bf16.mxu0 %v8174
      %8358 = vmatpush1.bf16.msra.mxu0 %v8173
      %8359 = vmatprep.subr.bf16.mxu0 %v8182
      %8360 = vmatpush1.bf16.msra.mxu0 %v8181
      %8361 = vmatprep.subr.bf16.mxu0 %v8190
      %8362 = vmatpush1.bf16.msra.mxu0 %v8189
      %8363 = vmatprep.subr.bf16.mxu0 %v8198
      %8364 = vmatpush1.bf16.msra.mxu0 %v8197
      %8365 = vmatprep.mubr.bf16.mxu0 %v7651
      %8366 = vmatmul.mubr.bf16.gmra.mrb[0].mxu0 %v7650
      %v8367 = vpop.f32.mrb[0].mxu0
      %v8368 = vadd.f32 %v7656, %v8367
      %v8369 = vpop.f32.mrb[0].mxu0
      %v8370 = vadd.f32 %v7660, %v8369
      %v8371 = vpop.f32.mrb[0].mxu0
      %v8372 = vpop.f32.mrb[0].mxu0
      %8373 = vdwg.mxu0
      %8374 = vmatprep.subr.bf16.mxu0 %v8080
      %8375 = vmatpush1.bf16.msra.mxu0 %v8079
      %8376 = vmatprep.subr.bf16.mxu0 %v8088
      %8377 = vmatpush1.bf16.msra.mxu0 %v8087
      %8378 = vmatprep.subr.bf16.mxu0 %v8096
      %8379 = vmatpush1.bf16.msra.mxu0 %v8095
      %8380 = vmatprep.subr.bf16.mxu0 %v8104
      %8381 = vmatpush1.bf16.msra.mxu0 %v8103
      %8382 = vmatprep.subr.bf16.mxu0 %v8112
      %8383 = vmatpush1.bf16.msra.mxu0 %v8111
      %8384 = vmatprep.subr.bf16.mxu0 %v8120
      %8385 = vmatpush1.bf16.msra.mxu0 %v8119
      %8386 = vmatprep.subr.bf16.mxu0 %v8128
      %8387 = vmatpush1.bf16.msra.mxu0 %v8127
      %8388 = vmatprep.subr.bf16.mxu0 %v8136
      %8389 = vmatpush1.bf16.msra.mxu0 %v8135
      %8390 = vmatprep.subr.bf16.mxu0 %v8144
      %8391 = vmatpush1.bf16.msra.mxu0 %v8143
      %8392 = vmatprep.subr.bf16.mxu0 %v8152
      %8393 = vmatpush1.bf16.msra.mxu0 %v8151
      %8394 = vmatprep.subr.bf16.mxu0 %v8160
      %8395 = vmatpush1.bf16.msra.mxu0 %v8159
      %8396 = vmatprep.subr.bf16.mxu0 %v8168
      %8397 = vmatpush1.bf16.msra.mxu0 %v8167
      %8398 = vmatprep.subr.bf16.mxu0 %v8176
      %8399 = vmatpush1.bf16.msra.mxu0 %v8175
      %8400 = vmatprep.subr.bf16.mxu0 %v8184
      %8401 = vmatpush1.bf16.msra.mxu0 %v8183
      %8402 = vmatprep.subr.bf16.mxu0 %v8192
      %8403 = vmatpush1.bf16.msra.mxu0 %v8191
      %8404 = vmatprep.subr.bf16.mxu0 %v8200
      %8405 = vmatpush1.bf16.msra.mxu0 %v8199
      %8406 = vmatprep.mubr.bf16.mxu0 %v7651
      %8407 = vmatmul.mubr.bf16.gmra.mrb[0].mxu0 %v7650
      %v8408 = vpop.f32.mrb[0].mxu0
      %v8409 = vadd.f32 %v7664, %v8408
      %v8410 = vpop.f32.mrb[0].mxu0
      %v8411 = vadd.f32 %v7668, %v8410
      %v8412 = vpop.f32.mrb[0].mxu0
      %v8413 = vpop.f32.mrb[0].mxu0
      %8414 = vdwg.mxu0
      %8415 = vmatprep.subr.bf16.mxu0 %v8082
      %8416 = vmatpush1.bf16.msra.mxu0 %v8081
      %8417 = vmatprep.subr.bf16.mxu0 %v8090
      %8418 = vmatpush1.bf16.msra.mxu0 %v8089
      %8419 = vmatprep.subr.bf16.mxu0 %v8098
      %8420 = vmatpush1.bf16.msra.mxu0 %v8097
      %8421 = vmatprep.subr.bf16.mxu0 %v8106
      %8422 = vmatpush1.bf16.msra.mxu0 %v8105
      %8423 = vmatprep.subr.bf16.mxu0 %v8114
      %8424 = vmatpush1.bf16.msra.mxu0 %v8113
      %8425 = vmatprep.subr.bf16.mxu0 %v8122
      %8426 = vmatpush1.bf16.msra.mxu0 %v8121
      %8427 = vmatprep.subr.bf16.mxu0 %v8130
      %8428 = vmatpush1.bf16.msra.mxu0 %v8129
      %8429 = vmatprep.subr.bf16.mxu0 %v8138
      %8430 = vmatpush1.bf16.msra.mxu0 %v8137
      %8431 = vmatprep.subr.bf16.mxu0 %v8146
      %8432 = vmatpush1.bf16.msra.mxu0 %v8145
      %8433 = vmatprep.subr.bf16.mxu0 %v8154
      %8434 = vmatpush1.bf16.msra.mxu0 %v8153
      %8435 = vmatprep.subr.bf16.mxu0 %v8162
      %8436 = vmatpush1.bf16.msra.mxu0 %v8161
      %8437 = vmatprep.subr.bf16.mxu0 %v8170
      %8438 = vmatpush1.bf16.msra.mxu0 %v8169
      %8439 = vmatprep.subr.bf16.mxu0 %v8178
      %8440 = vmatpush1.bf16.msra.mxu0 %v8177
      %8441 = vmatprep.subr.bf16.mxu0 %v8186
      %8442 = vmatpush1.bf16.msra.mxu0 %v8185
      %8443 = vmatprep.subr.bf16.mxu0 %v8194
      %8444 = vmatpush1.bf16.msra.mxu0 %v8193
      %8445 = vmatprep.subr.bf16.mxu0 %v8202
      %8446 = vmatpush1.bf16.msra.mxu0 %v8201
      %8447 = vmatprep.mubr.bf16.mxu0 %v7651
      %8448 = vmatmul.mubr.bf16.gmra.mrb[0].mxu0 %v7650
      %v8449 = vpop.f32.mrb[0].mxu0
      %v8450 = vadd.f32 %v7672, %v8449
      %v8451 = vpop.f32.mrb[0].mxu0
      %v8452 = vadd.f32 %v7676, %v8451
      %v8453 = vpop.f32.mrb[0].mxu0
      %v8454 = vpop.f32.mrb[0].mxu0
      %8455 = vdwg.mxu0
      %8456 = vmatprep.subr.bf16.mxu0 %v8084
      %8457 = vmatpush1.bf16.msra.mxu0 %v8083
      %8458 = vmatprep.subr.bf16.mxu0 %v8092
      %8459 = vmatpush1.bf16.msra.mxu0 %v8091
      %8460 = vmatprep.subr.bf16.mxu0 %v8100
      %8461 = vmatpush1.bf16.msra.mxu0 %v8099
      %8462 = vmatprep.subr.bf16.mxu0 %v8108
      %8463 = vmatpush1.bf16.msra.mxu0 %v8107
      %8464 = vmatprep.subr.bf16.mxu0 %v8116
      %8465 = vmatpush1.bf16.msra.mxu0 %v8115
      %8466 = vmatprep.subr.bf16.mxu0 %v8124
      %8467 = vmatpush1.bf16.msra.mxu0 %v8123
      %8468 = vmatprep.subr.bf16.mxu0 %v8132
      %8469 = vmatpush1.bf16.msra.mxu0 %v8131
      %8470 = vmatprep.subr.bf16.mxu0 %v8140
      %8471 = vmatpush1.bf16.msra.mxu0 %v8139
      %8472 = vmatprep.subr.bf16.mxu0 %v8148
      %8473 = vmatpush1.bf16.msra.mxu0 %v8147
      %8474 = vmatprep.subr.bf16.mxu0 %v8156
      %8475 = vmatpush1.bf16.msra.mxu0 %v8155
      %8476 = vmatprep.subr.bf16.mxu0 %v8164
      %8477 = vmatpush1.bf16.msra.mxu0 %v8163
      %8478 = vmatprep.subr.bf16.mxu0 %v8172
      %8479 = vmatpush1.bf16.msra.mxu0 %v8171
      %8480 = vmatprep.subr.bf16.mxu0 %v8180
      %8481 = vmatpush1.bf16.msra.mxu0 %v8179
      %8482 = vmatprep.subr.bf16.mxu0 %v8188
      %8483 = vmatpush1.bf16.msra.mxu0 %v8187
      %8484 = vmatprep.subr.bf16.mxu0 %v8196
      %8485 = vmatpush1.bf16.msra.mxu0 %v8195
      %8486 = vmatprep.subr.bf16.mxu0 %v8204
      %8487 = vmatpush1.bf16.msra.mxu0 %v8203
      %8488 = vmatprep.mubr.bf16.mxu0 %v7651
      %8489 = vmatmul.mubr.bf16.gmra.mrb[0].mxu0 %v7650
      %v8490 = vpop.f32.mrb[0].mxu0
      %v8491 = vadd.f32 %v7680, %v8490
      %v8492 = vpop.f32.mrb[0].mxu0
      %v8493 = vadd.f32 %v7684, %v8492
      %v8494 = vpop.f32.mrb[0].mxu0
      %v8495 = vpop.f32.mrb[0].mxu0
      %8496 = vdwg.mxu0
      %v8497 = vmax.f32 %v8368, 0.0
      %v8498 = vmax.f32 %v8370, 0.0
      %v8499 = vmax.f32 %v8409, 0.0
      %v8500 = vmax.f32 %v8411, 0.0
      %v8501 = vmax.f32 %v8450, 0.0
      %v8502 = vmax.f32 %v8452, 0.0
      %v8503 = vmax.f32 %v8491, 0.0
      %v8504 = vmax.f32 %v8493, 0.0
      %v8513 = vcombine.low %v8497, %v8498
      %v8514 = vcombine.low %v8499, %v8500
      %v8516 = vunpack.c.l.s4 1983009808
      %v8517 = vunpack.c.0.s8 %v8516
      %v8518 = vlaneseq
      %v8519 = vshrl.u32 %v8518, 7
      %v8520 = vsub.s32 %v8517, %v8519
      %v8521 = vrot.slane %v8513, %v8520
      %v8523 = vunpack.c.l.s4 1983009808
      %v8524 = vunpack.c.0.s8 %v8523
      %v8525 = vlaneseq
      %v8526 = vshrl.u32 %v8525, 7
      %v8527 = vsub.s32 %v8524, %v8526
      %v8528 = vrot.slane %v8514, %v8527
      %v8529 = vcombine.low %v8521, %v8528
      %v8530 = vcombine.low %v8501, %v8502
      %v8531 = vcombine.low %v8503, %v8504
      %v8533 = vunpack.c.l.s4 1983009808
      %v8534 = vunpack.c.0.s8 %v8533
      %v8535 = vlaneseq
      %v8536 = vshrl.u32 %v8535, 7
      %v8537 = vsub.s32 %v8534, %v8536
      %v8538 = vrot.slane %v8530, %v8537
      %v8540 = vunpack.c.l.s4 1983009808
      %v8541 = vunpack.c.0.s8 %v8540
      %v8542 = vlaneseq
      %v8543 = vshrl.u32 %v8542, 7
      %v8544 = vsub.s32 %v8541, %v8543
      %v8545 = vrot.slane %v8531, %v8544
      %v8546 = vcombine.low %v8538, %v8545
      %8549 = vst [vmem:[#allocation4] sm:$0xff] %v8529
      %8550 = vst [vmem:[#allocation4 + $0x8] sm:$0xff] %v8546
      %v8551 = vld [vmem:[#allocation3] sm:$0xf]
      %v8552 = vmul.f32 %v8551, 0.015625
      %v8555 = vunpack.c.l.s4 1983009808
      %v8556 = vunpack.c.0.s8 %v8555
      %v8557 = vlaneseq
      %v8558 = vshrl.u32 %v8557, 7
      %v8559 = vsub.s32 %v8556, %v8558
      %v8560 = vrot.slane %v8552, %v8559
      %v8561 = vcombine.high %v8560, %v8560
      %v8564 = vpack.c.bf16 %v8560, %v8560
      %v8565 = vpack.c.bf16 %v8561, %v8561
      %8566 = vmatprep.subr.bf16.mxu0 %v8078
      %8567 = vmatpush1.bf16.msra.mxu0 %v8077
      %8568 = vmatprep.subr.bf16.mxu0 %v8086
      %8569 = vmatpush1.bf16.msra.mxu0 %v8085
      %8570 = vmatprep.subr.bf16.mxu0 %v8094
      %8571 = vmatpush1.bf16.msra.mxu0 %v8093
      %8572 = vmatprep.subr.bf16.mxu0 %v8102
      %8573 = vmatpush1.bf16.msra.mxu0 %v8101
      %8574 = vmatprep.subr.bf16.mxu0 %v8110
      %8575 = vmatpush1.bf16.msra.mxu0 %v8109
      %8576 = vmatprep.subr.bf16.mxu0 %v8118
      %8577 = vmatpush1.bf16.msra.mxu0 %v8117
      %8578 = vmatprep.subr.bf16.mxu0 %v8126
      %8579 = vmatpush1.bf16.msra.mxu0 %v8125
      %8580 = vmatprep.subr.bf16.mxu0 %v8134
      %8581 = vmatpush1.bf16.msra.mxu0 %v8133
      %8582 = vmatprep.subr.bf16.mxu0 %v8142
      %8583 = vmatpush1.bf16.msra.mxu0 %v8141
      %8584 = vmatprep.subr.bf16.mxu0 %v8150
      %8585 = vmatpush1.bf16.msra.mxu0 %v8149
      %8586 = vmatprep.subr.bf16.mxu0 %v8158
      %8587 = vmatpush1.bf16.msra.mxu0 %v8157
      %8588 = vmatprep.subr.bf16.mxu0 %v8166
      %8589 = vmatpush1.bf16.msra.mxu0 %v8165
      %8590 = vmatprep.subr.bf16.mxu0 %v8174
      %8591 = vmatpush1.bf16.msra.mxu0 %v8173
      %8592 = vmatprep.subr.bf16.mxu0 %v8182
      %8593 = vmatpush1.bf16.msra.mxu0 %v8181
      %8594 = vmatprep.subr.bf16.mxu0 %v8190
      %8595 = vmatpush1.bf16.msra.mxu0 %v8189
      %8596 = vmatprep.subr.bf16.mxu0 %v8198
      %8597 = vmatpush1.bf16.msra.mxu0 %v8197
      %8598 = vmatprep.mubr.bf16.mxu0 %v8565
      %8599 = vmatmul.mubr.bf16.gmra.mrb[0].mxu0 %v8564
      %v8600 = vpop.f32.mrb[0].mxu0
      %v8601 = vadd.f32 %v7656, %v8600
      %v8602 = vpop.f32.mrb[0].mxu0
      %v8603 = vadd.f32 %v7660, %v8602
      %v8604 = vpop.f32.mrb[0].mxu0
      %v8605 = vpop.f32.mrb[0].mxu0
      %8606 = vdwg.mxu0
      %8607 = vmatprep.subr.bf16.mxu0 %v8080
      %8608 = vmatpush1.bf16.msra.mxu0 %v8079
      %8609 = vmatprep.subr.bf16.mxu0 %v8088
      %8610 = vmatpush1.bf16.msra.mxu0 %v8087
      %8611 = vmatprep.subr.bf16.mxu0 %v8096
      %8612 = vmatpush1.bf16.msra.mxu0 %v8095
      %8613 = vmatprep.subr.bf16.mxu0 %v8104
      %8614 = vmatpush1.bf16.msra.mxu0 %v8103
      %8615 = vmatprep.subr.bf16.mxu0 %v8112
      %8616 = vmatpush1.bf16.msra.mxu0 %v8111
      %8617 = vmatprep.subr.bf16.mxu0 %v8120
      %8618 = vmatpush1.bf16.msra.mxu0 %v8119
      %8619 = vmatprep.subr.bf16.mxu0 %v8128
      %8620 = vmatpush1.bf16.msra.mxu0 %v8127
      %8621 = vmatprep.subr.bf16.mxu0 %v8136
      %8622 = vmatpush1.bf16.msra.mxu0 %v8135
      %8623 = vmatprep.subr.bf16.mxu0 %v8144
      %8624 = vmatpush1.bf16.msra.mxu0 %v8143
      %8625 = vmatprep.subr.bf16.mxu0 %v8152
      %8626 = vmatpush1.bf16.msra.mxu0 %v8151
      %8627 = vmatprep.subr.bf16.mxu0 %v8160
      %8628 = vmatpush1.bf16.msra.mxu0 %v8159
      %8629 = vmatprep.subr.bf16.mxu0 %v8168
      %8630 = vmatpush1.bf16.msra.mxu0 %v8167
      %8631 = vmatprep.subr.bf16.mxu0 %v8176
      %8632 = vmatpush1.bf16.msra.mxu0 %v8175
      %8633 = vmatprep.subr.bf16.mxu0 %v8184
      %8634 = vmatpush1.bf16.msra.mxu0 %v8183
      %8635 = vmatprep.subr.bf16.mxu0 %v8192
      %8636 = vmatpush1.bf16.msra.mxu0 %v8191
      %8637 = vmatprep.subr.bf16.mxu0 %v8200
      %8638 = vmatpush1.bf16.msra.mxu0 %v8199
      %8639 = vmatprep.mubr.bf16.mxu0 %v8565
      %8640 = vmatmul.mubr.bf16.gmra.mrb[0].mxu0 %v8564
      %v8641 = vpop.f32.mrb[0].mxu0
      %v8642 = vadd.f32 %v7664, %v8641
      %v8643 = vpop.f32.mrb[0].mxu0
      %v8644 = vadd.f32 %v7668, %v8643
      %v8645 = vpop.f32.mrb[0].mxu0
      %v8646 = vpop.f32.mrb[0].mxu0
      %8647 = vdwg.mxu0
      %8648 = vmatprep.subr.bf16.mxu0 %v8082
      %8649 = vmatpush1.bf16.msra.mxu0 %v8081
      %8650 = vmatprep.subr.bf16.mxu0 %v8090
      %8651 = vmatpush1.bf16.msra.mxu0 %v8089
      %8652 = vmatprep.subr.bf16.mxu0 %v8098
      %8653 = vmatpush1.bf16.msra.mxu0 %v8097
      %8654 = vmatprep.subr.bf16.mxu0 %v8106
      %8655 = vmatpush1.bf16.msra.mxu0 %v8105
      %8656 = vmatprep.subr.bf16.mxu0 %v8114
      %8657 = vmatpush1.bf16.msra.mxu0 %v8113
      %8658 = vmatprep.subr.bf16.mxu0 %v8122
      %8659 = vmatpush1.bf16.msra.mxu0 %v8121
      %8660 = vmatprep.subr.bf16.mxu0 %v8130
      %8661 = vmatpush1.bf16.msra.mxu0 %v8129
      %8662 = vmatprep.subr.bf16.mxu0 %v8138
      %8663 = vmatpush1.bf16.msra.mxu0 %v8137
      %8664 = vmatprep.subr.bf16.mxu0 %v8146
      %8665 = vmatpush1.bf16.msra.mxu0 %v8145
      %8666 = vmatprep.subr.bf16.mxu0 %v8154
      %8667 = vmatpush1.bf16.msra.mxu0 %v8153
      %8668 = vmatprep.subr.bf16.mxu0 %v8162
      %8669 = vmatpush1.bf16.msra.mxu0 %v8161
      %8670 = vmatprep.subr.bf16.mxu0 %v8170
      %8671 = vmatpush1.bf16.msra.mxu0 %v8169
      %8672 = vmatprep.subr.bf16.mxu0 %v8178
      %8673 = vmatpush1.bf16.msra.mxu0 %v8177
      %8674 = vmatprep.subr.bf16.mxu0 %v8186
      %8675 = vmatpush1.bf16.msra.mxu0 %v8185
      %8676 = vmatprep.subr.bf16.mxu0 %v8194
      %8677 = vmatpush1.bf16.msra.mxu0 %v8193
      %8678 = vmatprep.subr.bf16.mxu0 %v8202
      %8679 = vmatpush1.bf16.msra.mxu0 %v8201
      %8680 = vmatprep.mubr.bf16.mxu0 %v8565
      %8681 = vmatmul.mubr.bf16.gmra.mrb[0].mxu0 %v8564
      %v8682 = vpop.f32.mrb[0].mxu0
      %v8683 = vadd.f32 %v7672, %v8682
      %v8684 = vpop.f32.mrb[0].mxu0
      %v8685 = vadd.f32 %v7676, %v8684
      %v8686 = vpop.f32.mrb[0].mxu0
      %v8687 = vpop.f32.mrb[0].mxu0
      %8688 = vdwg.mxu0
      %8689 = vmatprep.subr.bf16.mxu0 %v8084
      %8690 = vmatpush1.bf16.msra.mxu0 %v8083
      %8691 = vmatprep.subr.bf16.mxu0 %v8092
      %8692 = vmatpush1.bf16.msra.mxu0 %v8091
      %8693 = vmatprep.subr.bf16.mxu0 %v8100
      %8694 = vmatpush1.bf16.msra.mxu0 %v8099
      %8695 = vmatprep.subr.bf16.mxu0 %v8108
      %8696 = vmatpush1.bf16.msra.mxu0 %v8107
      %8697 = vmatprep.subr.bf16.mxu0 %v8116
      %8698 = vmatpush1.bf16.msra.mxu0 %v8115
      %8699 = vmatprep.subr.bf16.mxu0 %v8124
      %8700 = vmatpush1.bf16.msra.mxu0 %v8123
      %8701 = vmatprep.subr.bf16.mxu0 %v8132
      %8702 = vmatpush1.bf16.msra.mxu0 %v8131
      %8703 = vmatprep.subr.bf16.mxu0 %v8140
      %8704 = vmatpush1.bf16.msra.mxu0 %v8139
      %8705 = vmatprep.subr.bf16.mxu0 %v8148
      %8706 = vmatpush1.bf16.msra.mxu0 %v8147
      %8707 = vmatprep.subr.bf16.mxu0 %v8156
      %8708 = vmatpush1.bf16.msra.mxu0 %v8155
      %8709 = vmatprep.subr.bf16.mxu0 %v8164
      %8710 = vmatpush1.bf16.msra.mxu0 %v8163
      %8711 = vmatprep.subr.bf16.mxu0 %v8172
      %8712 = vmatpush1.bf16.msra.mxu0 %v8171
      %8713 = vmatprep.subr.bf16.mxu0 %v8180
      %8714 = vmatpush1.bf16.msra.mxu0 %v8179
      %8715 = vmatprep.subr.bf16.mxu0 %v8188
      %8716 = vmatpush1.bf16.msra.mxu0 %v8187
      %8717 = vmatprep.subr.bf16.mxu0 %v8196
      %8718 = vmatpush1.bf16.msra.mxu0 %v8195
      %8719 = vmatprep.subr.bf16.mxu0 %v8204
      %8720 = vmatpush1.bf16.msra.mxu0 %v8203
      %8721 = vmatprep.mubr.bf16.mxu0 %v8565
      %8722 = vmatmul.mubr.bf16.gmra.mrb[0].mxu0 %v8564
      %v8723 = vpop.f32.mrb[0].mxu0
      %v8724 = vadd.f32 %v7680, %v8723
      %v8725 = vpop.f32.mrb[0].mxu0
      %v8726 = vadd.f32 %v7684, %v8725
      %v8727 = vpop.f32.mrb[0].mxu0
      %v8728 = vpop.f32.mrb[0].mxu0
      %8729 = vdwg.mxu0
      %v8730 = vmax.f32 %v8601, 0.0
      %v8731 = vmax.f32 %v8603, 0.0
      %v8732 = vmax.f32 %v8642, 0.0
      %v8733 = vmax.f32 %v8644, 0.0
      %v8734 = vmax.f32 %v8683, 0.0
      %v8735 = vmax.f32 %v8685, 0.0
      %v8736 = vmax.f32 %v8724, 0.0
      %v8737 = vmax.f32 %v8726, 0.0
      %v8746 = vcombine.low %v8730, %v8731
      %v8747 = vcombine.low %v8732, %v8733
      %v8749 = vunpack.c.l.s4 1983009808
      %v8750 = vunpack.c.0.s8 %v8749
      %v8751 = vlaneseq
      %v8752 = vshrl.u32 %v8751, 7
      %v8753 = vsub.s32 %v8750, %v8752
      %v8754 = vrot.slane %v8746, %v8753
      %v8756 = vunpack.c.l.s4 1983009808
      %v8757 = vunpack.c.0.s8 %v8756
      %v8758 = vlaneseq
      %v8759 = vshrl.u32 %v8758, 7
      %v8760 = vsub.s32 %v8757, %v8759
      %v8761 = vrot.slane %v8747, %v8760
      %v8762 = vcombine.low %v8754, %v8761
      %v8763 = vcombine.low %v8734, %v8735
      %v8764 = vcombine.low %v8736, %v8737
      %v8766 = vunpack.c.l.s4 1983009808
      %v8767 = vunpack.c.0.s8 %v8766
      %v8768 = vlaneseq
      %v8769 = vshrl.u32 %v8768, 7
      %v8770 = vsub.s32 %v8767, %v8769
      %v8771 = vrot.slane %v8763, %v8770
      %v8773 = vunpack.c.l.s4 1983009808
      %v8774 = vunpack.c.0.s8 %v8773
      %v8775 = vlaneseq
      %v8776 = vshrl.u32 %v8775, 7
      %v8777 = vsub.s32 %v8774, %v8776
      %v8778 = vrot.slane %v8764, %v8777
      %v8779 = vcombine.low %v8771, %v8778
      %8782 = vst [vmem:[#allocation6] sm:$0xff] %v8762
      %8783 = vst [vmem:[#allocation6 + $0x8] sm:$0xff] %v8779
    $region25: #{pooled_projection_pallas.1} parent=1 // pred_fallthru
      _
    // Predicated region
    $region26: #{pooled_projection_pallas.1} parent=1 // pred_check
      _
    $region27: #{pooled_projection_pallas.1} parent=1 // pred_check_branch
      %8785 = sbr.rel (0) target = $region29
    $region28: #{pooled_projection_pallas.1} parent=1 // pred_region
      %s8787 = ssub.s32 256, 256
      %8788 = vsyncadd [#allocation5], %s8787
      %s8790 = sshll.u32 [#allocation4], 4
      %s8791 = int_to_ptr.vmem [resolvable:$true] %s8790
      %8793 = dma.vmem_to_hbm [thread:$0]  %s8791, 256, %s4, [#allocation5]
    $region29: #{pooled_projection_pallas.1} parent=1 // pred_fallthru
      _
    // Predicated region
    $region30: #{pooled_projection_pallas.1} parent=1 // pred_check
      _
    $region31: #{pooled_projection_pallas.1} parent=1 // pred_check_branch
      %8795 = sbr.rel (0) target = $region33
    $region32: #{pooled_projection_pallas.1} parent=1 // pred_region
      %s8797 = ssub.s32 256, 256
      %8798 = vsyncadd [#allocation7], %s8797
      %s8800 = sshll.u32 [#allocation6], 4
      %s8801 = int_to_ptr.vmem [resolvable:$true] %s8800
      %8803 = dma.vmem_to_hbm [thread:$0]  %s8801, 256, %s5, [#allocation7]
    $region33: #{pooled_projection_pallas.1} parent=1 // pred_fallthru
      _
    // Predicated region
    $region34: #{pooled_projection_pallas.1} parent=1 // pred_check
      _
    $region35: #{pooled_projection_pallas.1} parent=1 // pred_check_branch
      %8805 = sbr.rel (0) target = $region37
    $region36: #{pooled_projection_pallas.1} parent=1 // pred_region
      %8806 = dma.done [#allocation5], 256
    $region37: #{pooled_projection_pallas.1} parent=1 // pred_fallthru
      _
    // Predicated region
    $region38: #{pooled_projection_pallas.1} parent=1 // pred_check
      _
    $region39: #{pooled_projection_pallas.1} parent=1 // pred_check_branch
      %8808 = sbr.rel (0) target = $region41
    $region40: #{pooled_projection_pallas.1} parent=1 // pred_region
      %8809 = dma.done [#allocation7], 256
    $region41: #{pooled_projection_pallas.1} parent=1 // pred_fallthru
      _
    %8810 = vsyncpa [#allocation5], 1
    %8811 = vsyncpa [#allocation7], 1

</llo_original>
